<compile_context>
chip_gen: v5e
topology: v5e:2x2
jax: 0.10.0
libtpu: 0.0.40
codegen_flags: <defaults>
</compile_context>

<pallas_src>
import numpy as np

import jax
import jax.numpy as jnp
from jax.experimental import pallas as pl
from jax.experimental.pallas import tpu as pltpu

# `library` is empty in the source file, so fp_len = len(library[0]) is undefined;
# pick a small deterministic fingerprint length consistent with the module.
FP_LEN = 16
MAXLEN = 10
C1 = 256          # conv1 output channels
C2 = 128          # conv2 output channels
IN_LEN = FP_LEN * MAXLEN          # 160
FLAT1 = C1 * MAXLEN               # 2560

DEFAULT_TB = 256  # batch rows per grid step (multiple of 8; 256 fills v6e/v7x MXU)


# ---------------------------------------------------------------------------
# Fused kernel: conv1 (+ReLU, + channel-major regroup via expanded weight)
#               -> conv2 windows + max-pool -> fc1 + ReLU -> fc2 + sigmoid
# Shapes (per grid step, TB = batch tile):
#   x_ref     (TB, 160)  f32      w1_ref (160, 2560) bf16   b1_ref (1, 2560) f32
#   w2_ref    (256, 128) bf16     b2_ref (1, 128)    f32
#   fc1w_ref  (64, 128)  bf16     fc1b_ref (64, 1)   f32
#   fc2w_ref  (1, 64)    bf16     fc2b_ref (1, 1)    f32
#   o_ref     (1, TB)    f32      (probabilities, batch on lanes)
# ---------------------------------------------------------------------------
def _net_fused_kernel(x_ref, w1_ref, b1_ref, w2_ref, b2_ref,
                      fc1w_ref, fc1b_ref, fc2w_ref, fc2b_ref, o_ref):
    # conv1 as one matmul; output columns are already in torch's channel-major
    # flatten order flat[c*MAXLEN + t] thanks to the expanded weight layout.
    x16 = x_ref[...].astype(jnp.bfloat16)                       # (TB, 160)
    a = jnp.dot(x16, w1_ref[...], preferred_element_type=jnp.float32)
    a = jnp.maximum(a + b1_ref[...], 0.0)                       # (TB, 2560) f32
    a16 = a.astype(jnp.bfloat16)

    # conv2 over the 10 contiguous 256-wide windows, fused with max-pool.
    w2 = w2_ref[...]                                            # (256, 128) bf16
    acc = None
    for j in range(MAXLEN):                                     # static unroll, aligned slices
        win = a16[:, j * C1:(j + 1) * C1]                       # (TB, 256)
        yj = jnp.dot(win, w2, preferred_element_type=jnp.float32)
        acc = yj if acc is None else jnp.maximum(acc, yj)
    v = acc + b2_ref[...]                                       # (TB, 128) f32

    # Tail is done transposed so the batch stays on the 128-lane axis and the
    # final store is a dense (1, TB) row.
    vt = jnp.transpose(v).astype(jnp.bfloat16)                  # (128, TB)
    h = jnp.dot(fc1w_ref[...], vt, preferred_element_type=jnp.float32)
    h = jnp.maximum(h + fc1b_ref[...], 0.0)                     # (64, TB) f32
    h16 = h.astype(jnp.bfloat16)

    logit = jnp.dot(fc2w_ref[...], h16, preferred_element_type=jnp.float32)
    logit = logit + fc2b_ref[...]                               # (1, TB) f32
    o_ref[...] = jax.nn.sigmoid(logit)


# ---------------------------------------------------------------------------
# Parameter pre-layout (done ONCE at init, not per forward call).
# ---------------------------------------------------------------------------
def prepare_params(params):
    w1, b1, w2, b2, wfc1, bfc1, wfc2, bfc2 = params

    # Expanded conv1 weight: W1big[t*FP_LEN + f, c*MAXLEN + t] = w1[c, f]
    # so that (x_flat @ W1big)[q] == torch's x.view(1,1,2560,1) flatten order.
    w1_t = np.asarray(w1, np.float32).T                          # (16, 256) = [f, c]
    w1big = np.zeros((IN_LEN, FLAT1), np.float32)
    for t in range(MAXLEN):
        w1big[t * FP_LEN:(t + 1) * FP_LEN, t::MAXLEN] = w1_t
    b1big = np.repeat(np.asarray(b1, np.float32), MAXLEN)[None, :]   # (1, 2560)

    return (
        jnp.asarray(w1big, jnp.bfloat16),                        # (160, 2560)
        jnp.asarray(b1big, jnp.float32),                         # (1, 2560)
        jnp.asarray(w2, jnp.float32).T.astype(jnp.bfloat16),     # (256, 128)
        jnp.asarray(b2, jnp.float32)[None, :],                   # (1, 128)
        jnp.asarray(wfc1, jnp.bfloat16),                         # (64, 128)
        jnp.asarray(bfc1, jnp.float32)[:, None],                 # (64, 1)
        jnp.asarray(wfc2, jnp.bfloat16),                         # (1, 64)
        jnp.asarray(bfc2, jnp.float32)[None, :],                 # (1, 1)
    )


# ---------------------------------------------------------------------------
# Batched forward.  xb: (B, FP_LEN*MAXLEN) f32 -> (B,) probabilities.
# ---------------------------------------------------------------------------
def _round_up(n, m):
    return ((n + m - 1) // m) * m


def net_forward_batched(xb, prep, tb=DEFAULT_TB):
    w1big, b1big, w2t, b2r, fc1w, fc1b, fc2w, fc2b = prep
    B = xb.shape[0]
    tb = min(tb, _round_up(B, 8))
    nb = pl.cdiv(B, tb)
    b_pad = nb * tb
    if b_pad != B:
        xb = jnp.pad(xb, ((0, b_pad - B), (0, 0)))

    out = pl.pallas_call(
        _net_fused_kernel,
        out_shape=jax.ShapeDtypeStruct((1, b_pad), jnp.float32),
        grid=(nb,),
        in_specs=[
            pl.BlockSpec((tb, IN_LEN), lambda i: (i, 0)),        # x: tiled over batch
            pl.BlockSpec((IN_LEN, FLAT1), lambda i: (0, 0)),     # w1big (resident)
            pl.BlockSpec((1, FLAT1), lambda i: (0, 0)),          # b1big
            pl.BlockSpec((C1, C2), lambda i: (0, 0)),            # w2^T
            pl.BlockSpec((1, C2), lambda i: (0, 0)),             # b2
            pl.BlockSpec((64, C2), lambda i: (0, 0)),            # fc1 weight
            pl.BlockSpec((64, 1), lambda i: (0, 0)),             # fc1 bias (column)
            pl.BlockSpec((1, 64), lambda i: (0, 0)),             # fc2 weight
            pl.BlockSpec((1, 1), lambda i: (0, 0)),              # fc2 bias
        ],
        out_specs=pl.BlockSpec((1, tb), lambda i: (0, i)),       # lane-dense output row
        compiler_params=pltpu.CompilerParams(
            dimension_semantics=("parallel",)),                  # v7x: shard batch over 2 TCs
    )(xb, w1big, b1big, w2t, b2r, fc1w, fc1b, fc2w, fc2b)

    return out[0, :B]


def net_forward(x_flat, prep):
    """Single-sample forward matching torch's Net.forward; returns shape (1,)."""
    return net_forward_batched(x_flat[None, :], prep)[:1]


# ---------------------------------------------------------------------------
# Pure-JAX reference (mirrors torch layout math exactly, all f32).
# ---------------------------------------------------------------------------
def net_forward_ref(xb, params):
    w1, b1, w2, b2, wfc1, bfc1, wfc2, bfc2 = params
    B = xb.shape[0]
    X = xb.reshape(B, MAXLEN, FP_LEN)
    A = jnp.maximum(jnp.einsum('btf,cf->bct', X, w1) + b1[None, :, None], 0.0)  # (B,256,10)
    flat = A.reshape(B, FLAT1)                       # flat[b, c*10+t]  (channel-major)
    F = flat.reshape(B, MAXLEN, C1)                  # conv2 windows
    Y = jnp.einsum('bjk,mk->bjm', F, w2) + b2[None, None, :]                    # (B,10,128)
    v = Y.max(axis=1)                                # max_pool over positions  (B,128)
    h = jnp.maximum(v @ wfc1.T + bfc1, 0.0)          # (B,64)
    return jax.nn.sigmoid(h @ wfc2.T + bfc2)[:, 0]   # (B,)


def init_params(key):
    ks = jax.random.split(key, 8)
    scale = 0.05
    w1 = scale * jax.random.normal(ks[0], (C1, FP_LEN), jnp.float32)   # conv1.weight[:,0,:,0]
    b1 = scale * jax.random.normal(ks[1], (C1,), jnp.float32)
    w2 = scale * jax.random.normal(ks[2], (C2, C1), jnp.float32)       # conv2.weight[:,0,:,0]
    b2 = scale * jax.random.normal(ks[3], (C2,), jnp.float32)
    wfc1 = scale * jax.random.normal(ks[4], (64, C2), jnp.float32)
    bfc1 = scale * jax.random.normal(ks[5], (64,), jnp.float32)
    wfc2 = scale * jax.random.normal(ks[6], (1, 64), jnp.float32)
    bfc2 = scale * jax.random.normal(ks[7], (1,), jnp.float32)
    return (w1, b1, w2, b2, wfc1, bfc1, wfc2, bfc2)


if __name__ == "__main__":
    key = jax.random.PRNGKey(0)
    pkey, xkey = jax.random.split(key)
    raw_params = init_params(pkey)
    prep = prepare_params(raw_params)

    B = 300  # exercises two grid steps (TB=256) plus tail padding
    xb = jax.random.normal(xkey, (B, IN_LEN), jnp.float32)

    fwd = jax.jit(net_forward_batched)
    out = jax.block_until_ready(fwd(xb, prep))

    ref = net_forward_ref(xb, raw_params)

    assert out.shape == (B,), out.shape
    assert bool(jnp.all(jnp.isfinite(out)))
    max_err = float(jnp.max(jnp.abs(out - ref)))
    assert bool(jnp.allclose(out, ref, atol=1e-2, rtol=1e-2)), max_err

    print("KERNEL_OK")
</pallas_src>

<mosaic_0001>
module attributes {stable_mosaic.version = 11 : i64} {
  func.func @_net_fused_kernel(%arg0: i32, %arg1: memref<256x160xf32, #tpu.memory_space<vmem>>, %arg2: memref<160x2560xbf16, #tpu.memory_space<vmem>>, %arg3: memref<1x2560xf32, #tpu.memory_space<vmem>>, %arg4: memref<256x128xbf16, #tpu.memory_space<vmem>>, %arg5: memref<1x128xf32, #tpu.memory_space<vmem>>, %arg6: memref<64x128xbf16, #tpu.memory_space<vmem>>, %arg7: memref<64x1xf32, #tpu.memory_space<vmem>>, %arg8: memref<1x64xbf16, #tpu.memory_space<vmem>>, %arg9: memref<1x1xf32, #tpu.memory_space<vmem>>, %arg10: memref<1x256xf32, #tpu.memory_space<vmem>>) attributes {dimension_semantics = [#tpu.dimension_semantics<parallel>], iteration_bounds = array<i64: 2>, scalar_prefetch = 0 : i64, scratch_operands = 0 : i64, tpu.core_type = #tpu.core_type<tc>, window_params = [{transform_indices = @transform_0, window_bounds = array<i64: 256, 160>}, {pipeline_mode = #tpu.pipeline_mode<synchronous>, transform_indices = @transform_1, window_bounds = array<i64: 160, 2560>}, {pipeline_mode = #tpu.pipeline_mode<synchronous>, transform_indices = @transform_2, window_bounds = array<i64: 1, 2560>}, {pipeline_mode = #tpu.pipeline_mode<synchronous>, transform_indices = @transform_3, window_bounds = array<i64: 256, 128>}, {pipeline_mode = #tpu.pipeline_mode<synchronous>, transform_indices = @transform_4, window_bounds = array<i64: 1, 128>}, {pipeline_mode = #tpu.pipeline_mode<synchronous>, transform_indices = @transform_5, window_bounds = array<i64: 64, 128>}, {pipeline_mode = #tpu.pipeline_mode<synchronous>, transform_indices = @transform_6, window_bounds = array<i64: 64, 1>}, {pipeline_mode = #tpu.pipeline_mode<synchronous>, transform_indices = @transform_7, window_bounds = array<i64: 1, 64>}, {pipeline_mode = #tpu.pipeline_mode<synchronous>, transform_indices = @transform_8, window_bounds = array<i64: 1, 1>}, {transform_indices = @transform_9, window_bounds = array<i64: 1, 256>}]} {
    %c0 = arith.constant 0 : index
    %c0_0 = arith.constant 0 : index
    %0 = vector.load %arg1[%c0, %c0_0] : memref<256x160xf32, #tpu.memory_space<vmem>>, vector<256x160xf32>
    %1 = arith.truncf %0 : vector<256x160xf32> to vector<256x160xbf16>
    %c0_1 = arith.constant 0 : index
    %c0_2 = arith.constant 0 : index
    %2 = vector.load %arg2[%c0_1, %c0_2] : memref<160x2560xbf16, #tpu.memory_space<vmem>>, vector<160x2560xbf16>
    %cst = arith.constant dense<0.000000e+00> : vector<256x2560xf32>
    %3 = tpu.matmul %1, %2, %cst {dimension_numbers = #tpu.dot_dimension_numbers<[1], [0], [0], [1], [0, 0, 1, 1], [], []>} : vector<256x160xbf16>, vector<160x2560xbf16>, vector<256x2560xf32> -> vector<256x2560xf32>
    %c0_3 = arith.constant 0 : index
    %c0_4 = arith.constant 0 : index
    %4 = vector.load %arg3[%c0_3, %c0_4] : memref<1x2560xf32, #tpu.memory_space<vmem>>, vector<1x2560xf32>
    %5 = vector.broadcast %4 : vector<1x2560xf32> to vector<256x2560xf32>
    %6 = arith.addf %3, %5 : vector<256x2560xf32>
    %cst_5 = arith.constant 0.000000e+00 : f32
    %7 = vector.broadcast %cst_5 : f32 to vector<256x2560xf32>
    %8 = arith.maximumf %6, %7 : vector<256x2560xf32>
    %9 = arith.truncf %8 : vector<256x2560xf32> to vector<256x2560xbf16>
    %c0_6 = arith.constant 0 : index
    %c0_7 = arith.constant 0 : index
    %10 = vector.load %arg4[%c0_6, %c0_7] : memref<256x128xbf16, #tpu.memory_space<vmem>>, vector<256x128xbf16>
    %11 = vector.extract_strided_slice %9 {offsets = [0, 0], sizes = [256, 256], strides = [1, 1]} : vector<256x2560xbf16> to vector<256x256xbf16>
    %cst_8 = arith.constant dense<0.000000e+00> : vector<256x128xf32>
    %12 = tpu.matmul %11, %10, %cst_8 {dimension_numbers = #tpu.dot_dimension_numbers<[1], [0], [0], [1], [0, 0, 1, 1], [], []>} : vector<256x256xbf16>, vector<256x128xbf16>, vector<256x128xf32> -> vector<256x128xf32>
    %13 = vector.extract_strided_slice %9 {offsets = [0, 256], sizes = [256, 256], strides = [1, 1]} : vector<256x2560xbf16> to vector<256x256xbf16>
    %cst_9 = arith.constant dense<0.000000e+00> : vector<256x128xf32>
    %14 = tpu.matmul %13, %10, %cst_9 {dimension_numbers = #tpu.dot_dimension_numbers<[1], [0], [0], [1], [0, 0, 1, 1], [], []>} : vector<256x256xbf16>, vector<256x128xbf16>, vector<256x128xf32> -> vector<256x128xf32>
    %15 = arith.maximumf %12, %14 : vector<256x128xf32>
    %16 = vector.extract_strided_slice %9 {offsets = [0, 512], sizes = [256, 256], strides = [1, 1]} : vector<256x2560xbf16> to vector<256x256xbf16>
    %cst_10 = arith.constant dense<0.000000e+00> : vector<256x128xf32>
    %17 = tpu.matmul %16, %10, %cst_10 {dimension_numbers = #tpu.dot_dimension_numbers<[1], [0], [0], [1], [0, 0, 1, 1], [], []>} : vector<256x256xbf16>, vector<256x128xbf16>, vector<256x128xf32> -> vector<256x128xf32>
    %18 = arith.maximumf %15, %17 : vector<256x128xf32>
    %19 = vector.extract_strided_slice %9 {offsets = [0, 768], sizes = [256, 256], strides = [1, 1]} : vector<256x2560xbf16> to vector<256x256xbf16>
    %cst_11 = arith.constant dense<0.000000e+00> : vector<256x128xf32>
    %20 = tpu.matmul %19, %10, %cst_11 {dimension_numbers = #tpu.dot_dimension_numbers<[1], [0], [0], [1], [0, 0, 1, 1], [], []>} : vector<256x256xbf16>, vector<256x128xbf16>, vector<256x128xf32> -> vector<256x128xf32>
    %21 = arith.maximumf %18, %20 : vector<256x128xf32>
    %22 = vector.extract_strided_slice %9 {offsets = [0, 1024], sizes = [256, 256], strides = [1, 1]} : vector<256x2560xbf16> to vector<256x256xbf16>
    %cst_12 = arith.constant dense<0.000000e+00> : vector<256x128xf32>
    %23 = tpu.matmul %22, %10, %cst_12 {dimension_numbers = #tpu.dot_dimension_numbers<[1], [0], [0], [1], [0, 0, 1, 1], [], []>} : vector<256x256xbf16>, vector<256x128xbf16>, vector<256x128xf32> -> vector<256x128xf32>
    %24 = arith.maximumf %21, %23 : vector<256x128xf32>
    %25 = vector.extract_strided_slice %9 {offsets = [0, 1280], sizes = [256, 256], strides = [1, 1]} : vector<256x2560xbf16> to vector<256x256xbf16>
    %cst_13 = arith.constant dense<0.000000e+00> : vector<256x128xf32>
    %26 = tpu.matmul %25, %10, %cst_13 {dimension_numbers = #tpu.dot_dimension_numbers<[1], [0], [0], [1], [0, 0, 1, 1], [], []>} : vector<256x256xbf16>, vector<256x128xbf16>, vector<256x128xf32> -> vector<256x128xf32>
    %27 = arith.maximumf %24, %26 : vector<256x128xf32>
    %28 = vector.extract_strided_slice %9 {offsets = [0, 1536], sizes = [256, 256], strides = [1, 1]} : vector<256x2560xbf16> to vector<256x256xbf16>
    %cst_14 = arith.constant dense<0.000000e+00> : vector<256x128xf32>
    %29 = tpu.matmul %28, %10, %cst_14 {dimension_numbers = #tpu.dot_dimension_numbers<[1], [0], [0], [1], [0, 0, 1, 1], [], []>} : vector<256x256xbf16>, vector<256x128xbf16>, vector<256x128xf32> -> vector<256x128xf32>
    %30 = arith.maximumf %27, %29 : vector<256x128xf32>
    %31 = vector.extract_strided_slice %9 {offsets = [0, 1792], sizes = [256, 256], strides = [1, 1]} : vector<256x2560xbf16> to vector<256x256xbf16>
    %cst_15 = arith.constant dense<0.000000e+00> : vector<256x128xf32>
    %32 = tpu.matmul %31, %10, %cst_15 {dimension_numbers = #tpu.dot_dimension_numbers<[1], [0], [0], [1], [0, 0, 1, 1], [], []>} : vector<256x256xbf16>, vector<256x128xbf16>, vector<256x128xf32> -> vector<256x128xf32>
    %33 = arith.maximumf %30, %32 : vector<256x128xf32>
    %34 = vector.extract_strided_slice %9 {offsets = [0, 2048], sizes = [256, 256], strides = [1, 1]} : vector<256x2560xbf16> to vector<256x256xbf16>
    %cst_16 = arith.constant dense<0.000000e+00> : vector<256x128xf32>
    %35 = tpu.matmul %34, %10, %cst_16 {dimension_numbers = #tpu.dot_dimension_numbers<[1], [0], [0], [1], [0, 0, 1, 1], [], []>} : vector<256x256xbf16>, vector<256x128xbf16>, vector<256x128xf32> -> vector<256x128xf32>
    %36 = arith.maximumf %33, %35 : vector<256x128xf32>
    %37 = vector.extract_strided_slice %9 {offsets = [0, 2304], sizes = [256, 256], strides = [1, 1]} : vector<256x2560xbf16> to vector<256x256xbf16>
    %cst_17 = arith.constant dense<0.000000e+00> : vector<256x128xf32>
    %38 = tpu.matmul %37, %10, %cst_17 {dimension_numbers = #tpu.dot_dimension_numbers<[1], [0], [0], [1], [0, 0, 1, 1], [], []>} : vector<256x256xbf16>, vector<256x128xbf16>, vector<256x128xf32> -> vector<256x128xf32>
    %39 = arith.maximumf %36, %38 : vector<256x128xf32>
    %c0_18 = arith.constant 0 : index
    %c0_19 = arith.constant 0 : index
    %40 = vector.load %arg5[%c0_18, %c0_19] : memref<1x128xf32, #tpu.memory_space<vmem>>, vector<1x128xf32>
    %41 = vector.broadcast %40 : vector<1x128xf32> to vector<256x128xf32>
    %42 = arith.addf %39, %41 : vector<256x128xf32>
    %43 = tpu.transpose %42, [1, 0] : vector<256x128xf32> -> vector<128x256xf32>
    %44 = arith.truncf %43 : vector<128x256xf32> to vector<128x256xbf16>
    %c0_20 = arith.constant 0 : index
    %c0_21 = arith.constant 0 : index
    %45 = vector.load %arg6[%c0_20, %c0_21] : memref<64x128xbf16, #tpu.memory_space<vmem>>, vector<64x128xbf16>
    %cst_22 = arith.constant dense<0.000000e+00> : vector<64x256xf32>
    %46 = tpu.matmul %45, %44, %cst_22 {dimension_numbers = #tpu.dot_dimension_numbers<[1], [0], [0], [1], [0, 0, 1, 1], [], []>} : vector<64x128xbf16>, vector<128x256xbf16>, vector<64x256xf32> -> vector<64x256xf32>
    %c0_23 = arith.constant 0 : index
    %c0_24 = arith.constant 0 : index
    %47 = vector.load %arg7[%c0_23, %c0_24] : memref<64x1xf32, #tpu.memory_space<vmem>>, vector<64x1xf32>
    %48 = vector.broadcast %47 : vector<64x1xf32> to vector<64x256xf32>
    %49 = arith.addf %46, %48 : vector<64x256xf32>
    %cst_25 = arith.constant 0.000000e+00 : f32
    %50 = vector.broadcast %cst_25 : f32 to vector<64x256xf32>
    %51 = arith.maximumf %49, %50 : vector<64x256xf32>
    %52 = arith.truncf %51 : vector<64x256xf32> to vector<64x256xbf16>
    %c0_26 = arith.constant 0 : index
    %c0_27 = arith.constant 0 : index
    %53 = vector.load %arg8[%c0_26, %c0_27] : memref<1x64xbf16, #tpu.memory_space<vmem>>, vector<1x64xbf16>
    %cst_28 = arith.constant dense<0.000000e+00> : vector<1x256xf32>
    %54 = tpu.matmul %53, %52, %cst_28 {dimension_numbers = #tpu.dot_dimension_numbers<[1], [0], [0], [1], [0, 0, 1, 1], [], []>} : vector<1x64xbf16>, vector<64x256xbf16>, vector<1x256xf32> -> vector<1x256xf32>
    %c0_29 = arith.constant 0 : index
    %c0_30 = arith.constant 0 : index
    %55 = vector.load %arg9[%c0_29, %c0_30] : memref<1x1xf32, #tpu.memory_space<vmem>>, vector<1x1xf32>
    %56 = vector.broadcast %55 : vector<1x1xf32> to vector<1x256xf32>
    %57 = arith.addf %54, %56 : vector<1x256xf32>
    %58 = arith.negf %57 : vector<1x256xf32>
    %59 = math.exp %58 : vector<1x256xf32>
    %cst_31 = arith.constant 1.000000e+00 : f32
    %60 = vector.broadcast %cst_31 : f32 to vector<1x256xf32>
    %61 = arith.addf %60, %59 : vector<1x256xf32>
    %62 = arith.divf %60, %61 : vector<1x256xf32>
    %c0_32 = arith.constant 0 : index
    %c0_33 = arith.constant 0 : index
    %63 = vector.load %arg10[%c0_32, %c0_33] : memref<1x256xf32, #tpu.memory_space<vmem>>, vector<1x256xf32>
    tpu.vector_store %arg10[%c0_32, %c0_33], %62 {strides = array<i32>} : memref<1x256xf32, #tpu.memory_space<vmem>>, vector<1x256xf32>,
    return
  }
  func.func @transform_0(%arg0: i32) -> (i32, i32) {
    %c0_i32 = arith.constant 0 : i32
    %c0_i32_0 = arith.constant 0 : i32
    return %arg0, %c0_i32 : i32, i32
  }
  func.func @transform_1(%arg0: i32) -> (i32, i32) {
    %c0_i32 = arith.constant 0 : i32
    %c0_i32_0 = arith.constant 0 : i32
    %c0_i32_1 = arith.constant 0 : i32
    return %c0_i32, %c0_i32_0 : i32, i32
  }
  func.func @transform_2(%arg0: i32) -> (i32, i32) {
    %c0_i32 = arith.constant 0 : i32
    %c0_i32_0 = arith.constant 0 : i32
    %c0_i32_1 = arith.constant 0 : i32
    return %c0_i32, %c0_i32_0 : i32, i32
  }
  func.func @transform_3(%arg0: i32) -> (i32, i32) {
    %c0_i32 = arith.constant 0 : i32
    %c0_i32_0 = arith.constant 0 : i32
    %c0_i32_1 = arith.constant 0 : i32
    return %c0_i32, %c0_i32_0 : i32, i32
  }
  func.func @transform_4(%arg0: i32) -> (i32, i32) {
    %c0_i32 = arith.constant 0 : i32
    %c0_i32_0 = arith.constant 0 : i32
    %c0_i32_1 = arith.constant 0 : i32
    return %c0_i32, %c0_i32_0 : i32, i32
  }
  func.func @transform_5(%arg0: i32) -> (i32, i32) {
    %c0_i32 = arith.constant 0 : i32
    %c0_i32_0 = arith.constant 0 : i32
    %c0_i32_1 = arith.constant 0 : i32
    return %c0_i32, %c0_i32_0 : i32, i32
  }
  func.func @transform_6(%arg0: i32) -> (i32, i32) {
    %c0_i32 = arith.constant 0 : i32
    %c0_i32_0 = arith.constant 0 : i32
    %c0_i32_1 = arith.constant 0 : i32
    return %c0_i32, %c0_i32_0 : i32, i32
  }
  func.func @transform_7(%arg0: i32) -> (i32, i32) {
    %c0_i32 = arith.constant 0 : i32
    %c0_i32_0 = arith.constant 0 : i32
    %c0_i32_1 = arith.constant 0 : i32
    return %c0_i32, %c0_i32_0 : i32, i32
  }
  func.func @transform_8(%arg0: i32) -> (i32, i32) {
    %c0_i32 = arith.constant 0 : i32
    %c0_i32_0 = arith.constant 0 : i32
    %c0_i32_1 = arith.constant 0 : i32
    return %c0_i32, %c0_i32_0 : i32, i32
  }
  func.func @transform_9(%arg0: i32) -> (i32, i32) {
    %c0_i32 = arith.constant 0 : i32
    %c0_i32_0 = arith.constant 0 : i32
    return %c0_i32, %arg0 : i32, i32
  }
}

</mosaic_0001>

<llo_original>
// kernel: net_forward_batched.1
$region0: #{net_forward_batched.1}
  #allocation0 [shape = 'u32[]', space=smem, size = 0x4, offset = 0x4, fixed_abs, tag = 'smem constant byte address 0x4 - core index']
  #allocation1 [shape = 'u32[72,128]{1,0:T(1,128)}', space=vmem, size = 0x9000, scoped, tag = 'internal scratch']
  #allocation2 [shape = 'f32[1,1]{1,0:T(1,128)S(1)}', space=vmem, size = 0x200, scoped, tag = 'scoped memory for net_forward_batched.1']
  %s0 = inlined_call_operand.vmem [shape: f32[512,160], index: 0, kind: input, shape index: {}]
  %s1 = inlined_call_operand.vmem [shape: bf16[160,2560], index: 1, kind: input, shape index: {}]
  %s2 = inlined_call_operand.vmem [shape: f32[1,2560], index: 2, kind: input, shape index: {}]
  %s3 = inlined_call_operand.vmem [shape: bf16[256,128], index: 3, kind: input, shape index: {}]
  %s4 = inlined_call_operand.vmem [shape: f32[1,128], index: 4, kind: input, shape index: {}]
  %s5 = inlined_call_operand.vmem [shape: bf16[64,128], index: 5, kind: input, shape index: {}]
  %s6 = inlined_call_operand.vmem [shape: f32[64,1], index: 6, kind: input, shape index: {}]
  %s7 = inlined_call_operand.vmem [shape: bf16[1,64], index: 7, kind: input, shape index: {}]
  %s8 = inlined_call_operand.<no memory space> [shape: f32[1,1], index: 8, kind: input, shape index: {}]
  %s9 = inlined_call_operand.vmem [shape: f32[1,512], index: 9, kind: output, shape index: {}]
  %s10 = sld [smem:[#allocation0]]
  $region69: #{net_forward_batched.1} parent=0
    _
  %s12 = ssub.s32 1, %s10
  %s13 = scalar_select 0, %s12, %s10
  %v14 = vstv %s8
  %15 = vst [vmem:[#allocation2] sm:$0x1] %v14
  loop: start=0, step=1, limit=4
  $region2: #{net_forward_batched.1} parent=0 // loop_pre_header
    _
  $region3: #{net_forward_batched.1} parent=0 // loop_header
    %s17 = sphi 0, %s21
    %p18 = scmp.ge.s32.totalorder %s17, 4
    %s27 = sphi 0, %s29
    %s30 = sphi 0, %s27
    %s31 = sphi 0, %s30
    %s47 = sphi 0, %s31
    %s51 = sphi 0, %s51
    %s53 = sphi 0, %s51
    %s54 = sphi 0, %s53
    %s68 = sphi 0, %s54
    %s72 = sphi 0, %s72
    %s74 = sphi 0, %s72
    %s75 = sphi 0, %s74
    %s89 = sphi 0, %s75
    %s93 = sphi 0, %s93
    %s95 = sphi 0, %s93
    %s96 = sphi 0, %s95
    %s110 = sphi 0, %s96
    %s114 = sphi 0, %s114
    %s116 = sphi 0, %s114
    %s117 = sphi 0, %s116
    %s131 = sphi 0, %s117
    %s135 = sphi 0, %s135
    %s137 = sphi 0, %s135
    %s138 = sphi 0, %s137
    %s152 = sphi 0, %s138
    %s156 = sphi 0, %s156
    %s158 = sphi 0, %s156
    %s159 = sphi 0, %s158
    %s173 = sphi 0, %s159
    %s177 = sphi 0, %s177
    %s179 = sphi 0, %s177
    %s180 = sphi 0, %s179
    %s194 = sphi 0, %s180
    %s198 = sphi 0, %s198
    %s200 = sphi 0, %s198
    %s201 = sphi 0, %s200
    %s215 = sphi 0, %s201
    %s221 = sphi 0, %s223
    %s224 = sphi 0, %s221
    %s225 = sphi 0, %s224
    %s241 = sphi 0, %s225
  $region4: #{net_forward_batched.1} parent=0 // loop_header_branch
    %20 = sbr.rel (%p18) target = $region8
  $region5: #{net_forward_batched.1} parent=0 // loop_body
    %s22 = ssub.s32 %s17, 1
    %s23 = ssub.s32 %s17, 2
    %s24 = sadd.s32 %s17, 1
    %s25 = ssub.s32 %s17, %s24
    %p26 = scmp.eq.s32.totalorder %s25, 0
    %s28 = sadd.s32 %s27, 1
    %s29 = scalar_select %p26, %s27, %s28
    %p32 = pneg %p26
    %p33 = scmp.eq.s32.totalorder %s17, 1
    %p34 = por %p32, %p33
    %p35 = scmp.ne.s32.totalorder %s27, %s30
    %p36 = scmp.eq.s32.totalorder %s17, 0
    %p37 = por %p35, %p36
    %p38 = scmp.ne.s32.totalorder %s27, %s30
    %p39 = scmp.eq.s32.totalorder %s22, 1
    %p40 = por %p38, %p39
    %p41 = scmp.ne.s32.totalorder %s30, %s31
    %p42 = scmp.eq.s32.totalorder %s22, 0
    %p43 = por %p41, %p42
    %p44 = scmp.ne.s32.totalorder %s30, %s31
    %p45 = scmp.eq.s32.totalorder %s23, 1
    %p46 = por %p44, %p45
    %p48 = scmp.ne.s32.totalorder %s31, %s47
    %p49 = scmp.eq.s32.totalorder %s23, 0
    %p50 = por %p48, %p49
    %s52 = sadd.s32 %s51, 1
    %p55 = scmp.eq.s32.totalorder %s17, 1
    %p56 = scmp.ne.s32.totalorder %s51, %s53
    %p57 = scmp.eq.s32.totalorder %s17, 0
    %p58 = por %p56, %p57
    %p59 = scmp.ne.s32.totalorder %s51, %s53
    %p60 = scmp.eq.s32.totalorder %s22, 1
    %p61 = por %p59, %p60
    %p62 = scmp.ne.s32.totalorder %s53, %s54
    %p63 = scmp.eq.s32.totalorder %s22, 0
    %p64 = por %p62, %p63
    %p65 = scmp.ne.s32.totalorder %s53, %s54
    %p66 = scmp.eq.s32.totalorder %s23, 1
    %p67 = por %p65, %p66
    %p69 = scmp.ne.s32.totalorder %s54, %s68
    %p70 = scmp.eq.s32.totalorder %s23, 0
    %p71 = por %p69, %p70
    %s73 = sadd.s32 %s72, 1
    %p76 = scmp.eq.s32.totalorder %s17, 1
    %p77 = scmp.ne.s32.totalorder %s72, %s74
    %p78 = scmp.eq.s32.totalorder %s17, 0
    %p79 = por %p77, %p78
    %p80 = scmp.ne.s32.totalorder %s72, %s74
    %p81 = scmp.eq.s32.totalorder %s22, 1
    %p82 = por %p80, %p81
    %p83 = scmp.ne.s32.totalorder %s74, %s75
    %p84 = scmp.eq.s32.totalorder %s22, 0
    %p85 = por %p83, %p84
    %p86 = scmp.ne.s32.totalorder %s74, %s75
    %p87 = scmp.eq.s32.totalorder %s23, 1
    %p88 = por %p86, %p87
    %p90 = scmp.ne.s32.totalorder %s75, %s89
    %p91 = scmp.eq.s32.totalorder %s23, 0
    %p92 = por %p90, %p91
    %s94 = sadd.s32 %s93, 1
    %p97 = scmp.eq.s32.totalorder %s17, 1
    %p98 = scmp.ne.s32.totalorder %s93, %s95
    %p99 = scmp.eq.s32.totalorder %s17, 0
    %p100 = por %p98, %p99
    %p101 = scmp.ne.s32.totalorder %s93, %s95
    %p102 = scmp.eq.s32.totalorder %s22, 1
    %p103 = por %p101, %p102
    %p104 = scmp.ne.s32.totalorder %s95, %s96
    %p105 = scmp.eq.s32.totalorder %s22, 0
    %p106 = por %p104, %p105
    %p107 = scmp.ne.s32.totalorder %s95, %s96
    %p108 = scmp.eq.s32.totalorder %s23, 1
    %p109 = por %p107, %p108
    %p111 = scmp.ne.s32.totalorder %s96, %s110
    %p112 = scmp.eq.s32.totalorder %s23, 0
    %p113 = por %p111, %p112
    %s115 = sadd.s32 %s114, 1
    %p118 = scmp.eq.s32.totalorder %s17, 1
    %p119 = scmp.ne.s32.totalorder %s114, %s116
    %p120 = scmp.eq.s32.totalorder %s17, 0
    %p121 = por %p119, %p120
    %p122 = scmp.ne.s32.totalorder %s114, %s116
    %p123 = scmp.eq.s32.totalorder %s22, 1
    %p124 = por %p122, %p123
    %p125 = scmp.ne.s32.totalorder %s116, %s117
    %p126 = scmp.eq.s32.totalorder %s22, 0
    %p127 = por %p125, %p126
    %p128 = scmp.ne.s32.totalorder %s116, %s117
    %p129 = scmp.eq.s32.totalorder %s23, 1
    %p130 = por %p128, %p129
    %p132 = scmp.ne.s32.totalorder %s117, %s131
    %p133 = scmp.eq.s32.totalorder %s23, 0
    %p134 = por %p132, %p133
    %s136 = sadd.s32 %s135, 1
    %p139 = scmp.eq.s32.totalorder %s17, 1
    %p140 = scmp.ne.s32.totalorder %s135, %s137
    %p141 = scmp.eq.s32.totalorder %s17, 0
    %p142 = por %p140, %p141
    %p143 = scmp.ne.s32.totalorder %s135, %s137
    %p144 = scmp.eq.s32.totalorder %s22, 1
    %p145 = por %p143, %p144
    %p146 = scmp.ne.s32.totalorder %s137, %s138
    %p147 = scmp.eq.s32.totalorder %s22, 0
    %p148 = por %p146, %p147
    %p149 = scmp.ne.s32.totalorder %s137, %s138
    %p150 = scmp.eq.s32.totalorder %s23, 1
    %p151 = por %p149, %p150
    %p153 = scmp.ne.s32.totalorder %s138, %s152
    %p154 = scmp.eq.s32.totalorder %s23, 0
    %p155 = por %p153, %p154
    %s157 = sadd.s32 %s156, 1
    %p160 = scmp.eq.s32.totalorder %s17, 1
    %p161 = scmp.ne.s32.totalorder %s156, %s158
    %p162 = scmp.eq.s32.totalorder %s17, 0
    %p163 = por %p161, %p162
    %p164 = scmp.ne.s32.totalorder %s156, %s158
    %p165 = scmp.eq.s32.totalorder %s22, 1
    %p166 = por %p164, %p165
    %p167 = scmp.ne.s32.totalorder %s158, %s159
    %p168 = scmp.eq.s32.totalorder %s22, 0
    %p169 = por %p167, %p168
    %p170 = scmp.ne.s32.totalorder %s158, %s159
    %p171 = scmp.eq.s32.totalorder %s23, 1
    %p172 = por %p170, %p171
    %p174 = scmp.ne.s32.totalorder %s159, %s173
    %p175 = scmp.eq.s32.totalorder %s23, 0
    %p176 = por %p174, %p175
    %s178 = sadd.s32 %s177, 1
    %p181 = scmp.eq.s32.totalorder %s17, 1
    %p182 = scmp.ne.s32.totalorder %s177, %s179
    %p183 = scmp.eq.s32.totalorder %s17, 0
    %p184 = por %p182, %p183
    %p185 = scmp.ne.s32.totalorder %s177, %s179
    %p186 = scmp.eq.s32.totalorder %s22, 1
    %p187 = por %p185, %p186
    %p188 = scmp.ne.s32.totalorder %s179, %s180
    %p189 = scmp.eq.s32.totalorder %s22, 0
    %p190 = por %p188, %p189
    %p191 = scmp.ne.s32.totalorder %s179, %s180
    %p192 = scmp.eq.s32.totalorder %s23, 1
    %p193 = por %p191, %p192
    %p195 = scmp.ne.s32.totalorder %s180, %s194
    %p196 = scmp.eq.s32.totalorder %s23, 0
    %p197 = por %p195, %p196
    %s199 = sadd.s32 %s198, 1
    %p202 = scmp.eq.s32.totalorder %s17, 1
    %p203 = scmp.ne.s32.totalorder %s198, %s200
    %p204 = scmp.eq.s32.totalorder %s17, 0
    %p205 = por %p203, %p204
    %p206 = scmp.ne.s32.totalorder %s198, %s200
    %p207 = scmp.eq.s32.totalorder %s22, 1
    %p208 = por %p206, %p207
    %p209 = scmp.ne.s32.totalorder %s200, %s201
    %p210 = scmp.eq.s32.totalorder %s22, 0
    %p211 = por %p209, %p210
    %p212 = scmp.ne.s32.totalorder %s200, %s201
    %p213 = scmp.eq.s32.totalorder %s23, 1
    %p214 = por %p212, %p213
    %p216 = scmp.ne.s32.totalorder %s201, %s215
    %p217 = scmp.eq.s32.totalorder %s23, 0
    %p218 = por %p216, %p217
    %s219 = ssub.s32 %s17, %s24
    %p220 = scmp.eq.s32.totalorder %s219, 0
    %s222 = sadd.s32 %s221, 1
    %s223 = scalar_select %p220, %s221, %s222
    %p226 = pneg %p220
    %p227 = scmp.eq.s32.totalorder %s17, 1
    %p228 = por %p226, %p227
    %p229 = scmp.ne.s32.totalorder %s221, %s224
    %p230 = scmp.eq.s32.totalorder %s17, 0
    %p231 = por %p229, %p230
    %p232 = scmp.ne.s32.totalorder %s221, %s224
    %p233 = scmp.eq.s32.totalorder %s22, 1
    %p234 = por %p232, %p233
    %p235 = scmp.ne.s32.totalorder %s224, %s225
    %p236 = scmp.eq.s32.totalorder %s22, 0
    %p237 = por %p235, %p236
    %p238 = scmp.ne.s32.totalorder %s224, %s225
    %p239 = scmp.eq.s32.totalorder %s23, 1
    %p240 = por %p238, %p239
    %p242 = scmp.ne.s32.totalorder %s225, %s241
    %p243 = scmp.eq.s32.totalorder %s23, 0
    %p244 = por %p242, %p243
    %p245 = scmp.le.s32.totalorder 1, %s17
    %p246 = scmp.lt.s32.totalorder %s17, 3
    %p247 = pnand %p245, %p246
    %p248 = pneg %p247
    // Predicated region
    $region9: #{net_forward_batched.1} parent=5 // pred_check
      _
    $region10: #{net_forward_batched.1} parent=5 // pred_check_branch
      %250 = sbr.rel (%p247) target = $region12
    $region11: #{net_forward_batched.1} parent=5 // pred_region
      %s251 = ssub.s32 %s17, 1
      // Predicated region
      $region13: #{net_forward_batched.1} parent=11 // pred_check
        %p252 = pneg %p64
      $region14: #{net_forward_batched.1} parent=11 // pred_check_branch
        %254 = sbr.rel (%p252) target = $region16
      $region15: #{net_forward_batched.1} parent=11 // pred_region
        _
      $region16: #{net_forward_batched.1} parent=11 // pred_fallthru
        _
      // Predicated region
      $region17: #{net_forward_batched.1} parent=11 // pred_check
        %p255 = pneg %p85
      $region18: #{net_forward_batched.1} parent=11 // pred_check_branch
        %257 = sbr.rel (%p255) target = $region20
      $region19: #{net_forward_batched.1} parent=11 // pred_region
        _
      $region20: #{net_forward_batched.1} parent=11 // pred_fallthru
        _
      // Predicated region
      $region21: #{net_forward_batched.1} parent=11 // pred_check
        %p258 = pneg %p106
      $region22: #{net_forward_batched.1} parent=11 // pred_check_branch
        %260 = sbr.rel (%p258) target = $region24
      $region23: #{net_forward_batched.1} parent=11 // pred_region
        _
      $region24: #{net_forward_batched.1} parent=11 // pred_fallthru
        _
      // Predicated region
      $region25: #{net_forward_batched.1} parent=11 // pred_check
        %p261 = pneg %p127
      $region26: #{net_forward_batched.1} parent=11 // pred_check_branch
        %263 = sbr.rel (%p261) target = $region28
      $region27: #{net_forward_batched.1} parent=11 // pred_region
        _
      $region28: #{net_forward_batched.1} parent=11 // pred_fallthru
        _
      // Predicated region
      $region29: #{net_forward_batched.1} parent=11 // pred_check
        %p264 = pneg %p148
      $region30: #{net_forward_batched.1} parent=11 // pred_check_branch
        %266 = sbr.rel (%p264) target = $region32
      $region31: #{net_forward_batched.1} parent=11 // pred_region
        _
      $region32: #{net_forward_batched.1} parent=11 // pred_fallthru
        _
      // Predicated region
      $region33: #{net_forward_batched.1} parent=11 // pred_check
        %p267 = pneg %p169
      $region34: #{net_forward_batched.1} parent=11 // pred_check_branch
        %269 = sbr.rel (%p267) target = $region36
      $region35: #{net_forward_batched.1} parent=11 // pred_region
        _
      $region36: #{net_forward_batched.1} parent=11 // pred_fallthru
        _
      // Predicated region
      $region37: #{net_forward_batched.1} parent=11 // pred_check
        %p270 = pneg %p190
      $region38: #{net_forward_batched.1} parent=11 // pred_check_branch
        %272 = sbr.rel (%p270) target = $region40
      $region39: #{net_forward_batched.1} parent=11 // pred_region
        _
      $region40: #{net_forward_batched.1} parent=11 // pred_fallthru
        _
      // Predicated region
      $region41: #{net_forward_batched.1} parent=11 // pred_check
        %p273 = pneg %p211
      $region42: #{net_forward_batched.1} parent=11 // pred_check_branch
        %275 = sbr.rel (%p273) target = $region44
      $region43: #{net_forward_batched.1} parent=11 // pred_region
        _
      $region44: #{net_forward_batched.1} parent=11 // pred_fallthru
        _
    $region12: #{net_forward_batched.1} parent=5 // pred_fallthru
      _
    %p276 = scmp.lt.s32.totalorder %s17, 2
    // Predicated region
    $region45: #{net_forward_batched.1} parent=5 // pred_check
      %p277 = pneg %p276
    $region46: #{net_forward_batched.1} parent=5 // pred_check_branch
      %279 = sbr.rel (%p277) target = $region48
    $region47: #{net_forward_batched.1} parent=5 // pred_region
      // Predicated region
      $region49: #{net_forward_batched.1} parent=47 // pred_check
        %p280 = pneg %p37
      $region50: #{net_forward_batched.1} parent=47 // pred_check_branch
        %282 = sbr.rel (%p280) target = $region52
      $region51: #{net_forward_batched.1} parent=47 // pred_region
        %s283 = smul.u32 32, %s17
        %p284 = scmp.lt.s32.totalorder %s283, 63
        %s285 = scalar_select %p284, %s283, 63
        %s286 = smul.addr %s285, 2
        %s287 = smul.addr %s286, 8
        %s288 = scalar_lea.vmem %s0, %s287
        %s289 = smul.u32 32, %s17
      $region52: #{net_forward_batched.1} parent=47 // pred_fallthru
        _
    $region48: #{net_forward_batched.1} parent=5 // pred_fallthru
      _
    %p290 = scmp.le.s32.totalorder 1, %s17
    %p291 = scmp.lt.s32.totalorder %s17, 3
    %p292 = pnand %p290, %p291
    %p293 = pneg %p292
    // Predicated region
    $region53: #{net_forward_batched.1} parent=5 // pred_check
      _
    $region54: #{net_forward_batched.1} parent=5 // pred_check_branch
      %295 = sbr.rel (%p292) target = $region56
    $region55: #{net_forward_batched.1} parent=5 // pred_region
      %s296 = ssub.s32 %s17, 1
      %s297 = smul.u32 32, %s22
      %p298 = scmp.lt.s32.totalorder %s297, 63
      %s299 = scalar_select %p298, %s297, 63
      %s300 = smul.addr %s299, 2
      %s301 = smul.addr %s300, 8
      %s302 = scalar_lea.vmem %s0, %s301
      %p303 = pneg %p43
      %p304 = pneg %p40
      %p305 = pneg %p64
      %p306 = pneg %p61
      %p307 = pneg %p85
      %p308 = pneg %p82
      %p309 = pneg %p106
      %p310 = pneg %p103
      %p311 = pneg %p127
      %p312 = pneg %p124
      %p313 = pneg %p148
      %p314 = pneg %p145
      %p315 = pneg %p169
      %p316 = pneg %p166
      %p317 = pneg %p190
      %p318 = pneg %p187
      %p319 = pneg %p211
      %p320 = pneg %p208
      %p321 = pneg %p237
      %p322 = pneg %p234
      %s323 = smul.u32 2, %s22
      %p324 = scmp.lt.s32.totalorder %s323, 3
      %s325 = scalar_select %p324, %s323, 3
      %s326 = scalar_lea.vmem %s9, %s325
      %s327 = smul.u32 32, %s22
      %p328 = scmp.lt.s32.totalorder %s327, 63
      %s329 = scalar_select %p328, %s327, 63
      %s330 = smul.addr %s329, 2
      %s331 = smul.addr %s330, 8
      %s332 = scalar_lea.vmem %s0, %s331
      %s333 = smul.u32 32, %s22
      %s334 = smul.u32 2, %s22
      %p335 = scmp.lt.s32.totalorder %s334, 3
      %s336 = scalar_select %p335, %s334, 3
      %s337 = scalar_lea.vmem %s9, %s336
      %s338 = smul.u32 2, %s22
      %v340 = vld [vmem:[%s332] sm:$0xff]
      %v341 = vld [vmem:[%s332 + $0x8] sm:$0xff]
      %v342 = vld [vmem:[%s332 + $0x10] sm:$0xff]
      %v343 = vld [vmem:[%s332 + $0x18] sm:$0xff]
      %v344 = vld [vmem:[%s332 + $0x20] sm:$0xff]
      %v345 = vld [vmem:[%s332 + $0x28] sm:$0xff]
      %v346 = vld [vmem:[%s332 + $0x30] sm:$0xff]
      %v347 = vld [vmem:[%s332 + $0x38] sm:$0xff]
      %v348 = vld [vmem:[%s332 + $0x40] sm:$0xff]
      %v349 = vld [vmem:[%s332 + $0x48] sm:$0xff]
      %v350 = vld [vmem:[%s332 + $0x50] sm:$0xff]
      %v351 = vld [vmem:[%s332 + $0x58] sm:$0xff]
      %v352 = vld [vmem:[%s332 + $0x60] sm:$0xff]
      %v353 = vld [vmem:[%s332 + $0x68] sm:$0xff]
      %v354 = vld [vmem:[%s332 + $0x70] sm:$0xff]
      %v355 = vld [vmem:[%s332 + $0x78] sm:$0xff]
      %v356 = vld [vmem:[%s332 + $0x80] sm:$0xff]
      %v357 = vld [vmem:[%s332 + $0x88] sm:$0xff]
      %v358 = vld [vmem:[%s332 + $0x90] sm:$0xff]
      %v359 = vld [vmem:[%s332 + $0x98] sm:$0xff]
      %v360 = vld [vmem:[%s332 + $0xa0] sm:$0xff]
      %v361 = vld [vmem:[%s332 + $0xa8] sm:$0xff]
      %v362 = vld [vmem:[%s332 + $0xb0] sm:$0xff]
      %v363 = vld [vmem:[%s332 + $0xb8] sm:$0xff]
      %v364 = vld [vmem:[%s332 + $0xc0] sm:$0xff]
      %v365 = vld [vmem:[%s332 + $0xc8] sm:$0xff]
      %v366 = vld [vmem:[%s332 + $0xd0] sm:$0xff]
      %v367 = vld [vmem:[%s332 + $0xd8] sm:$0xff]
      %v368 = vld [vmem:[%s332 + $0xe0] sm:$0xff]
      %v369 = vld [vmem:[%s332 + $0xe8] sm:$0xff]
      %v370 = vld [vmem:[%s332 + $0xf0] sm:$0xff]
      %v371 = vld [vmem:[%s332 + $0xf8] sm:$0xff]
      %v372 = vld [vmem:[%s332 + $0x100] sm:$0xff]
      %v373 = vld [vmem:[%s332 + $0x108] sm:$0xff]
      %v374 = vld [vmem:[%s332 + $0x110] sm:$0xff]
      %v375 = vld [vmem:[%s332 + $0x118] sm:$0xff]
      %v376 = vld [vmem:[%s332 + $0x120] sm:$0xff]
      %v377 = vld [vmem:[%s332 + $0x128] sm:$0xff]
      %v378 = vld [vmem:[%s332 + $0x130] sm:$0xff]
      %v379 = vld [vmem:[%s332 + $0x138] sm:$0xff]
      %v380 = vld [vmem:[%s332 + $0x140] sm:$0xff]
      %v381 = vld [vmem:[%s332 + $0x148] sm:$0xff]
      %v382 = vld [vmem:[%s332 + $0x150] sm:$0xff]
      %v383 = vld [vmem:[%s332 + $0x158] sm:$0xff]
      %v384 = vld [vmem:[%s332 + $0x160] sm:$0xff]
      %v385 = vld [vmem:[%s332 + $0x168] sm:$0xff]
      %v386 = vld [vmem:[%s332 + $0x170] sm:$0xff]
      %v387 = vld [vmem:[%s332 + $0x178] sm:$0xff]
      %v388 = vld [vmem:[%s332 + $0x180] sm:$0xff]
      %v389 = vld [vmem:[%s332 + $0x188] sm:$0xff]
      %v390 = vld [vmem:[%s332 + $0x190] sm:$0xff]
      %v391 = vld [vmem:[%s332 + $0x198] sm:$0xff]
      %v392 = vld [vmem:[%s332 + $0x1a0] sm:$0xff]
      %v393 = vld [vmem:[%s332 + $0x1a8] sm:$0xff]
      %v394 = vld [vmem:[%s332 + $0x1b0] sm:$0xff]
      %v395 = vld [vmem:[%s332 + $0x1b8] sm:$0xff]
      %v396 = vld [vmem:[%s332 + $0x1c0] sm:$0xff]
      %v397 = vld [vmem:[%s332 + $0x1c8] sm:$0xff]
      %v398 = vld [vmem:[%s332 + $0x1d0] sm:$0xff]
      %v399 = vld [vmem:[%s332 + $0x1d8] sm:$0xff]
      %v400 = vld [vmem:[%s332 + $0x1e0] sm:$0xff]
      %v401 = vld [vmem:[%s332 + $0x1e8] sm:$0xff]
      %v402 = vld [vmem:[%s332 + $0x1f0] sm:$0xff]
      %v403 = vld [vmem:[%s332 + $0x1f8] sm:$0xff]
      %v404 = vpack.c.bf16 %v342, %v340
      %v405 = vpack.c.bf16 %v343, %v341
      %v406 = vpack.c.bf16 %v346, %v344
      %v407 = vpack.c.bf16 %v347, %v345
      %v408 = vpack.c.bf16 %v350, %v348
      %v409 = vpack.c.bf16 %v351, %v349
      %v410 = vpack.c.bf16 %v354, %v352
      %v411 = vpack.c.bf16 %v355, %v353
      %v412 = vpack.c.bf16 %v358, %v356
      %v413 = vpack.c.bf16 %v359, %v357
      %v414 = vpack.c.bf16 %v362, %v360
      %v415 = vpack.c.bf16 %v363, %v361
      %v416 = vpack.c.bf16 %v366, %v364
      %v417 = vpack.c.bf16 %v367, %v365
      %v418 = vpack.c.bf16 %v370, %v368
      %v419 = vpack.c.bf16 %v371, %v369
      %v420 = vpack.c.bf16 %v374, %v372
      %v421 = vpack.c.bf16 %v375, %v373
      %v422 = vpack.c.bf16 %v378, %v376
      %v423 = vpack.c.bf16 %v379, %v377
      %v424 = vpack.c.bf16 %v382, %v380
      %v425 = vpack.c.bf16 %v383, %v381
      %v426 = vpack.c.bf16 %v386, %v384
      %v427 = vpack.c.bf16 %v387, %v385
      %v428 = vpack.c.bf16 %v390, %v388
      %v429 = vpack.c.bf16 %v391, %v389
      %v430 = vpack.c.bf16 %v394, %v392
      %v431 = vpack.c.bf16 %v395, %v393
      %v432 = vpack.c.bf16 %v398, %v396
      %v433 = vpack.c.bf16 %v399, %v397
      %v434 = vpack.c.bf16 %v402, %v400
      %v435 = vpack.c.bf16 %v403, %v401
      %v436 = vld [vmem:[%s1] sm:$0xff]
      %v437 = vld [vmem:[%s1 + $0x8] sm:$0xff]
      %v438 = vld [vmem:[%s1 + $0x10] sm:$0xff]
      %v439 = vld [vmem:[%s1 + $0x18] sm:$0xff]
      %v440 = vld [vmem:[%s1 + $0x20] sm:$0xff]
      %v441 = vld [vmem:[%s1 + $0x28] sm:$0xff]
      %v442 = vld [vmem:[%s1 + $0x30] sm:$0xff]
      %v443 = vld [vmem:[%s1 + $0x38] sm:$0xff]
      %v444 = vld [vmem:[%s1 + $0x40] sm:$0xff]
      %v445 = vld [vmem:[%s1 + $0x48] sm:$0xff]
      %v446 = vld [vmem:[%s1 + $0x50] sm:$0xff]
      %v447 = vld [vmem:[%s1 + $0x58] sm:$0xff]
      %v448 = vld [vmem:[%s1 + $0x60] sm:$0xff]
      %v449 = vld [vmem:[%s1 + $0x68] sm:$0xff]
      %v450 = vld [vmem:[%s1 + $0x70] sm:$0xff]
      %v451 = vld [vmem:[%s1 + $0x78] sm:$0xff]
      %v452 = vld [vmem:[%s1 + $0x80] sm:$0xff]
      %v453 = vld [vmem:[%s1 + $0x88] sm:$0xff]
      %v454 = vld [vmem:[%s1 + $0x90] sm:$0xff]
      %v455 = vld [vmem:[%s1 + $0x98] sm:$0xff]
      %v456 = vld [vmem:[%s1 + $0xa0] sm:$0xff]
      %v457 = vld [vmem:[%s1 + $0xa8] sm:$0xff]
      %v458 = vld [vmem:[%s1 + $0xb0] sm:$0xff]
      %v459 = vld [vmem:[%s1 + $0xb8] sm:$0xff]
      %v460 = vld [vmem:[%s1 + $0xc0] sm:$0xff]
      %v461 = vld [vmem:[%s1 + $0xc8] sm:$0xff]
      %v462 = vld [vmem:[%s1 + $0xd0] sm:$0xff]
      %v463 = vld [vmem:[%s1 + $0xd8] sm:$0xff]
      %v464 = vld [vmem:[%s1 + $0xe0] sm:$0xff]
      %v465 = vld [vmem:[%s1 + $0xe8] sm:$0xff]
      %v466 = vld [vmem:[%s1 + $0xf0] sm:$0xff]
      %v467 = vld [vmem:[%s1 + $0xf8] sm:$0xff]
      %v468 = vld [vmem:[%s1 + $0x100] sm:$0xff]
      %v469 = vld [vmem:[%s1 + $0x108] sm:$0xff]
      %v470 = vld [vmem:[%s1 + $0x110] sm:$0xff]
      %v471 = vld [vmem:[%s1 + $0x118] sm:$0xff]
      %v472 = vld [vmem:[%s1 + $0x120] sm:$0xff]
      %v473 = vld [vmem:[%s1 + $0x128] sm:$0xff]
      %v474 = vld [vmem:[%s1 + $0x130] sm:$0xff]
      %v475 = vld [vmem:[%s1 + $0x138] sm:$0xff]
      %v476 = vld [vmem:[%s1 + $0x140] sm:$0xff]
      %v477 = vld [vmem:[%s1 + $0x148] sm:$0xff]
      %v478 = vld [vmem:[%s1 + $0x150] sm:$0xff]
      %v479 = vld [vmem:[%s1 + $0x158] sm:$0xff]
      %v480 = vld [vmem:[%s1 + $0x160] sm:$0xff]
      %v481 = vld [vmem:[%s1 + $0x168] sm:$0xff]
      %v482 = vld [vmem:[%s1 + $0x170] sm:$0xff]
      %v483 = vld [vmem:[%s1 + $0x178] sm:$0xff]
      %v484 = vld [vmem:[%s1 + $0x180] sm:$0xff]
      %v485 = vld [vmem:[%s1 + $0x188] sm:$0xff]
      %v486 = vld [vmem:[%s1 + $0x190] sm:$0xff]
      %v487 = vld [vmem:[%s1 + $0x198] sm:$0xff]
      %v488 = vld [vmem:[%s1 + $0x1a0] sm:$0xff]
      %v489 = vld [vmem:[%s1 + $0x1a8] sm:$0xff]
      %v490 = vld [vmem:[%s1 + $0x1b0] sm:$0xff]
      %v491 = vld [vmem:[%s1 + $0x1b8] sm:$0xff]
      %v492 = vld [vmem:[%s1 + $0x1c0] sm:$0xff]
      %v493 = vld [vmem:[%s1 + $0x1c8] sm:$0xff]
      %v494 = vld [vmem:[%s1 + $0x1d0] sm:$0xff]
      %v495 = vld [vmem:[%s1 + $0x1d8] sm:$0xff]
      %v496 = vld [vmem:[%s1 + $0x1e0] sm:$0xff]
      %v497 = vld [vmem:[%s1 + $0x1e8] sm:$0xff]
      %v498 = vld [vmem:[%s1 + $0x1f0] sm:$0xff]
      %v499 = vld [vmem:[%s1 + $0x1f8] sm:$0xff]
      %v500 = vld [vmem:[%s1 + $0x200] sm:$0xff]
      %v501 = vld [vmem:[%s1 + $0x208] sm:$0xff]
      %v502 = vld [vmem:[%s1 + $0x210] sm:$0xff]
      %v503 = vld [vmem:[%s1 + $0x218] sm:$0xff]
      %v504 = vld [vmem:[%s1 + $0x220] sm:$0xff]
      %v505 = vld [vmem:[%s1 + $0x228] sm:$0xff]
      %v506 = vld [vmem:[%s1 + $0x230] sm:$0xff]
      %v507 = vld [vmem:[%s1 + $0x238] sm:$0xff]
      %v508 = vld [vmem:[%s1 + $0x240] sm:$0xff]
      %v509 = vld [vmem:[%s1 + $0x248] sm:$0xff]
      %v510 = vld [vmem:[%s1 + $0x250] sm:$0xff]
      %v511 = vld [vmem:[%s1 + $0x258] sm:$0xff]
      %v512 = vld [vmem:[%s1 + $0x260] sm:$0xff]
      %v513 = vld [vmem:[%s1 + $0x268] sm:$0xff]
      %v514 = vld [vmem:[%s1 + $0x270] sm:$0xff]
      %v515 = vld [vmem:[%s1 + $0x278] sm:$0xff]
      %v516 = vld [vmem:[%s1 + $0x280] sm:$0xff]
      %v517 = vld [vmem:[%s1 + $0x288] sm:$0xff]
      %v518 = vld [vmem:[%s1 + $0x290] sm:$0xff]
      %v519 = vld [vmem:[%s1 + $0x298] sm:$0xff]
      %v520 = vld [vmem:[%s1 + $0x2a0] sm:$0xff]
      %v521 = vld [vmem:[%s1 + $0x2a8] sm:$0xff]
      %v522 = vld [vmem:[%s1 + $0x2b0] sm:$0xff]
      %v523 = vld [vmem:[%s1 + $0x2b8] sm:$0xff]
      %v524 = vld [vmem:[%s1 + $0x2c0] sm:$0xff]
      %v525 = vld [vmem:[%s1 + $0x2c8] sm:$0xff]
      %v526 = vld [vmem:[%s1 + $0x2d0] sm:$0xff]
      %v527 = vld [vmem:[%s1 + $0x2d8] sm:$0xff]
      %v528 = vld [vmem:[%s1 + $0x2e0] sm:$0xff]
      %v529 = vld [vmem:[%s1 + $0x2e8] sm:$0xff]
      %v530 = vld [vmem:[%s1 + $0x2f0] sm:$0xff]
      %v531 = vld [vmem:[%s1 + $0x2f8] sm:$0xff]
      %v532 = vld [vmem:[%s1 + $0x300] sm:$0xff]
      %v533 = vld [vmem:[%s1 + $0x308] sm:$0xff]
      %v534 = vld [vmem:[%s1 + $0x310] sm:$0xff]
      %v535 = vld [vmem:[%s1 + $0x318] sm:$0xff]
      %v536 = vld [vmem:[%s1 + $0x320] sm:$0xff]
      %v537 = vld [vmem:[%s1 + $0x328] sm:$0xff]
      %v538 = vld [vmem:[%s1 + $0x330] sm:$0xff]
      %v539 = vld [vmem:[%s1 + $0x338] sm:$0xff]
      %v540 = vld [vmem:[%s1 + $0x340] sm:$0xff]
      %v541 = vld [vmem:[%s1 + $0x348] sm:$0xff]
      %v542 = vld [vmem:[%s1 + $0x350] sm:$0xff]
      %v543 = vld [vmem:[%s1 + $0x358] sm:$0xff]
      %v544 = vld [vmem:[%s1 + $0x360] sm:$0xff]
      %v545 = vld [vmem:[%s1 + $0x368] sm:$0xff]
      %v546 = vld [vmem:[%s1 + $0x370] sm:$0xff]
      %v547 = vld [vmem:[%s1 + $0x378] sm:$0xff]
      %v548 = vld [vmem:[%s1 + $0x380] sm:$0xff]
      %v549 = vld [vmem:[%s1 + $0x388] sm:$0xff]
      %v550 = vld [vmem:[%s1 + $0x390] sm:$0xff]
      %v551 = vld [vmem:[%s1 + $0x398] sm:$0xff]
      %v552 = vld [vmem:[%s1 + $0x3a0] sm:$0xff]
      %v553 = vld [vmem:[%s1 + $0x3a8] sm:$0xff]
      %v554 = vld [vmem:[%s1 + $0x3b0] sm:$0xff]
      %v555 = vld [vmem:[%s1 + $0x3b8] sm:$0xff]
      %v556 = vld [vmem:[%s1 + $0x3c0] sm:$0xff]
      %v557 = vld [vmem:[%s1 + $0x3c8] sm:$0xff]
      %v558 = vld [vmem:[%s1 + $0x3d0] sm:$0xff]
      %v559 = vld [vmem:[%s1 + $0x3d8] sm:$0xff]
      %v560 = vld [vmem:[%s1 + $0x3e0] sm:$0xff]
      %v561 = vld [vmem:[%s1 + $0x3e8] sm:$0xff]
      %v562 = vld [vmem:[%s1 + $0x3f0] sm:$0xff]
      %v563 = vld [vmem:[%s1 + $0x3f8] sm:$0xff]
      %v564 = vld [vmem:[%s1 + $0x400] sm:$0xff]
      %v565 = vld [vmem:[%s1 + $0x408] sm:$0xff]
      %v566 = vld [vmem:[%s1 + $0x410] sm:$0xff]
      %v567 = vld [vmem:[%s1 + $0x418] sm:$0xff]
      %v568 = vld [vmem:[%s1 + $0x420] sm:$0xff]
      %v569 = vld [vmem:[%s1 + $0x428] sm:$0xff]
      %v570 = vld [vmem:[%s1 + $0x430] sm:$0xff]
      %v571 = vld [vmem:[%s1 + $0x438] sm:$0xff]
      %v572 = vld [vmem:[%s1 + $0x440] sm:$0xff]
      %v573 = vld [vmem:[%s1 + $0x448] sm:$0xff]
      %v574 = vld [vmem:[%s1 + $0x450] sm:$0xff]
      %v575 = vld [vmem:[%s1 + $0x458] sm:$0xff]
      %v576 = vld [vmem:[%s1 + $0x460] sm:$0xff]
      %v577 = vld [vmem:[%s1 + $0x468] sm:$0xff]
      %v578 = vld [vmem:[%s1 + $0x470] sm:$0xff]
      %v579 = vld [vmem:[%s1 + $0x478] sm:$0xff]
      %v580 = vld [vmem:[%s1 + $0x480] sm:$0xff]
      %v581 = vld [vmem:[%s1 + $0x488] sm:$0xff]
      %v582 = vld [vmem:[%s1 + $0x490] sm:$0xff]
      %v583 = vld [vmem:[%s1 + $0x498] sm:$0xff]
      %v584 = vld [vmem:[%s1 + $0x4a0] sm:$0xff]
      %v585 = vld [vmem:[%s1 + $0x4a8] sm:$0xff]
      %v586 = vld [vmem:[%s1 + $0x4b0] sm:$0xff]
      %v587 = vld [vmem:[%s1 + $0x4b8] sm:$0xff]
      %v588 = vld [vmem:[%s1 + $0x4c0] sm:$0xff]
      %v589 = vld [vmem:[%s1 + $0x4c8] sm:$0xff]
      %v590 = vld [vmem:[%s1 + $0x4d0] sm:$0xff]
      %v591 = vld [vmem:[%s1 + $0x4d8] sm:$0xff]
      %v592 = vld [vmem:[%s1 + $0x4e0] sm:$0xff]
      %v593 = vld [vmem:[%s1 + $0x4e8] sm:$0xff]
      %v594 = vld [vmem:[%s1 + $0x4f0] sm:$0xff]
      %v595 = vld [vmem:[%s1 + $0x4f8] sm:$0xff]
      %v596 = vld [vmem:[%s1 + $0x500] sm:$0xff]
      %v597 = vld [vmem:[%s1 + $0x508] sm:$0xff]
      %v598 = vld [vmem:[%s1 + $0x510] sm:$0xff]
      %v599 = vld [vmem:[%s1 + $0x518] sm:$0xff]
      %v600 = vld [vmem:[%s1 + $0x520] sm:$0xff]
      %v601 = vld [vmem:[%s1 + $0x528] sm:$0xff]
      %v602 = vld [vmem:[%s1 + $0x530] sm:$0xff]
      %v603 = vld [vmem:[%s1 + $0x538] sm:$0xff]
      %v604 = vld [vmem:[%s1 + $0x540] sm:$0xff]
      %v605 = vld [vmem:[%s1 + $0x548] sm:$0xff]
      %v606 = vld [vmem:[%s1 + $0x550] sm:$0xff]
      %v607 = vld [vmem:[%s1 + $0x558] sm:$0xff]
      %v608 = vld [vmem:[%s1 + $0x560] sm:$0xff]
      %v609 = vld [vmem:[%s1 + $0x568] sm:$0xff]
      %v610 = vld [vmem:[%s1 + $0x570] sm:$0xff]
      %v611 = vld [vmem:[%s1 + $0x578] sm:$0xff]
      %v612 = vld [vmem:[%s1 + $0x580] sm:$0xff]
      %v613 = vld [vmem:[%s1 + $0x588] sm:$0xff]
      %v614 = vld [vmem:[%s1 + $0x590] sm:$0xff]
      %v615 = vld [vmem:[%s1 + $0x598] sm:$0xff]
      %v616 = vld [vmem:[%s1 + $0x5a0] sm:$0xff]
      %v617 = vld [vmem:[%s1 + $0x5a8] sm:$0xff]
      %v618 = vld [vmem:[%s1 + $0x5b0] sm:$0xff]
      %v619 = vld [vmem:[%s1 + $0x5b8] sm:$0xff]
      %v620 = vld [vmem:[%s1 + $0x5c0] sm:$0xff]
      %v621 = vld [vmem:[%s1 + $0x5c8] sm:$0xff]
      %v622 = vld [vmem:[%s1 + $0x5d0] sm:$0xff]
      %v623 = vld [vmem:[%s1 + $0x5d8] sm:$0xff]
      %v624 = vld [vmem:[%s1 + $0x5e0] sm:$0xff]
      %v625 = vld [vmem:[%s1 + $0x5e8] sm:$0xff]
      %v626 = vld [vmem:[%s1 + $0x5f0] sm:$0xff]
      %v627 = vld [vmem:[%s1 + $0x5f8] sm:$0xff]
      %v628 = vld [vmem:[%s1 + $0x600] sm:$0xff]
      %v629 = vld [vmem:[%s1 + $0x608] sm:$0xff]
      %v630 = vld [vmem:[%s1 + $0x610] sm:$0xff]
      %v631 = vld [vmem:[%s1 + $0x618] sm:$0xff]
      %v632 = vld [vmem:[%s1 + $0x620] sm:$0xff]
      %v633 = vld [vmem:[%s1 + $0x628] sm:$0xff]
      %v634 = vld [vmem:[%s1 + $0x630] sm:$0xff]
      %v635 = vld [vmem:[%s1 + $0x638] sm:$0xff]
      %v636 = vld [vmem:[%s2] sm:$0xff]
      %v637 = vld [vmem:[%s2 + $0x8] sm:$0xff]
      %v638 = vld [vmem:[%s2 + $0x10] sm:$0xf]
      %v642 = vperm.slane %v636, 0
      %v643 = vperm.slane %v636, 1
      %v644 = vperm.slane %v636, 2
      %v645 = vperm.slane %v636, 3
      %v646 = vperm.slane %v636, 4
      %v647 = vperm.slane %v636, 5
      %v648 = vperm.slane %v636, 6
      %v649 = vperm.slane %v636, 7
      %v650 = vperm.slane %v637, 0
      %v651 = vperm.slane %v637, 1
      %v652 = vperm.slane %v637, 2
      %v653 = vperm.slane %v637, 3
      %v654 = vperm.slane %v637, 4
      %v655 = vperm.slane %v637, 5
      %v656 = vperm.slane %v637, 6
      %v657 = vperm.slane %v637, 7
      %v658 = vperm.slane %v638, 0
      %v659 = vperm.slane %v638, 1
      %v660 = vperm.slane %v638, 2
      %v661 = vperm.slane %v638, 3
      %v882 = vunpack.c.l.b16 %v436
      %v883 = vunpack.c.h.b16 %v436
      %v884 = vunpack.c.l.b16 %v437
      %v885 = vunpack.c.h.b16 %v437
      %v886 = vunpack.c.l.b16 %v438
      %v887 = vunpack.c.h.b16 %v438
      %v888 = vunpack.c.l.b16 %v439
      %v889 = vunpack.c.h.b16 %v439
      %v890 = vunpack.c.l.b16 %v440
      %v891 = vunpack.c.h.b16 %v440
      %v892 = vunpack.c.l.b16 %v441
      %v893 = vunpack.c.h.b16 %v441
      %v894 = vunpack.c.l.b16 %v442
      %v895 = vunpack.c.h.b16 %v442
      %v896 = vunpack.c.l.b16 %v443
      %v897 = vunpack.c.h.b16 %v443
      %v898 = vunpack.c.l.b16 %v444
      %v899 = vunpack.c.h.b16 %v444
      %v900 = vunpack.c.l.b16 %v445
      %v901 = vunpack.c.h.b16 %v445
      %v902 = vunpack.c.l.b16 %v446
      %v903 = vunpack.c.h.b16 %v446
      %v904 = vunpack.c.l.b16 %v447
      %v905 = vunpack.c.h.b16 %v447
      %v906 = vunpack.c.l.b16 %v448
      %v907 = vunpack.c.h.b16 %v448
      %v908 = vunpack.c.l.b16 %v449
      %v909 = vunpack.c.h.b16 %v449
      %v910 = vunpack.c.l.b16 %v450
      %v911 = vunpack.c.h.b16 %v450
      %v912 = vunpack.c.l.b16 %v451
      %v913 = vunpack.c.h.b16 %v451
      %v914 = vunpack.c.l.b16 %v452
      %v915 = vunpack.c.h.b16 %v452
      %v916 = vunpack.c.l.b16 %v453
      %v917 = vunpack.c.h.b16 %v453
      %v918 = vunpack.c.l.b16 %v454
      %v919 = vunpack.c.h.b16 %v454
      %v920 = vunpack.c.l.b16 %v455
      %v921 = vunpack.c.h.b16 %v455
      %v922 = vunpack.c.l.b16 %v456
      %v923 = vunpack.c.h.b16 %v456
      %v924 = vunpack.c.l.b16 %v457
      %v925 = vunpack.c.h.b16 %v457
      %v926 = vunpack.c.l.b16 %v458
      %v927 = vunpack.c.h.b16 %v458
      %v928 = vunpack.c.l.b16 %v459
      %v929 = vunpack.c.h.b16 %v459
      %v930 = vunpack.c.l.b16 %v460
      %v931 = vunpack.c.h.b16 %v460
      %v932 = vunpack.c.l.b16 %v461
      %v933 = vunpack.c.h.b16 %v461
      %v934 = vunpack.c.l.b16 %v462
      %v935 = vunpack.c.h.b16 %v462
      %v936 = vunpack.c.l.b16 %v463
      %v937 = vunpack.c.h.b16 %v463
      %v938 = vunpack.c.l.b16 %v464
      %v939 = vunpack.c.h.b16 %v464
      %v940 = vunpack.c.l.b16 %v465
      %v941 = vunpack.c.h.b16 %v465
      %v942 = vunpack.c.l.b16 %v466
      %v943 = vunpack.c.h.b16 %v466
      %v944 = vunpack.c.l.b16 %v467
      %v945 = vunpack.c.h.b16 %v467
      %v946 = vunpack.c.l.b16 %v468
      %v947 = vunpack.c.h.b16 %v468
      %v948 = vunpack.c.l.b16 %v469
      %v949 = vunpack.c.h.b16 %v469
      %v950 = vunpack.c.l.b16 %v470
      %v951 = vunpack.c.h.b16 %v470
      %v952 = vunpack.c.l.b16 %v471
      %v953 = vunpack.c.h.b16 %v471
      %v954 = vunpack.c.l.b16 %v472
      %v955 = vunpack.c.h.b16 %v472
      %v956 = vunpack.c.l.b16 %v473
      %v957 = vunpack.c.h.b16 %v473
      %v958 = vunpack.c.l.b16 %v474
      %v959 = vunpack.c.h.b16 %v474
      %v960 = vunpack.c.l.b16 %v475
      %v961 = vunpack.c.h.b16 %v475
      %v962 = vunpack.c.l.b16 %v476
      %v963 = vunpack.c.h.b16 %v476
      %v964 = vunpack.c.l.b16 %v477
      %v965 = vunpack.c.h.b16 %v477
      %v966 = vunpack.c.l.b16 %v478
      %v967 = vunpack.c.h.b16 %v478
      %v968 = vunpack.c.l.b16 %v479
      %v969 = vunpack.c.h.b16 %v479
      %v970 = vunpack.c.l.b16 %v480
      %v971 = vunpack.c.h.b16 %v480
      %v972 = vunpack.c.l.b16 %v481
      %v973 = vunpack.c.h.b16 %v481
      %v974 = vunpack.c.l.b16 %v482
      %v975 = vunpack.c.h.b16 %v482
      %v976 = vunpack.c.l.b16 %v483
      %v977 = vunpack.c.h.b16 %v483
      %v978 = vunpack.c.l.b16 %v484
      %v979 = vunpack.c.h.b16 %v484
      %v980 = vunpack.c.l.b16 %v485
      %v981 = vunpack.c.h.b16 %v485
      %v982 = vunpack.c.l.b16 %v486
      %v983 = vunpack.c.h.b16 %v486
      %v984 = vunpack.c.l.b16 %v487
      %v985 = vunpack.c.h.b16 %v487
      %v986 = vunpack.c.l.b16 %v488
      %v987 = vunpack.c.h.b16 %v488
      %v988 = vunpack.c.l.b16 %v489
      %v989 = vunpack.c.h.b16 %v489
      %v990 = vunpack.c.l.b16 %v490
      %v991 = vunpack.c.h.b16 %v490
      %v992 = vunpack.c.l.b16 %v491
      %v993 = vunpack.c.h.b16 %v491
      %v994 = vunpack.c.l.b16 %v492
      %v995 = vunpack.c.h.b16 %v492
      %v996 = vunpack.c.l.b16 %v493
      %v997 = vunpack.c.h.b16 %v493
      %v998 = vunpack.c.l.b16 %v494
      %v999 = vunpack.c.h.b16 %v494
      %v1000 = vunpack.c.l.b16 %v495
      %v1001 = vunpack.c.h.b16 %v495
      %v1002 = vunpack.c.l.b16 %v496
      %v1003 = vunpack.c.h.b16 %v496
      %v1004 = vunpack.c.l.b16 %v497
      %v1005 = vunpack.c.h.b16 %v497
      %v1006 = vunpack.c.l.b16 %v498
      %v1007 = vunpack.c.h.b16 %v498
      %v1008 = vunpack.c.l.b16 %v499
      %v1009 = vunpack.c.h.b16 %v499
      %v1010 = vunpack.c.l.b16 %v500
      %v1011 = vunpack.c.h.b16 %v500
      %v1012 = vunpack.c.l.b16 %v501
      %v1013 = vunpack.c.h.b16 %v501
      %v1014 = vunpack.c.l.b16 %v502
      %v1015 = vunpack.c.h.b16 %v502
      %v1016 = vunpack.c.l.b16 %v503
      %v1017 = vunpack.c.h.b16 %v503
      %v1018 = vunpack.c.l.b16 %v504
      %v1019 = vunpack.c.h.b16 %v504
      %v1020 = vunpack.c.l.b16 %v505
      %v1021 = vunpack.c.h.b16 %v505
      %v1022 = vunpack.c.l.b16 %v506
      %v1023 = vunpack.c.h.b16 %v506
      %v1024 = vunpack.c.l.b16 %v507
      %v1025 = vunpack.c.h.b16 %v507
      %v1026 = vunpack.c.l.b16 %v508
      %v1027 = vunpack.c.h.b16 %v508
      %v1028 = vunpack.c.l.b16 %v509
      %v1029 = vunpack.c.h.b16 %v509
      %v1030 = vunpack.c.l.b16 %v510
      %v1031 = vunpack.c.h.b16 %v510
      %v1032 = vunpack.c.l.b16 %v511
      %v1033 = vunpack.c.h.b16 %v511
      %v1034 = vunpack.c.l.b16 %v512
      %v1035 = vunpack.c.h.b16 %v512
      %v1036 = vunpack.c.l.b16 %v513
      %v1037 = vunpack.c.h.b16 %v513
      %v1038 = vunpack.c.l.b16 %v514
      %v1039 = vunpack.c.h.b16 %v514
      %v1040 = vunpack.c.l.b16 %v515
      %v1041 = vunpack.c.h.b16 %v515
      %v1042 = vunpack.c.l.b16 %v516
      %v1043 = vunpack.c.h.b16 %v516
      %v1044 = vunpack.c.l.b16 %v517
      %v1045 = vunpack.c.h.b16 %v517
      %v1046 = vunpack.c.l.b16 %v518
      %v1047 = vunpack.c.h.b16 %v518
      %v1048 = vunpack.c.l.b16 %v519
      %v1049 = vunpack.c.h.b16 %v519
      %v1050 = vunpack.c.l.b16 %v520
      %v1051 = vunpack.c.h.b16 %v520
      %v1052 = vunpack.c.l.b16 %v521
      %v1053 = vunpack.c.h.b16 %v521
      %v1054 = vunpack.c.l.b16 %v522
      %v1055 = vunpack.c.h.b16 %v522
      %v1056 = vunpack.c.l.b16 %v523
      %v1057 = vunpack.c.h.b16 %v523
      %v1058 = vunpack.c.l.b16 %v524
      %v1059 = vunpack.c.h.b16 %v524
      %v1060 = vunpack.c.l.b16 %v525
      %v1061 = vunpack.c.h.b16 %v525
      %v1062 = vunpack.c.l.b16 %v526
      %v1063 = vunpack.c.h.b16 %v526
      %v1064 = vunpack.c.l.b16 %v527
      %v1065 = vunpack.c.h.b16 %v527
      %v1066 = vunpack.c.l.b16 %v528
      %v1067 = vunpack.c.h.b16 %v528
      %v1068 = vunpack.c.l.b16 %v529
      %v1069 = vunpack.c.h.b16 %v529
      %v1070 = vunpack.c.l.b16 %v530
      %v1071 = vunpack.c.h.b16 %v530
      %v1072 = vunpack.c.l.b16 %v531
      %v1073 = vunpack.c.h.b16 %v531
      %v1074 = vunpack.c.l.b16 %v532
      %v1075 = vunpack.c.h.b16 %v532
      %v1076 = vunpack.c.l.b16 %v533
      %v1077 = vunpack.c.h.b16 %v533
      %v1078 = vunpack.c.l.b16 %v534
      %v1079 = vunpack.c.h.b16 %v534
      %v1080 = vunpack.c.l.b16 %v535
      %v1081 = vunpack.c.h.b16 %v535
      %v1082 = vunpack.c.l.b16 %v536
      %v1083 = vunpack.c.h.b16 %v536
      %v1084 = vunpack.c.l.b16 %v537
      %v1085 = vunpack.c.h.b16 %v537
      %v1086 = vunpack.c.l.b16 %v538
      %v1087 = vunpack.c.h.b16 %v538
      %v1088 = vunpack.c.l.b16 %v539
      %v1089 = vunpack.c.h.b16 %v539
      %v1090 = vunpack.c.l.b16 %v540
      %v1091 = vunpack.c.h.b16 %v540
      %v1092 = vunpack.c.l.b16 %v541
      %v1093 = vunpack.c.h.b16 %v541
      %v1094 = vunpack.c.l.b16 %v542
      %v1095 = vunpack.c.h.b16 %v542
      %v1096 = vunpack.c.l.b16 %v543
      %v1097 = vunpack.c.h.b16 %v543
      %v1098 = vunpack.c.l.b16 %v544
      %v1099 = vunpack.c.h.b16 %v544
      %v1100 = vunpack.c.l.b16 %v545
      %v1101 = vunpack.c.h.b16 %v545
      %v1102 = vunpack.c.l.b16 %v546
      %v1103 = vunpack.c.h.b16 %v546
      %v1104 = vunpack.c.l.b16 %v547
      %v1105 = vunpack.c.h.b16 %v547
      %v1106 = vunpack.c.l.b16 %v548
      %v1107 = vunpack.c.h.b16 %v548
      %v1108 = vunpack.c.l.b16 %v549
      %v1109 = vunpack.c.h.b16 %v549
      %v1110 = vunpack.c.l.b16 %v550
      %v1111 = vunpack.c.h.b16 %v550
      %v1112 = vunpack.c.l.b16 %v551
      %v1113 = vunpack.c.h.b16 %v551
      %v1114 = vunpack.c.l.b16 %v552
      %v1115 = vunpack.c.h.b16 %v552
      %v1116 = vunpack.c.l.b16 %v553
      %v1117 = vunpack.c.h.b16 %v553
      %v1118 = vunpack.c.l.b16 %v554
      %v1119 = vunpack.c.h.b16 %v554
      %v1120 = vunpack.c.l.b16 %v555
      %v1121 = vunpack.c.h.b16 %v555
      %v1122 = vunpack.c.l.b16 %v556
      %v1123 = vunpack.c.h.b16 %v556
      %v1124 = vunpack.c.l.b16 %v557
      %v1125 = vunpack.c.h.b16 %v557
      %v1126 = vunpack.c.l.b16 %v558
      %v1127 = vunpack.c.h.b16 %v558
      %v1128 = vunpack.c.l.b16 %v559
      %v1129 = vunpack.c.h.b16 %v559
      %v1130 = vunpack.c.l.b16 %v560
      %v1131 = vunpack.c.h.b16 %v560
      %v1132 = vunpack.c.l.b16 %v561
      %v1133 = vunpack.c.h.b16 %v561
      %v1134 = vunpack.c.l.b16 %v562
      %v1135 = vunpack.c.h.b16 %v562
      %v1136 = vunpack.c.l.b16 %v563
      %v1137 = vunpack.c.h.b16 %v563
      %v1138 = vunpack.c.l.b16 %v564
      %v1139 = vunpack.c.h.b16 %v564
      %v1140 = vunpack.c.l.b16 %v565
      %v1141 = vunpack.c.h.b16 %v565
      %v1142 = vunpack.c.l.b16 %v566
      %v1143 = vunpack.c.h.b16 %v566
      %v1144 = vunpack.c.l.b16 %v567
      %v1145 = vunpack.c.h.b16 %v567
      %v1146 = vunpack.c.l.b16 %v568
      %v1147 = vunpack.c.h.b16 %v568
      %v1148 = vunpack.c.l.b16 %v569
      %v1149 = vunpack.c.h.b16 %v569
      %v1150 = vunpack.c.l.b16 %v570
      %v1151 = vunpack.c.h.b16 %v570
      %v1152 = vunpack.c.l.b16 %v571
      %v1153 = vunpack.c.h.b16 %v571
      %v1154 = vunpack.c.l.b16 %v572
      %v1155 = vunpack.c.h.b16 %v572
      %v1156 = vunpack.c.l.b16 %v573
      %v1157 = vunpack.c.h.b16 %v573
      %v1158 = vunpack.c.l.b16 %v574
      %v1159 = vunpack.c.h.b16 %v574
      %v1160 = vunpack.c.l.b16 %v575
      %v1161 = vunpack.c.h.b16 %v575
      %v1162 = vunpack.c.l.b16 %v576
      %v1163 = vunpack.c.h.b16 %v576
      %v1164 = vunpack.c.l.b16 %v577
      %v1165 = vunpack.c.h.b16 %v577
      %v1166 = vunpack.c.l.b16 %v578
      %v1167 = vunpack.c.h.b16 %v578
      %v1168 = vunpack.c.l.b16 %v579
      %v1169 = vunpack.c.h.b16 %v579
      %v1170 = vunpack.c.l.b16 %v580
      %v1171 = vunpack.c.h.b16 %v580
      %v1172 = vunpack.c.l.b16 %v581
      %v1173 = vunpack.c.h.b16 %v581
      %v1174 = vunpack.c.l.b16 %v582
      %v1175 = vunpack.c.h.b16 %v582
      %v1176 = vunpack.c.l.b16 %v583
      %v1177 = vunpack.c.h.b16 %v583
      %v1178 = vunpack.c.l.b16 %v584
      %v1179 = vunpack.c.h.b16 %v584
      %v1180 = vunpack.c.l.b16 %v585
      %v1181 = vunpack.c.h.b16 %v585
      %v1182 = vunpack.c.l.b16 %v586
      %v1183 = vunpack.c.h.b16 %v586
      %v1184 = vunpack.c.l.b16 %v587
      %v1185 = vunpack.c.h.b16 %v587
      %v1186 = vunpack.c.l.b16 %v588
      %v1187 = vunpack.c.h.b16 %v588
      %v1188 = vunpack.c.l.b16 %v589
      %v1189 = vunpack.c.h.b16 %v589
      %v1190 = vunpack.c.l.b16 %v590
      %v1191 = vunpack.c.h.b16 %v590
      %v1192 = vunpack.c.l.b16 %v591
      %v1193 = vunpack.c.h.b16 %v591
      %v1194 = vunpack.c.l.b16 %v592
      %v1195 = vunpack.c.h.b16 %v592
      %v1196 = vunpack.c.l.b16 %v593
      %v1197 = vunpack.c.h.b16 %v593
      %v1198 = vunpack.c.l.b16 %v594
      %v1199 = vunpack.c.h.b16 %v594
      %v1200 = vunpack.c.l.b16 %v595
      %v1201 = vunpack.c.h.b16 %v595
      %v1202 = vunpack.c.l.b16 %v596
      %v1203 = vunpack.c.h.b16 %v596
      %v1204 = vunpack.c.l.b16 %v597
      %v1205 = vunpack.c.h.b16 %v597
      %v1206 = vunpack.c.l.b16 %v598
      %v1207 = vunpack.c.h.b16 %v598
      %v1208 = vunpack.c.l.b16 %v599
      %v1209 = vunpack.c.h.b16 %v599
      %v1210 = vunpack.c.l.b16 %v600
      %v1211 = vunpack.c.h.b16 %v600
      %v1212 = vunpack.c.l.b16 %v601
      %v1213 = vunpack.c.h.b16 %v601
      %v1214 = vunpack.c.l.b16 %v602
      %v1215 = vunpack.c.h.b16 %v602
      %v1216 = vunpack.c.l.b16 %v603
      %v1217 = vunpack.c.h.b16 %v603
      %v1218 = vunpack.c.l.b16 %v604
      %v1219 = vunpack.c.h.b16 %v604
      %v1220 = vunpack.c.l.b16 %v605
      %v1221 = vunpack.c.h.b16 %v605
      %v1222 = vunpack.c.l.b16 %v606
      %v1223 = vunpack.c.h.b16 %v606
      %v1224 = vunpack.c.l.b16 %v607
      %v1225 = vunpack.c.h.b16 %v607
      %v1226 = vunpack.c.l.b16 %v608
      %v1227 = vunpack.c.h.b16 %v608
      %v1228 = vunpack.c.l.b16 %v609
      %v1229 = vunpack.c.h.b16 %v609
      %v1230 = vunpack.c.l.b16 %v610
      %v1231 = vunpack.c.h.b16 %v610
      %v1232 = vunpack.c.l.b16 %v611
      %v1233 = vunpack.c.h.b16 %v611
      %v1234 = vunpack.c.l.b16 %v612
      %v1235 = vunpack.c.h.b16 %v612
      %v1236 = vunpack.c.l.b16 %v613
      %v1237 = vunpack.c.h.b16 %v613
      %v1238 = vunpack.c.l.b16 %v614
      %v1239 = vunpack.c.h.b16 %v614
      %v1240 = vunpack.c.l.b16 %v615
      %v1241 = vunpack.c.h.b16 %v615
      %v1242 = vunpack.c.l.b16 %v616
      %v1243 = vunpack.c.h.b16 %v616
      %v1244 = vunpack.c.l.b16 %v617
      %v1245 = vunpack.c.h.b16 %v617
      %v1246 = vunpack.c.l.b16 %v618
      %v1247 = vunpack.c.h.b16 %v618
      %v1248 = vunpack.c.l.b16 %v619
      %v1249 = vunpack.c.h.b16 %v619
      %v1250 = vunpack.c.l.b16 %v620
      %v1251 = vunpack.c.h.b16 %v620
      %v1252 = vunpack.c.l.b16 %v621
      %v1253 = vunpack.c.h.b16 %v621
      %v1254 = vunpack.c.l.b16 %v622
      %v1255 = vunpack.c.h.b16 %v622
      %v1256 = vunpack.c.l.b16 %v623
      %v1257 = vunpack.c.h.b16 %v623
      %v1258 = vunpack.c.l.b16 %v624
      %v1259 = vunpack.c.h.b16 %v624
      %v1260 = vunpack.c.l.b16 %v625
      %v1261 = vunpack.c.h.b16 %v625
      %v1262 = vunpack.c.l.b16 %v626
      %v1263 = vunpack.c.h.b16 %v626
      %v1264 = vunpack.c.l.b16 %v627
      %v1265 = vunpack.c.h.b16 %v627
      %v1266 = vunpack.c.l.b16 %v628
      %v1267 = vunpack.c.h.b16 %v628
      %v1268 = vunpack.c.l.b16 %v629
      %v1269 = vunpack.c.h.b16 %v629
      %v1270 = vunpack.c.l.b16 %v630
      %v1271 = vunpack.c.h.b16 %v630
      %v1272 = vunpack.c.l.b16 %v631
      %v1273 = vunpack.c.h.b16 %v631
      %v1274 = vunpack.c.l.b16 %v632
      %v1275 = vunpack.c.h.b16 %v632
      %v1276 = vunpack.c.l.b16 %v633
      %v1277 = vunpack.c.h.b16 %v633
      %v1278 = vunpack.c.l.b16 %v634
      %v1279 = vunpack.c.h.b16 %v634
      %v1280 = vunpack.c.l.b16 %v635
      %v1281 = vunpack.c.h.b16 %v635
      %v1282 = vpack.c.b16 %v902, %v882
      %v1283 = vpack.c.b16 %v903, %v883
      %v1284 = vpack.c.b16 %v904, %v884
      %v1285 = vpack.c.b16 %v905, %v885
      %v1286 = vpack.c.b16 %v906, %v886
      %v1287 = vpack.c.b16 %v907, %v887
      %v1288 = vpack.c.b16 %v908, %v888
      %v1289 = vpack.c.b16 %v909, %v889
      %v1290 = vpack.c.b16 %v910, %v890
      %v1291 = vpack.c.b16 %v911, %v891
      %v1292 = vpack.c.b16 %v912, %v892
      %v1293 = vpack.c.b16 %v913, %v893
      %v1294 = vpack.c.b16 %v914, %v894
      %v1295 = vpack.c.b16 %v915, %v895
      %v1296 = vpack.c.b16 %v916, %v896
      %v1297 = vpack.c.b16 %v917, %v897
      %v1298 = vpack.c.b16 %v918, %v898
      %v1299 = vpack.c.b16 %v919, %v899
      %v1300 = vpack.c.b16 %v920, %v900
      %v1301 = vpack.c.b16 %v921, %v901
      %v1302 = vpack.c.b16 %v942, %v922
      %v1303 = vpack.c.b16 %v943, %v923
      %v1304 = vpack.c.b16 %v944, %v924
      %v1305 = vpack.c.b16 %v945, %v925
      %v1306 = vpack.c.b16 %v946, %v926
      %v1307 = vpack.c.b16 %v947, %v927
      %v1308 = vpack.c.b16 %v948, %v928
      %v1309 = vpack.c.b16 %v949, %v929
      %v1310 = vpack.c.b16 %v950, %v930
      %v1311 = vpack.c.b16 %v951, %v931
      %v1312 = vpack.c.b16 %v952, %v932
      %v1313 = vpack.c.b16 %v953, %v933
      %v1314 = vpack.c.b16 %v954, %v934
      %v1315 = vpack.c.b16 %v955, %v935
      %v1316 = vpack.c.b16 %v956, %v936
      %v1317 = vpack.c.b16 %v957, %v937
      %v1318 = vpack.c.b16 %v958, %v938
      %v1319 = vpack.c.b16 %v959, %v939
      %v1320 = vpack.c.b16 %v960, %v940
      %v1321 = vpack.c.b16 %v961, %v941
      %v1322 = vpack.c.b16 %v982, %v962
      %v1323 = vpack.c.b16 %v983, %v963
      %v1324 = vpack.c.b16 %v984, %v964
      %v1325 = vpack.c.b16 %v985, %v965
      %v1326 = vpack.c.b16 %v986, %v966
      %v1327 = vpack.c.b16 %v987, %v967
      %v1328 = vpack.c.b16 %v988, %v968
      %v1329 = vpack.c.b16 %v989, %v969
      %v1330 = vpack.c.b16 %v990, %v970
      %v1331 = vpack.c.b16 %v991, %v971
      %v1332 = vpack.c.b16 %v992, %v972
      %v1333 = vpack.c.b16 %v993, %v973
      %v1334 = vpack.c.b16 %v994, %v974
      %v1335 = vpack.c.b16 %v995, %v975
      %v1336 = vpack.c.b16 %v996, %v976
      %v1337 = vpack.c.b16 %v997, %v977
      %v1338 = vpack.c.b16 %v998, %v978
      %v1339 = vpack.c.b16 %v999, %v979
      %v1340 = vpack.c.b16 %v1000, %v980
      %v1341 = vpack.c.b16 %v1001, %v981
      %v1342 = vpack.c.b16 %v1022, %v1002
      %v1343 = vpack.c.b16 %v1023, %v1003
      %v1344 = vpack.c.b16 %v1024, %v1004
      %v1345 = vpack.c.b16 %v1025, %v1005
      %v1346 = vpack.c.b16 %v1026, %v1006
      %v1347 = vpack.c.b16 %v1027, %v1007
      %v1348 = vpack.c.b16 %v1028, %v1008
      %v1349 = vpack.c.b16 %v1029, %v1009
      %v1350 = vpack.c.b16 %v1030, %v1010
      %v1351 = vpack.c.b16 %v1031, %v1011
      %v1352 = vpack.c.b16 %v1032, %v1012
      %v1353 = vpack.c.b16 %v1033, %v1013
      %v1354 = vpack.c.b16 %v1034, %v1014
      %v1355 = vpack.c.b16 %v1035, %v1015
      %v1356 = vpack.c.b16 %v1036, %v1016
      %v1357 = vpack.c.b16 %v1037, %v1017
      %v1358 = vpack.c.b16 %v1038, %v1018
      %v1359 = vpack.c.b16 %v1039, %v1019
      %v1360 = vpack.c.b16 %v1040, %v1020
      %v1361 = vpack.c.b16 %v1041, %v1021
      %v1362 = vpack.c.b16 %v1062, %v1042
      %v1363 = vpack.c.b16 %v1063, %v1043
      %v1364 = vpack.c.b16 %v1064, %v1044
      %v1365 = vpack.c.b16 %v1065, %v1045
      %v1366 = vpack.c.b16 %v1066, %v1046
      %v1367 = vpack.c.b16 %v1067, %v1047
      %v1368 = vpack.c.b16 %v1068, %v1048
      %v1369 = vpack.c.b16 %v1069, %v1049
      %v1370 = vpack.c.b16 %v1070, %v1050
      %v1371 = vpack.c.b16 %v1071, %v1051
      %v1372 = vpack.c.b16 %v1072, %v1052
      %v1373 = vpack.c.b16 %v1073, %v1053
      %v1374 = vpack.c.b16 %v1074, %v1054
      %v1375 = vpack.c.b16 %v1075, %v1055
      %v1376 = vpack.c.b16 %v1076, %v1056
      %v1377 = vpack.c.b16 %v1077, %v1057
      %v1378 = vpack.c.b16 %v1078, %v1058
      %v1379 = vpack.c.b16 %v1079, %v1059
      %v1380 = vpack.c.b16 %v1080, %v1060
      %v1381 = vpack.c.b16 %v1081, %v1061
      %v1382 = vpack.c.b16 %v1102, %v1082
      %v1383 = vpack.c.b16 %v1103, %v1083
      %v1384 = vpack.c.b16 %v1104, %v1084
      %v1385 = vpack.c.b16 %v1105, %v1085
      %v1386 = vpack.c.b16 %v1106, %v1086
      %v1387 = vpack.c.b16 %v1107, %v1087
      %v1388 = vpack.c.b16 %v1108, %v1088
      %v1389 = vpack.c.b16 %v1109, %v1089
      %v1390 = vpack.c.b16 %v1110, %v1090
      %v1391 = vpack.c.b16 %v1111, %v1091
      %v1392 = vpack.c.b16 %v1112, %v1092
      %v1393 = vpack.c.b16 %v1113, %v1093
      %v1394 = vpack.c.b16 %v1114, %v1094
      %v1395 = vpack.c.b16 %v1115, %v1095
      %v1396 = vpack.c.b16 %v1116, %v1096
      %v1397 = vpack.c.b16 %v1117, %v1097
      %v1398 = vpack.c.b16 %v1118, %v1098
      %v1399 = vpack.c.b16 %v1119, %v1099
      %v1400 = vpack.c.b16 %v1120, %v1100
      %v1401 = vpack.c.b16 %v1121, %v1101
      %v1402 = vpack.c.b16 %v1142, %v1122
      %v1403 = vpack.c.b16 %v1143, %v1123
      %v1404 = vpack.c.b16 %v1144, %v1124
      %v1405 = vpack.c.b16 %v1145, %v1125
      %v1406 = vpack.c.b16 %v1146, %v1126
      %v1407 = vpack.c.b16 %v1147, %v1127
      %v1408 = vpack.c.b16 %v1148, %v1128
      %v1409 = vpack.c.b16 %v1149, %v1129
      %v1410 = vpack.c.b16 %v1150, %v1130
      %v1411 = vpack.c.b16 %v1151, %v1131
      %v1412 = vpack.c.b16 %v1152, %v1132
      %v1413 = vpack.c.b16 %v1153, %v1133
      %v1414 = vpack.c.b16 %v1154, %v1134
      %v1415 = vpack.c.b16 %v1155, %v1135
      %v1416 = vpack.c.b16 %v1156, %v1136
      %v1417 = vpack.c.b16 %v1157, %v1137
      %v1418 = vpack.c.b16 %v1158, %v1138
      %v1419 = vpack.c.b16 %v1159, %v1139
      %v1420 = vpack.c.b16 %v1160, %v1140
      %v1421 = vpack.c.b16 %v1161, %v1141
      %v1422 = vpack.c.b16 %v1182, %v1162
      %v1423 = vpack.c.b16 %v1183, %v1163
      %v1424 = vpack.c.b16 %v1184, %v1164
      %v1425 = vpack.c.b16 %v1185, %v1165
      %v1426 = vpack.c.b16 %v1186, %v1166
      %v1427 = vpack.c.b16 %v1187, %v1167
      %v1428 = vpack.c.b16 %v1188, %v1168
      %v1429 = vpack.c.b16 %v1189, %v1169
      %v1430 = vpack.c.b16 %v1190, %v1170
      %v1431 = vpack.c.b16 %v1191, %v1171
      %v1432 = vpack.c.b16 %v1192, %v1172
      %v1433 = vpack.c.b16 %v1193, %v1173
      %v1434 = vpack.c.b16 %v1194, %v1174
      %v1435 = vpack.c.b16 %v1195, %v1175
      %v1436 = vpack.c.b16 %v1196, %v1176
      %v1437 = vpack.c.b16 %v1197, %v1177
      %v1438 = vpack.c.b16 %v1198, %v1178
      %v1439 = vpack.c.b16 %v1199, %v1179
      %v1440 = vpack.c.b16 %v1200, %v1180
      %v1441 = vpack.c.b16 %v1201, %v1181
      %v1442 = vpack.c.b16 %v1222, %v1202
      %v1443 = vpack.c.b16 %v1223, %v1203
      %v1444 = vpack.c.b16 %v1224, %v1204
      %v1445 = vpack.c.b16 %v1225, %v1205
      %v1446 = vpack.c.b16 %v1226, %v1206
      %v1447 = vpack.c.b16 %v1227, %v1207
      %v1448 = vpack.c.b16 %v1228, %v1208
      %v1449 = vpack.c.b16 %v1229, %v1209
      %v1450 = vpack.c.b16 %v1230, %v1210
      %v1451 = vpack.c.b16 %v1231, %v1211
      %v1452 = vpack.c.b16 %v1232, %v1212
      %v1453 = vpack.c.b16 %v1233, %v1213
      %v1454 = vpack.c.b16 %v1234, %v1214
      %v1455 = vpack.c.b16 %v1235, %v1215
      %v1456 = vpack.c.b16 %v1236, %v1216
      %v1457 = vpack.c.b16 %v1237, %v1217
      %v1458 = vpack.c.b16 %v1238, %v1218
      %v1459 = vpack.c.b16 %v1239, %v1219
      %v1460 = vpack.c.b16 %v1240, %v1220
      %v1461 = vpack.c.b16 %v1241, %v1221
      %v1462 = vpack.c.b16 %v1262, %v1242
      %v1463 = vpack.c.b16 %v1263, %v1243
      %v1464 = vpack.c.b16 %v1264, %v1244
      %v1465 = vpack.c.b16 %v1265, %v1245
      %v1466 = vpack.c.b16 %v1266, %v1246
      %v1467 = vpack.c.b16 %v1267, %v1247
      %v1468 = vpack.c.b16 %v1268, %v1248
      %v1469 = vpack.c.b16 %v1269, %v1249
      %v1470 = vpack.c.b16 %v1270, %v1250
      %v1471 = vpack.c.b16 %v1271, %v1251
      %v1472 = vpack.c.b16 %v1272, %v1252
      %v1473 = vpack.c.b16 %v1273, %v1253
      %v1474 = vpack.c.b16 %v1274, %v1254
      %v1475 = vpack.c.b16 %v1275, %v1255
      %v1476 = vpack.c.b16 %v1276, %v1256
      %v1477 = vpack.c.b16 %v1277, %v1257
      %v1478 = vpack.c.b16 %v1278, %v1258
      %v1479 = vpack.c.b16 %v1279, %v1259
      %v1480 = vpack.c.b16 %v1280, %v1260
      %v1481 = vpack.c.b16 %v1281, %v1261
      %vm1682 = vcmask 261120
      %v1684 = vsel %vm1682, %v405, 0
      %v1687 = vsel %vm1682, %v407, 0
      %v1690 = vsel %vm1682, %v409, 0
      %v1693 = vsel %vm1682, %v411, 0
      %v1696 = vsel %vm1682, %v413, 0
      %v1699 = vsel %vm1682, %v415, 0
      %v1702 = vsel %vm1682, %v417, 0
      %v1705 = vsel %vm1682, %v419, 0
      %v1708 = vsel %vm1682, %v421, 0
      %v1711 = vsel %vm1682, %v423, 0
      %v1714 = vsel %vm1682, %v425, 0
      %v1717 = vsel %vm1682, %v427, 0
      %v1720 = vsel %vm1682, %v429, 0
      %v1723 = vsel %vm1682, %v431, 0
      %v1726 = vsel %vm1682, %v433, 0
      %v1729 = vsel %vm1682, %v435, 0
      %1731 = vmatpush.bf16.msra.mxu0 %v1422
      %1732 = vmatpush.bf16.msra.mxu0 %v1402
      %1733 = vmatpush.bf16.msra.mxu0 %v1382
      %1734 = vmatpush.bf16.msra.mxu0 %v1362
      %1735 = vmatpush.bf16.msra.mxu0 %v1342
      %1736 = vmatpush.bf16.msra.mxu0 %v1322
      %1737 = vmatpush.bf16.msra.mxu0 %v1302
      %1738 = vmatpush.bf16.msra.mxu0 %v1282
      %1739 = vmatmul.bf16.gmra.mxu0 %v404
      %v1740 = vpop.f32.mrf.mxu0
      %v1741 = vadd.f32 %v642, %v1740
      %v1742 = vpop.f32.mrf.mxu0
      %v1743 = vadd.f32 %v642, %v1742
      %1744 = vmatmul.bf16.gmra.mxu0 %v406
      %v1745 = vpop.f32.mrf.mxu0
      %v1746 = vadd.f32 %v642, %v1745
      %v1747 = vpop.f32.mrf.mxu0
      %v1748 = vadd.f32 %v642, %v1747
      %1749 = vmatmul.bf16.gmra.mxu0 %v408
      %v1750 = vpop.f32.mrf.mxu0
      %v1751 = vadd.f32 %v642, %v1750
      %v1752 = vpop.f32.mrf.mxu0
      %v1753 = vadd.f32 %v642, %v1752
      %1754 = vmatmul.bf16.gmra.mxu0 %v410
      %v1755 = vpop.f32.mrf.mxu0
      %v1756 = vadd.f32 %v642, %v1755
      %v1757 = vpop.f32.mrf.mxu0
      %v1758 = vadd.f32 %v642, %v1757
      %1759 = vmatmul.bf16.gmra.mxu0 %v412
      %v1760 = vpop.f32.mrf.mxu0
      %v1761 = vadd.f32 %v642, %v1760
      %v1762 = vpop.f32.mrf.mxu0
      %v1763 = vadd.f32 %v642, %v1762
      %1764 = vmatmul.bf16.gmra.mxu0 %v414
      %v1765 = vpop.f32.mrf.mxu0
      %v1766 = vadd.f32 %v642, %v1765
      %v1767 = vpop.f32.mrf.mxu0
      %v1768 = vadd.f32 %v642, %v1767
      %1769 = vmatmul.bf16.gmra.mxu0 %v416
      %v1770 = vpop.f32.mrf.mxu0
      %v1771 = vadd.f32 %v642, %v1770
      %v1772 = vpop.f32.mrf.mxu0
      %v1773 = vadd.f32 %v642, %v1772
      %1774 = vmatmul.bf16.gmra.mxu0 %v418
      %v1775 = vpop.f32.mrf.mxu0
      %v1776 = vadd.f32 %v642, %v1775
      %v1777 = vpop.f32.mrf.mxu0
      %v1778 = vadd.f32 %v642, %v1777
      %1779 = vmatmul.bf16.gmra.mxu0 %v420
      %v1780 = vpop.f32.mrf.mxu0
      %v1781 = vadd.f32 %v642, %v1780
      %v1782 = vpop.f32.mrf.mxu0
      %v1783 = vadd.f32 %v642, %v1782
      %1784 = vmatmul.bf16.gmra.mxu0 %v422
      %v1785 = vpop.f32.mrf.mxu0
      %v1786 = vadd.f32 %v642, %v1785
      %v1787 = vpop.f32.mrf.mxu0
      %v1788 = vadd.f32 %v642, %v1787
      %1789 = vmatmul.bf16.gmra.mxu0 %v424
      %v1790 = vpop.f32.mrf.mxu0
      %v1791 = vadd.f32 %v642, %v1790
      %v1792 = vpop.f32.mrf.mxu0
      %v1793 = vadd.f32 %v642, %v1792
      %1794 = vmatmul.bf16.gmra.mxu0 %v426
      %v1795 = vpop.f32.mrf.mxu0
      %v1796 = vadd.f32 %v642, %v1795
      %v1797 = vpop.f32.mrf.mxu0
      %v1798 = vadd.f32 %v642, %v1797
      %1799 = vmatmul.bf16.gmra.mxu0 %v428
      %v1800 = vpop.f32.mrf.mxu0
      %v1801 = vadd.f32 %v642, %v1800
      %v1802 = vpop.f32.mrf.mxu0
      %v1803 = vadd.f32 %v642, %v1802
      %1804 = vmatmul.bf16.gmra.mxu0 %v430
      %v1805 = vpop.f32.mrf.mxu0
      %v1806 = vadd.f32 %v642, %v1805
      %v1807 = vpop.f32.mrf.mxu0
      %v1808 = vadd.f32 %v642, %v1807
      %1809 = vmatmul.bf16.gmra.mxu0 %v432
      %v1810 = vpop.f32.mrf.mxu0
      %v1811 = vadd.f32 %v642, %v1810
      %v1812 = vpop.f32.mrf.mxu0
      %v1813 = vadd.f32 %v642, %v1812
      %1814 = vmatmul.bf16.gmra.mxu0 %v434
      %v1815 = vpop.f32.mrf.mxu0
      %v1816 = vadd.f32 %v642, %v1815
      %v1817 = vpop.f32.mrf.mxu0
      %v1818 = vadd.f32 %v642, %v1817
      %1819 = vdwg.mxu0
      %1820 = vmatpush.bf16.msra.mxu0 0
      %1821 = vmatpush.bf16.msra.mxu0 0
      %1822 = vmatpush.bf16.msra.mxu0 0
      %1823 = vmatpush.bf16.msra.mxu0 0
      %1824 = vmatpush.bf16.msra.mxu0 0
      %1825 = vmatpush.bf16.msra.mxu0 0
      %1826 = vmatpush.bf16.msra.mxu0 %v1462
      %1827 = vmatpush.bf16.msra.mxu0 %v1442
      %1828 = vmatmul.bf16.gmra.mxu0 %v1684
      %v1829 = vpop.f32.mrf.mxu0
      %v1830 = vadd.f32 %v1741, %v1829
      %v1831 = vpop.f32.mrf.mxu0
      %v1832 = vadd.f32 %v1743, %v1831
      %1833 = vmatmul.bf16.gmra.mxu0 %v1687
      %v1834 = vpop.f32.mrf.mxu0
      %v1835 = vadd.f32 %v1746, %v1834
      %v1836 = vpop.f32.mrf.mxu0
      %v1837 = vadd.f32 %v1748, %v1836
      %1838 = vmatmul.bf16.gmra.mxu0 %v1690
      %v1839 = vpop.f32.mrf.mxu0
      %v1840 = vadd.f32 %v1751, %v1839
      %v1841 = vpop.f32.mrf.mxu0
      %v1842 = vadd.f32 %v1753, %v1841
      %1843 = vmatmul.bf16.gmra.mxu0 %v1693
      %v1844 = vpop.f32.mrf.mxu0
      %v1845 = vadd.f32 %v1756, %v1844
      %v1846 = vpop.f32.mrf.mxu0
      %v1847 = vadd.f32 %v1758, %v1846
      %1848 = vmatmul.bf16.gmra.mxu0 %v1696
      %v1849 = vpop.f32.mrf.mxu0
      %v1850 = vadd.f32 %v1761, %v1849
      %v1851 = vpop.f32.mrf.mxu0
      %v1852 = vadd.f32 %v1763, %v1851
      %1853 = vmatmul.bf16.gmra.mxu0 %v1699
      %v1854 = vpop.f32.mrf.mxu0
      %v1855 = vadd.f32 %v1766, %v1854
      %v1856 = vpop.f32.mrf.mxu0
      %v1857 = vadd.f32 %v1768, %v1856
      %1858 = vmatmul.bf16.gmra.mxu0 %v1702
      %v1859 = vpop.f32.mrf.mxu0
      %v1860 = vadd.f32 %v1771, %v1859
      %v1861 = vpop.f32.mrf.mxu0
      %v1862 = vadd.f32 %v1773, %v1861
      %1863 = vmatmul.bf16.gmra.mxu0 %v1705
      %v1864 = vpop.f32.mrf.mxu0
      %v1865 = vadd.f32 %v1776, %v1864
      %v1866 = vpop.f32.mrf.mxu0
      %v1867 = vadd.f32 %v1778, %v1866
      %1868 = vmatmul.bf16.gmra.mxu0 %v1708
      %v1869 = vpop.f32.mrf.mxu0
      %v1870 = vadd.f32 %v1781, %v1869
      %v1871 = vpop.f32.mrf.mxu0
      %v1872 = vadd.f32 %v1783, %v1871
      %1873 = vmatmul.bf16.gmra.mxu0 %v1711
      %v1874 = vpop.f32.mrf.mxu0
      %v1875 = vadd.f32 %v1786, %v1874
      %v1876 = vpop.f32.mrf.mxu0
      %v1877 = vadd.f32 %v1788, %v1876
      %1878 = vmatmul.bf16.gmra.mxu0 %v1714
      %v1879 = vpop.f32.mrf.mxu0
      %v1880 = vadd.f32 %v1791, %v1879
      %v1881 = vpop.f32.mrf.mxu0
      %v1882 = vadd.f32 %v1793, %v1881
      %1883 = vmatmul.bf16.gmra.mxu0 %v1717
      %v1884 = vpop.f32.mrf.mxu0
      %v1885 = vadd.f32 %v1796, %v1884
      %v1886 = vpop.f32.mrf.mxu0
      %v1887 = vadd.f32 %v1798, %v1886
      %1888 = vmatmul.bf16.gmra.mxu0 %v1720
      %v1889 = vpop.f32.mrf.mxu0
      %v1890 = vadd.f32 %v1801, %v1889
      %v1891 = vpop.f32.mrf.mxu0
      %v1892 = vadd.f32 %v1803, %v1891
      %1893 = vmatmul.bf16.gmra.mxu0 %v1723
      %v1894 = vpop.f32.mrf.mxu0
      %v1895 = vadd.f32 %v1806, %v1894
      %v1896 = vpop.f32.mrf.mxu0
      %v1897 = vadd.f32 %v1808, %v1896
      %1898 = vmatmul.bf16.gmra.mxu0 %v1726
      %v1899 = vpop.f32.mrf.mxu0
      %v1900 = vadd.f32 %v1811, %v1899
      %v1901 = vpop.f32.mrf.mxu0
      %v1902 = vadd.f32 %v1813, %v1901
      %1903 = vmatmul.bf16.gmra.mxu0 %v1729
      %v1904 = vpop.f32.mrf.mxu0
      %v1905 = vadd.f32 %v1816, %v1904
      %v1906 = vpop.f32.mrf.mxu0
      %v1907 = vadd.f32 %v1818, %v1906
      %1908 = vdwg.mxu0
      %1909 = vmatpush.bf16.msra.mxu0 %v1423
      %1910 = vmatpush.bf16.msra.mxu0 %v1403
      %1911 = vmatpush.bf16.msra.mxu0 %v1383
      %1912 = vmatpush.bf16.msra.mxu0 %v1363
      %1913 = vmatpush.bf16.msra.mxu0 %v1343
      %1914 = vmatpush.bf16.msra.mxu0 %v1323
      %1915 = vmatpush.bf16.msra.mxu0 %v1303
      %1916 = vmatpush.bf16.msra.mxu0 %v1283
      %1917 = vmatmul.bf16.gmra.mxu0 %v404
      %v1918 = vpop.f32.mrf.mxu0
      %v1919 = vadd.f32 %v643, %v1918
      %v1920 = vpop.f32.mrf.mxu0
      %v1921 = vadd.f32 %v643, %v1920
      %1922 = vmatmul.bf16.gmra.mxu0 %v406
      %v1923 = vpop.f32.mrf.mxu0
      %v1924 = vadd.f32 %v643, %v1923
      %v1925 = vpop.f32.mrf.mxu0
      %v1926 = vadd.f32 %v643, %v1925
      %1927 = vmatmul.bf16.gmra.mxu0 %v408
      %v1928 = vpop.f32.mrf.mxu0
      %v1929 = vadd.f32 %v643, %v1928
      %v1930 = vpop.f32.mrf.mxu0
      %v1931 = vadd.f32 %v643, %v1930
      %1932 = vmatmul.bf16.gmra.mxu0 %v410
      %v1933 = vpop.f32.mrf.mxu0
      %v1934 = vadd.f32 %v643, %v1933
      %v1935 = vpop.f32.mrf.mxu0
      %v1936 = vadd.f32 %v643, %v1935
      %1937 = vmatmul.bf16.gmra.mxu0 %v412
      %v1938 = vpop.f32.mrf.mxu0
      %v1939 = vadd.f32 %v643, %v1938
      %v1940 = vpop.f32.mrf.mxu0
      %v1941 = vadd.f32 %v643, %v1940
      %1942 = vmatmul.bf16.gmra.mxu0 %v414
      %v1943 = vpop.f32.mrf.mxu0
      %v1944 = vadd.f32 %v643, %v1943
      %v1945 = vpop.f32.mrf.mxu0
      %v1946 = vadd.f32 %v643, %v1945
      %1947 = vmatmul.bf16.gmra.mxu0 %v416
      %v1948 = vpop.f32.mrf.mxu0
      %v1949 = vadd.f32 %v643, %v1948
      %v1950 = vpop.f32.mrf.mxu0
      %v1951 = vadd.f32 %v643, %v1950
      %1952 = vmatmul.bf16.gmra.mxu0 %v418
      %v1953 = vpop.f32.mrf.mxu0
      %v1954 = vadd.f32 %v643, %v1953
      %v1955 = vpop.f32.mrf.mxu0
      %v1956 = vadd.f32 %v643, %v1955
      %1957 = vmatmul.bf16.gmra.mxu0 %v420
      %v1958 = vpop.f32.mrf.mxu0
      %v1959 = vadd.f32 %v643, %v1958
      %v1960 = vpop.f32.mrf.mxu0
      %v1961 = vadd.f32 %v643, %v1960
      %1962 = vmatmul.bf16.gmra.mxu0 %v422
      %v1963 = vpop.f32.mrf.mxu0
      %v1964 = vadd.f32 %v643, %v1963
      %v1965 = vpop.f32.mrf.mxu0
      %v1966 = vadd.f32 %v643, %v1965
      %1967 = vmatmul.bf16.gmra.mxu0 %v424
      %v1968 = vpop.f32.mrf.mxu0
      %v1969 = vadd.f32 %v643, %v1968
      %v1970 = vpop.f32.mrf.mxu0
      %v1971 = vadd.f32 %v643, %v1970
      %1972 = vmatmul.bf16.gmra.mxu0 %v426
      %v1973 = vpop.f32.mrf.mxu0
      %v1974 = vadd.f32 %v643, %v1973
      %v1975 = vpop.f32.mrf.mxu0
      %v1976 = vadd.f32 %v643, %v1975
      %1977 = vmatmul.bf16.gmra.mxu0 %v428
      %v1978 = vpop.f32.mrf.mxu0
      %v1979 = vadd.f32 %v643, %v1978
      %v1980 = vpop.f32.mrf.mxu0
      %v1981 = vadd.f32 %v643, %v1980
      %1982 = vmatmul.bf16.gmra.mxu0 %v430
      %v1983 = vpop.f32.mrf.mxu0
      %v1984 = vadd.f32 %v643, %v1983
      %v1985 = vpop.f32.mrf.mxu0
      %v1986 = vadd.f32 %v643, %v1985
      %1987 = vmatmul.bf16.gmra.mxu0 %v432
      %v1988 = vpop.f32.mrf.mxu0
      %v1989 = vadd.f32 %v643, %v1988
      %v1990 = vpop.f32.mrf.mxu0
      %v1991 = vadd.f32 %v643, %v1990
      %1992 = vmatmul.bf16.gmra.mxu0 %v434
      %v1993 = vpop.f32.mrf.mxu0
      %v1994 = vadd.f32 %v643, %v1993
      %v1995 = vpop.f32.mrf.mxu0
      %v1996 = vadd.f32 %v643, %v1995
      %1997 = vdwg.mxu0
      %1998 = vmatpush.bf16.msra.mxu0 0
      %1999 = vmatpush.bf16.msra.mxu0 0
      %2000 = vmatpush.bf16.msra.mxu0 0
      %2001 = vmatpush.bf16.msra.mxu0 0
      %2002 = vmatpush.bf16.msra.mxu0 0
      %2003 = vmatpush.bf16.msra.mxu0 0
      %2004 = vmatpush.bf16.msra.mxu0 %v1463
      %2005 = vmatpush.bf16.msra.mxu0 %v1443
      %2006 = vmatmul.bf16.gmra.mxu0 %v1684
      %v2007 = vpop.f32.mrf.mxu0
      %v2008 = vadd.f32 %v1919, %v2007
      %v2009 = vpop.f32.mrf.mxu0
      %v2010 = vadd.f32 %v1921, %v2009
      %2011 = vmatmul.bf16.gmra.mxu0 %v1687
      %v2012 = vpop.f32.mrf.mxu0
      %v2013 = vadd.f32 %v1924, %v2012
      %v2014 = vpop.f32.mrf.mxu0
      %v2015 = vadd.f32 %v1926, %v2014
      %2016 = vmatmul.bf16.gmra.mxu0 %v1690
      %v2017 = vpop.f32.mrf.mxu0
      %v2018 = vadd.f32 %v1929, %v2017
      %v2019 = vpop.f32.mrf.mxu0
      %v2020 = vadd.f32 %v1931, %v2019
      %2021 = vmatmul.bf16.gmra.mxu0 %v1693
      %v2022 = vpop.f32.mrf.mxu0
      %v2023 = vadd.f32 %v1934, %v2022
      %v2024 = vpop.f32.mrf.mxu0
      %v2025 = vadd.f32 %v1936, %v2024
      %2026 = vmatmul.bf16.gmra.mxu0 %v1696
      %v2027 = vpop.f32.mrf.mxu0
      %v2028 = vadd.f32 %v1939, %v2027
      %v2029 = vpop.f32.mrf.mxu0
      %v2030 = vadd.f32 %v1941, %v2029
      %2031 = vmatmul.bf16.gmra.mxu0 %v1699
      %v2032 = vpop.f32.mrf.mxu0
      %v2033 = vadd.f32 %v1944, %v2032
      %v2034 = vpop.f32.mrf.mxu0
      %v2035 = vadd.f32 %v1946, %v2034
      %2036 = vmatmul.bf16.gmra.mxu0 %v1702
      %v2037 = vpop.f32.mrf.mxu0
      %v2038 = vadd.f32 %v1949, %v2037
      %v2039 = vpop.f32.mrf.mxu0
      %v2040 = vadd.f32 %v1951, %v2039
      %2041 = vmatmul.bf16.gmra.mxu0 %v1705
      %v2042 = vpop.f32.mrf.mxu0
      %v2043 = vadd.f32 %v1954, %v2042
      %v2044 = vpop.f32.mrf.mxu0
      %v2045 = vadd.f32 %v1956, %v2044
      %2046 = vmatmul.bf16.gmra.mxu0 %v1708
      %v2047 = vpop.f32.mrf.mxu0
      %v2048 = vadd.f32 %v1959, %v2047
      %v2049 = vpop.f32.mrf.mxu0
      %v2050 = vadd.f32 %v1961, %v2049
      %2051 = vmatmul.bf16.gmra.mxu0 %v1711
      %v2052 = vpop.f32.mrf.mxu0
      %v2053 = vadd.f32 %v1964, %v2052
      %v2054 = vpop.f32.mrf.mxu0
      %v2055 = vadd.f32 %v1966, %v2054
      %2056 = vmatmul.bf16.gmra.mxu0 %v1714
      %v2057 = vpop.f32.mrf.mxu0
      %v2058 = vadd.f32 %v1969, %v2057
      %v2059 = vpop.f32.mrf.mxu0
      %v2060 = vadd.f32 %v1971, %v2059
      %2061 = vmatmul.bf16.gmra.mxu0 %v1717
      %v2062 = vpop.f32.mrf.mxu0
      %v2063 = vadd.f32 %v1974, %v2062
      %v2064 = vpop.f32.mrf.mxu0
      %v2065 = vadd.f32 %v1976, %v2064
      %2066 = vmatmul.bf16.gmra.mxu0 %v1720
      %v2067 = vpop.f32.mrf.mxu0
      %v2068 = vadd.f32 %v1979, %v2067
      %v2069 = vpop.f32.mrf.mxu0
      %v2070 = vadd.f32 %v1981, %v2069
      %2071 = vmatmul.bf16.gmra.mxu0 %v1723
      %v2072 = vpop.f32.mrf.mxu0
      %v2073 = vadd.f32 %v1984, %v2072
      %v2074 = vpop.f32.mrf.mxu0
      %v2075 = vadd.f32 %v1986, %v2074
      %2076 = vmatmul.bf16.gmra.mxu0 %v1726
      %v2077 = vpop.f32.mrf.mxu0
      %v2078 = vadd.f32 %v1989, %v2077
      %v2079 = vpop.f32.mrf.mxu0
      %v2080 = vadd.f32 %v1991, %v2079
      %2081 = vmatmul.bf16.gmra.mxu0 %v1729
      %v2082 = vpop.f32.mrf.mxu0
      %v2083 = vadd.f32 %v1994, %v2082
      %v2084 = vpop.f32.mrf.mxu0
      %v2085 = vadd.f32 %v1996, %v2084
      %2086 = vdwg.mxu0
      %2087 = vmatpush.bf16.msra.mxu0 %v1424
      %2088 = vmatpush.bf16.msra.mxu0 %v1404
      %2089 = vmatpush.bf16.msra.mxu0 %v1384
      %2090 = vmatpush.bf16.msra.mxu0 %v1364
      %2091 = vmatpush.bf16.msra.mxu0 %v1344
      %2092 = vmatpush.bf16.msra.mxu0 %v1324
      %2093 = vmatpush.bf16.msra.mxu0 %v1304
      %2094 = vmatpush.bf16.msra.mxu0 %v1284
      %2095 = vmatmul.bf16.gmra.mxu0 %v404
      %v2096 = vpop.f32.mrf.mxu0
      %v2097 = vadd.f32 %v644, %v2096
      %v2098 = vpop.f32.mrf.mxu0
      %v2099 = vadd.f32 %v644, %v2098
      %2100 = vmatmul.bf16.gmra.mxu0 %v406
      %v2101 = vpop.f32.mrf.mxu0
      %v2102 = vadd.f32 %v644, %v2101
      %v2103 = vpop.f32.mrf.mxu0
      %v2104 = vadd.f32 %v644, %v2103
      %2105 = vmatmul.bf16.gmra.mxu0 %v408
      %v2106 = vpop.f32.mrf.mxu0
      %v2107 = vadd.f32 %v644, %v2106
      %v2108 = vpop.f32.mrf.mxu0
      %v2109 = vadd.f32 %v644, %v2108
      %2110 = vmatmul.bf16.gmra.mxu0 %v410
      %v2111 = vpop.f32.mrf.mxu0
      %v2112 = vadd.f32 %v644, %v2111
      %v2113 = vpop.f32.mrf.mxu0
      %v2114 = vadd.f32 %v644, %v2113
      %2115 = vmatmul.bf16.gmra.mxu0 %v412
      %v2116 = vpop.f32.mrf.mxu0
      %v2117 = vadd.f32 %v644, %v2116
      %v2118 = vpop.f32.mrf.mxu0
      %v2119 = vadd.f32 %v644, %v2118
      %2120 = vmatmul.bf16.gmra.mxu0 %v414
      %v2121 = vpop.f32.mrf.mxu0
      %v2122 = vadd.f32 %v644, %v2121
      %v2123 = vpop.f32.mrf.mxu0
      %v2124 = vadd.f32 %v644, %v2123
      %2125 = vmatmul.bf16.gmra.mxu0 %v416
      %v2126 = vpop.f32.mrf.mxu0
      %v2127 = vadd.f32 %v644, %v2126
      %v2128 = vpop.f32.mrf.mxu0
      %v2129 = vadd.f32 %v644, %v2128
      %2130 = vmatmul.bf16.gmra.mxu0 %v418
      %v2131 = vpop.f32.mrf.mxu0
      %v2132 = vadd.f32 %v644, %v2131
      %v2133 = vpop.f32.mrf.mxu0
      %v2134 = vadd.f32 %v644, %v2133
      %2135 = vmatmul.bf16.gmra.mxu0 %v420
      %v2136 = vpop.f32.mrf.mxu0
      %v2137 = vadd.f32 %v644, %v2136
      %v2138 = vpop.f32.mrf.mxu0
      %v2139 = vadd.f32 %v644, %v2138
      %2140 = vmatmul.bf16.gmra.mxu0 %v422
      %v2141 = vpop.f32.mrf.mxu0
      %v2142 = vadd.f32 %v644, %v2141
      %v2143 = vpop.f32.mrf.mxu0
      %v2144 = vadd.f32 %v644, %v2143
      %2145 = vmatmul.bf16.gmra.mxu0 %v424
      %v2146 = vpop.f32.mrf.mxu0
      %v2147 = vadd.f32 %v644, %v2146
      %v2148 = vpop.f32.mrf.mxu0
      %v2149 = vadd.f32 %v644, %v2148
      %2150 = vmatmul.bf16.gmra.mxu0 %v426
      %v2151 = vpop.f32.mrf.mxu0
      %v2152 = vadd.f32 %v644, %v2151
      %v2153 = vpop.f32.mrf.mxu0
      %v2154 = vadd.f32 %v644, %v2153
      %2155 = vmatmul.bf16.gmra.mxu0 %v428
      %v2156 = vpop.f32.mrf.mxu0
      %v2157 = vadd.f32 %v644, %v2156
      %v2158 = vpop.f32.mrf.mxu0
      %v2159 = vadd.f32 %v644, %v2158
      %2160 = vmatmul.bf16.gmra.mxu0 %v430
      %v2161 = vpop.f32.mrf.mxu0
      %v2162 = vadd.f32 %v644, %v2161
      %v2163 = vpop.f32.mrf.mxu0
      %v2164 = vadd.f32 %v644, %v2163
      %2165 = vmatmul.bf16.gmra.mxu0 %v432
      %v2166 = vpop.f32.mrf.mxu0
      %v2167 = vadd.f32 %v644, %v2166
      %v2168 = vpop.f32.mrf.mxu0
      %v2169 = vadd.f32 %v644, %v2168
      %2170 = vmatmul.bf16.gmra.mxu0 %v434
      %v2171 = vpop.f32.mrf.mxu0
      %v2172 = vadd.f32 %v644, %v2171
      %v2173 = vpop.f32.mrf.mxu0
      %v2174 = vadd.f32 %v644, %v2173
      %2175 = vdwg.mxu0
      %2176 = vmatpush.bf16.msra.mxu0 0
      %2177 = vmatpush.bf16.msra.mxu0 0
      %2178 = vmatpush.bf16.msra.mxu0 0
      %2179 = vmatpush.bf16.msra.mxu0 0
      %2180 = vmatpush.bf16.msra.mxu0 0
      %2181 = vmatpush.bf16.msra.mxu0 0
      %2182 = vmatpush.bf16.msra.mxu0 %v1464
      %2183 = vmatpush.bf16.msra.mxu0 %v1444
      %2184 = vmatmul.bf16.gmra.mxu0 %v1684
      %v2185 = vpop.f32.mrf.mxu0
      %v2186 = vadd.f32 %v2097, %v2185
      %v2187 = vpop.f32.mrf.mxu0
      %v2188 = vadd.f32 %v2099, %v2187
      %2189 = vmatmul.bf16.gmra.mxu0 %v1687
      %v2190 = vpop.f32.mrf.mxu0
      %v2191 = vadd.f32 %v2102, %v2190
      %v2192 = vpop.f32.mrf.mxu0
      %v2193 = vadd.f32 %v2104, %v2192
      %2194 = vmatmul.bf16.gmra.mxu0 %v1690
      %v2195 = vpop.f32.mrf.mxu0
      %v2196 = vadd.f32 %v2107, %v2195
      %v2197 = vpop.f32.mrf.mxu0
      %v2198 = vadd.f32 %v2109, %v2197
      %2199 = vmatmul.bf16.gmra.mxu0 %v1693
      %v2200 = vpop.f32.mrf.mxu0
      %v2201 = vadd.f32 %v2112, %v2200
      %v2202 = vpop.f32.mrf.mxu0
      %v2203 = vadd.f32 %v2114, %v2202
      %2204 = vmatmul.bf16.gmra.mxu0 %v1696
      %v2205 = vpop.f32.mrf.mxu0
      %v2206 = vadd.f32 %v2117, %v2205
      %v2207 = vpop.f32.mrf.mxu0
      %v2208 = vadd.f32 %v2119, %v2207
      %2209 = vmatmul.bf16.gmra.mxu0 %v1699
      %v2210 = vpop.f32.mrf.mxu0
      %v2211 = vadd.f32 %v2122, %v2210
      %v2212 = vpop.f32.mrf.mxu0
      %v2213 = vadd.f32 %v2124, %v2212
      %2214 = vmatmul.bf16.gmra.mxu0 %v1702
      %v2215 = vpop.f32.mrf.mxu0
      %v2216 = vadd.f32 %v2127, %v2215
      %v2217 = vpop.f32.mrf.mxu0
      %v2218 = vadd.f32 %v2129, %v2217
      %2219 = vmatmul.bf16.gmra.mxu0 %v1705
      %v2220 = vpop.f32.mrf.mxu0
      %v2221 = vadd.f32 %v2132, %v2220
      %v2222 = vpop.f32.mrf.mxu0
      %v2223 = vadd.f32 %v2134, %v2222
      %2224 = vmatmul.bf16.gmra.mxu0 %v1708
      %v2225 = vpop.f32.mrf.mxu0
      %v2226 = vadd.f32 %v2137, %v2225
      %v2227 = vpop.f32.mrf.mxu0
      %v2228 = vadd.f32 %v2139, %v2227
      %2229 = vmatmul.bf16.gmra.mxu0 %v1711
      %v2230 = vpop.f32.mrf.mxu0
      %v2231 = vadd.f32 %v2142, %v2230
      %v2232 = vpop.f32.mrf.mxu0
      %v2233 = vadd.f32 %v2144, %v2232
      %2234 = vmatmul.bf16.gmra.mxu0 %v1714
      %v2235 = vpop.f32.mrf.mxu0
      %v2236 = vadd.f32 %v2147, %v2235
      %v2237 = vpop.f32.mrf.mxu0
      %v2238 = vadd.f32 %v2149, %v2237
      %2239 = vmatmul.bf16.gmra.mxu0 %v1717
      %v2240 = vpop.f32.mrf.mxu0
      %v2241 = vadd.f32 %v2152, %v2240
      %v2242 = vpop.f32.mrf.mxu0
      %v2243 = vadd.f32 %v2154, %v2242
      %2244 = vmatmul.bf16.gmra.mxu0 %v1720
      %v2245 = vpop.f32.mrf.mxu0
      %v2246 = vadd.f32 %v2157, %v2245
      %v2247 = vpop.f32.mrf.mxu0
      %v2248 = vadd.f32 %v2159, %v2247
      %2249 = vmatmul.bf16.gmra.mxu0 %v1723
      %v2250 = vpop.f32.mrf.mxu0
      %v2251 = vadd.f32 %v2162, %v2250
      %v2252 = vpop.f32.mrf.mxu0
      %v2253 = vadd.f32 %v2164, %v2252
      %2254 = vmatmul.bf16.gmra.mxu0 %v1726
      %v2255 = vpop.f32.mrf.mxu0
      %v2256 = vadd.f32 %v2167, %v2255
      %v2257 = vpop.f32.mrf.mxu0
      %v2258 = vadd.f32 %v2169, %v2257
      %2259 = vmatmul.bf16.gmra.mxu0 %v1729
      %v2260 = vpop.f32.mrf.mxu0
      %v2261 = vadd.f32 %v2172, %v2260
      %v2262 = vpop.f32.mrf.mxu0
      %v2263 = vadd.f32 %v2174, %v2262
      %2264 = vdwg.mxu0
      %2265 = vmatpush.bf16.msra.mxu0 %v1425
      %2266 = vmatpush.bf16.msra.mxu0 %v1405
      %2267 = vmatpush.bf16.msra.mxu0 %v1385
      %2268 = vmatpush.bf16.msra.mxu0 %v1365
      %2269 = vmatpush.bf16.msra.mxu0 %v1345
      %2270 = vmatpush.bf16.msra.mxu0 %v1325
      %2271 = vmatpush.bf16.msra.mxu0 %v1305
      %2272 = vmatpush.bf16.msra.mxu0 %v1285
      %2273 = vmatmul.bf16.gmra.mxu0 %v404
      %v2274 = vpop.f32.mrf.mxu0
      %v2275 = vadd.f32 %v645, %v2274
      %v2276 = vpop.f32.mrf.mxu0
      %v2277 = vadd.f32 %v645, %v2276
      %2278 = vmatmul.bf16.gmra.mxu0 %v406
      %v2279 = vpop.f32.mrf.mxu0
      %v2280 = vadd.f32 %v645, %v2279
      %v2281 = vpop.f32.mrf.mxu0
      %v2282 = vadd.f32 %v645, %v2281
      %2283 = vmatmul.bf16.gmra.mxu0 %v408
      %v2284 = vpop.f32.mrf.mxu0
      %v2285 = vadd.f32 %v645, %v2284
      %v2286 = vpop.f32.mrf.mxu0
      %v2287 = vadd.f32 %v645, %v2286
      %2288 = vmatmul.bf16.gmra.mxu0 %v410
      %v2289 = vpop.f32.mrf.mxu0
      %v2290 = vadd.f32 %v645, %v2289
      %v2291 = vpop.f32.mrf.mxu0
      %v2292 = vadd.f32 %v645, %v2291
      %2293 = vmatmul.bf16.gmra.mxu0 %v412
      %v2294 = vpop.f32.mrf.mxu0
      %v2295 = vadd.f32 %v645, %v2294
      %v2296 = vpop.f32.mrf.mxu0
      %v2297 = vadd.f32 %v645, %v2296
      %2298 = vmatmul.bf16.gmra.mxu0 %v414
      %v2299 = vpop.f32.mrf.mxu0
      %v2300 = vadd.f32 %v645, %v2299
      %v2301 = vpop.f32.mrf.mxu0
      %v2302 = vadd.f32 %v645, %v2301
      %2303 = vmatmul.bf16.gmra.mxu0 %v416
      %v2304 = vpop.f32.mrf.mxu0
      %v2305 = vadd.f32 %v645, %v2304
      %v2306 = vpop.f32.mrf.mxu0
      %v2307 = vadd.f32 %v645, %v2306
      %2308 = vmatmul.bf16.gmra.mxu0 %v418
      %v2309 = vpop.f32.mrf.mxu0
      %v2310 = vadd.f32 %v645, %v2309
      %v2311 = vpop.f32.mrf.mxu0
      %v2312 = vadd.f32 %v645, %v2311
      %2313 = vmatmul.bf16.gmra.mxu0 %v420
      %v2314 = vpop.f32.mrf.mxu0
      %v2315 = vadd.f32 %v645, %v2314
      %v2316 = vpop.f32.mrf.mxu0
      %v2317 = vadd.f32 %v645, %v2316
      %2318 = vmatmul.bf16.gmra.mxu0 %v422
      %v2319 = vpop.f32.mrf.mxu0
      %v2320 = vadd.f32 %v645, %v2319
      %v2321 = vpop.f32.mrf.mxu0
      %v2322 = vadd.f32 %v645, %v2321
      %2323 = vmatmul.bf16.gmra.mxu0 %v424
      %v2324 = vpop.f32.mrf.mxu0
      %v2325 = vadd.f32 %v645, %v2324
      %v2326 = vpop.f32.mrf.mxu0
      %v2327 = vadd.f32 %v645, %v2326
      %2328 = vmatmul.bf16.gmra.mxu0 %v426
      %v2329 = vpop.f32.mrf.mxu0
      %v2330 = vadd.f32 %v645, %v2329
      %v2331 = vpop.f32.mrf.mxu0
      %v2332 = vadd.f32 %v645, %v2331
      %2333 = vmatmul.bf16.gmra.mxu0 %v428
      %v2334 = vpop.f32.mrf.mxu0
      %v2335 = vadd.f32 %v645, %v2334
      %v2336 = vpop.f32.mrf.mxu0
      %v2337 = vadd.f32 %v645, %v2336
      %2338 = vmatmul.bf16.gmra.mxu0 %v430
      %v2339 = vpop.f32.mrf.mxu0
      %v2340 = vadd.f32 %v645, %v2339
      %v2341 = vpop.f32.mrf.mxu0
      %v2342 = vadd.f32 %v645, %v2341
      %2343 = vmatmul.bf16.gmra.mxu0 %v432
      %v2344 = vpop.f32.mrf.mxu0
      %v2345 = vadd.f32 %v645, %v2344
      %v2346 = vpop.f32.mrf.mxu0
      %v2347 = vadd.f32 %v645, %v2346
      %2348 = vmatmul.bf16.gmra.mxu0 %v434
      %v2349 = vpop.f32.mrf.mxu0
      %v2350 = vadd.f32 %v645, %v2349
      %v2351 = vpop.f32.mrf.mxu0
      %v2352 = vadd.f32 %v645, %v2351
      %2353 = vdwg.mxu0
      %2354 = vmatpush.bf16.msra.mxu0 0
      %2355 = vmatpush.bf16.msra.mxu0 0
      %2356 = vmatpush.bf16.msra.mxu0 0
      %2357 = vmatpush.bf16.msra.mxu0 0
      %2358 = vmatpush.bf16.msra.mxu0 0
      %2359 = vmatpush.bf16.msra.mxu0 0
      %2360 = vmatpush.bf16.msra.mxu0 %v1465
      %2361 = vmatpush.bf16.msra.mxu0 %v1445
      %2362 = vmatmul.bf16.gmra.mxu0 %v1684
      %v2363 = vpop.f32.mrf.mxu0
      %v2364 = vadd.f32 %v2275, %v2363
      %v2365 = vpop.f32.mrf.mxu0
      %v2366 = vadd.f32 %v2277, %v2365
      %2367 = vmatmul.bf16.gmra.mxu0 %v1687
      %v2368 = vpop.f32.mrf.mxu0
      %v2369 = vadd.f32 %v2280, %v2368
      %v2370 = vpop.f32.mrf.mxu0
      %v2371 = vadd.f32 %v2282, %v2370
      %2372 = vmatmul.bf16.gmra.mxu0 %v1690
      %v2373 = vpop.f32.mrf.mxu0
      %v2374 = vadd.f32 %v2285, %v2373
      %v2375 = vpop.f32.mrf.mxu0
      %v2376 = vadd.f32 %v2287, %v2375
      %2377 = vmatmul.bf16.gmra.mxu0 %v1693
      %v2378 = vpop.f32.mrf.mxu0
      %v2379 = vadd.f32 %v2290, %v2378
      %v2380 = vpop.f32.mrf.mxu0
      %v2381 = vadd.f32 %v2292, %v2380
      %2382 = vmatmul.bf16.gmra.mxu0 %v1696
      %v2383 = vpop.f32.mrf.mxu0
      %v2384 = vadd.f32 %v2295, %v2383
      %v2385 = vpop.f32.mrf.mxu0
      %v2386 = vadd.f32 %v2297, %v2385
      %2387 = vmatmul.bf16.gmra.mxu0 %v1699
      %v2388 = vpop.f32.mrf.mxu0
      %v2389 = vadd.f32 %v2300, %v2388
      %v2390 = vpop.f32.mrf.mxu0
      %v2391 = vadd.f32 %v2302, %v2390
      %2392 = vmatmul.bf16.gmra.mxu0 %v1702
      %v2393 = vpop.f32.mrf.mxu0
      %v2394 = vadd.f32 %v2305, %v2393
      %v2395 = vpop.f32.mrf.mxu0
      %v2396 = vadd.f32 %v2307, %v2395
      %2397 = vmatmul.bf16.gmra.mxu0 %v1705
      %v2398 = vpop.f32.mrf.mxu0
      %v2399 = vadd.f32 %v2310, %v2398
      %v2400 = vpop.f32.mrf.mxu0
      %v2401 = vadd.f32 %v2312, %v2400
      %2402 = vmatmul.bf16.gmra.mxu0 %v1708
      %v2403 = vpop.f32.mrf.mxu0
      %v2404 = vadd.f32 %v2315, %v2403
      %v2405 = vpop.f32.mrf.mxu0
      %v2406 = vadd.f32 %v2317, %v2405
      %2407 = vmatmul.bf16.gmra.mxu0 %v1711
      %v2408 = vpop.f32.mrf.mxu0
      %v2409 = vadd.f32 %v2320, %v2408
      %v2410 = vpop.f32.mrf.mxu0
      %v2411 = vadd.f32 %v2322, %v2410
      %2412 = vmatmul.bf16.gmra.mxu0 %v1714
      %v2413 = vpop.f32.mrf.mxu0
      %v2414 = vadd.f32 %v2325, %v2413
      %v2415 = vpop.f32.mrf.mxu0
      %v2416 = vadd.f32 %v2327, %v2415
      %2417 = vmatmul.bf16.gmra.mxu0 %v1717
      %v2418 = vpop.f32.mrf.mxu0
      %v2419 = vadd.f32 %v2330, %v2418
      %v2420 = vpop.f32.mrf.mxu0
      %v2421 = vadd.f32 %v2332, %v2420
      %2422 = vmatmul.bf16.gmra.mxu0 %v1720
      %v2423 = vpop.f32.mrf.mxu0
      %v2424 = vadd.f32 %v2335, %v2423
      %v2425 = vpop.f32.mrf.mxu0
      %v2426 = vadd.f32 %v2337, %v2425
      %2427 = vmatmul.bf16.gmra.mxu0 %v1723
      %v2428 = vpop.f32.mrf.mxu0
      %v2429 = vadd.f32 %v2340, %v2428
      %v2430 = vpop.f32.mrf.mxu0
      %v2431 = vadd.f32 %v2342, %v2430
      %2432 = vmatmul.bf16.gmra.mxu0 %v1726
      %v2433 = vpop.f32.mrf.mxu0
      %v2434 = vadd.f32 %v2345, %v2433
      %v2435 = vpop.f32.mrf.mxu0
      %v2436 = vadd.f32 %v2347, %v2435
      %2437 = vmatmul.bf16.gmra.mxu0 %v1729
      %v2438 = vpop.f32.mrf.mxu0
      %v2439 = vadd.f32 %v2350, %v2438
      %v2440 = vpop.f32.mrf.mxu0
      %v2441 = vadd.f32 %v2352, %v2440
      %2442 = vdwg.mxu0
      %2443 = vmatpush.bf16.msra.mxu0 %v1426
      %2444 = vmatpush.bf16.msra.mxu0 %v1406
      %2445 = vmatpush.bf16.msra.mxu0 %v1386
      %2446 = vmatpush.bf16.msra.mxu0 %v1366
      %2447 = vmatpush.bf16.msra.mxu0 %v1346
      %2448 = vmatpush.bf16.msra.mxu0 %v1326
      %2449 = vmatpush.bf16.msra.mxu0 %v1306
      %2450 = vmatpush.bf16.msra.mxu0 %v1286
      %2451 = vmatmul.bf16.gmra.mxu0 %v404
      %v2452 = vpop.f32.mrf.mxu0
      %v2453 = vadd.f32 %v646, %v2452
      %v2454 = vpop.f32.mrf.mxu0
      %v2455 = vadd.f32 %v646, %v2454
      %2456 = vmatmul.bf16.gmra.mxu0 %v406
      %v2457 = vpop.f32.mrf.mxu0
      %v2458 = vadd.f32 %v646, %v2457
      %v2459 = vpop.f32.mrf.mxu0
      %v2460 = vadd.f32 %v646, %v2459
      %2461 = vmatmul.bf16.gmra.mxu0 %v408
      %v2462 = vpop.f32.mrf.mxu0
      %v2463 = vadd.f32 %v646, %v2462
      %v2464 = vpop.f32.mrf.mxu0
      %v2465 = vadd.f32 %v646, %v2464
      %2466 = vmatmul.bf16.gmra.mxu0 %v410
      %v2467 = vpop.f32.mrf.mxu0
      %v2468 = vadd.f32 %v646, %v2467
      %v2469 = vpop.f32.mrf.mxu0
      %v2470 = vadd.f32 %v646, %v2469
      %2471 = vmatmul.bf16.gmra.mxu0 %v412
      %v2472 = vpop.f32.mrf.mxu0
      %v2473 = vadd.f32 %v646, %v2472
      %v2474 = vpop.f32.mrf.mxu0
      %v2475 = vadd.f32 %v646, %v2474
      %2476 = vmatmul.bf16.gmra.mxu0 %v414
      %v2477 = vpop.f32.mrf.mxu0
      %v2478 = vadd.f32 %v646, %v2477
      %v2479 = vpop.f32.mrf.mxu0
      %v2480 = vadd.f32 %v646, %v2479
      %2481 = vmatmul.bf16.gmra.mxu0 %v416
      %v2482 = vpop.f32.mrf.mxu0
      %v2483 = vadd.f32 %v646, %v2482
      %v2484 = vpop.f32.mrf.mxu0
      %v2485 = vadd.f32 %v646, %v2484
      %2486 = vmatmul.bf16.gmra.mxu0 %v418
      %v2487 = vpop.f32.mrf.mxu0
      %v2488 = vadd.f32 %v646, %v2487
      %v2489 = vpop.f32.mrf.mxu0
      %v2490 = vadd.f32 %v646, %v2489
      %2491 = vmatmul.bf16.gmra.mxu0 %v420
      %v2492 = vpop.f32.mrf.mxu0
      %v2493 = vadd.f32 %v646, %v2492
      %v2494 = vpop.f32.mrf.mxu0
      %v2495 = vadd.f32 %v646, %v2494
      %2496 = vmatmul.bf16.gmra.mxu0 %v422
      %v2497 = vpop.f32.mrf.mxu0
      %v2498 = vadd.f32 %v646, %v2497
      %v2499 = vpop.f32.mrf.mxu0
      %v2500 = vadd.f32 %v646, %v2499
      %2501 = vmatmul.bf16.gmra.mxu0 %v424
      %v2502 = vpop.f32.mrf.mxu0
      %v2503 = vadd.f32 %v646, %v2502
      %v2504 = vpop.f32.mrf.mxu0
      %v2505 = vadd.f32 %v646, %v2504
      %2506 = vmatmul.bf16.gmra.mxu0 %v426
      %v2507 = vpop.f32.mrf.mxu0
      %v2508 = vadd.f32 %v646, %v2507
      %v2509 = vpop.f32.mrf.mxu0
      %v2510 = vadd.f32 %v646, %v2509
      %2511 = vmatmul.bf16.gmra.mxu0 %v428
      %v2512 = vpop.f32.mrf.mxu0
      %v2513 = vadd.f32 %v646, %v2512
      %v2514 = vpop.f32.mrf.mxu0
      %v2515 = vadd.f32 %v646, %v2514
      %2516 = vmatmul.bf16.gmra.mxu0 %v430
      %v2517 = vpop.f32.mrf.mxu0
      %v2518 = vadd.f32 %v646, %v2517
      %v2519 = vpop.f32.mrf.mxu0
      %v2520 = vadd.f32 %v646, %v2519
      %2521 = vmatmul.bf16.gmra.mxu0 %v432
      %v2522 = vpop.f32.mrf.mxu0
      %v2523 = vadd.f32 %v646, %v2522
      %v2524 = vpop.f32.mrf.mxu0
      %v2525 = vadd.f32 %v646, %v2524
      %2526 = vmatmul.bf16.gmra.mxu0 %v434
      %v2527 = vpop.f32.mrf.mxu0
      %v2528 = vadd.f32 %v646, %v2527
      %v2529 = vpop.f32.mrf.mxu0
      %v2530 = vadd.f32 %v646, %v2529
      %2531 = vdwg.mxu0
      %2532 = vmatpush.bf16.msra.mxu0 0
      %2533 = vmatpush.bf16.msra.mxu0 0
      %2534 = vmatpush.bf16.msra.mxu0 0
      %2535 = vmatpush.bf16.msra.mxu0 0
      %2536 = vmatpush.bf16.msra.mxu0 0
      %2537 = vmatpush.bf16.msra.mxu0 0
      %2538 = vmatpush.bf16.msra.mxu0 %v1466
      %2539 = vmatpush.bf16.msra.mxu0 %v1446
      %2540 = vmatmul.bf16.gmra.mxu0 %v1684
      %v2541 = vpop.f32.mrf.mxu0
      %v2542 = vadd.f32 %v2453, %v2541
      %v2543 = vpop.f32.mrf.mxu0
      %v2544 = vadd.f32 %v2455, %v2543
      %2545 = vmatmul.bf16.gmra.mxu0 %v1687
      %v2546 = vpop.f32.mrf.mxu0
      %v2547 = vadd.f32 %v2458, %v2546
      %v2548 = vpop.f32.mrf.mxu0
      %v2549 = vadd.f32 %v2460, %v2548
      %2550 = vmatmul.bf16.gmra.mxu0 %v1690
      %v2551 = vpop.f32.mrf.mxu0
      %v2552 = vadd.f32 %v2463, %v2551
      %v2553 = vpop.f32.mrf.mxu0
      %v2554 = vadd.f32 %v2465, %v2553
      %2555 = vmatmul.bf16.gmra.mxu0 %v1693
      %v2556 = vpop.f32.mrf.mxu0
      %v2557 = vadd.f32 %v2468, %v2556
      %v2558 = vpop.f32.mrf.mxu0
      %v2559 = vadd.f32 %v2470, %v2558
      %2560 = vmatmul.bf16.gmra.mxu0 %v1696
      %v2561 = vpop.f32.mrf.mxu0
      %v2562 = vadd.f32 %v2473, %v2561
      %v2563 = vpop.f32.mrf.mxu0
      %v2564 = vadd.f32 %v2475, %v2563
      %2565 = vmatmul.bf16.gmra.mxu0 %v1699
      %v2566 = vpop.f32.mrf.mxu0
      %v2567 = vadd.f32 %v2478, %v2566
      %v2568 = vpop.f32.mrf.mxu0
      %v2569 = vadd.f32 %v2480, %v2568
      %2570 = vmatmul.bf16.gmra.mxu0 %v1702
      %v2571 = vpop.f32.mrf.mxu0
      %v2572 = vadd.f32 %v2483, %v2571
      %v2573 = vpop.f32.mrf.mxu0
      %v2574 = vadd.f32 %v2485, %v2573
      %2575 = vmatmul.bf16.gmra.mxu0 %v1705
      %v2576 = vpop.f32.mrf.mxu0
      %v2577 = vadd.f32 %v2488, %v2576
      %v2578 = vpop.f32.mrf.mxu0
      %v2579 = vadd.f32 %v2490, %v2578
      %2580 = vmatmul.bf16.gmra.mxu0 %v1708
      %v2581 = vpop.f32.mrf.mxu0
      %v2582 = vadd.f32 %v2493, %v2581
      %v2583 = vpop.f32.mrf.mxu0
      %v2584 = vadd.f32 %v2495, %v2583
      %2585 = vmatmul.bf16.gmra.mxu0 %v1711
      %v2586 = vpop.f32.mrf.mxu0
      %v2587 = vadd.f32 %v2498, %v2586
      %v2588 = vpop.f32.mrf.mxu0
      %v2589 = vadd.f32 %v2500, %v2588
      %2590 = vmatmul.bf16.gmra.mxu0 %v1714
      %v2591 = vpop.f32.mrf.mxu0
      %v2592 = vadd.f32 %v2503, %v2591
      %v2593 = vpop.f32.mrf.mxu0
      %v2594 = vadd.f32 %v2505, %v2593
      %2595 = vmatmul.bf16.gmra.mxu0 %v1717
      %v2596 = vpop.f32.mrf.mxu0
      %v2597 = vadd.f32 %v2508, %v2596
      %v2598 = vpop.f32.mrf.mxu0
      %v2599 = vadd.f32 %v2510, %v2598
      %2600 = vmatmul.bf16.gmra.mxu0 %v1720
      %v2601 = vpop.f32.mrf.mxu0
      %v2602 = vadd.f32 %v2513, %v2601
      %v2603 = vpop.f32.mrf.mxu0
      %v2604 = vadd.f32 %v2515, %v2603
      %2605 = vmatmul.bf16.gmra.mxu0 %v1723
      %v2606 = vpop.f32.mrf.mxu0
      %v2607 = vadd.f32 %v2518, %v2606
      %v2608 = vpop.f32.mrf.mxu0
      %v2609 = vadd.f32 %v2520, %v2608
      %2610 = vmatmul.bf16.gmra.mxu0 %v1726
      %v2611 = vpop.f32.mrf.mxu0
      %v2612 = vadd.f32 %v2523, %v2611
      %v2613 = vpop.f32.mrf.mxu0
      %v2614 = vadd.f32 %v2525, %v2613
      %2615 = vmatmul.bf16.gmra.mxu0 %v1729
      %v2616 = vpop.f32.mrf.mxu0
      %v2617 = vadd.f32 %v2528, %v2616
      %v2618 = vpop.f32.mrf.mxu0
      %v2619 = vadd.f32 %v2530, %v2618
      %2620 = vdwg.mxu0
      %2621 = vmatpush.bf16.msra.mxu0 %v1427
      %2622 = vmatpush.bf16.msra.mxu0 %v1407
      %2623 = vmatpush.bf16.msra.mxu0 %v1387
      %2624 = vmatpush.bf16.msra.mxu0 %v1367
      %2625 = vmatpush.bf16.msra.mxu0 %v1347
      %2626 = vmatpush.bf16.msra.mxu0 %v1327
      %2627 = vmatpush.bf16.msra.mxu0 %v1307
      %2628 = vmatpush.bf16.msra.mxu0 %v1287
      %2629 = vmatmul.bf16.gmra.mxu0 %v404
      %v2630 = vpop.f32.mrf.mxu0
      %v2631 = vadd.f32 %v647, %v2630
      %v2632 = vpop.f32.mrf.mxu0
      %v2633 = vadd.f32 %v647, %v2632
      %2634 = vmatmul.bf16.gmra.mxu0 %v406
      %v2635 = vpop.f32.mrf.mxu0
      %v2636 = vadd.f32 %v647, %v2635
      %v2637 = vpop.f32.mrf.mxu0
      %v2638 = vadd.f32 %v647, %v2637
      %2639 = vmatmul.bf16.gmra.mxu0 %v408
      %v2640 = vpop.f32.mrf.mxu0
      %v2641 = vadd.f32 %v647, %v2640
      %v2642 = vpop.f32.mrf.mxu0
      %v2643 = vadd.f32 %v647, %v2642
      %2644 = vmatmul.bf16.gmra.mxu0 %v410
      %v2645 = vpop.f32.mrf.mxu0
      %v2646 = vadd.f32 %v647, %v2645
      %v2647 = vpop.f32.mrf.mxu0
      %v2648 = vadd.f32 %v647, %v2647
      %2649 = vmatmul.bf16.gmra.mxu0 %v412
      %v2650 = vpop.f32.mrf.mxu0
      %v2651 = vadd.f32 %v647, %v2650
      %v2652 = vpop.f32.mrf.mxu0
      %v2653 = vadd.f32 %v647, %v2652
      %2654 = vmatmul.bf16.gmra.mxu0 %v414
      %v2655 = vpop.f32.mrf.mxu0
      %v2656 = vadd.f32 %v647, %v2655
      %v2657 = vpop.f32.mrf.mxu0
      %v2658 = vadd.f32 %v647, %v2657
      %2659 = vmatmul.bf16.gmra.mxu0 %v416
      %v2660 = vpop.f32.mrf.mxu0
      %v2661 = vadd.f32 %v647, %v2660
      %v2662 = vpop.f32.mrf.mxu0
      %v2663 = vadd.f32 %v647, %v2662
      %2664 = vmatmul.bf16.gmra.mxu0 %v418
      %v2665 = vpop.f32.mrf.mxu0
      %v2666 = vadd.f32 %v647, %v2665
      %v2667 = vpop.f32.mrf.mxu0
      %v2668 = vadd.f32 %v647, %v2667
      %2669 = vmatmul.bf16.gmra.mxu0 %v420
      %v2670 = vpop.f32.mrf.mxu0
      %v2671 = vadd.f32 %v647, %v2670
      %v2672 = vpop.f32.mrf.mxu0
      %v2673 = vadd.f32 %v647, %v2672
      %2674 = vmatmul.bf16.gmra.mxu0 %v422
      %v2675 = vpop.f32.mrf.mxu0
      %v2676 = vadd.f32 %v647, %v2675
      %v2677 = vpop.f32.mrf.mxu0
      %v2678 = vadd.f32 %v647, %v2677
      %2679 = vmatmul.bf16.gmra.mxu0 %v424
      %v2680 = vpop.f32.mrf.mxu0
      %v2681 = vadd.f32 %v647, %v2680
      %v2682 = vpop.f32.mrf.mxu0
      %v2683 = vadd.f32 %v647, %v2682
      %2684 = vmatmul.bf16.gmra.mxu0 %v426
      %v2685 = vpop.f32.mrf.mxu0
      %v2686 = vadd.f32 %v647, %v2685
      %v2687 = vpop.f32.mrf.mxu0
      %v2688 = vadd.f32 %v647, %v2687
      %2689 = vmatmul.bf16.gmra.mxu0 %v428
      %v2690 = vpop.f32.mrf.mxu0
      %v2691 = vadd.f32 %v647, %v2690
      %v2692 = vpop.f32.mrf.mxu0
      %v2693 = vadd.f32 %v647, %v2692
      %2694 = vmatmul.bf16.gmra.mxu0 %v430
      %v2695 = vpop.f32.mrf.mxu0
      %v2696 = vadd.f32 %v647, %v2695
      %v2697 = vpop.f32.mrf.mxu0
      %v2698 = vadd.f32 %v647, %v2697
      %2699 = vmatmul.bf16.gmra.mxu0 %v432
      %v2700 = vpop.f32.mrf.mxu0
      %v2701 = vadd.f32 %v647, %v2700
      %v2702 = vpop.f32.mrf.mxu0
      %v2703 = vadd.f32 %v647, %v2702
      %2704 = vmatmul.bf16.gmra.mxu0 %v434
      %v2705 = vpop.f32.mrf.mxu0
      %v2706 = vadd.f32 %v647, %v2705
      %v2707 = vpop.f32.mrf.mxu0
      %v2708 = vadd.f32 %v647, %v2707
      %2709 = vdwg.mxu0
      %2710 = vmatpush.bf16.msra.mxu0 0
      %2711 = vmatpush.bf16.msra.mxu0 0
      %2712 = vmatpush.bf16.msra.mxu0 0
      %2713 = vmatpush.bf16.msra.mxu0 0
      %2714 = vmatpush.bf16.msra.mxu0 0
      %2715 = vmatpush.bf16.msra.mxu0 0
      %2716 = vmatpush.bf16.msra.mxu0 %v1467
      %2717 = vmatpush.bf16.msra.mxu0 %v1447
      %2718 = vmatmul.bf16.gmra.mxu0 %v1684
      %v2719 = vpop.f32.mrf.mxu0
      %v2720 = vadd.f32 %v2631, %v2719
      %v2721 = vpop.f32.mrf.mxu0
      %v2722 = vadd.f32 %v2633, %v2721
      %2723 = vmatmul.bf16.gmra.mxu0 %v1687
      %v2724 = vpop.f32.mrf.mxu0
      %v2725 = vadd.f32 %v2636, %v2724
      %v2726 = vpop.f32.mrf.mxu0
      %v2727 = vadd.f32 %v2638, %v2726
      %2728 = vmatmul.bf16.gmra.mxu0 %v1690
      %v2729 = vpop.f32.mrf.mxu0
      %v2730 = vadd.f32 %v2641, %v2729
      %v2731 = vpop.f32.mrf.mxu0
      %v2732 = vadd.f32 %v2643, %v2731
      %2733 = vmatmul.bf16.gmra.mxu0 %v1693
      %v2734 = vpop.f32.mrf.mxu0
      %v2735 = vadd.f32 %v2646, %v2734
      %v2736 = vpop.f32.mrf.mxu0
      %v2737 = vadd.f32 %v2648, %v2736
      %2738 = vmatmul.bf16.gmra.mxu0 %v1696
      %v2739 = vpop.f32.mrf.mxu0
      %v2740 = vadd.f32 %v2651, %v2739
      %v2741 = vpop.f32.mrf.mxu0
      %v2742 = vadd.f32 %v2653, %v2741
      %2743 = vmatmul.bf16.gmra.mxu0 %v1699
      %v2744 = vpop.f32.mrf.mxu0
      %v2745 = vadd.f32 %v2656, %v2744
      %v2746 = vpop.f32.mrf.mxu0
      %v2747 = vadd.f32 %v2658, %v2746
      %2748 = vmatmul.bf16.gmra.mxu0 %v1702
      %v2749 = vpop.f32.mrf.mxu0
      %v2750 = vadd.f32 %v2661, %v2749
      %v2751 = vpop.f32.mrf.mxu0
      %v2752 = vadd.f32 %v2663, %v2751
      %2753 = vmatmul.bf16.gmra.mxu0 %v1705
      %v2754 = vpop.f32.mrf.mxu0
      %v2755 = vadd.f32 %v2666, %v2754
      %v2756 = vpop.f32.mrf.mxu0
      %v2757 = vadd.f32 %v2668, %v2756
      %2758 = vmatmul.bf16.gmra.mxu0 %v1708
      %v2759 = vpop.f32.mrf.mxu0
      %v2760 = vadd.f32 %v2671, %v2759
      %v2761 = vpop.f32.mrf.mxu0
      %v2762 = vadd.f32 %v2673, %v2761
      %2763 = vmatmul.bf16.gmra.mxu0 %v1711
      %v2764 = vpop.f32.mrf.mxu0
      %v2765 = vadd.f32 %v2676, %v2764
      %v2766 = vpop.f32.mrf.mxu0
      %v2767 = vadd.f32 %v2678, %v2766
      %2768 = vmatmul.bf16.gmra.mxu0 %v1714
      %v2769 = vpop.f32.mrf.mxu0
      %v2770 = vadd.f32 %v2681, %v2769
      %v2771 = vpop.f32.mrf.mxu0
      %v2772 = vadd.f32 %v2683, %v2771
      %2773 = vmatmul.bf16.gmra.mxu0 %v1717
      %v2774 = vpop.f32.mrf.mxu0
      %v2775 = vadd.f32 %v2686, %v2774
      %v2776 = vpop.f32.mrf.mxu0
      %v2777 = vadd.f32 %v2688, %v2776
      %2778 = vmatmul.bf16.gmra.mxu0 %v1720
      %v2779 = vpop.f32.mrf.mxu0
      %v2780 = vadd.f32 %v2691, %v2779
      %v2781 = vpop.f32.mrf.mxu0
      %v2782 = vadd.f32 %v2693, %v2781
      %2783 = vmatmul.bf16.gmra.mxu0 %v1723
      %v2784 = vpop.f32.mrf.mxu0
      %v2785 = vadd.f32 %v2696, %v2784
      %v2786 = vpop.f32.mrf.mxu0
      %v2787 = vadd.f32 %v2698, %v2786
      %2788 = vmatmul.bf16.gmra.mxu0 %v1726
      %v2789 = vpop.f32.mrf.mxu0
      %v2790 = vadd.f32 %v2701, %v2789
      %v2791 = vpop.f32.mrf.mxu0
      %v2792 = vadd.f32 %v2703, %v2791
      %2793 = vmatmul.bf16.gmra.mxu0 %v1729
      %v2794 = vpop.f32.mrf.mxu0
      %v2795 = vadd.f32 %v2706, %v2794
      %v2796 = vpop.f32.mrf.mxu0
      %v2797 = vadd.f32 %v2708, %v2796
      %2798 = vdwg.mxu0
      %2799 = vmatpush.bf16.msra.mxu0 %v1428
      %2800 = vmatpush.bf16.msra.mxu0 %v1408
      %2801 = vmatpush.bf16.msra.mxu0 %v1388
      %2802 = vmatpush.bf16.msra.mxu0 %v1368
      %2803 = vmatpush.bf16.msra.mxu0 %v1348
      %2804 = vmatpush.bf16.msra.mxu0 %v1328
      %2805 = vmatpush.bf16.msra.mxu0 %v1308
      %2806 = vmatpush.bf16.msra.mxu0 %v1288
      %2807 = vmatmul.bf16.gmra.mxu0 %v404
      %v2808 = vpop.f32.mrf.mxu0
      %v2809 = vadd.f32 %v648, %v2808
      %v2810 = vpop.f32.mrf.mxu0
      %v2811 = vadd.f32 %v648, %v2810
      %2812 = vmatmul.bf16.gmra.mxu0 %v406
      %v2813 = vpop.f32.mrf.mxu0
      %v2814 = vadd.f32 %v648, %v2813
      %v2815 = vpop.f32.mrf.mxu0
      %v2816 = vadd.f32 %v648, %v2815
      %2817 = vmatmul.bf16.gmra.mxu0 %v408
      %v2818 = vpop.f32.mrf.mxu0
      %v2819 = vadd.f32 %v648, %v2818
      %v2820 = vpop.f32.mrf.mxu0
      %v2821 = vadd.f32 %v648, %v2820
      %2822 = vmatmul.bf16.gmra.mxu0 %v410
      %v2823 = vpop.f32.mrf.mxu0
      %v2824 = vadd.f32 %v648, %v2823
      %v2825 = vpop.f32.mrf.mxu0
      %v2826 = vadd.f32 %v648, %v2825
      %2827 = vmatmul.bf16.gmra.mxu0 %v412
      %v2828 = vpop.f32.mrf.mxu0
      %v2829 = vadd.f32 %v648, %v2828
      %v2830 = vpop.f32.mrf.mxu0
      %v2831 = vadd.f32 %v648, %v2830
      %2832 = vmatmul.bf16.gmra.mxu0 %v414
      %v2833 = vpop.f32.mrf.mxu0
      %v2834 = vadd.f32 %v648, %v2833
      %v2835 = vpop.f32.mrf.mxu0
      %v2836 = vadd.f32 %v648, %v2835
      %2837 = vmatmul.bf16.gmra.mxu0 %v416
      %v2838 = vpop.f32.mrf.mxu0
      %v2839 = vadd.f32 %v648, %v2838
      %v2840 = vpop.f32.mrf.mxu0
      %v2841 = vadd.f32 %v648, %v2840
      %2842 = vmatmul.bf16.gmra.mxu0 %v418
      %v2843 = vpop.f32.mrf.mxu0
      %v2844 = vadd.f32 %v648, %v2843
      %v2845 = vpop.f32.mrf.mxu0
      %v2846 = vadd.f32 %v648, %v2845
      %2847 = vmatmul.bf16.gmra.mxu0 %v420
      %v2848 = vpop.f32.mrf.mxu0
      %v2849 = vadd.f32 %v648, %v2848
      %v2850 = vpop.f32.mrf.mxu0
      %v2851 = vadd.f32 %v648, %v2850
      %2852 = vmatmul.bf16.gmra.mxu0 %v422
      %v2853 = vpop.f32.mrf.mxu0
      %v2854 = vadd.f32 %v648, %v2853
      %v2855 = vpop.f32.mrf.mxu0
      %v2856 = vadd.f32 %v648, %v2855
      %2857 = vmatmul.bf16.gmra.mxu0 %v424
      %v2858 = vpop.f32.mrf.mxu0
      %v2859 = vadd.f32 %v648, %v2858
      %v2860 = vpop.f32.mrf.mxu0
      %v2861 = vadd.f32 %v648, %v2860
      %2862 = vmatmul.bf16.gmra.mxu0 %v426
      %v2863 = vpop.f32.mrf.mxu0
      %v2864 = vadd.f32 %v648, %v2863
      %v2865 = vpop.f32.mrf.mxu0
      %v2866 = vadd.f32 %v648, %v2865
      %2867 = vmatmul.bf16.gmra.mxu0 %v428
      %v2868 = vpop.f32.mrf.mxu0
      %v2869 = vadd.f32 %v648, %v2868
      %v2870 = vpop.f32.mrf.mxu0
      %v2871 = vadd.f32 %v648, %v2870
      %2872 = vmatmul.bf16.gmra.mxu0 %v430
      %v2873 = vpop.f32.mrf.mxu0
      %v2874 = vadd.f32 %v648, %v2873
      %v2875 = vpop.f32.mrf.mxu0
      %v2876 = vadd.f32 %v648, %v2875
      %2877 = vmatmul.bf16.gmra.mxu0 %v432
      %v2878 = vpop.f32.mrf.mxu0
      %v2879 = vadd.f32 %v648, %v2878
      %v2880 = vpop.f32.mrf.mxu0
      %v2881 = vadd.f32 %v648, %v2880
      %2882 = vmatmul.bf16.gmra.mxu0 %v434
      %v2883 = vpop.f32.mrf.mxu0
      %v2884 = vadd.f32 %v648, %v2883
      %v2885 = vpop.f32.mrf.mxu0
      %v2886 = vadd.f32 %v648, %v2885
      %2887 = vdwg.mxu0
      %2888 = vmatpush.bf16.msra.mxu0 0
      %2889 = vmatpush.bf16.msra.mxu0 0
      %2890 = vmatpush.bf16.msra.mxu0 0
      %2891 = vmatpush.bf16.msra.mxu0 0
      %2892 = vmatpush.bf16.msra.mxu0 0
      %2893 = vmatpush.bf16.msra.mxu0 0
      %2894 = vmatpush.bf16.msra.mxu0 %v1468
      %2895 = vmatpush.bf16.msra.mxu0 %v1448
      %2896 = vmatmul.bf16.gmra.mxu0 %v1684
      %v2897 = vpop.f32.mrf.mxu0
      %v2898 = vadd.f32 %v2809, %v2897
      %v2899 = vpop.f32.mrf.mxu0
      %v2900 = vadd.f32 %v2811, %v2899
      %2901 = vmatmul.bf16.gmra.mxu0 %v1687
      %v2902 = vpop.f32.mrf.mxu0
      %v2903 = vadd.f32 %v2814, %v2902
      %v2904 = vpop.f32.mrf.mxu0
      %v2905 = vadd.f32 %v2816, %v2904
      %2906 = vmatmul.bf16.gmra.mxu0 %v1690
      %v2907 = vpop.f32.mrf.mxu0
      %v2908 = vadd.f32 %v2819, %v2907
      %v2909 = vpop.f32.mrf.mxu0
      %v2910 = vadd.f32 %v2821, %v2909
      %2911 = vmatmul.bf16.gmra.mxu0 %v1693
      %v2912 = vpop.f32.mrf.mxu0
      %v2913 = vadd.f32 %v2824, %v2912
      %v2914 = vpop.f32.mrf.mxu0
      %v2915 = vadd.f32 %v2826, %v2914
      %2916 = vmatmul.bf16.gmra.mxu0 %v1696
      %v2917 = vpop.f32.mrf.mxu0
      %v2918 = vadd.f32 %v2829, %v2917
      %v2919 = vpop.f32.mrf.mxu0
      %v2920 = vadd.f32 %v2831, %v2919
      %2921 = vmatmul.bf16.gmra.mxu0 %v1699
      %v2922 = vpop.f32.mrf.mxu0
      %v2923 = vadd.f32 %v2834, %v2922
      %v2924 = vpop.f32.mrf.mxu0
      %v2925 = vadd.f32 %v2836, %v2924
      %2926 = vmatmul.bf16.gmra.mxu0 %v1702
      %v2927 = vpop.f32.mrf.mxu0
      %v2928 = vadd.f32 %v2839, %v2927
      %v2929 = vpop.f32.mrf.mxu0
      %v2930 = vadd.f32 %v2841, %v2929
      %2931 = vmatmul.bf16.gmra.mxu0 %v1705
      %v2932 = vpop.f32.mrf.mxu0
      %v2933 = vadd.f32 %v2844, %v2932
      %v2934 = vpop.f32.mrf.mxu0
      %v2935 = vadd.f32 %v2846, %v2934
      %2936 = vmatmul.bf16.gmra.mxu0 %v1708
      %v2937 = vpop.f32.mrf.mxu0
      %v2938 = vadd.f32 %v2849, %v2937
      %v2939 = vpop.f32.mrf.mxu0
      %v2940 = vadd.f32 %v2851, %v2939
      %2941 = vmatmul.bf16.gmra.mxu0 %v1711
      %v2942 = vpop.f32.mrf.mxu0
      %v2943 = vadd.f32 %v2854, %v2942
      %v2944 = vpop.f32.mrf.mxu0
      %v2945 = vadd.f32 %v2856, %v2944
      %2946 = vmatmul.bf16.gmra.mxu0 %v1714
      %v2947 = vpop.f32.mrf.mxu0
      %v2948 = vadd.f32 %v2859, %v2947
      %v2949 = vpop.f32.mrf.mxu0
      %v2950 = vadd.f32 %v2861, %v2949
      %2951 = vmatmul.bf16.gmra.mxu0 %v1717
      %v2952 = vpop.f32.mrf.mxu0
      %v2953 = vadd.f32 %v2864, %v2952
      %v2954 = vpop.f32.mrf.mxu0
      %v2955 = vadd.f32 %v2866, %v2954
      %2956 = vmatmul.bf16.gmra.mxu0 %v1720
      %v2957 = vpop.f32.mrf.mxu0
      %v2958 = vadd.f32 %v2869, %v2957
      %v2959 = vpop.f32.mrf.mxu0
      %v2960 = vadd.f32 %v2871, %v2959
      %2961 = vmatmul.bf16.gmra.mxu0 %v1723
      %v2962 = vpop.f32.mrf.mxu0
      %v2963 = vadd.f32 %v2874, %v2962
      %v2964 = vpop.f32.mrf.mxu0
      %v2965 = vadd.f32 %v2876, %v2964
      %2966 = vmatmul.bf16.gmra.mxu0 %v1726
      %v2967 = vpop.f32.mrf.mxu0
      %v2968 = vadd.f32 %v2879, %v2967
      %v2969 = vpop.f32.mrf.mxu0
      %v2970 = vadd.f32 %v2881, %v2969
      %2971 = vmatmul.bf16.gmra.mxu0 %v1729
      %v2972 = vpop.f32.mrf.mxu0
      %v2973 = vadd.f32 %v2884, %v2972
      %v2974 = vpop.f32.mrf.mxu0
      %v2975 = vadd.f32 %v2886, %v2974
      %2976 = vdwg.mxu0
      %2977 = vmatpush.bf16.msra.mxu0 %v1429
      %2978 = vmatpush.bf16.msra.mxu0 %v1409
      %2979 = vmatpush.bf16.msra.mxu0 %v1389
      %2980 = vmatpush.bf16.msra.mxu0 %v1369
      %2981 = vmatpush.bf16.msra.mxu0 %v1349
      %2982 = vmatpush.bf16.msra.mxu0 %v1329
      %2983 = vmatpush.bf16.msra.mxu0 %v1309
      %2984 = vmatpush.bf16.msra.mxu0 %v1289
      %2985 = vmatmul.bf16.gmra.mxu0 %v404
      %v2986 = vpop.f32.mrf.mxu0
      %v2987 = vadd.f32 %v649, %v2986
      %v2988 = vpop.f32.mrf.mxu0
      %v2989 = vadd.f32 %v649, %v2988
      %2990 = vmatmul.bf16.gmra.mxu0 %v406
      %v2991 = vpop.f32.mrf.mxu0
      %v2992 = vadd.f32 %v649, %v2991
      %v2993 = vpop.f32.mrf.mxu0
      %v2994 = vadd.f32 %v649, %v2993
      %2995 = vmatmul.bf16.gmra.mxu0 %v408
      %v2996 = vpop.f32.mrf.mxu0
      %v2997 = vadd.f32 %v649, %v2996
      %v2998 = vpop.f32.mrf.mxu0
      %v2999 = vadd.f32 %v649, %v2998
      %3000 = vmatmul.bf16.gmra.mxu0 %v410
      %v3001 = vpop.f32.mrf.mxu0
      %v3002 = vadd.f32 %v649, %v3001
      %v3003 = vpop.f32.mrf.mxu0
      %v3004 = vadd.f32 %v649, %v3003
      %3005 = vmatmul.bf16.gmra.mxu0 %v412
      %v3006 = vpop.f32.mrf.mxu0
      %v3007 = vadd.f32 %v649, %v3006
      %v3008 = vpop.f32.mrf.mxu0
      %v3009 = vadd.f32 %v649, %v3008
      %3010 = vmatmul.bf16.gmra.mxu0 %v414
      %v3011 = vpop.f32.mrf.mxu0
      %v3012 = vadd.f32 %v649, %v3011
      %v3013 = vpop.f32.mrf.mxu0
      %v3014 = vadd.f32 %v649, %v3013
      %3015 = vmatmul.bf16.gmra.mxu0 %v416
      %v3016 = vpop.f32.mrf.mxu0
      %v3017 = vadd.f32 %v649, %v3016
      %v3018 = vpop.f32.mrf.mxu0
      %v3019 = vadd.f32 %v649, %v3018
      %3020 = vmatmul.bf16.gmra.mxu0 %v418
      %v3021 = vpop.f32.mrf.mxu0
      %v3022 = vadd.f32 %v649, %v3021
      %v3023 = vpop.f32.mrf.mxu0
      %v3024 = vadd.f32 %v649, %v3023
      %3025 = vmatmul.bf16.gmra.mxu0 %v420
      %v3026 = vpop.f32.mrf.mxu0
      %v3027 = vadd.f32 %v649, %v3026
      %v3028 = vpop.f32.mrf.mxu0
      %v3029 = vadd.f32 %v649, %v3028
      %3030 = vmatmul.bf16.gmra.mxu0 %v422
      %v3031 = vpop.f32.mrf.mxu0
      %v3032 = vadd.f32 %v649, %v3031
      %v3033 = vpop.f32.mrf.mxu0
      %v3034 = vadd.f32 %v649, %v3033
      %3035 = vmatmul.bf16.gmra.mxu0 %v424
      %v3036 = vpop.f32.mrf.mxu0
      %v3037 = vadd.f32 %v649, %v3036
      %v3038 = vpop.f32.mrf.mxu0
      %v3039 = vadd.f32 %v649, %v3038
      %3040 = vmatmul.bf16.gmra.mxu0 %v426
      %v3041 = vpop.f32.mrf.mxu0
      %v3042 = vadd.f32 %v649, %v3041
      %v3043 = vpop.f32.mrf.mxu0
      %v3044 = vadd.f32 %v649, %v3043
      %3045 = vmatmul.bf16.gmra.mxu0 %v428
      %v3046 = vpop.f32.mrf.mxu0
      %v3047 = vadd.f32 %v649, %v3046
      %v3048 = vpop.f32.mrf.mxu0
      %v3049 = vadd.f32 %v649, %v3048
      %3050 = vmatmul.bf16.gmra.mxu0 %v430
      %v3051 = vpop.f32.mrf.mxu0
      %v3052 = vadd.f32 %v649, %v3051
      %v3053 = vpop.f32.mrf.mxu0
      %v3054 = vadd.f32 %v649, %v3053
      %3055 = vmatmul.bf16.gmra.mxu0 %v432
      %v3056 = vpop.f32.mrf.mxu0
      %v3057 = vadd.f32 %v649, %v3056
      %v3058 = vpop.f32.mrf.mxu0
      %v3059 = vadd.f32 %v649, %v3058
      %3060 = vmatmul.bf16.gmra.mxu0 %v434
      %v3061 = vpop.f32.mrf.mxu0
      %v3062 = vadd.f32 %v649, %v3061
      %v3063 = vpop.f32.mrf.mxu0
      %v3064 = vadd.f32 %v649, %v3063
      %3065 = vdwg.mxu0
      %3066 = vmatpush.bf16.msra.mxu0 0
      %3067 = vmatpush.bf16.msra.mxu0 0
      %3068 = vmatpush.bf16.msra.mxu0 0
      %3069 = vmatpush.bf16.msra.mxu0 0
      %3070 = vmatpush.bf16.msra.mxu0 0
      %3071 = vmatpush.bf16.msra.mxu0 0
      %3072 = vmatpush.bf16.msra.mxu0 %v1469
      %3073 = vmatpush.bf16.msra.mxu0 %v1449
      %3074 = vmatmul.bf16.gmra.mxu0 %v1684
      %v3075 = vpop.f32.mrf.mxu0
      %v3076 = vadd.f32 %v2987, %v3075
      %v3077 = vpop.f32.mrf.mxu0
      %v3078 = vadd.f32 %v2989, %v3077
      %3079 = vmatmul.bf16.gmra.mxu0 %v1687
      %v3080 = vpop.f32.mrf.mxu0
      %v3081 = vadd.f32 %v2992, %v3080
      %v3082 = vpop.f32.mrf.mxu0
      %v3083 = vadd.f32 %v2994, %v3082
      %3084 = vmatmul.bf16.gmra.mxu0 %v1690
      %v3085 = vpop.f32.mrf.mxu0
      %v3086 = vadd.f32 %v2997, %v3085
      %v3087 = vpop.f32.mrf.mxu0
      %v3088 = vadd.f32 %v2999, %v3087
      %3089 = vmatmul.bf16.gmra.mxu0 %v1693
      %v3090 = vpop.f32.mrf.mxu0
      %v3091 = vadd.f32 %v3002, %v3090
      %v3092 = vpop.f32.mrf.mxu0
      %v3093 = vadd.f32 %v3004, %v3092
      %3094 = vmatmul.bf16.gmra.mxu0 %v1696
      %v3095 = vpop.f32.mrf.mxu0
      %v3096 = vadd.f32 %v3007, %v3095
      %v3097 = vpop.f32.mrf.mxu0
      %v3098 = vadd.f32 %v3009, %v3097
      %3099 = vmatmul.bf16.gmra.mxu0 %v1699
      %v3100 = vpop.f32.mrf.mxu0
      %v3101 = vadd.f32 %v3012, %v3100
      %v3102 = vpop.f32.mrf.mxu0
      %v3103 = vadd.f32 %v3014, %v3102
      %3104 = vmatmul.bf16.gmra.mxu0 %v1702
      %v3105 = vpop.f32.mrf.mxu0
      %v3106 = vadd.f32 %v3017, %v3105
      %v3107 = vpop.f32.mrf.mxu0
      %v3108 = vadd.f32 %v3019, %v3107
      %3109 = vmatmul.bf16.gmra.mxu0 %v1705
      %v3110 = vpop.f32.mrf.mxu0
      %v3111 = vadd.f32 %v3022, %v3110
      %v3112 = vpop.f32.mrf.mxu0
      %v3113 = vadd.f32 %v3024, %v3112
      %3114 = vmatmul.bf16.gmra.mxu0 %v1708
      %v3115 = vpop.f32.mrf.mxu0
      %v3116 = vadd.f32 %v3027, %v3115
      %v3117 = vpop.f32.mrf.mxu0
      %v3118 = vadd.f32 %v3029, %v3117
      %3119 = vmatmul.bf16.gmra.mxu0 %v1711
      %v3120 = vpop.f32.mrf.mxu0
      %v3121 = vadd.f32 %v3032, %v3120
      %v3122 = vpop.f32.mrf.mxu0
      %v3123 = vadd.f32 %v3034, %v3122
      %3124 = vmatmul.bf16.gmra.mxu0 %v1714
      %v3125 = vpop.f32.mrf.mxu0
      %v3126 = vadd.f32 %v3037, %v3125
      %v3127 = vpop.f32.mrf.mxu0
      %v3128 = vadd.f32 %v3039, %v3127
      %3129 = vmatmul.bf16.gmra.mxu0 %v1717
      %v3130 = vpop.f32.mrf.mxu0
      %v3131 = vadd.f32 %v3042, %v3130
      %v3132 = vpop.f32.mrf.mxu0
      %v3133 = vadd.f32 %v3044, %v3132
      %3134 = vmatmul.bf16.gmra.mxu0 %v1720
      %v3135 = vpop.f32.mrf.mxu0
      %v3136 = vadd.f32 %v3047, %v3135
      %v3137 = vpop.f32.mrf.mxu0
      %v3138 = vadd.f32 %v3049, %v3137
      %3139 = vmatmul.bf16.gmra.mxu0 %v1723
      %v3140 = vpop.f32.mrf.mxu0
      %v3141 = vadd.f32 %v3052, %v3140
      %v3142 = vpop.f32.mrf.mxu0
      %v3143 = vadd.f32 %v3054, %v3142
      %3144 = vmatmul.bf16.gmra.mxu0 %v1726
      %v3145 = vpop.f32.mrf.mxu0
      %v3146 = vadd.f32 %v3057, %v3145
      %v3147 = vpop.f32.mrf.mxu0
      %v3148 = vadd.f32 %v3059, %v3147
      %3149 = vmatmul.bf16.gmra.mxu0 %v1729
      %v3150 = vpop.f32.mrf.mxu0
      %v3151 = vadd.f32 %v3062, %v3150
      %v3152 = vpop.f32.mrf.mxu0
      %v3153 = vadd.f32 %v3064, %v3152
      %3154 = vdwg.mxu0
      %3155 = vmatpush.bf16.msra.mxu0 %v1430
      %3156 = vmatpush.bf16.msra.mxu0 %v1410
      %3157 = vmatpush.bf16.msra.mxu0 %v1390
      %3158 = vmatpush.bf16.msra.mxu0 %v1370
      %3159 = vmatpush.bf16.msra.mxu0 %v1350
      %3160 = vmatpush.bf16.msra.mxu0 %v1330
      %3161 = vmatpush.bf16.msra.mxu0 %v1310
      %3162 = vmatpush.bf16.msra.mxu0 %v1290
      %3163 = vmatmul.bf16.gmra.mxu0 %v404
      %v3164 = vpop.f32.mrf.mxu0
      %v3165 = vadd.f32 %v650, %v3164
      %v3166 = vpop.f32.mrf.mxu0
      %v3167 = vadd.f32 %v650, %v3166
      %3168 = vmatmul.bf16.gmra.mxu0 %v406
      %v3169 = vpop.f32.mrf.mxu0
      %v3170 = vadd.f32 %v650, %v3169
      %v3171 = vpop.f32.mrf.mxu0
      %v3172 = vadd.f32 %v650, %v3171
      %3173 = vmatmul.bf16.gmra.mxu0 %v408
      %v3174 = vpop.f32.mrf.mxu0
      %v3175 = vadd.f32 %v650, %v3174
      %v3176 = vpop.f32.mrf.mxu0
      %v3177 = vadd.f32 %v650, %v3176
      %3178 = vmatmul.bf16.gmra.mxu0 %v410
      %v3179 = vpop.f32.mrf.mxu0
      %v3180 = vadd.f32 %v650, %v3179
      %v3181 = vpop.f32.mrf.mxu0
      %v3182 = vadd.f32 %v650, %v3181
      %3183 = vmatmul.bf16.gmra.mxu0 %v412
      %v3184 = vpop.f32.mrf.mxu0
      %v3185 = vadd.f32 %v650, %v3184
      %v3186 = vpop.f32.mrf.mxu0
      %v3187 = vadd.f32 %v650, %v3186
      %3188 = vmatmul.bf16.gmra.mxu0 %v414
      %v3189 = vpop.f32.mrf.mxu0
      %v3190 = vadd.f32 %v650, %v3189
      %v3191 = vpop.f32.mrf.mxu0
      %v3192 = vadd.f32 %v650, %v3191
      %3193 = vmatmul.bf16.gmra.mxu0 %v416
      %v3194 = vpop.f32.mrf.mxu0
      %v3195 = vadd.f32 %v650, %v3194
      %v3196 = vpop.f32.mrf.mxu0
      %v3197 = vadd.f32 %v650, %v3196
      %3198 = vmatmul.bf16.gmra.mxu0 %v418
      %v3199 = vpop.f32.mrf.mxu0
      %v3200 = vadd.f32 %v650, %v3199
      %v3201 = vpop.f32.mrf.mxu0
      %v3202 = vadd.f32 %v650, %v3201
      %3203 = vmatmul.bf16.gmra.mxu0 %v420
      %v3204 = vpop.f32.mrf.mxu0
      %v3205 = vadd.f32 %v650, %v3204
      %v3206 = vpop.f32.mrf.mxu0
      %v3207 = vadd.f32 %v650, %v3206
      %3208 = vmatmul.bf16.gmra.mxu0 %v422
      %v3209 = vpop.f32.mrf.mxu0
      %v3210 = vadd.f32 %v650, %v3209
      %v3211 = vpop.f32.mrf.mxu0
      %v3212 = vadd.f32 %v650, %v3211
      %3213 = vmatmul.bf16.gmra.mxu0 %v424
      %v3214 = vpop.f32.mrf.mxu0
      %v3215 = vadd.f32 %v650, %v3214
      %v3216 = vpop.f32.mrf.mxu0
      %v3217 = vadd.f32 %v650, %v3216
      %3218 = vmatmul.bf16.gmra.mxu0 %v426
      %v3219 = vpop.f32.mrf.mxu0
      %v3220 = vadd.f32 %v650, %v3219
      %v3221 = vpop.f32.mrf.mxu0
      %v3222 = vadd.f32 %v650, %v3221
      %3223 = vmatmul.bf16.gmra.mxu0 %v428
      %v3224 = vpop.f32.mrf.mxu0
      %v3225 = vadd.f32 %v650, %v3224
      %v3226 = vpop.f32.mrf.mxu0
      %v3227 = vadd.f32 %v650, %v3226
      %3228 = vmatmul.bf16.gmra.mxu0 %v430
      %v3229 = vpop.f32.mrf.mxu0
      %v3230 = vadd.f32 %v650, %v3229
      %v3231 = vpop.f32.mrf.mxu0
      %v3232 = vadd.f32 %v650, %v3231
      %3233 = vmatmul.bf16.gmra.mxu0 %v432
      %v3234 = vpop.f32.mrf.mxu0
      %v3235 = vadd.f32 %v650, %v3234
      %v3236 = vpop.f32.mrf.mxu0
      %v3237 = vadd.f32 %v650, %v3236
      %3238 = vmatmul.bf16.gmra.mxu0 %v434
      %v3239 = vpop.f32.mrf.mxu0
      %v3240 = vadd.f32 %v650, %v3239
      %v3241 = vpop.f32.mrf.mxu0
      %v3242 = vadd.f32 %v650, %v3241
      %3243 = vdwg.mxu0
      %3244 = vmatpush.bf16.msra.mxu0 0
      %3245 = vmatpush.bf16.msra.mxu0 0
      %3246 = vmatpush.bf16.msra.mxu0 0
      %3247 = vmatpush.bf16.msra.mxu0 0
      %3248 = vmatpush.bf16.msra.mxu0 0
      %3249 = vmatpush.bf16.msra.mxu0 0
      %3250 = vmatpush.bf16.msra.mxu0 %v1470
      %3251 = vmatpush.bf16.msra.mxu0 %v1450
      %3252 = vmatmul.bf16.gmra.mxu0 %v1684
      %v3253 = vpop.f32.mrf.mxu0
      %v3254 = vadd.f32 %v3165, %v3253
      %v3255 = vpop.f32.mrf.mxu0
      %v3256 = vadd.f32 %v3167, %v3255
      %3257 = vmatmul.bf16.gmra.mxu0 %v1687
      %v3258 = vpop.f32.mrf.mxu0
      %v3259 = vadd.f32 %v3170, %v3258
      %v3260 = vpop.f32.mrf.mxu0
      %v3261 = vadd.f32 %v3172, %v3260
      %3262 = vmatmul.bf16.gmra.mxu0 %v1690
      %v3263 = vpop.f32.mrf.mxu0
      %v3264 = vadd.f32 %v3175, %v3263
      %v3265 = vpop.f32.mrf.mxu0
      %v3266 = vadd.f32 %v3177, %v3265
      %3267 = vmatmul.bf16.gmra.mxu0 %v1693
      %v3268 = vpop.f32.mrf.mxu0
      %v3269 = vadd.f32 %v3180, %v3268
      %v3270 = vpop.f32.mrf.mxu0
      %v3271 = vadd.f32 %v3182, %v3270
      %3272 = vmatmul.bf16.gmra.mxu0 %v1696
      %v3273 = vpop.f32.mrf.mxu0
      %v3274 = vadd.f32 %v3185, %v3273
      %v3275 = vpop.f32.mrf.mxu0
      %v3276 = vadd.f32 %v3187, %v3275
      %3277 = vmatmul.bf16.gmra.mxu0 %v1699
      %v3278 = vpop.f32.mrf.mxu0
      %v3279 = vadd.f32 %v3190, %v3278
      %v3280 = vpop.f32.mrf.mxu0
      %v3281 = vadd.f32 %v3192, %v3280
      %3282 = vmatmul.bf16.gmra.mxu0 %v1702
      %v3283 = vpop.f32.mrf.mxu0
      %v3284 = vadd.f32 %v3195, %v3283
      %v3285 = vpop.f32.mrf.mxu0
      %v3286 = vadd.f32 %v3197, %v3285
      %3287 = vmatmul.bf16.gmra.mxu0 %v1705
      %v3288 = vpop.f32.mrf.mxu0
      %v3289 = vadd.f32 %v3200, %v3288
      %v3290 = vpop.f32.mrf.mxu0
      %v3291 = vadd.f32 %v3202, %v3290
      %3292 = vmatmul.bf16.gmra.mxu0 %v1708
      %v3293 = vpop.f32.mrf.mxu0
      %v3294 = vadd.f32 %v3205, %v3293
      %v3295 = vpop.f32.mrf.mxu0
      %v3296 = vadd.f32 %v3207, %v3295
      %3297 = vmatmul.bf16.gmra.mxu0 %v1711
      %v3298 = vpop.f32.mrf.mxu0
      %v3299 = vadd.f32 %v3210, %v3298
      %v3300 = vpop.f32.mrf.mxu0
      %v3301 = vadd.f32 %v3212, %v3300
      %3302 = vmatmul.bf16.gmra.mxu0 %v1714
      %v3303 = vpop.f32.mrf.mxu0
      %v3304 = vadd.f32 %v3215, %v3303
      %v3305 = vpop.f32.mrf.mxu0
      %v3306 = vadd.f32 %v3217, %v3305
      %3307 = vmatmul.bf16.gmra.mxu0 %v1717
      %v3308 = vpop.f32.mrf.mxu0
      %v3309 = vadd.f32 %v3220, %v3308
      %v3310 = vpop.f32.mrf.mxu0
      %v3311 = vadd.f32 %v3222, %v3310
      %3312 = vmatmul.bf16.gmra.mxu0 %v1720
      %v3313 = vpop.f32.mrf.mxu0
      %v3314 = vadd.f32 %v3225, %v3313
      %v3315 = vpop.f32.mrf.mxu0
      %v3316 = vadd.f32 %v3227, %v3315
      %3317 = vmatmul.bf16.gmra.mxu0 %v1723
      %v3318 = vpop.f32.mrf.mxu0
      %v3319 = vadd.f32 %v3230, %v3318
      %v3320 = vpop.f32.mrf.mxu0
      %v3321 = vadd.f32 %v3232, %v3320
      %3322 = vmatmul.bf16.gmra.mxu0 %v1726
      %v3323 = vpop.f32.mrf.mxu0
      %v3324 = vadd.f32 %v3235, %v3323
      %v3325 = vpop.f32.mrf.mxu0
      %v3326 = vadd.f32 %v3237, %v3325
      %3327 = vmatmul.bf16.gmra.mxu0 %v1729
      %v3328 = vpop.f32.mrf.mxu0
      %v3329 = vadd.f32 %v3240, %v3328
      %v3330 = vpop.f32.mrf.mxu0
      %v3331 = vadd.f32 %v3242, %v3330
      %3332 = vdwg.mxu0
      %3333 = vmatpush.bf16.msra.mxu0 %v1431
      %3334 = vmatpush.bf16.msra.mxu0 %v1411
      %3335 = vmatpush.bf16.msra.mxu0 %v1391
      %3336 = vmatpush.bf16.msra.mxu0 %v1371
      %3337 = vmatpush.bf16.msra.mxu0 %v1351
      %3338 = vmatpush.bf16.msra.mxu0 %v1331
      %3339 = vmatpush.bf16.msra.mxu0 %v1311
      %3340 = vmatpush.bf16.msra.mxu0 %v1291
      %3341 = vmatmul.bf16.gmra.mxu0 %v404
      %v3342 = vpop.f32.mrf.mxu0
      %v3343 = vadd.f32 %v651, %v3342
      %v3344 = vpop.f32.mrf.mxu0
      %v3345 = vadd.f32 %v651, %v3344
      %3346 = vmatmul.bf16.gmra.mxu0 %v406
      %v3347 = vpop.f32.mrf.mxu0
      %v3348 = vadd.f32 %v651, %v3347
      %v3349 = vpop.f32.mrf.mxu0
      %v3350 = vadd.f32 %v651, %v3349
      %3351 = vmatmul.bf16.gmra.mxu0 %v408
      %v3352 = vpop.f32.mrf.mxu0
      %v3353 = vadd.f32 %v651, %v3352
      %v3354 = vpop.f32.mrf.mxu0
      %v3355 = vadd.f32 %v651, %v3354
      %3356 = vmatmul.bf16.gmra.mxu0 %v410
      %v3357 = vpop.f32.mrf.mxu0
      %v3358 = vadd.f32 %v651, %v3357
      %v3359 = vpop.f32.mrf.mxu0
      %v3360 = vadd.f32 %v651, %v3359
      %3361 = vmatmul.bf16.gmra.mxu0 %v412
      %v3362 = vpop.f32.mrf.mxu0
      %v3363 = vadd.f32 %v651, %v3362
      %v3364 = vpop.f32.mrf.mxu0
      %v3365 = vadd.f32 %v651, %v3364
      %3366 = vmatmul.bf16.gmra.mxu0 %v414
      %v3367 = vpop.f32.mrf.mxu0
      %v3368 = vadd.f32 %v651, %v3367
      %v3369 = vpop.f32.mrf.mxu0
      %v3370 = vadd.f32 %v651, %v3369
      %3371 = vmatmul.bf16.gmra.mxu0 %v416
      %v3372 = vpop.f32.mrf.mxu0
      %v3373 = vadd.f32 %v651, %v3372
      %v3374 = vpop.f32.mrf.mxu0
      %v3375 = vadd.f32 %v651, %v3374
      %3376 = vmatmul.bf16.gmra.mxu0 %v418
      %v3377 = vpop.f32.mrf.mxu0
      %v3378 = vadd.f32 %v651, %v3377
      %v3379 = vpop.f32.mrf.mxu0
      %v3380 = vadd.f32 %v651, %v3379
      %3381 = vmatmul.bf16.gmra.mxu0 %v420
      %v3382 = vpop.f32.mrf.mxu0
      %v3383 = vadd.f32 %v651, %v3382
      %v3384 = vpop.f32.mrf.mxu0
      %v3385 = vadd.f32 %v651, %v3384
      %3386 = vmatmul.bf16.gmra.mxu0 %v422
      %v3387 = vpop.f32.mrf.mxu0
      %v3388 = vadd.f32 %v651, %v3387
      %v3389 = vpop.f32.mrf.mxu0
      %v3390 = vadd.f32 %v651, %v3389
      %3391 = vmatmul.bf16.gmra.mxu0 %v424
      %v3392 = vpop.f32.mrf.mxu0
      %v3393 = vadd.f32 %v651, %v3392
      %v3394 = vpop.f32.mrf.mxu0
      %v3395 = vadd.f32 %v651, %v3394
      %3396 = vmatmul.bf16.gmra.mxu0 %v426
      %v3397 = vpop.f32.mrf.mxu0
      %v3398 = vadd.f32 %v651, %v3397
      %v3399 = vpop.f32.mrf.mxu0
      %v3400 = vadd.f32 %v651, %v3399
      %3401 = vmatmul.bf16.gmra.mxu0 %v428
      %v3402 = vpop.f32.mrf.mxu0
      %v3403 = vadd.f32 %v651, %v3402
      %v3404 = vpop.f32.mrf.mxu0
      %v3405 = vadd.f32 %v651, %v3404
      %3406 = vmatmul.bf16.gmra.mxu0 %v430
      %v3407 = vpop.f32.mrf.mxu0
      %v3408 = vadd.f32 %v651, %v3407
      %v3409 = vpop.f32.mrf.mxu0
      %v3410 = vadd.f32 %v651, %v3409
      %3411 = vmatmul.bf16.gmra.mxu0 %v432
      %v3412 = vpop.f32.mrf.mxu0
      %v3413 = vadd.f32 %v651, %v3412
      %v3414 = vpop.f32.mrf.mxu0
      %v3415 = vadd.f32 %v651, %v3414
      %3416 = vmatmul.bf16.gmra.mxu0 %v434
      %v3417 = vpop.f32.mrf.mxu0
      %v3418 = vadd.f32 %v651, %v3417
      %v3419 = vpop.f32.mrf.mxu0
      %v3420 = vadd.f32 %v651, %v3419
      %3421 = vdwg.mxu0
      %3422 = vmatpush.bf16.msra.mxu0 0
      %3423 = vmatpush.bf16.msra.mxu0 0
      %3424 = vmatpush.bf16.msra.mxu0 0
      %3425 = vmatpush.bf16.msra.mxu0 0
      %3426 = vmatpush.bf16.msra.mxu0 0
      %3427 = vmatpush.bf16.msra.mxu0 0
      %3428 = vmatpush.bf16.msra.mxu0 %v1471
      %3429 = vmatpush.bf16.msra.mxu0 %v1451
      %3430 = vmatmul.bf16.gmra.mxu0 %v1684
      %v3431 = vpop.f32.mrf.mxu0
      %v3432 = vadd.f32 %v3343, %v3431
      %v3433 = vpop.f32.mrf.mxu0
      %v3434 = vadd.f32 %v3345, %v3433
      %3435 = vmatmul.bf16.gmra.mxu0 %v1687
      %v3436 = vpop.f32.mrf.mxu0
      %v3437 = vadd.f32 %v3348, %v3436
      %v3438 = vpop.f32.mrf.mxu0
      %v3439 = vadd.f32 %v3350, %v3438
      %3440 = vmatmul.bf16.gmra.mxu0 %v1690
      %v3441 = vpop.f32.mrf.mxu0
      %v3442 = vadd.f32 %v3353, %v3441
      %v3443 = vpop.f32.mrf.mxu0
      %v3444 = vadd.f32 %v3355, %v3443
      %3445 = vmatmul.bf16.gmra.mxu0 %v1693
      %v3446 = vpop.f32.mrf.mxu0
      %v3447 = vadd.f32 %v3358, %v3446
      %v3448 = vpop.f32.mrf.mxu0
      %v3449 = vadd.f32 %v3360, %v3448
      %3450 = vmatmul.bf16.gmra.mxu0 %v1696
      %v3451 = vpop.f32.mrf.mxu0
      %v3452 = vadd.f32 %v3363, %v3451
      %v3453 = vpop.f32.mrf.mxu0
      %v3454 = vadd.f32 %v3365, %v3453
      %3455 = vmatmul.bf16.gmra.mxu0 %v1699
      %v3456 = vpop.f32.mrf.mxu0
      %v3457 = vadd.f32 %v3368, %v3456
      %v3458 = vpop.f32.mrf.mxu0
      %v3459 = vadd.f32 %v3370, %v3458
      %3460 = vmatmul.bf16.gmra.mxu0 %v1702
      %v3461 = vpop.f32.mrf.mxu0
      %v3462 = vadd.f32 %v3373, %v3461
      %v3463 = vpop.f32.mrf.mxu0
      %v3464 = vadd.f32 %v3375, %v3463
      %3465 = vmatmul.bf16.gmra.mxu0 %v1705
      %v3466 = vpop.f32.mrf.mxu0
      %v3467 = vadd.f32 %v3378, %v3466
      %v3468 = vpop.f32.mrf.mxu0
      %v3469 = vadd.f32 %v3380, %v3468
      %3470 = vmatmul.bf16.gmra.mxu0 %v1708
      %v3471 = vpop.f32.mrf.mxu0
      %v3472 = vadd.f32 %v3383, %v3471
      %v3473 = vpop.f32.mrf.mxu0
      %v3474 = vadd.f32 %v3385, %v3473
      %3475 = vmatmul.bf16.gmra.mxu0 %v1711
      %v3476 = vpop.f32.mrf.mxu0
      %v3477 = vadd.f32 %v3388, %v3476
      %v3478 = vpop.f32.mrf.mxu0
      %v3479 = vadd.f32 %v3390, %v3478
      %3480 = vmatmul.bf16.gmra.mxu0 %v1714
      %v3481 = vpop.f32.mrf.mxu0
      %v3482 = vadd.f32 %v3393, %v3481
      %v3483 = vpop.f32.mrf.mxu0
      %v3484 = vadd.f32 %v3395, %v3483
      %3485 = vmatmul.bf16.gmra.mxu0 %v1717
      %v3486 = vpop.f32.mrf.mxu0
      %v3487 = vadd.f32 %v3398, %v3486
      %v3488 = vpop.f32.mrf.mxu0
      %v3489 = vadd.f32 %v3400, %v3488
      %3490 = vmatmul.bf16.gmra.mxu0 %v1720
      %v3491 = vpop.f32.mrf.mxu0
      %v3492 = vadd.f32 %v3403, %v3491
      %v3493 = vpop.f32.mrf.mxu0
      %v3494 = vadd.f32 %v3405, %v3493
      %3495 = vmatmul.bf16.gmra.mxu0 %v1723
      %v3496 = vpop.f32.mrf.mxu0
      %v3497 = vadd.f32 %v3408, %v3496
      %v3498 = vpop.f32.mrf.mxu0
      %v3499 = vadd.f32 %v3410, %v3498
      %3500 = vmatmul.bf16.gmra.mxu0 %v1726
      %v3501 = vpop.f32.mrf.mxu0
      %v3502 = vadd.f32 %v3413, %v3501
      %v3503 = vpop.f32.mrf.mxu0
      %v3504 = vadd.f32 %v3415, %v3503
      %3505 = vmatmul.bf16.gmra.mxu0 %v1729
      %v3506 = vpop.f32.mrf.mxu0
      %v3507 = vadd.f32 %v3418, %v3506
      %v3508 = vpop.f32.mrf.mxu0
      %v3509 = vadd.f32 %v3420, %v3508
      %3510 = vdwg.mxu0
      %3511 = vmatpush.bf16.msra.mxu0 %v1432
      %3512 = vmatpush.bf16.msra.mxu0 %v1412
      %3513 = vmatpush.bf16.msra.mxu0 %v1392
      %3514 = vmatpush.bf16.msra.mxu0 %v1372
      %3515 = vmatpush.bf16.msra.mxu0 %v1352
      %3516 = vmatpush.bf16.msra.mxu0 %v1332
      %3517 = vmatpush.bf16.msra.mxu0 %v1312
      %3518 = vmatpush.bf16.msra.mxu0 %v1292
      %3519 = vmatmul.bf16.gmra.mxu0 %v404
      %v3520 = vpop.f32.mrf.mxu0
      %v3521 = vadd.f32 %v652, %v3520
      %v3522 = vpop.f32.mrf.mxu0
      %v3523 = vadd.f32 %v652, %v3522
      %3524 = vmatmul.bf16.gmra.mxu0 %v406
      %v3525 = vpop.f32.mrf.mxu0
      %v3526 = vadd.f32 %v652, %v3525
      %v3527 = vpop.f32.mrf.mxu0
      %v3528 = vadd.f32 %v652, %v3527
      %3529 = vmatmul.bf16.gmra.mxu0 %v408
      %v3530 = vpop.f32.mrf.mxu0
      %v3531 = vadd.f32 %v652, %v3530
      %v3532 = vpop.f32.mrf.mxu0
      %v3533 = vadd.f32 %v652, %v3532
      %3534 = vmatmul.bf16.gmra.mxu0 %v410
      %v3535 = vpop.f32.mrf.mxu0
      %v3536 = vadd.f32 %v652, %v3535
      %v3537 = vpop.f32.mrf.mxu0
      %v3538 = vadd.f32 %v652, %v3537
      %3539 = vmatmul.bf16.gmra.mxu0 %v412
      %v3540 = vpop.f32.mrf.mxu0
      %v3541 = vadd.f32 %v652, %v3540
      %v3542 = vpop.f32.mrf.mxu0
      %v3543 = vadd.f32 %v652, %v3542
      %3544 = vmatmul.bf16.gmra.mxu0 %v414
      %v3545 = vpop.f32.mrf.mxu0
      %v3546 = vadd.f32 %v652, %v3545
      %v3547 = vpop.f32.mrf.mxu0
      %v3548 = vadd.f32 %v652, %v3547
      %3549 = vmatmul.bf16.gmra.mxu0 %v416
      %v3550 = vpop.f32.mrf.mxu0
      %v3551 = vadd.f32 %v652, %v3550
      %v3552 = vpop.f32.mrf.mxu0
      %v3553 = vadd.f32 %v652, %v3552
      %3554 = vmatmul.bf16.gmra.mxu0 %v418
      %v3555 = vpop.f32.mrf.mxu0
      %v3556 = vadd.f32 %v652, %v3555
      %v3557 = vpop.f32.mrf.mxu0
      %v3558 = vadd.f32 %v652, %v3557
      %3559 = vmatmul.bf16.gmra.mxu0 %v420
      %v3560 = vpop.f32.mrf.mxu0
      %v3561 = vadd.f32 %v652, %v3560
      %v3562 = vpop.f32.mrf.mxu0
      %v3563 = vadd.f32 %v652, %v3562
      %3564 = vmatmul.bf16.gmra.mxu0 %v422
      %v3565 = vpop.f32.mrf.mxu0
      %v3566 = vadd.f32 %v652, %v3565
      %v3567 = vpop.f32.mrf.mxu0
      %v3568 = vadd.f32 %v652, %v3567
      %3569 = vmatmul.bf16.gmra.mxu0 %v424
      %v3570 = vpop.f32.mrf.mxu0
      %v3571 = vadd.f32 %v652, %v3570
      %v3572 = vpop.f32.mrf.mxu0
      %v3573 = vadd.f32 %v652, %v3572
      %3574 = vmatmul.bf16.gmra.mxu0 %v426
      %v3575 = vpop.f32.mrf.mxu0
      %v3576 = vadd.f32 %v652, %v3575
      %v3577 = vpop.f32.mrf.mxu0
      %v3578 = vadd.f32 %v652, %v3577
      %3579 = vmatmul.bf16.gmra.mxu0 %v428
      %v3580 = vpop.f32.mrf.mxu0
      %v3581 = vadd.f32 %v652, %v3580
      %v3582 = vpop.f32.mrf.mxu0
      %v3583 = vadd.f32 %v652, %v3582
      %3584 = vmatmul.bf16.gmra.mxu0 %v430
      %v3585 = vpop.f32.mrf.mxu0
      %v3586 = vadd.f32 %v652, %v3585
      %v3587 = vpop.f32.mrf.mxu0
      %v3588 = vadd.f32 %v652, %v3587
      %3589 = vmatmul.bf16.gmra.mxu0 %v432
      %v3590 = vpop.f32.mrf.mxu0
      %v3591 = vadd.f32 %v652, %v3590
      %v3592 = vpop.f32.mrf.mxu0
      %v3593 = vadd.f32 %v652, %v3592
      %3594 = vmatmul.bf16.gmra.mxu0 %v434
      %v3595 = vpop.f32.mrf.mxu0
      %v3596 = vadd.f32 %v652, %v3595
      %v3597 = vpop.f32.mrf.mxu0
      %v3598 = vadd.f32 %v652, %v3597
      %3599 = vdwg.mxu0
      %3600 = vmatpush.bf16.msra.mxu0 0
      %3601 = vmatpush.bf16.msra.mxu0 0
      %3602 = vmatpush.bf16.msra.mxu0 0
      %3603 = vmatpush.bf16.msra.mxu0 0
      %3604 = vmatpush.bf16.msra.mxu0 0
      %3605 = vmatpush.bf16.msra.mxu0 0
      %3606 = vmatpush.bf16.msra.mxu0 %v1472
      %3607 = vmatpush.bf16.msra.mxu0 %v1452
      %3608 = vmatmul.bf16.gmra.mxu0 %v1684
      %v3609 = vpop.f32.mrf.mxu0
      %v3610 = vadd.f32 %v3521, %v3609
      %v3611 = vpop.f32.mrf.mxu0
      %v3612 = vadd.f32 %v3523, %v3611
      %3613 = vmatmul.bf16.gmra.mxu0 %v1687
      %v3614 = vpop.f32.mrf.mxu0
      %v3615 = vadd.f32 %v3526, %v3614
      %v3616 = vpop.f32.mrf.mxu0
      %v3617 = vadd.f32 %v3528, %v3616
      %3618 = vmatmul.bf16.gmra.mxu0 %v1690
      %v3619 = vpop.f32.mrf.mxu0
      %v3620 = vadd.f32 %v3531, %v3619
      %v3621 = vpop.f32.mrf.mxu0
      %v3622 = vadd.f32 %v3533, %v3621
      %3623 = vmatmul.bf16.gmra.mxu0 %v1693
      %v3624 = vpop.f32.mrf.mxu0
      %v3625 = vadd.f32 %v3536, %v3624
      %v3626 = vpop.f32.mrf.mxu0
      %v3627 = vadd.f32 %v3538, %v3626
      %3628 = vmatmul.bf16.gmra.mxu0 %v1696
      %v3629 = vpop.f32.mrf.mxu0
      %v3630 = vadd.f32 %v3541, %v3629
      %v3631 = vpop.f32.mrf.mxu0
      %v3632 = vadd.f32 %v3543, %v3631
      %3633 = vmatmul.bf16.gmra.mxu0 %v1699
      %v3634 = vpop.f32.mrf.mxu0
      %v3635 = vadd.f32 %v3546, %v3634
      %v3636 = vpop.f32.mrf.mxu0
      %v3637 = vadd.f32 %v3548, %v3636
      %3638 = vmatmul.bf16.gmra.mxu0 %v1702
      %v3639 = vpop.f32.mrf.mxu0
      %v3640 = vadd.f32 %v3551, %v3639
      %v3641 = vpop.f32.mrf.mxu0
      %v3642 = vadd.f32 %v3553, %v3641
      %3643 = vmatmul.bf16.gmra.mxu0 %v1705
      %v3644 = vpop.f32.mrf.mxu0
      %v3645 = vadd.f32 %v3556, %v3644
      %v3646 = vpop.f32.mrf.mxu0
      %v3647 = vadd.f32 %v3558, %v3646
      %3648 = vmatmul.bf16.gmra.mxu0 %v1708
      %v3649 = vpop.f32.mrf.mxu0
      %v3650 = vadd.f32 %v3561, %v3649
      %v3651 = vpop.f32.mrf.mxu0
      %v3652 = vadd.f32 %v3563, %v3651
      %3653 = vmatmul.bf16.gmra.mxu0 %v1711
      %v3654 = vpop.f32.mrf.mxu0
      %v3655 = vadd.f32 %v3566, %v3654
      %v3656 = vpop.f32.mrf.mxu0
      %v3657 = vadd.f32 %v3568, %v3656
      %3658 = vmatmul.bf16.gmra.mxu0 %v1714
      %v3659 = vpop.f32.mrf.mxu0
      %v3660 = vadd.f32 %v3571, %v3659
      %v3661 = vpop.f32.mrf.mxu0
      %v3662 = vadd.f32 %v3573, %v3661
      %3663 = vmatmul.bf16.gmra.mxu0 %v1717
      %v3664 = vpop.f32.mrf.mxu0
      %v3665 = vadd.f32 %v3576, %v3664
      %v3666 = vpop.f32.mrf.mxu0
      %v3667 = vadd.f32 %v3578, %v3666
      %3668 = vmatmul.bf16.gmra.mxu0 %v1720
      %v3669 = vpop.f32.mrf.mxu0
      %v3670 = vadd.f32 %v3581, %v3669
      %v3671 = vpop.f32.mrf.mxu0
      %v3672 = vadd.f32 %v3583, %v3671
      %3673 = vmatmul.bf16.gmra.mxu0 %v1723
      %v3674 = vpop.f32.mrf.mxu0
      %v3675 = vadd.f32 %v3586, %v3674
      %v3676 = vpop.f32.mrf.mxu0
      %v3677 = vadd.f32 %v3588, %v3676
      %3678 = vmatmul.bf16.gmra.mxu0 %v1726
      %v3679 = vpop.f32.mrf.mxu0
      %v3680 = vadd.f32 %v3591, %v3679
      %v3681 = vpop.f32.mrf.mxu0
      %v3682 = vadd.f32 %v3593, %v3681
      %3683 = vmatmul.bf16.gmra.mxu0 %v1729
      %v3684 = vpop.f32.mrf.mxu0
      %v3685 = vadd.f32 %v3596, %v3684
      %v3686 = vpop.f32.mrf.mxu0
      %v3687 = vadd.f32 %v3598, %v3686
      %3688 = vdwg.mxu0
      %3689 = vmatpush.bf16.msra.mxu0 %v1433
      %3690 = vmatpush.bf16.msra.mxu0 %v1413
      %3691 = vmatpush.bf16.msra.mxu0 %v1393
      %3692 = vmatpush.bf16.msra.mxu0 %v1373
      %3693 = vmatpush.bf16.msra.mxu0 %v1353
      %3694 = vmatpush.bf16.msra.mxu0 %v1333
      %3695 = vmatpush.bf16.msra.mxu0 %v1313
      %3696 = vmatpush.bf16.msra.mxu0 %v1293
      %3697 = vmatmul.bf16.gmra.mxu0 %v404
      %v3698 = vpop.f32.mrf.mxu0
      %v3699 = vadd.f32 %v653, %v3698
      %v3700 = vpop.f32.mrf.mxu0
      %v3701 = vadd.f32 %v653, %v3700
      %3702 = vmatmul.bf16.gmra.mxu0 %v406
      %v3703 = vpop.f32.mrf.mxu0
      %v3704 = vadd.f32 %v653, %v3703
      %v3705 = vpop.f32.mrf.mxu0
      %v3706 = vadd.f32 %v653, %v3705
      %3707 = vmatmul.bf16.gmra.mxu0 %v408
      %v3708 = vpop.f32.mrf.mxu0
      %v3709 = vadd.f32 %v653, %v3708
      %v3710 = vpop.f32.mrf.mxu0
      %v3711 = vadd.f32 %v653, %v3710
      %3712 = vmatmul.bf16.gmra.mxu0 %v410
      %v3713 = vpop.f32.mrf.mxu0
      %v3714 = vadd.f32 %v653, %v3713
      %v3715 = vpop.f32.mrf.mxu0
      %v3716 = vadd.f32 %v653, %v3715
      %3717 = vmatmul.bf16.gmra.mxu0 %v412
      %v3718 = vpop.f32.mrf.mxu0
      %v3719 = vadd.f32 %v653, %v3718
      %v3720 = vpop.f32.mrf.mxu0
      %v3721 = vadd.f32 %v653, %v3720
      %3722 = vmatmul.bf16.gmra.mxu0 %v414
      %v3723 = vpop.f32.mrf.mxu0
      %v3724 = vadd.f32 %v653, %v3723
      %v3725 = vpop.f32.mrf.mxu0
      %v3726 = vadd.f32 %v653, %v3725
      %3727 = vmatmul.bf16.gmra.mxu0 %v416
      %v3728 = vpop.f32.mrf.mxu0
      %v3729 = vadd.f32 %v653, %v3728
      %v3730 = vpop.f32.mrf.mxu0
      %v3731 = vadd.f32 %v653, %v3730
      %3732 = vmatmul.bf16.gmra.mxu0 %v418
      %v3733 = vpop.f32.mrf.mxu0
      %v3734 = vadd.f32 %v653, %v3733
      %v3735 = vpop.f32.mrf.mxu0
      %v3736 = vadd.f32 %v653, %v3735
      %3737 = vmatmul.bf16.gmra.mxu0 %v420
      %v3738 = vpop.f32.mrf.mxu0
      %v3739 = vadd.f32 %v653, %v3738
      %v3740 = vpop.f32.mrf.mxu0
      %v3741 = vadd.f32 %v653, %v3740
      %3742 = vmatmul.bf16.gmra.mxu0 %v422
      %v3743 = vpop.f32.mrf.mxu0
      %v3744 = vadd.f32 %v653, %v3743
      %v3745 = vpop.f32.mrf.mxu0
      %v3746 = vadd.f32 %v653, %v3745
      %3747 = vmatmul.bf16.gmra.mxu0 %v424
      %v3748 = vpop.f32.mrf.mxu0
      %v3749 = vadd.f32 %v653, %v3748
      %v3750 = vpop.f32.mrf.mxu0
      %v3751 = vadd.f32 %v653, %v3750
      %3752 = vmatmul.bf16.gmra.mxu0 %v426
      %v3753 = vpop.f32.mrf.mxu0
      %v3754 = vadd.f32 %v653, %v3753
      %v3755 = vpop.f32.mrf.mxu0
      %v3756 = vadd.f32 %v653, %v3755
      %3757 = vmatmul.bf16.gmra.mxu0 %v428
      %v3758 = vpop.f32.mrf.mxu0
      %v3759 = vadd.f32 %v653, %v3758
      %v3760 = vpop.f32.mrf.mxu0
      %v3761 = vadd.f32 %v653, %v3760
      %3762 = vmatmul.bf16.gmra.mxu0 %v430
      %v3763 = vpop.f32.mrf.mxu0
      %v3764 = vadd.f32 %v653, %v3763
      %v3765 = vpop.f32.mrf.mxu0
      %v3766 = vadd.f32 %v653, %v3765
      %3767 = vmatmul.bf16.gmra.mxu0 %v432
      %v3768 = vpop.f32.mrf.mxu0
      %v3769 = vadd.f32 %v653, %v3768
      %v3770 = vpop.f32.mrf.mxu0
      %v3771 = vadd.f32 %v653, %v3770
      %3772 = vmatmul.bf16.gmra.mxu0 %v434
      %v3773 = vpop.f32.mrf.mxu0
      %v3774 = vadd.f32 %v653, %v3773
      %v3775 = vpop.f32.mrf.mxu0
      %v3776 = vadd.f32 %v653, %v3775
      %3777 = vdwg.mxu0
      %3778 = vmatpush.bf16.msra.mxu0 0
      %3779 = vmatpush.bf16.msra.mxu0 0
      %3780 = vmatpush.bf16.msra.mxu0 0
      %3781 = vmatpush.bf16.msra.mxu0 0
      %3782 = vmatpush.bf16.msra.mxu0 0
      %3783 = vmatpush.bf16.msra.mxu0 0
      %3784 = vmatpush.bf16.msra.mxu0 %v1473
      %3785 = vmatpush.bf16.msra.mxu0 %v1453
      %3786 = vmatmul.bf16.gmra.mxu0 %v1684
      %v3787 = vpop.f32.mrf.mxu0
      %v3788 = vadd.f32 %v3699, %v3787
      %v3789 = vpop.f32.mrf.mxu0
      %v3790 = vadd.f32 %v3701, %v3789
      %3791 = vmatmul.bf16.gmra.mxu0 %v1687
      %v3792 = vpop.f32.mrf.mxu0
      %v3793 = vadd.f32 %v3704, %v3792
      %v3794 = vpop.f32.mrf.mxu0
      %v3795 = vadd.f32 %v3706, %v3794
      %3796 = vmatmul.bf16.gmra.mxu0 %v1690
      %v3797 = vpop.f32.mrf.mxu0
      %v3798 = vadd.f32 %v3709, %v3797
      %v3799 = vpop.f32.mrf.mxu0
      %v3800 = vadd.f32 %v3711, %v3799
      %3801 = vmatmul.bf16.gmra.mxu0 %v1693
      %v3802 = vpop.f32.mrf.mxu0
      %v3803 = vadd.f32 %v3714, %v3802
      %v3804 = vpop.f32.mrf.mxu0
      %v3805 = vadd.f32 %v3716, %v3804
      %3806 = vmatmul.bf16.gmra.mxu0 %v1696
      %v3807 = vpop.f32.mrf.mxu0
      %v3808 = vadd.f32 %v3719, %v3807
      %v3809 = vpop.f32.mrf.mxu0
      %v3810 = vadd.f32 %v3721, %v3809
      %3811 = vmatmul.bf16.gmra.mxu0 %v1699
      %v3812 = vpop.f32.mrf.mxu0
      %v3813 = vadd.f32 %v3724, %v3812
      %v3814 = vpop.f32.mrf.mxu0
      %v3815 = vadd.f32 %v3726, %v3814
      %3816 = vmatmul.bf16.gmra.mxu0 %v1702
      %v3817 = vpop.f32.mrf.mxu0
      %v3818 = vadd.f32 %v3729, %v3817
      %v3819 = vpop.f32.mrf.mxu0
      %v3820 = vadd.f32 %v3731, %v3819
      %3821 = vmatmul.bf16.gmra.mxu0 %v1705
      %v3822 = vpop.f32.mrf.mxu0
      %v3823 = vadd.f32 %v3734, %v3822
      %v3824 = vpop.f32.mrf.mxu0
      %v3825 = vadd.f32 %v3736, %v3824
      %3826 = vmatmul.bf16.gmra.mxu0 %v1708
      %v3827 = vpop.f32.mrf.mxu0
      %v3828 = vadd.f32 %v3739, %v3827
      %v3829 = vpop.f32.mrf.mxu0
      %v3830 = vadd.f32 %v3741, %v3829
      %3831 = vmatmul.bf16.gmra.mxu0 %v1711
      %v3832 = vpop.f32.mrf.mxu0
      %v3833 = vadd.f32 %v3744, %v3832
      %v3834 = vpop.f32.mrf.mxu0
      %v3835 = vadd.f32 %v3746, %v3834
      %3836 = vmatmul.bf16.gmra.mxu0 %v1714
      %v3837 = vpop.f32.mrf.mxu0
      %v3838 = vadd.f32 %v3749, %v3837
      %v3839 = vpop.f32.mrf.mxu0
      %v3840 = vadd.f32 %v3751, %v3839
      %3841 = vmatmul.bf16.gmra.mxu0 %v1717
      %v3842 = vpop.f32.mrf.mxu0
      %v3843 = vadd.f32 %v3754, %v3842
      %v3844 = vpop.f32.mrf.mxu0
      %v3845 = vadd.f32 %v3756, %v3844
      %3846 = vmatmul.bf16.gmra.mxu0 %v1720
      %v3847 = vpop.f32.mrf.mxu0
      %v3848 = vadd.f32 %v3759, %v3847
      %v3849 = vpop.f32.mrf.mxu0
      %v3850 = vadd.f32 %v3761, %v3849
      %3851 = vmatmul.bf16.gmra.mxu0 %v1723
      %v3852 = vpop.f32.mrf.mxu0
      %v3853 = vadd.f32 %v3764, %v3852
      %v3854 = vpop.f32.mrf.mxu0
      %v3855 = vadd.f32 %v3766, %v3854
      %3856 = vmatmul.bf16.gmra.mxu0 %v1726
      %v3857 = vpop.f32.mrf.mxu0
      %v3858 = vadd.f32 %v3769, %v3857
      %v3859 = vpop.f32.mrf.mxu0
      %v3860 = vadd.f32 %v3771, %v3859
      %3861 = vmatmul.bf16.gmra.mxu0 %v1729
      %v3862 = vpop.f32.mrf.mxu0
      %v3863 = vadd.f32 %v3774, %v3862
      %v3864 = vpop.f32.mrf.mxu0
      %v3865 = vadd.f32 %v3776, %v3864
      %3866 = vdwg.mxu0
      %3867 = vmatpush.bf16.msra.mxu0 %v1434
      %3868 = vmatpush.bf16.msra.mxu0 %v1414
      %3869 = vmatpush.bf16.msra.mxu0 %v1394
      %3870 = vmatpush.bf16.msra.mxu0 %v1374
      %3871 = vmatpush.bf16.msra.mxu0 %v1354
      %3872 = vmatpush.bf16.msra.mxu0 %v1334
      %3873 = vmatpush.bf16.msra.mxu0 %v1314
      %3874 = vmatpush.bf16.msra.mxu0 %v1294
      %3875 = vmatmul.bf16.gmra.mxu0 %v404
      %v3876 = vpop.f32.mrf.mxu0
      %v3877 = vadd.f32 %v654, %v3876
      %v3878 = vpop.f32.mrf.mxu0
      %v3879 = vadd.f32 %v654, %v3878
      %3880 = vmatmul.bf16.gmra.mxu0 %v406
      %v3881 = vpop.f32.mrf.mxu0
      %v3882 = vadd.f32 %v654, %v3881
      %v3883 = vpop.f32.mrf.mxu0
      %v3884 = vadd.f32 %v654, %v3883
      %3885 = vmatmul.bf16.gmra.mxu0 %v408
      %v3886 = vpop.f32.mrf.mxu0
      %v3887 = vadd.f32 %v654, %v3886
      %v3888 = vpop.f32.mrf.mxu0
      %v3889 = vadd.f32 %v654, %v3888
      %3890 = vmatmul.bf16.gmra.mxu0 %v410
      %v3891 = vpop.f32.mrf.mxu0
      %v3892 = vadd.f32 %v654, %v3891
      %v3893 = vpop.f32.mrf.mxu0
      %v3894 = vadd.f32 %v654, %v3893
      %3895 = vmatmul.bf16.gmra.mxu0 %v412
      %v3896 = vpop.f32.mrf.mxu0
      %v3897 = vadd.f32 %v654, %v3896
      %v3898 = vpop.f32.mrf.mxu0
      %v3899 = vadd.f32 %v654, %v3898
      %3900 = vmatmul.bf16.gmra.mxu0 %v414
      %v3901 = vpop.f32.mrf.mxu0
      %v3902 = vadd.f32 %v654, %v3901
      %v3903 = vpop.f32.mrf.mxu0
      %v3904 = vadd.f32 %v654, %v3903
      %3905 = vmatmul.bf16.gmra.mxu0 %v416
      %v3906 = vpop.f32.mrf.mxu0
      %v3907 = vadd.f32 %v654, %v3906
      %v3908 = vpop.f32.mrf.mxu0
      %v3909 = vadd.f32 %v654, %v3908
      %3910 = vmatmul.bf16.gmra.mxu0 %v418
      %v3911 = vpop.f32.mrf.mxu0
      %v3912 = vadd.f32 %v654, %v3911
      %v3913 = vpop.f32.mrf.mxu0
      %v3914 = vadd.f32 %v654, %v3913
      %3915 = vmatmul.bf16.gmra.mxu0 %v420
      %v3916 = vpop.f32.mrf.mxu0
      %v3917 = vadd.f32 %v654, %v3916
      %v3918 = vpop.f32.mrf.mxu0
      %v3919 = vadd.f32 %v654, %v3918
      %3920 = vmatmul.bf16.gmra.mxu0 %v422
      %v3921 = vpop.f32.mrf.mxu0
      %v3922 = vadd.f32 %v654, %v3921
      %v3923 = vpop.f32.mrf.mxu0
      %v3924 = vadd.f32 %v654, %v3923
      %3925 = vmatmul.bf16.gmra.mxu0 %v424
      %v3926 = vpop.f32.mrf.mxu0
      %v3927 = vadd.f32 %v654, %v3926
      %v3928 = vpop.f32.mrf.mxu0
      %v3929 = vadd.f32 %v654, %v3928
      %3930 = vmatmul.bf16.gmra.mxu0 %v426
      %v3931 = vpop.f32.mrf.mxu0
      %v3932 = vadd.f32 %v654, %v3931
      %v3933 = vpop.f32.mrf.mxu0
      %v3934 = vadd.f32 %v654, %v3933
      %3935 = vmatmul.bf16.gmra.mxu0 %v428
      %v3936 = vpop.f32.mrf.mxu0
      %v3937 = vadd.f32 %v654, %v3936
      %v3938 = vpop.f32.mrf.mxu0
      %v3939 = vadd.f32 %v654, %v3938
      %3940 = vmatmul.bf16.gmra.mxu0 %v430
      %v3941 = vpop.f32.mrf.mxu0
      %v3942 = vadd.f32 %v654, %v3941
      %v3943 = vpop.f32.mrf.mxu0
      %v3944 = vadd.f32 %v654, %v3943
      %3945 = vmatmul.bf16.gmra.mxu0 %v432
      %v3946 = vpop.f32.mrf.mxu0
      %v3947 = vadd.f32 %v654, %v3946
      %v3948 = vpop.f32.mrf.mxu0
      %v3949 = vadd.f32 %v654, %v3948
      %3950 = vmatmul.bf16.gmra.mxu0 %v434
      %v3951 = vpop.f32.mrf.mxu0
      %v3952 = vadd.f32 %v654, %v3951
      %v3953 = vpop.f32.mrf.mxu0
      %v3954 = vadd.f32 %v654, %v3953
      %3955 = vdwg.mxu0
      %3956 = vmatpush.bf16.msra.mxu0 0
      %3957 = vmatpush.bf16.msra.mxu0 0
      %3958 = vmatpush.bf16.msra.mxu0 0
      %3959 = vmatpush.bf16.msra.mxu0 0
      %3960 = vmatpush.bf16.msra.mxu0 0
      %3961 = vmatpush.bf16.msra.mxu0 0
      %3962 = vmatpush.bf16.msra.mxu0 %v1474
      %3963 = vmatpush.bf16.msra.mxu0 %v1454
      %3964 = vmatmul.bf16.gmra.mxu0 %v1684
      %v3965 = vpop.f32.mrf.mxu0
      %v3966 = vadd.f32 %v3877, %v3965
      %v3967 = vpop.f32.mrf.mxu0
      %v3968 = vadd.f32 %v3879, %v3967
      %3969 = vmatmul.bf16.gmra.mxu0 %v1687
      %v3970 = vpop.f32.mrf.mxu0
      %v3971 = vadd.f32 %v3882, %v3970
      %v3972 = vpop.f32.mrf.mxu0
      %v3973 = vadd.f32 %v3884, %v3972
      %3974 = vmatmul.bf16.gmra.mxu0 %v1690
      %v3975 = vpop.f32.mrf.mxu0
      %v3976 = vadd.f32 %v3887, %v3975
      %v3977 = vpop.f32.mrf.mxu0
      %v3978 = vadd.f32 %v3889, %v3977
      %3979 = vmatmul.bf16.gmra.mxu0 %v1693
      %v3980 = vpop.f32.mrf.mxu0
      %v3981 = vadd.f32 %v3892, %v3980
      %v3982 = vpop.f32.mrf.mxu0
      %v3983 = vadd.f32 %v3894, %v3982
      %3984 = vmatmul.bf16.gmra.mxu0 %v1696
      %v3985 = vpop.f32.mrf.mxu0
      %v3986 = vadd.f32 %v3897, %v3985
      %v3987 = vpop.f32.mrf.mxu0
      %v3988 = vadd.f32 %v3899, %v3987
      %3989 = vmatmul.bf16.gmra.mxu0 %v1699
      %v3990 = vpop.f32.mrf.mxu0
      %v3991 = vadd.f32 %v3902, %v3990
      %v3992 = vpop.f32.mrf.mxu0
      %v3993 = vadd.f32 %v3904, %v3992
      %3994 = vmatmul.bf16.gmra.mxu0 %v1702
      %v3995 = vpop.f32.mrf.mxu0
      %v3996 = vadd.f32 %v3907, %v3995
      %v3997 = vpop.f32.mrf.mxu0
      %v3998 = vadd.f32 %v3909, %v3997
      %3999 = vmatmul.bf16.gmra.mxu0 %v1705
      %v4000 = vpop.f32.mrf.mxu0
      %v4001 = vadd.f32 %v3912, %v4000
      %v4002 = vpop.f32.mrf.mxu0
      %v4003 = vadd.f32 %v3914, %v4002
      %4004 = vmatmul.bf16.gmra.mxu0 %v1708
      %v4005 = vpop.f32.mrf.mxu0
      %v4006 = vadd.f32 %v3917, %v4005
      %v4007 = vpop.f32.mrf.mxu0
      %v4008 = vadd.f32 %v3919, %v4007
      %4009 = vmatmul.bf16.gmra.mxu0 %v1711
      %v4010 = vpop.f32.mrf.mxu0
      %v4011 = vadd.f32 %v3922, %v4010
      %v4012 = vpop.f32.mrf.mxu0
      %v4013 = vadd.f32 %v3924, %v4012
      %4014 = vmatmul.bf16.gmra.mxu0 %v1714
      %v4015 = vpop.f32.mrf.mxu0
      %v4016 = vadd.f32 %v3927, %v4015
      %v4017 = vpop.f32.mrf.mxu0
      %v4018 = vadd.f32 %v3929, %v4017
      %4019 = vmatmul.bf16.gmra.mxu0 %v1717
      %v4020 = vpop.f32.mrf.mxu0
      %v4021 = vadd.f32 %v3932, %v4020
      %v4022 = vpop.f32.mrf.mxu0
      %v4023 = vadd.f32 %v3934, %v4022
      %4024 = vmatmul.bf16.gmra.mxu0 %v1720
      %v4025 = vpop.f32.mrf.mxu0
      %v4026 = vadd.f32 %v3937, %v4025
      %v4027 = vpop.f32.mrf.mxu0
      %v4028 = vadd.f32 %v3939, %v4027
      %4029 = vmatmul.bf16.gmra.mxu0 %v1723
      %v4030 = vpop.f32.mrf.mxu0
      %v4031 = vadd.f32 %v3942, %v4030
      %v4032 = vpop.f32.mrf.mxu0
      %v4033 = vadd.f32 %v3944, %v4032
      %4034 = vmatmul.bf16.gmra.mxu0 %v1726
      %v4035 = vpop.f32.mrf.mxu0
      %v4036 = vadd.f32 %v3947, %v4035
      %v4037 = vpop.f32.mrf.mxu0
      %v4038 = vadd.f32 %v3949, %v4037
      %4039 = vmatmul.bf16.gmra.mxu0 %v1729
      %v4040 = vpop.f32.mrf.mxu0
      %v4041 = vadd.f32 %v3952, %v4040
      %v4042 = vpop.f32.mrf.mxu0
      %v4043 = vadd.f32 %v3954, %v4042
      %4044 = vdwg.mxu0
      %4045 = vmatpush.bf16.msra.mxu0 %v1435
      %4046 = vmatpush.bf16.msra.mxu0 %v1415
      %4047 = vmatpush.bf16.msra.mxu0 %v1395
      %4048 = vmatpush.bf16.msra.mxu0 %v1375
      %4049 = vmatpush.bf16.msra.mxu0 %v1355
      %4050 = vmatpush.bf16.msra.mxu0 %v1335
      %4051 = vmatpush.bf16.msra.mxu0 %v1315
      %4052 = vmatpush.bf16.msra.mxu0 %v1295
      %4053 = vmatmul.bf16.gmra.mxu0 %v404
      %v4054 = vpop.f32.mrf.mxu0
      %v4055 = vadd.f32 %v655, %v4054
      %v4056 = vpop.f32.mrf.mxu0
      %v4057 = vadd.f32 %v655, %v4056
      %4058 = vmatmul.bf16.gmra.mxu0 %v406
      %v4059 = vpop.f32.mrf.mxu0
      %v4060 = vadd.f32 %v655, %v4059
      %v4061 = vpop.f32.mrf.mxu0
      %v4062 = vadd.f32 %v655, %v4061
      %4063 = vmatmul.bf16.gmra.mxu0 %v408
      %v4064 = vpop.f32.mrf.mxu0
      %v4065 = vadd.f32 %v655, %v4064
      %v4066 = vpop.f32.mrf.mxu0
      %v4067 = vadd.f32 %v655, %v4066
      %4068 = vmatmul.bf16.gmra.mxu0 %v410
      %v4069 = vpop.f32.mrf.mxu0
      %v4070 = vadd.f32 %v655, %v4069
      %v4071 = vpop.f32.mrf.mxu0
      %v4072 = vadd.f32 %v655, %v4071
      %4073 = vmatmul.bf16.gmra.mxu0 %v412
      %v4074 = vpop.f32.mrf.mxu0
      %v4075 = vadd.f32 %v655, %v4074
      %v4076 = vpop.f32.mrf.mxu0
      %v4077 = vadd.f32 %v655, %v4076
      %4078 = vmatmul.bf16.gmra.mxu0 %v414
      %v4079 = vpop.f32.mrf.mxu0
      %v4080 = vadd.f32 %v655, %v4079
      %v4081 = vpop.f32.mrf.mxu0
      %v4082 = vadd.f32 %v655, %v4081
      %4083 = vmatmul.bf16.gmra.mxu0 %v416
      %v4084 = vpop.f32.mrf.mxu0
      %v4085 = vadd.f32 %v655, %v4084
      %v4086 = vpop.f32.mrf.mxu0
      %v4087 = vadd.f32 %v655, %v4086
      %4088 = vmatmul.bf16.gmra.mxu0 %v418
      %v4089 = vpop.f32.mrf.mxu0
      %v4090 = vadd.f32 %v655, %v4089
      %v4091 = vpop.f32.mrf.mxu0
      %v4092 = vadd.f32 %v655, %v4091
      %4093 = vmatmul.bf16.gmra.mxu0 %v420
      %v4094 = vpop.f32.mrf.mxu0
      %v4095 = vadd.f32 %v655, %v4094
      %v4096 = vpop.f32.mrf.mxu0
      %v4097 = vadd.f32 %v655, %v4096
      %4098 = vmatmul.bf16.gmra.mxu0 %v422
      %v4099 = vpop.f32.mrf.mxu0
      %v4100 = vadd.f32 %v655, %v4099
      %v4101 = vpop.f32.mrf.mxu0
      %v4102 = vadd.f32 %v655, %v4101
      %4103 = vmatmul.bf16.gmra.mxu0 %v424
      %v4104 = vpop.f32.mrf.mxu0
      %v4105 = vadd.f32 %v655, %v4104
      %v4106 = vpop.f32.mrf.mxu0
      %v4107 = vadd.f32 %v655, %v4106
      %4108 = vmatmul.bf16.gmra.mxu0 %v426
      %v4109 = vpop.f32.mrf.mxu0
      %v4110 = vadd.f32 %v655, %v4109
      %v4111 = vpop.f32.mrf.mxu0
      %v4112 = vadd.f32 %v655, %v4111
      %4113 = vmatmul.bf16.gmra.mxu0 %v428
      %v4114 = vpop.f32.mrf.mxu0
      %v4115 = vadd.f32 %v655, %v4114
      %v4116 = vpop.f32.mrf.mxu0
      %v4117 = vadd.f32 %v655, %v4116
      %4118 = vmatmul.bf16.gmra.mxu0 %v430
      %v4119 = vpop.f32.mrf.mxu0
      %v4120 = vadd.f32 %v655, %v4119
      %v4121 = vpop.f32.mrf.mxu0
      %v4122 = vadd.f32 %v655, %v4121
      %4123 = vmatmul.bf16.gmra.mxu0 %v432
      %v4124 = vpop.f32.mrf.mxu0
      %v4125 = vadd.f32 %v655, %v4124
      %v4126 = vpop.f32.mrf.mxu0
      %v4127 = vadd.f32 %v655, %v4126
      %4128 = vmatmul.bf16.gmra.mxu0 %v434
      %v4129 = vpop.f32.mrf.mxu0
      %v4130 = vadd.f32 %v655, %v4129
      %v4131 = vpop.f32.mrf.mxu0
      %v4132 = vadd.f32 %v655, %v4131
      %4133 = vdwg.mxu0
      %4134 = vmatpush.bf16.msra.mxu0 0
      %4135 = vmatpush.bf16.msra.mxu0 0
      %4136 = vmatpush.bf16.msra.mxu0 0
      %4137 = vmatpush.bf16.msra.mxu0 0
      %4138 = vmatpush.bf16.msra.mxu0 0
      %4139 = vmatpush.bf16.msra.mxu0 0
      %4140 = vmatpush.bf16.msra.mxu0 %v1475
      %4141 = vmatpush.bf16.msra.mxu0 %v1455
      %4142 = vmatmul.bf16.gmra.mxu0 %v1684
      %v4143 = vpop.f32.mrf.mxu0
      %v4144 = vadd.f32 %v4055, %v4143
      %v4145 = vpop.f32.mrf.mxu0
      %v4146 = vadd.f32 %v4057, %v4145
      %4147 = vmatmul.bf16.gmra.mxu0 %v1687
      %v4148 = vpop.f32.mrf.mxu0
      %v4149 = vadd.f32 %v4060, %v4148
      %v4150 = vpop.f32.mrf.mxu0
      %v4151 = vadd.f32 %v4062, %v4150
      %4152 = vmatmul.bf16.gmra.mxu0 %v1690
      %v4153 = vpop.f32.mrf.mxu0
      %v4154 = vadd.f32 %v4065, %v4153
      %v4155 = vpop.f32.mrf.mxu0
      %v4156 = vadd.f32 %v4067, %v4155
      %4157 = vmatmul.bf16.gmra.mxu0 %v1693
      %v4158 = vpop.f32.mrf.mxu0
      %v4159 = vadd.f32 %v4070, %v4158
      %v4160 = vpop.f32.mrf.mxu0
      %v4161 = vadd.f32 %v4072, %v4160
      %4162 = vmatmul.bf16.gmra.mxu0 %v1696
      %v4163 = vpop.f32.mrf.mxu0
      %v4164 = vadd.f32 %v4075, %v4163
      %v4165 = vpop.f32.mrf.mxu0
      %v4166 = vadd.f32 %v4077, %v4165
      %4167 = vmatmul.bf16.gmra.mxu0 %v1699
      %v4168 = vpop.f32.mrf.mxu0
      %v4169 = vadd.f32 %v4080, %v4168
      %v4170 = vpop.f32.mrf.mxu0
      %v4171 = vadd.f32 %v4082, %v4170
      %4172 = vmatmul.bf16.gmra.mxu0 %v1702
      %v4173 = vpop.f32.mrf.mxu0
      %v4174 = vadd.f32 %v4085, %v4173
      %v4175 = vpop.f32.mrf.mxu0
      %v4176 = vadd.f32 %v4087, %v4175
      %4177 = vmatmul.bf16.gmra.mxu0 %v1705
      %v4178 = vpop.f32.mrf.mxu0
      %v4179 = vadd.f32 %v4090, %v4178
      %v4180 = vpop.f32.mrf.mxu0
      %v4181 = vadd.f32 %v4092, %v4180
      %4182 = vmatmul.bf16.gmra.mxu0 %v1708
      %v4183 = vpop.f32.mrf.mxu0
      %v4184 = vadd.f32 %v4095, %v4183
      %v4185 = vpop.f32.mrf.mxu0
      %v4186 = vadd.f32 %v4097, %v4185
      %4187 = vmatmul.bf16.gmra.mxu0 %v1711
      %v4188 = vpop.f32.mrf.mxu0
      %v4189 = vadd.f32 %v4100, %v4188
      %v4190 = vpop.f32.mrf.mxu0
      %v4191 = vadd.f32 %v4102, %v4190
      %4192 = vmatmul.bf16.gmra.mxu0 %v1714
      %v4193 = vpop.f32.mrf.mxu0
      %v4194 = vadd.f32 %v4105, %v4193
      %v4195 = vpop.f32.mrf.mxu0
      %v4196 = vadd.f32 %v4107, %v4195
      %4197 = vmatmul.bf16.gmra.mxu0 %v1717
      %v4198 = vpop.f32.mrf.mxu0
      %v4199 = vadd.f32 %v4110, %v4198
      %v4200 = vpop.f32.mrf.mxu0
      %v4201 = vadd.f32 %v4112, %v4200
      %4202 = vmatmul.bf16.gmra.mxu0 %v1720
      %v4203 = vpop.f32.mrf.mxu0
      %v4204 = vadd.f32 %v4115, %v4203
      %v4205 = vpop.f32.mrf.mxu0
      %v4206 = vadd.f32 %v4117, %v4205
      %4207 = vmatmul.bf16.gmra.mxu0 %v1723
      %v4208 = vpop.f32.mrf.mxu0
      %v4209 = vadd.f32 %v4120, %v4208
      %v4210 = vpop.f32.mrf.mxu0
      %v4211 = vadd.f32 %v4122, %v4210
      %4212 = vmatmul.bf16.gmra.mxu0 %v1726
      %v4213 = vpop.f32.mrf.mxu0
      %v4214 = vadd.f32 %v4125, %v4213
      %v4215 = vpop.f32.mrf.mxu0
      %v4216 = vadd.f32 %v4127, %v4215
      %4217 = vmatmul.bf16.gmra.mxu0 %v1729
      %v4218 = vpop.f32.mrf.mxu0
      %v4219 = vadd.f32 %v4130, %v4218
      %v4220 = vpop.f32.mrf.mxu0
      %v4221 = vadd.f32 %v4132, %v4220
      %4222 = vdwg.mxu0
      %4223 = vmatpush.bf16.msra.mxu0 %v1436
      %4224 = vmatpush.bf16.msra.mxu0 %v1416
      %4225 = vmatpush.bf16.msra.mxu0 %v1396
      %4226 = vmatpush.bf16.msra.mxu0 %v1376
      %4227 = vmatpush.bf16.msra.mxu0 %v1356
      %4228 = vmatpush.bf16.msra.mxu0 %v1336
      %4229 = vmatpush.bf16.msra.mxu0 %v1316
      %4230 = vmatpush.bf16.msra.mxu0 %v1296
      %4231 = vmatmul.bf16.gmra.mxu0 %v404
      %v4232 = vpop.f32.mrf.mxu0
      %v4233 = vadd.f32 %v656, %v4232
      %v4234 = vpop.f32.mrf.mxu0
      %v4235 = vadd.f32 %v656, %v4234
      %4236 = vmatmul.bf16.gmra.mxu0 %v406
      %v4237 = vpop.f32.mrf.mxu0
      %v4238 = vadd.f32 %v656, %v4237
      %v4239 = vpop.f32.mrf.mxu0
      %v4240 = vadd.f32 %v656, %v4239
      %4241 = vmatmul.bf16.gmra.mxu0 %v408
      %v4242 = vpop.f32.mrf.mxu0
      %v4243 = vadd.f32 %v656, %v4242
      %v4244 = vpop.f32.mrf.mxu0
      %v4245 = vadd.f32 %v656, %v4244
      %4246 = vmatmul.bf16.gmra.mxu0 %v410
      %v4247 = vpop.f32.mrf.mxu0
      %v4248 = vadd.f32 %v656, %v4247
      %v4249 = vpop.f32.mrf.mxu0
      %v4250 = vadd.f32 %v656, %v4249
      %4251 = vmatmul.bf16.gmra.mxu0 %v412
      %v4252 = vpop.f32.mrf.mxu0
      %v4253 = vadd.f32 %v656, %v4252
      %v4254 = vpop.f32.mrf.mxu0
      %v4255 = vadd.f32 %v656, %v4254
      %4256 = vmatmul.bf16.gmra.mxu0 %v414
      %v4257 = vpop.f32.mrf.mxu0
      %v4258 = vadd.f32 %v656, %v4257
      %v4259 = vpop.f32.mrf.mxu0
      %v4260 = vadd.f32 %v656, %v4259
      %4261 = vmatmul.bf16.gmra.mxu0 %v416
      %v4262 = vpop.f32.mrf.mxu0
      %v4263 = vadd.f32 %v656, %v4262
      %v4264 = vpop.f32.mrf.mxu0
      %v4265 = vadd.f32 %v656, %v4264
      %4266 = vmatmul.bf16.gmra.mxu0 %v418
      %v4267 = vpop.f32.mrf.mxu0
      %v4268 = vadd.f32 %v656, %v4267
      %v4269 = vpop.f32.mrf.mxu0
      %v4270 = vadd.f32 %v656, %v4269
      %4271 = vmatmul.bf16.gmra.mxu0 %v420
      %v4272 = vpop.f32.mrf.mxu0
      %v4273 = vadd.f32 %v656, %v4272
      %v4274 = vpop.f32.mrf.mxu0
      %v4275 = vadd.f32 %v656, %v4274
      %4276 = vmatmul.bf16.gmra.mxu0 %v422
      %v4277 = vpop.f32.mrf.mxu0
      %v4278 = vadd.f32 %v656, %v4277
      %v4279 = vpop.f32.mrf.mxu0
      %v4280 = vadd.f32 %v656, %v4279
      %4281 = vmatmul.bf16.gmra.mxu0 %v424
      %v4282 = vpop.f32.mrf.mxu0
      %v4283 = vadd.f32 %v656, %v4282
      %v4284 = vpop.f32.mrf.mxu0
      %v4285 = vadd.f32 %v656, %v4284
      %4286 = vmatmul.bf16.gmra.mxu0 %v426
      %v4287 = vpop.f32.mrf.mxu0
      %v4288 = vadd.f32 %v656, %v4287
      %v4289 = vpop.f32.mrf.mxu0
      %v4290 = vadd.f32 %v656, %v4289
      %4291 = vmatmul.bf16.gmra.mxu0 %v428
      %v4292 = vpop.f32.mrf.mxu0
      %v4293 = vadd.f32 %v656, %v4292
      %v4294 = vpop.f32.mrf.mxu0
      %v4295 = vadd.f32 %v656, %v4294
      %4296 = vmatmul.bf16.gmra.mxu0 %v430
      %v4297 = vpop.f32.mrf.mxu0
      %v4298 = vadd.f32 %v656, %v4297
      %v4299 = vpop.f32.mrf.mxu0
      %v4300 = vadd.f32 %v656, %v4299
      %4301 = vmatmul.bf16.gmra.mxu0 %v432
      %v4302 = vpop.f32.mrf.mxu0
      %v4303 = vadd.f32 %v656, %v4302
      %v4304 = vpop.f32.mrf.mxu0
      %v4305 = vadd.f32 %v656, %v4304
      %4306 = vmatmul.bf16.gmra.mxu0 %v434
      %v4307 = vpop.f32.mrf.mxu0
      %v4308 = vadd.f32 %v656, %v4307
      %v4309 = vpop.f32.mrf.mxu0
      %v4310 = vadd.f32 %v656, %v4309
      %4311 = vdwg.mxu0
      %4312 = vmatpush.bf16.msra.mxu0 0
      %4313 = vmatpush.bf16.msra.mxu0 0
      %4314 = vmatpush.bf16.msra.mxu0 0
      %4315 = vmatpush.bf16.msra.mxu0 0
      %4316 = vmatpush.bf16.msra.mxu0 0
      %4317 = vmatpush.bf16.msra.mxu0 0
      %4318 = vmatpush.bf16.msra.mxu0 %v1476
      %4319 = vmatpush.bf16.msra.mxu0 %v1456
      %4320 = vmatmul.bf16.gmra.mxu0 %v1684
      %v4321 = vpop.f32.mrf.mxu0
      %v4322 = vadd.f32 %v4233, %v4321
      %v4323 = vpop.f32.mrf.mxu0
      %v4324 = vadd.f32 %v4235, %v4323
      %4325 = vmatmul.bf16.gmra.mxu0 %v1687
      %v4326 = vpop.f32.mrf.mxu0
      %v4327 = vadd.f32 %v4238, %v4326
      %v4328 = vpop.f32.mrf.mxu0
      %v4329 = vadd.f32 %v4240, %v4328
      %4330 = vmatmul.bf16.gmra.mxu0 %v1690
      %v4331 = vpop.f32.mrf.mxu0
      %v4332 = vadd.f32 %v4243, %v4331
      %v4333 = vpop.f32.mrf.mxu0
      %v4334 = vadd.f32 %v4245, %v4333
      %4335 = vmatmul.bf16.gmra.mxu0 %v1693
      %v4336 = vpop.f32.mrf.mxu0
      %v4337 = vadd.f32 %v4248, %v4336
      %v4338 = vpop.f32.mrf.mxu0
      %v4339 = vadd.f32 %v4250, %v4338
      %4340 = vmatmul.bf16.gmra.mxu0 %v1696
      %v4341 = vpop.f32.mrf.mxu0
      %v4342 = vadd.f32 %v4253, %v4341
      %v4343 = vpop.f32.mrf.mxu0
      %v4344 = vadd.f32 %v4255, %v4343
      %4345 = vmatmul.bf16.gmra.mxu0 %v1699
      %v4346 = vpop.f32.mrf.mxu0
      %v4347 = vadd.f32 %v4258, %v4346
      %v4348 = vpop.f32.mrf.mxu0
      %v4349 = vadd.f32 %v4260, %v4348
      %4350 = vmatmul.bf16.gmra.mxu0 %v1702
      %v4351 = vpop.f32.mrf.mxu0
      %v4352 = vadd.f32 %v4263, %v4351
      %v4353 = vpop.f32.mrf.mxu0
      %v4354 = vadd.f32 %v4265, %v4353
      %4355 = vmatmul.bf16.gmra.mxu0 %v1705
      %v4356 = vpop.f32.mrf.mxu0
      %v4357 = vadd.f32 %v4268, %v4356
      %v4358 = vpop.f32.mrf.mxu0
      %v4359 = vadd.f32 %v4270, %v4358
      %4360 = vmatmul.bf16.gmra.mxu0 %v1708
      %v4361 = vpop.f32.mrf.mxu0
      %v4362 = vadd.f32 %v4273, %v4361
      %v4363 = vpop.f32.mrf.mxu0
      %v4364 = vadd.f32 %v4275, %v4363
      %4365 = vmatmul.bf16.gmra.mxu0 %v1711
      %v4366 = vpop.f32.mrf.mxu0
      %v4367 = vadd.f32 %v4278, %v4366
      %v4368 = vpop.f32.mrf.mxu0
      %v4369 = vadd.f32 %v4280, %v4368
      %4370 = vmatmul.bf16.gmra.mxu0 %v1714
      %v4371 = vpop.f32.mrf.mxu0
      %v4372 = vadd.f32 %v4283, %v4371
      %v4373 = vpop.f32.mrf.mxu0
      %v4374 = vadd.f32 %v4285, %v4373
      %4375 = vmatmul.bf16.gmra.mxu0 %v1717
      %v4376 = vpop.f32.mrf.mxu0
      %v4377 = vadd.f32 %v4288, %v4376
      %v4378 = vpop.f32.mrf.mxu0
      %v4379 = vadd.f32 %v4290, %v4378
      %4380 = vmatmul.bf16.gmra.mxu0 %v1720
      %v4381 = vpop.f32.mrf.mxu0
      %v4382 = vadd.f32 %v4293, %v4381
      %v4383 = vpop.f32.mrf.mxu0
      %v4384 = vadd.f32 %v4295, %v4383
      %4385 = vmatmul.bf16.gmra.mxu0 %v1723
      %v4386 = vpop.f32.mrf.mxu0
      %v4387 = vadd.f32 %v4298, %v4386
      %v4388 = vpop.f32.mrf.mxu0
      %v4389 = vadd.f32 %v4300, %v4388
      %4390 = vmatmul.bf16.gmra.mxu0 %v1726
      %v4391 = vpop.f32.mrf.mxu0
      %v4392 = vadd.f32 %v4303, %v4391
      %v4393 = vpop.f32.mrf.mxu0
      %v4394 = vadd.f32 %v4305, %v4393
      %4395 = vmatmul.bf16.gmra.mxu0 %v1729
      %v4396 = vpop.f32.mrf.mxu0
      %v4397 = vadd.f32 %v4308, %v4396
      %v4398 = vpop.f32.mrf.mxu0
      %v4399 = vadd.f32 %v4310, %v4398
      %4400 = vdwg.mxu0
      %4401 = vmatpush.bf16.msra.mxu0 %v1437
      %4402 = vmatpush.bf16.msra.mxu0 %v1417
      %4403 = vmatpush.bf16.msra.mxu0 %v1397
      %4404 = vmatpush.bf16.msra.mxu0 %v1377
      %4405 = vmatpush.bf16.msra.mxu0 %v1357
      %4406 = vmatpush.bf16.msra.mxu0 %v1337
      %4407 = vmatpush.bf16.msra.mxu0 %v1317
      %4408 = vmatpush.bf16.msra.mxu0 %v1297
      %4409 = vmatmul.bf16.gmra.mxu0 %v404
      %v4410 = vpop.f32.mrf.mxu0
      %v4411 = vadd.f32 %v657, %v4410
      %v4412 = vpop.f32.mrf.mxu0
      %v4413 = vadd.f32 %v657, %v4412
      %4414 = vmatmul.bf16.gmra.mxu0 %v406
      %v4415 = vpop.f32.mrf.mxu0
      %v4416 = vadd.f32 %v657, %v4415
      %v4417 = vpop.f32.mrf.mxu0
      %v4418 = vadd.f32 %v657, %v4417
      %4419 = vmatmul.bf16.gmra.mxu0 %v408
      %v4420 = vpop.f32.mrf.mxu0
      %v4421 = vadd.f32 %v657, %v4420
      %v4422 = vpop.f32.mrf.mxu0
      %v4423 = vadd.f32 %v657, %v4422
      %4424 = vmatmul.bf16.gmra.mxu0 %v410
      %v4425 = vpop.f32.mrf.mxu0
      %v4426 = vadd.f32 %v657, %v4425
      %v4427 = vpop.f32.mrf.mxu0
      %v4428 = vadd.f32 %v657, %v4427
      %4429 = vmatmul.bf16.gmra.mxu0 %v412
      %v4430 = vpop.f32.mrf.mxu0
      %v4431 = vadd.f32 %v657, %v4430
      %v4432 = vpop.f32.mrf.mxu0
      %v4433 = vadd.f32 %v657, %v4432
      %4434 = vmatmul.bf16.gmra.mxu0 %v414
      %v4435 = vpop.f32.mrf.mxu0
      %v4436 = vadd.f32 %v657, %v4435
      %v4437 = vpop.f32.mrf.mxu0
      %v4438 = vadd.f32 %v657, %v4437
      %4439 = vmatmul.bf16.gmra.mxu0 %v416
      %v4440 = vpop.f32.mrf.mxu0
      %v4441 = vadd.f32 %v657, %v4440
      %v4442 = vpop.f32.mrf.mxu0
      %v4443 = vadd.f32 %v657, %v4442
      %4444 = vmatmul.bf16.gmra.mxu0 %v418
      %v4445 = vpop.f32.mrf.mxu0
      %v4446 = vadd.f32 %v657, %v4445
      %v4447 = vpop.f32.mrf.mxu0
      %v4448 = vadd.f32 %v657, %v4447
      %4449 = vmatmul.bf16.gmra.mxu0 %v420
      %v4450 = vpop.f32.mrf.mxu0
      %v4451 = vadd.f32 %v657, %v4450
      %v4452 = vpop.f32.mrf.mxu0
      %v4453 = vadd.f32 %v657, %v4452
      %4454 = vmatmul.bf16.gmra.mxu0 %v422
      %v4455 = vpop.f32.mrf.mxu0
      %v4456 = vadd.f32 %v657, %v4455
      %v4457 = vpop.f32.mrf.mxu0
      %v4458 = vadd.f32 %v657, %v4457
      %4459 = vmatmul.bf16.gmra.mxu0 %v424
      %v4460 = vpop.f32.mrf.mxu0
      %v4461 = vadd.f32 %v657, %v4460
      %v4462 = vpop.f32.mrf.mxu0
      %v4463 = vadd.f32 %v657, %v4462
      %4464 = vmatmul.bf16.gmra.mxu0 %v426
      %v4465 = vpop.f32.mrf.mxu0
      %v4466 = vadd.f32 %v657, %v4465
      %v4467 = vpop.f32.mrf.mxu0
      %v4468 = vadd.f32 %v657, %v4467
      %4469 = vmatmul.bf16.gmra.mxu0 %v428
      %v4470 = vpop.f32.mrf.mxu0
      %v4471 = vadd.f32 %v657, %v4470
      %v4472 = vpop.f32.mrf.mxu0
      %v4473 = vadd.f32 %v657, %v4472
      %4474 = vmatmul.bf16.gmra.mxu0 %v430
      %v4475 = vpop.f32.mrf.mxu0
      %v4476 = vadd.f32 %v657, %v4475
      %v4477 = vpop.f32.mrf.mxu0
      %v4478 = vadd.f32 %v657, %v4477
      %4479 = vmatmul.bf16.gmra.mxu0 %v432
      %v4480 = vpop.f32.mrf.mxu0
      %v4481 = vadd.f32 %v657, %v4480
      %v4482 = vpop.f32.mrf.mxu0
      %v4483 = vadd.f32 %v657, %v4482
      %4484 = vmatmul.bf16.gmra.mxu0 %v434
      %v4485 = vpop.f32.mrf.mxu0
      %v4486 = vadd.f32 %v657, %v4485
      %v4487 = vpop.f32.mrf.mxu0
      %v4488 = vadd.f32 %v657, %v4487
      %4489 = vdwg.mxu0
      %4490 = vmatpush.bf16.msra.mxu0 0
      %4491 = vmatpush.bf16.msra.mxu0 0
      %4492 = vmatpush.bf16.msra.mxu0 0
      %4493 = vmatpush.bf16.msra.mxu0 0
      %4494 = vmatpush.bf16.msra.mxu0 0
      %4495 = vmatpush.bf16.msra.mxu0 0
      %4496 = vmatpush.bf16.msra.mxu0 %v1477
      %4497 = vmatpush.bf16.msra.mxu0 %v1457
      %4498 = vmatmul.bf16.gmra.mxu0 %v1684
      %v4499 = vpop.f32.mrf.mxu0
      %v4500 = vadd.f32 %v4411, %v4499
      %v4501 = vpop.f32.mrf.mxu0
      %v4502 = vadd.f32 %v4413, %v4501
      %4503 = vmatmul.bf16.gmra.mxu0 %v1687
      %v4504 = vpop.f32.mrf.mxu0
      %v4505 = vadd.f32 %v4416, %v4504
      %v4506 = vpop.f32.mrf.mxu0
      %v4507 = vadd.f32 %v4418, %v4506
      %4508 = vmatmul.bf16.gmra.mxu0 %v1690
      %v4509 = vpop.f32.mrf.mxu0
      %v4510 = vadd.f32 %v4421, %v4509
      %v4511 = vpop.f32.mrf.mxu0
      %v4512 = vadd.f32 %v4423, %v4511
      %4513 = vmatmul.bf16.gmra.mxu0 %v1693
      %v4514 = vpop.f32.mrf.mxu0
      %v4515 = vadd.f32 %v4426, %v4514
      %v4516 = vpop.f32.mrf.mxu0
      %v4517 = vadd.f32 %v4428, %v4516
      %4518 = vmatmul.bf16.gmra.mxu0 %v1696
      %v4519 = vpop.f32.mrf.mxu0
      %v4520 = vadd.f32 %v4431, %v4519
      %v4521 = vpop.f32.mrf.mxu0
      %v4522 = vadd.f32 %v4433, %v4521
      %4523 = vmatmul.bf16.gmra.mxu0 %v1699
      %v4524 = vpop.f32.mrf.mxu0
      %v4525 = vadd.f32 %v4436, %v4524
      %v4526 = vpop.f32.mrf.mxu0
      %v4527 = vadd.f32 %v4438, %v4526
      %4528 = vmatmul.bf16.gmra.mxu0 %v1702
      %v4529 = vpop.f32.mrf.mxu0
      %v4530 = vadd.f32 %v4441, %v4529
      %v4531 = vpop.f32.mrf.mxu0
      %v4532 = vadd.f32 %v4443, %v4531
      %4533 = vmatmul.bf16.gmra.mxu0 %v1705
      %v4534 = vpop.f32.mrf.mxu0
      %v4535 = vadd.f32 %v4446, %v4534
      %v4536 = vpop.f32.mrf.mxu0
      %v4537 = vadd.f32 %v4448, %v4536
      %4538 = vmatmul.bf16.gmra.mxu0 %v1708
      %v4539 = vpop.f32.mrf.mxu0
      %v4540 = vadd.f32 %v4451, %v4539
      %v4541 = vpop.f32.mrf.mxu0
      %v4542 = vadd.f32 %v4453, %v4541
      %4543 = vmatmul.bf16.gmra.mxu0 %v1711
      %v4544 = vpop.f32.mrf.mxu0
      %v4545 = vadd.f32 %v4456, %v4544
      %v4546 = vpop.f32.mrf.mxu0
      %v4547 = vadd.f32 %v4458, %v4546
      %4548 = vmatmul.bf16.gmra.mxu0 %v1714
      %v4549 = vpop.f32.mrf.mxu0
      %v4550 = vadd.f32 %v4461, %v4549
      %v4551 = vpop.f32.mrf.mxu0
      %v4552 = vadd.f32 %v4463, %v4551
      %4553 = vmatmul.bf16.gmra.mxu0 %v1717
      %v4554 = vpop.f32.mrf.mxu0
      %v4555 = vadd.f32 %v4466, %v4554
      %v4556 = vpop.f32.mrf.mxu0
      %v4557 = vadd.f32 %v4468, %v4556
      %4558 = vmatmul.bf16.gmra.mxu0 %v1720
      %v4559 = vpop.f32.mrf.mxu0
      %v4560 = vadd.f32 %v4471, %v4559
      %v4561 = vpop.f32.mrf.mxu0
      %v4562 = vadd.f32 %v4473, %v4561
      %4563 = vmatmul.bf16.gmra.mxu0 %v1723
      %v4564 = vpop.f32.mrf.mxu0
      %v4565 = vadd.f32 %v4476, %v4564
      %v4566 = vpop.f32.mrf.mxu0
      %v4567 = vadd.f32 %v4478, %v4566
      %4568 = vmatmul.bf16.gmra.mxu0 %v1726
      %v4569 = vpop.f32.mrf.mxu0
      %v4570 = vadd.f32 %v4481, %v4569
      %v4571 = vpop.f32.mrf.mxu0
      %v4572 = vadd.f32 %v4483, %v4571
      %4573 = vmatmul.bf16.gmra.mxu0 %v1729
      %v4574 = vpop.f32.mrf.mxu0
      %v4575 = vadd.f32 %v4486, %v4574
      %v4576 = vpop.f32.mrf.mxu0
      %v4577 = vadd.f32 %v4488, %v4576
      %4578 = vdwg.mxu0
      %4579 = vmatpush.bf16.msra.mxu0 %v1438
      %4580 = vmatpush.bf16.msra.mxu0 %v1418
      %4581 = vmatpush.bf16.msra.mxu0 %v1398
      %4582 = vmatpush.bf16.msra.mxu0 %v1378
      %4583 = vmatpush.bf16.msra.mxu0 %v1358
      %4584 = vmatpush.bf16.msra.mxu0 %v1338
      %4585 = vmatpush.bf16.msra.mxu0 %v1318
      %4586 = vmatpush.bf16.msra.mxu0 %v1298
      %4587 = vmatmul.bf16.gmra.mxu0 %v404
      %v4588 = vpop.f32.mrf.mxu0
      %v4589 = vadd.f32 %v658, %v4588
      %v4590 = vpop.f32.mrf.mxu0
      %v4591 = vadd.f32 %v658, %v4590
      %4592 = vmatmul.bf16.gmra.mxu0 %v406
      %v4593 = vpop.f32.mrf.mxu0
      %v4594 = vadd.f32 %v658, %v4593
      %v4595 = vpop.f32.mrf.mxu0
      %v4596 = vadd.f32 %v658, %v4595
      %4597 = vmatmul.bf16.gmra.mxu0 %v408
      %v4598 = vpop.f32.mrf.mxu0
      %v4599 = vadd.f32 %v658, %v4598
      %v4600 = vpop.f32.mrf.mxu0
      %v4601 = vadd.f32 %v658, %v4600
      %4602 = vmatmul.bf16.gmra.mxu0 %v410
      %v4603 = vpop.f32.mrf.mxu0
      %v4604 = vadd.f32 %v658, %v4603
      %v4605 = vpop.f32.mrf.mxu0
      %v4606 = vadd.f32 %v658, %v4605
      %4607 = vmatmul.bf16.gmra.mxu0 %v412
      %v4608 = vpop.f32.mrf.mxu0
      %v4609 = vadd.f32 %v658, %v4608
      %v4610 = vpop.f32.mrf.mxu0
      %v4611 = vadd.f32 %v658, %v4610
      %4612 = vmatmul.bf16.gmra.mxu0 %v414
      %v4613 = vpop.f32.mrf.mxu0
      %v4614 = vadd.f32 %v658, %v4613
      %v4615 = vpop.f32.mrf.mxu0
      %v4616 = vadd.f32 %v658, %v4615
      %4617 = vmatmul.bf16.gmra.mxu0 %v416
      %v4618 = vpop.f32.mrf.mxu0
      %v4619 = vadd.f32 %v658, %v4618
      %v4620 = vpop.f32.mrf.mxu0
      %v4621 = vadd.f32 %v658, %v4620
      %4622 = vmatmul.bf16.gmra.mxu0 %v418
      %v4623 = vpop.f32.mrf.mxu0
      %v4624 = vadd.f32 %v658, %v4623
      %v4625 = vpop.f32.mrf.mxu0
      %v4626 = vadd.f32 %v658, %v4625
      %4627 = vmatmul.bf16.gmra.mxu0 %v420
      %v4628 = vpop.f32.mrf.mxu0
      %v4629 = vadd.f32 %v658, %v4628
      %v4630 = vpop.f32.mrf.mxu0
      %v4631 = vadd.f32 %v658, %v4630
      %4632 = vmatmul.bf16.gmra.mxu0 %v422
      %v4633 = vpop.f32.mrf.mxu0
      %v4634 = vadd.f32 %v658, %v4633
      %v4635 = vpop.f32.mrf.mxu0
      %v4636 = vadd.f32 %v658, %v4635
      %4637 = vmatmul.bf16.gmra.mxu0 %v424
      %v4638 = vpop.f32.mrf.mxu0
      %v4639 = vadd.f32 %v658, %v4638
      %v4640 = vpop.f32.mrf.mxu0
      %v4641 = vadd.f32 %v658, %v4640
      %4642 = vmatmul.bf16.gmra.mxu0 %v426
      %v4643 = vpop.f32.mrf.mxu0
      %v4644 = vadd.f32 %v658, %v4643
      %v4645 = vpop.f32.mrf.mxu0
      %v4646 = vadd.f32 %v658, %v4645
      %4647 = vmatmul.bf16.gmra.mxu0 %v428
      %v4648 = vpop.f32.mrf.mxu0
      %v4649 = vadd.f32 %v658, %v4648
      %v4650 = vpop.f32.mrf.mxu0
      %v4651 = vadd.f32 %v658, %v4650
      %4652 = vmatmul.bf16.gmra.mxu0 %v430
      %v4653 = vpop.f32.mrf.mxu0
      %v4654 = vadd.f32 %v658, %v4653
      %v4655 = vpop.f32.mrf.mxu0
      %v4656 = vadd.f32 %v658, %v4655
      %4657 = vmatmul.bf16.gmra.mxu0 %v432
      %v4658 = vpop.f32.mrf.mxu0
      %v4659 = vadd.f32 %v658, %v4658
      %v4660 = vpop.f32.mrf.mxu0
      %v4661 = vadd.f32 %v658, %v4660
      %4662 = vmatmul.bf16.gmra.mxu0 %v434
      %v4663 = vpop.f32.mrf.mxu0
      %v4664 = vadd.f32 %v658, %v4663
      %v4665 = vpop.f32.mrf.mxu0
      %v4666 = vadd.f32 %v658, %v4665
      %4667 = vdwg.mxu0
      %4668 = vmatpush.bf16.msra.mxu0 0
      %4669 = vmatpush.bf16.msra.mxu0 0
      %4670 = vmatpush.bf16.msra.mxu0 0
      %4671 = vmatpush.bf16.msra.mxu0 0
      %4672 = vmatpush.bf16.msra.mxu0 0
      %4673 = vmatpush.bf16.msra.mxu0 0
      %4674 = vmatpush.bf16.msra.mxu0 %v1478
      %4675 = vmatpush.bf16.msra.mxu0 %v1458
      %4676 = vmatmul.bf16.gmra.mxu0 %v1684
      %v4677 = vpop.f32.mrf.mxu0
      %v4678 = vadd.f32 %v4589, %v4677
      %v4679 = vpop.f32.mrf.mxu0
      %v4680 = vadd.f32 %v4591, %v4679
      %4681 = vmatmul.bf16.gmra.mxu0 %v1687
      %v4682 = vpop.f32.mrf.mxu0
      %v4683 = vadd.f32 %v4594, %v4682
      %v4684 = vpop.f32.mrf.mxu0
      %v4685 = vadd.f32 %v4596, %v4684
      %4686 = vmatmul.bf16.gmra.mxu0 %v1690
      %v4687 = vpop.f32.mrf.mxu0
      %v4688 = vadd.f32 %v4599, %v4687
      %v4689 = vpop.f32.mrf.mxu0
      %v4690 = vadd.f32 %v4601, %v4689
      %4691 = vmatmul.bf16.gmra.mxu0 %v1693
      %v4692 = vpop.f32.mrf.mxu0
      %v4693 = vadd.f32 %v4604, %v4692
      %v4694 = vpop.f32.mrf.mxu0
      %v4695 = vadd.f32 %v4606, %v4694
      %4696 = vmatmul.bf16.gmra.mxu0 %v1696
      %v4697 = vpop.f32.mrf.mxu0
      %v4698 = vadd.f32 %v4609, %v4697
      %v4699 = vpop.f32.mrf.mxu0
      %v4700 = vadd.f32 %v4611, %v4699
      %4701 = vmatmul.bf16.gmra.mxu0 %v1699
      %v4702 = vpop.f32.mrf.mxu0
      %v4703 = vadd.f32 %v4614, %v4702
      %v4704 = vpop.f32.mrf.mxu0
      %v4705 = vadd.f32 %v4616, %v4704
      %4706 = vmatmul.bf16.gmra.mxu0 %v1702
      %v4707 = vpop.f32.mrf.mxu0
      %v4708 = vadd.f32 %v4619, %v4707
      %v4709 = vpop.f32.mrf.mxu0
      %v4710 = vadd.f32 %v4621, %v4709
      %4711 = vmatmul.bf16.gmra.mxu0 %v1705
      %v4712 = vpop.f32.mrf.mxu0
      %v4713 = vadd.f32 %v4624, %v4712
      %v4714 = vpop.f32.mrf.mxu0
      %v4715 = vadd.f32 %v4626, %v4714
      %4716 = vmatmul.bf16.gmra.mxu0 %v1708
      %v4717 = vpop.f32.mrf.mxu0
      %v4718 = vadd.f32 %v4629, %v4717
      %v4719 = vpop.f32.mrf.mxu0
      %v4720 = vadd.f32 %v4631, %v4719
      %4721 = vmatmul.bf16.gmra.mxu0 %v1711
      %v4722 = vpop.f32.mrf.mxu0
      %v4723 = vadd.f32 %v4634, %v4722
      %v4724 = vpop.f32.mrf.mxu0
      %v4725 = vadd.f32 %v4636, %v4724
      %4726 = vmatmul.bf16.gmra.mxu0 %v1714
      %v4727 = vpop.f32.mrf.mxu0
      %v4728 = vadd.f32 %v4639, %v4727
      %v4729 = vpop.f32.mrf.mxu0
      %v4730 = vadd.f32 %v4641, %v4729
      %4731 = vmatmul.bf16.gmra.mxu0 %v1717
      %v4732 = vpop.f32.mrf.mxu0
      %v4733 = vadd.f32 %v4644, %v4732
      %v4734 = vpop.f32.mrf.mxu0
      %v4735 = vadd.f32 %v4646, %v4734
      %4736 = vmatmul.bf16.gmra.mxu0 %v1720
      %v4737 = vpop.f32.mrf.mxu0
      %v4738 = vadd.f32 %v4649, %v4737
      %v4739 = vpop.f32.mrf.mxu0
      %v4740 = vadd.f32 %v4651, %v4739
      %4741 = vmatmul.bf16.gmra.mxu0 %v1723
      %v4742 = vpop.f32.mrf.mxu0
      %v4743 = vadd.f32 %v4654, %v4742
      %v4744 = vpop.f32.mrf.mxu0
      %v4745 = vadd.f32 %v4656, %v4744
      %4746 = vmatmul.bf16.gmra.mxu0 %v1726
      %v4747 = vpop.f32.mrf.mxu0
      %v4748 = vadd.f32 %v4659, %v4747
      %v4749 = vpop.f32.mrf.mxu0
      %v4750 = vadd.f32 %v4661, %v4749
      %4751 = vmatmul.bf16.gmra.mxu0 %v1729
      %v4752 = vpop.f32.mrf.mxu0
      %v4753 = vadd.f32 %v4664, %v4752
      %v4754 = vpop.f32.mrf.mxu0
      %v4755 = vadd.f32 %v4666, %v4754
      %4756 = vdwg.mxu0
      %4757 = vmatpush.bf16.msra.mxu0 %v1439
      %4758 = vmatpush.bf16.msra.mxu0 %v1419
      %4759 = vmatpush.bf16.msra.mxu0 %v1399
      %4760 = vmatpush.bf16.msra.mxu0 %v1379
      %4761 = vmatpush.bf16.msra.mxu0 %v1359
      %4762 = vmatpush.bf16.msra.mxu0 %v1339
      %4763 = vmatpush.bf16.msra.mxu0 %v1319
      %4764 = vmatpush.bf16.msra.mxu0 %v1299
      %4765 = vmatmul.bf16.gmra.mxu0 %v404
      %v4766 = vpop.f32.mrf.mxu0
      %v4767 = vadd.f32 %v659, %v4766
      %v4768 = vpop.f32.mrf.mxu0
      %v4769 = vadd.f32 %v659, %v4768
      %4770 = vmatmul.bf16.gmra.mxu0 %v406
      %v4771 = vpop.f32.mrf.mxu0
      %v4772 = vadd.f32 %v659, %v4771
      %v4773 = vpop.f32.mrf.mxu0
      %v4774 = vadd.f32 %v659, %v4773
      %4775 = vmatmul.bf16.gmra.mxu0 %v408
      %v4776 = vpop.f32.mrf.mxu0
      %v4777 = vadd.f32 %v659, %v4776
      %v4778 = vpop.f32.mrf.mxu0
      %v4779 = vadd.f32 %v659, %v4778
      %4780 = vmatmul.bf16.gmra.mxu0 %v410
      %v4781 = vpop.f32.mrf.mxu0
      %v4782 = vadd.f32 %v659, %v4781
      %v4783 = vpop.f32.mrf.mxu0
      %v4784 = vadd.f32 %v659, %v4783
      %4785 = vmatmul.bf16.gmra.mxu0 %v412
      %v4786 = vpop.f32.mrf.mxu0
      %v4787 = vadd.f32 %v659, %v4786
      %v4788 = vpop.f32.mrf.mxu0
      %v4789 = vadd.f32 %v659, %v4788
      %4790 = vmatmul.bf16.gmra.mxu0 %v414
      %v4791 = vpop.f32.mrf.mxu0
      %v4792 = vadd.f32 %v659, %v4791
      %v4793 = vpop.f32.mrf.mxu0
      %v4794 = vadd.f32 %v659, %v4793
      %4795 = vmatmul.bf16.gmra.mxu0 %v416
      %v4796 = vpop.f32.mrf.mxu0
      %v4797 = vadd.f32 %v659, %v4796
      %v4798 = vpop.f32.mrf.mxu0
      %v4799 = vadd.f32 %v659, %v4798
      %4800 = vmatmul.bf16.gmra.mxu0 %v418
      %v4801 = vpop.f32.mrf.mxu0
      %v4802 = vadd.f32 %v659, %v4801
      %v4803 = vpop.f32.mrf.mxu0
      %v4804 = vadd.f32 %v659, %v4803
      %4805 = vmatmul.bf16.gmra.mxu0 %v420
      %v4806 = vpop.f32.mrf.mxu0
      %v4807 = vadd.f32 %v659, %v4806
      %v4808 = vpop.f32.mrf.mxu0
      %v4809 = vadd.f32 %v659, %v4808
      %4810 = vmatmul.bf16.gmra.mxu0 %v422
      %v4811 = vpop.f32.mrf.mxu0
      %v4812 = vadd.f32 %v659, %v4811
      %v4813 = vpop.f32.mrf.mxu0
      %v4814 = vadd.f32 %v659, %v4813
      %4815 = vmatmul.bf16.gmra.mxu0 %v424
      %v4816 = vpop.f32.mrf.mxu0
      %v4817 = vadd.f32 %v659, %v4816
      %v4818 = vpop.f32.mrf.mxu0
      %v4819 = vadd.f32 %v659, %v4818
      %4820 = vmatmul.bf16.gmra.mxu0 %v426
      %v4821 = vpop.f32.mrf.mxu0
      %v4822 = vadd.f32 %v659, %v4821
      %v4823 = vpop.f32.mrf.mxu0
      %v4824 = vadd.f32 %v659, %v4823
      %4825 = vmatmul.bf16.gmra.mxu0 %v428
      %v4826 = vpop.f32.mrf.mxu0
      %v4827 = vadd.f32 %v659, %v4826
      %v4828 = vpop.f32.mrf.mxu0
      %v4829 = vadd.f32 %v659, %v4828
      %4830 = vmatmul.bf16.gmra.mxu0 %v430
      %v4831 = vpop.f32.mrf.mxu0
      %v4832 = vadd.f32 %v659, %v4831
      %v4833 = vpop.f32.mrf.mxu0
      %v4834 = vadd.f32 %v659, %v4833
      %4835 = vmatmul.bf16.gmra.mxu0 %v432
      %v4836 = vpop.f32.mrf.mxu0
      %v4837 = vadd.f32 %v659, %v4836
      %v4838 = vpop.f32.mrf.mxu0
      %v4839 = vadd.f32 %v659, %v4838
      %4840 = vmatmul.bf16.gmra.mxu0 %v434
      %v4841 = vpop.f32.mrf.mxu0
      %v4842 = vadd.f32 %v659, %v4841
      %v4843 = vpop.f32.mrf.mxu0
      %v4844 = vadd.f32 %v659, %v4843
      %4845 = vdwg.mxu0
      %4846 = vmatpush.bf16.msra.mxu0 0
      %4847 = vmatpush.bf16.msra.mxu0 0
      %4848 = vmatpush.bf16.msra.mxu0 0
      %4849 = vmatpush.bf16.msra.mxu0 0
      %4850 = vmatpush.bf16.msra.mxu0 0
      %4851 = vmatpush.bf16.msra.mxu0 0
      %4852 = vmatpush.bf16.msra.mxu0 %v1479
      %4853 = vmatpush.bf16.msra.mxu0 %v1459
      %4854 = vmatmul.bf16.gmra.mxu0 %v1684
      %v4855 = vpop.f32.mrf.mxu0
      %v4856 = vadd.f32 %v4767, %v4855
      %v4857 = vpop.f32.mrf.mxu0
      %v4858 = vadd.f32 %v4769, %v4857
      %4859 = vmatmul.bf16.gmra.mxu0 %v1687
      %v4860 = vpop.f32.mrf.mxu0
      %v4861 = vadd.f32 %v4772, %v4860
      %v4862 = vpop.f32.mrf.mxu0
      %v4863 = vadd.f32 %v4774, %v4862
      %4864 = vmatmul.bf16.gmra.mxu0 %v1690
      %v4865 = vpop.f32.mrf.mxu0
      %v4866 = vadd.f32 %v4777, %v4865
      %v4867 = vpop.f32.mrf.mxu0
      %v4868 = vadd.f32 %v4779, %v4867
      %4869 = vmatmul.bf16.gmra.mxu0 %v1693
      %v4870 = vpop.f32.mrf.mxu0
      %v4871 = vadd.f32 %v4782, %v4870
      %v4872 = vpop.f32.mrf.mxu0
      %v4873 = vadd.f32 %v4784, %v4872
      %4874 = vmatmul.bf16.gmra.mxu0 %v1696
      %v4875 = vpop.f32.mrf.mxu0
      %v4876 = vadd.f32 %v4787, %v4875
      %v4877 = vpop.f32.mrf.mxu0
      %v4878 = vadd.f32 %v4789, %v4877
      %4879 = vmatmul.bf16.gmra.mxu0 %v1699
      %v4880 = vpop.f32.mrf.mxu0
      %v4881 = vadd.f32 %v4792, %v4880
      %v4882 = vpop.f32.mrf.mxu0
      %v4883 = vadd.f32 %v4794, %v4882
      %4884 = vmatmul.bf16.gmra.mxu0 %v1702
      %v4885 = vpop.f32.mrf.mxu0
      %v4886 = vadd.f32 %v4797, %v4885
      %v4887 = vpop.f32.mrf.mxu0
      %v4888 = vadd.f32 %v4799, %v4887
      %4889 = vmatmul.bf16.gmra.mxu0 %v1705
      %v4890 = vpop.f32.mrf.mxu0
      %v4891 = vadd.f32 %v4802, %v4890
      %v4892 = vpop.f32.mrf.mxu0
      %v4893 = vadd.f32 %v4804, %v4892
      %4894 = vmatmul.bf16.gmra.mxu0 %v1708
      %v4895 = vpop.f32.mrf.mxu0
      %v4896 = vadd.f32 %v4807, %v4895
      %v4897 = vpop.f32.mrf.mxu0
      %v4898 = vadd.f32 %v4809, %v4897
      %4899 = vmatmul.bf16.gmra.mxu0 %v1711
      %v4900 = vpop.f32.mrf.mxu0
      %v4901 = vadd.f32 %v4812, %v4900
      %v4902 = vpop.f32.mrf.mxu0
      %v4903 = vadd.f32 %v4814, %v4902
      %4904 = vmatmul.bf16.gmra.mxu0 %v1714
      %v4905 = vpop.f32.mrf.mxu0
      %v4906 = vadd.f32 %v4817, %v4905
      %v4907 = vpop.f32.mrf.mxu0
      %v4908 = vadd.f32 %v4819, %v4907
      %4909 = vmatmul.bf16.gmra.mxu0 %v1717
      %v4910 = vpop.f32.mrf.mxu0
      %v4911 = vadd.f32 %v4822, %v4910
      %v4912 = vpop.f32.mrf.mxu0
      %v4913 = vadd.f32 %v4824, %v4912
      %4914 = vmatmul.bf16.gmra.mxu0 %v1720
      %v4915 = vpop.f32.mrf.mxu0
      %v4916 = vadd.f32 %v4827, %v4915
      %v4917 = vpop.f32.mrf.mxu0
      %v4918 = vadd.f32 %v4829, %v4917
      %4919 = vmatmul.bf16.gmra.mxu0 %v1723
      %v4920 = vpop.f32.mrf.mxu0
      %v4921 = vadd.f32 %v4832, %v4920
      %v4922 = vpop.f32.mrf.mxu0
      %v4923 = vadd.f32 %v4834, %v4922
      %4924 = vmatmul.bf16.gmra.mxu0 %v1726
      %v4925 = vpop.f32.mrf.mxu0
      %v4926 = vadd.f32 %v4837, %v4925
      %v4927 = vpop.f32.mrf.mxu0
      %v4928 = vadd.f32 %v4839, %v4927
      %4929 = vmatmul.bf16.gmra.mxu0 %v1729
      %v4930 = vpop.f32.mrf.mxu0
      %v4931 = vadd.f32 %v4842, %v4930
      %v4932 = vpop.f32.mrf.mxu0
      %v4933 = vadd.f32 %v4844, %v4932
      %4934 = vdwg.mxu0
      %4935 = vmatpush.bf16.msra.mxu0 %v1440
      %4936 = vmatpush.bf16.msra.mxu0 %v1420
      %4937 = vmatpush.bf16.msra.mxu0 %v1400
      %4938 = vmatpush.bf16.msra.mxu0 %v1380
      %4939 = vmatpush.bf16.msra.mxu0 %v1360
      %4940 = vmatpush.bf16.msra.mxu0 %v1340
      %4941 = vmatpush.bf16.msra.mxu0 %v1320
      %4942 = vmatpush.bf16.msra.mxu0 %v1300
      %4943 = vmatmul.bf16.gmra.mxu0 %v404
      %v4944 = vpop.f32.mrf.mxu0
      %v4945 = vadd.f32 %v660, %v4944
      %v4946 = vpop.f32.mrf.mxu0
      %v4947 = vadd.f32 %v660, %v4946
      %4948 = vmatmul.bf16.gmra.mxu0 %v406
      %v4949 = vpop.f32.mrf.mxu0
      %v4950 = vadd.f32 %v660, %v4949
      %v4951 = vpop.f32.mrf.mxu0
      %v4952 = vadd.f32 %v660, %v4951
      %4953 = vmatmul.bf16.gmra.mxu0 %v408
      %v4954 = vpop.f32.mrf.mxu0
      %v4955 = vadd.f32 %v660, %v4954
      %v4956 = vpop.f32.mrf.mxu0
      %v4957 = vadd.f32 %v660, %v4956
      %4958 = vmatmul.bf16.gmra.mxu0 %v410
      %v4959 = vpop.f32.mrf.mxu0
      %v4960 = vadd.f32 %v660, %v4959
      %v4961 = vpop.f32.mrf.mxu0
      %v4962 = vadd.f32 %v660, %v4961
      %4963 = vmatmul.bf16.gmra.mxu0 %v412
      %v4964 = vpop.f32.mrf.mxu0
      %v4965 = vadd.f32 %v660, %v4964
      %v4966 = vpop.f32.mrf.mxu0
      %v4967 = vadd.f32 %v660, %v4966
      %4968 = vmatmul.bf16.gmra.mxu0 %v414
      %v4969 = vpop.f32.mrf.mxu0
      %v4970 = vadd.f32 %v660, %v4969
      %v4971 = vpop.f32.mrf.mxu0
      %v4972 = vadd.f32 %v660, %v4971
      %4973 = vmatmul.bf16.gmra.mxu0 %v416
      %v4974 = vpop.f32.mrf.mxu0
      %v4975 = vadd.f32 %v660, %v4974
      %v4976 = vpop.f32.mrf.mxu0
      %v4977 = vadd.f32 %v660, %v4976
      %4978 = vmatmul.bf16.gmra.mxu0 %v418
      %v4979 = vpop.f32.mrf.mxu0
      %v4980 = vadd.f32 %v660, %v4979
      %v4981 = vpop.f32.mrf.mxu0
      %v4982 = vadd.f32 %v660, %v4981
      %4983 = vmatmul.bf16.gmra.mxu0 %v420
      %v4984 = vpop.f32.mrf.mxu0
      %v4985 = vadd.f32 %v660, %v4984
      %v4986 = vpop.f32.mrf.mxu0
      %v4987 = vadd.f32 %v660, %v4986
      %4988 = vmatmul.bf16.gmra.mxu0 %v422
      %v4989 = vpop.f32.mrf.mxu0
      %v4990 = vadd.f32 %v660, %v4989
      %v4991 = vpop.f32.mrf.mxu0
      %v4992 = vadd.f32 %v660, %v4991
      %4993 = vmatmul.bf16.gmra.mxu0 %v424
      %v4994 = vpop.f32.mrf.mxu0
      %v4995 = vadd.f32 %v660, %v4994
      %v4996 = vpop.f32.mrf.mxu0
      %v4997 = vadd.f32 %v660, %v4996
      %4998 = vmatmul.bf16.gmra.mxu0 %v426
      %v4999 = vpop.f32.mrf.mxu0
      %v5000 = vadd.f32 %v660, %v4999
      %v5001 = vpop.f32.mrf.mxu0
      %v5002 = vadd.f32 %v660, %v5001
      %5003 = vmatmul.bf16.gmra.mxu0 %v428
      %v5004 = vpop.f32.mrf.mxu0
      %v5005 = vadd.f32 %v660, %v5004
      %v5006 = vpop.f32.mrf.mxu0
      %v5007 = vadd.f32 %v660, %v5006
      %5008 = vmatmul.bf16.gmra.mxu0 %v430
      %v5009 = vpop.f32.mrf.mxu0
      %v5010 = vadd.f32 %v660, %v5009
      %v5011 = vpop.f32.mrf.mxu0
      %v5012 = vadd.f32 %v660, %v5011
      %5013 = vmatmul.bf16.gmra.mxu0 %v432
      %v5014 = vpop.f32.mrf.mxu0
      %v5015 = vadd.f32 %v660, %v5014
      %v5016 = vpop.f32.mrf.mxu0
      %v5017 = vadd.f32 %v660, %v5016
      %5018 = vmatmul.bf16.gmra.mxu0 %v434
      %v5019 = vpop.f32.mrf.mxu0
      %v5020 = vadd.f32 %v660, %v5019
      %v5021 = vpop.f32.mrf.mxu0
      %v5022 = vadd.f32 %v660, %v5021
      %5023 = vdwg.mxu0
      %5024 = vmatpush.bf16.msra.mxu0 0
      %5025 = vmatpush.bf16.msra.mxu0 0
      %5026 = vmatpush.bf16.msra.mxu0 0
      %5027 = vmatpush.bf16.msra.mxu0 0
      %5028 = vmatpush.bf16.msra.mxu0 0
      %5029 = vmatpush.bf16.msra.mxu0 0
      %5030 = vmatpush.bf16.msra.mxu0 %v1480
      %5031 = vmatpush.bf16.msra.mxu0 %v1460
      %5032 = vmatmul.bf16.gmra.mxu0 %v1684
      %v5033 = vpop.f32.mrf.mxu0
      %v5034 = vadd.f32 %v4945, %v5033
      %v5035 = vpop.f32.mrf.mxu0
      %v5036 = vadd.f32 %v4947, %v5035
      %5037 = vmatmul.bf16.gmra.mxu0 %v1687
      %v5038 = vpop.f32.mrf.mxu0
      %v5039 = vadd.f32 %v4950, %v5038
      %v5040 = vpop.f32.mrf.mxu0
      %v5041 = vadd.f32 %v4952, %v5040
      %5042 = vmatmul.bf16.gmra.mxu0 %v1690
      %v5043 = vpop.f32.mrf.mxu0
      %v5044 = vadd.f32 %v4955, %v5043
      %v5045 = vpop.f32.mrf.mxu0
      %v5046 = vadd.f32 %v4957, %v5045
      %5047 = vmatmul.bf16.gmra.mxu0 %v1693
      %v5048 = vpop.f32.mrf.mxu0
      %v5049 = vadd.f32 %v4960, %v5048
      %v5050 = vpop.f32.mrf.mxu0
      %v5051 = vadd.f32 %v4962, %v5050
      %5052 = vmatmul.bf16.gmra.mxu0 %v1696
      %v5053 = vpop.f32.mrf.mxu0
      %v5054 = vadd.f32 %v4965, %v5053
      %v5055 = vpop.f32.mrf.mxu0
      %v5056 = vadd.f32 %v4967, %v5055
      %5057 = vmatmul.bf16.gmra.mxu0 %v1699
      %v5058 = vpop.f32.mrf.mxu0
      %v5059 = vadd.f32 %v4970, %v5058
      %v5060 = vpop.f32.mrf.mxu0
      %v5061 = vadd.f32 %v4972, %v5060
      %5062 = vmatmul.bf16.gmra.mxu0 %v1702
      %v5063 = vpop.f32.mrf.mxu0
      %v5064 = vadd.f32 %v4975, %v5063
      %v5065 = vpop.f32.mrf.mxu0
      %v5066 = vadd.f32 %v4977, %v5065
      %5067 = vmatmul.bf16.gmra.mxu0 %v1705
      %v5068 = vpop.f32.mrf.mxu0
      %v5069 = vadd.f32 %v4980, %v5068
      %v5070 = vpop.f32.mrf.mxu0
      %v5071 = vadd.f32 %v4982, %v5070
      %5072 = vmatmul.bf16.gmra.mxu0 %v1708
      %v5073 = vpop.f32.mrf.mxu0
      %v5074 = vadd.f32 %v4985, %v5073
      %v5075 = vpop.f32.mrf.mxu0
      %v5076 = vadd.f32 %v4987, %v5075
      %5077 = vmatmul.bf16.gmra.mxu0 %v1711
      %v5078 = vpop.f32.mrf.mxu0
      %v5079 = vadd.f32 %v4990, %v5078
      %v5080 = vpop.f32.mrf.mxu0
      %v5081 = vadd.f32 %v4992, %v5080
      %5082 = vmatmul.bf16.gmra.mxu0 %v1714
      %v5083 = vpop.f32.mrf.mxu0
      %v5084 = vadd.f32 %v4995, %v5083
      %v5085 = vpop.f32.mrf.mxu0
      %v5086 = vadd.f32 %v4997, %v5085
      %5087 = vmatmul.bf16.gmra.mxu0 %v1717
      %v5088 = vpop.f32.mrf.mxu0
      %v5089 = vadd.f32 %v5000, %v5088
      %v5090 = vpop.f32.mrf.mxu0
      %v5091 = vadd.f32 %v5002, %v5090
      %5092 = vmatmul.bf16.gmra.mxu0 %v1720
      %v5093 = vpop.f32.mrf.mxu0
      %v5094 = vadd.f32 %v5005, %v5093
      %v5095 = vpop.f32.mrf.mxu0
      %v5096 = vadd.f32 %v5007, %v5095
      %5097 = vmatmul.bf16.gmra.mxu0 %v1723
      %v5098 = vpop.f32.mrf.mxu0
      %v5099 = vadd.f32 %v5010, %v5098
      %v5100 = vpop.f32.mrf.mxu0
      %v5101 = vadd.f32 %v5012, %v5100
      %5102 = vmatmul.bf16.gmra.mxu0 %v1726
      %v5103 = vpop.f32.mrf.mxu0
      %v5104 = vadd.f32 %v5015, %v5103
      %v5105 = vpop.f32.mrf.mxu0
      %v5106 = vadd.f32 %v5017, %v5105
      %5107 = vmatmul.bf16.gmra.mxu0 %v1729
      %v5108 = vpop.f32.mrf.mxu0
      %v5109 = vadd.f32 %v5020, %v5108
      %v5110 = vpop.f32.mrf.mxu0
      %v5111 = vadd.f32 %v5022, %v5110
      %5112 = vdwg.mxu0
      %5113 = vmatpush.bf16.msra.mxu0 %v1441
      %5114 = vmatpush.bf16.msra.mxu0 %v1421
      %5115 = vmatpush.bf16.msra.mxu0 %v1401
      %5116 = vmatpush.bf16.msra.mxu0 %v1381
      %5117 = vmatpush.bf16.msra.mxu0 %v1361
      %5118 = vmatpush.bf16.msra.mxu0 %v1341
      %5119 = vmatpush.bf16.msra.mxu0 %v1321
      %5120 = vmatpush.bf16.msra.mxu0 %v1301
      %5121 = vmatmul.bf16.gmra.mxu0 %v404
      %v5122 = vpop.f32.mrf.mxu0
      %v5123 = vadd.f32 %v661, %v5122
      %v5124 = vpop.f32.mrf.mxu0
      %v5125 = vadd.f32 %v661, %v5124
      %5126 = vmatmul.bf16.gmra.mxu0 %v406
      %v5127 = vpop.f32.mrf.mxu0
      %v5128 = vadd.f32 %v661, %v5127
      %v5129 = vpop.f32.mrf.mxu0
      %v5130 = vadd.f32 %v661, %v5129
      %5131 = vmatmul.bf16.gmra.mxu0 %v408
      %v5132 = vpop.f32.mrf.mxu0
      %v5133 = vadd.f32 %v661, %v5132
      %v5134 = vpop.f32.mrf.mxu0
      %v5135 = vadd.f32 %v661, %v5134
      %5136 = vmatmul.bf16.gmra.mxu0 %v410
      %v5137 = vpop.f32.mrf.mxu0
      %v5138 = vadd.f32 %v661, %v5137
      %v5139 = vpop.f32.mrf.mxu0
      %v5140 = vadd.f32 %v661, %v5139
      %5141 = vmatmul.bf16.gmra.mxu0 %v412
      %v5142 = vpop.f32.mrf.mxu0
      %v5143 = vadd.f32 %v661, %v5142
      %v5144 = vpop.f32.mrf.mxu0
      %v5145 = vadd.f32 %v661, %v5144
      %5146 = vmatmul.bf16.gmra.mxu0 %v414
      %v5147 = vpop.f32.mrf.mxu0
      %v5148 = vadd.f32 %v661, %v5147
      %v5149 = vpop.f32.mrf.mxu0
      %v5150 = vadd.f32 %v661, %v5149
      %5151 = vmatmul.bf16.gmra.mxu0 %v416
      %v5152 = vpop.f32.mrf.mxu0
      %v5153 = vadd.f32 %v661, %v5152
      %v5154 = vpop.f32.mrf.mxu0
      %v5155 = vadd.f32 %v661, %v5154
      %5156 = vmatmul.bf16.gmra.mxu0 %v418
      %v5157 = vpop.f32.mrf.mxu0
      %v5158 = vadd.f32 %v661, %v5157
      %v5159 = vpop.f32.mrf.mxu0
      %v5160 = vadd.f32 %v661, %v5159
      %5161 = vmatmul.bf16.gmra.mxu0 %v420
      %v5162 = vpop.f32.mrf.mxu0
      %v5163 = vadd.f32 %v661, %v5162
      %v5164 = vpop.f32.mrf.mxu0
      %v5165 = vadd.f32 %v661, %v5164
      %5166 = vmatmul.bf16.gmra.mxu0 %v422
      %v5167 = vpop.f32.mrf.mxu0
      %v5168 = vadd.f32 %v661, %v5167
      %v5169 = vpop.f32.mrf.mxu0
      %v5170 = vadd.f32 %v661, %v5169
      %5171 = vmatmul.bf16.gmra.mxu0 %v424
      %v5172 = vpop.f32.mrf.mxu0
      %v5173 = vadd.f32 %v661, %v5172
      %v5174 = vpop.f32.mrf.mxu0
      %v5175 = vadd.f32 %v661, %v5174
      %5176 = vmatmul.bf16.gmra.mxu0 %v426
      %v5177 = vpop.f32.mrf.mxu0
      %v5178 = vadd.f32 %v661, %v5177
      %v5179 = vpop.f32.mrf.mxu0
      %v5180 = vadd.f32 %v661, %v5179
      %5181 = vmatmul.bf16.gmra.mxu0 %v428
      %v5182 = vpop.f32.mrf.mxu0
      %v5183 = vadd.f32 %v661, %v5182
      %v5184 = vpop.f32.mrf.mxu0
      %v5185 = vadd.f32 %v661, %v5184
      %5186 = vmatmul.bf16.gmra.mxu0 %v430
      %v5187 = vpop.f32.mrf.mxu0
      %v5188 = vadd.f32 %v661, %v5187
      %v5189 = vpop.f32.mrf.mxu0
      %v5190 = vadd.f32 %v661, %v5189
      %5191 = vmatmul.bf16.gmra.mxu0 %v432
      %v5192 = vpop.f32.mrf.mxu0
      %v5193 = vadd.f32 %v661, %v5192
      %v5194 = vpop.f32.mrf.mxu0
      %v5195 = vadd.f32 %v661, %v5194
      %5196 = vmatmul.bf16.gmra.mxu0 %v434
      %v5197 = vpop.f32.mrf.mxu0
      %v5198 = vadd.f32 %v661, %v5197
      %v5199 = vpop.f32.mrf.mxu0
      %v5200 = vadd.f32 %v661, %v5199
      %5201 = vdwg.mxu0
      %5202 = vmatpush.bf16.msra.mxu0 0
      %5203 = vmatpush.bf16.msra.mxu0 0
      %5204 = vmatpush.bf16.msra.mxu0 0
      %5205 = vmatpush.bf16.msra.mxu0 0
      %5206 = vmatpush.bf16.msra.mxu0 0
      %5207 = vmatpush.bf16.msra.mxu0 0
      %5208 = vmatpush.bf16.msra.mxu0 %v1481
      %5209 = vmatpush.bf16.msra.mxu0 %v1461
      %5210 = vmatmul.bf16.gmra.mxu0 %v1684
      %v5211 = vpop.f32.mrf.mxu0
      %v5212 = vadd.f32 %v5123, %v5211
      %v5213 = vpop.f32.mrf.mxu0
      %v5214 = vadd.f32 %v5125, %v5213
      %5215 = vmatmul.bf16.gmra.mxu0 %v1687
      %v5216 = vpop.f32.mrf.mxu0
      %v5217 = vadd.f32 %v5128, %v5216
      %v5218 = vpop.f32.mrf.mxu0
      %v5219 = vadd.f32 %v5130, %v5218
      %5220 = vmatmul.bf16.gmra.mxu0 %v1690
      %v5221 = vpop.f32.mrf.mxu0
      %v5222 = vadd.f32 %v5133, %v5221
      %v5223 = vpop.f32.mrf.mxu0
      %v5224 = vadd.f32 %v5135, %v5223
      %5225 = vmatmul.bf16.gmra.mxu0 %v1693
      %v5226 = vpop.f32.mrf.mxu0
      %v5227 = vadd.f32 %v5138, %v5226
      %v5228 = vpop.f32.mrf.mxu0
      %v5229 = vadd.f32 %v5140, %v5228
      %5230 = vmatmul.bf16.gmra.mxu0 %v1696
      %v5231 = vpop.f32.mrf.mxu0
      %v5232 = vadd.f32 %v5143, %v5231
      %v5233 = vpop.f32.mrf.mxu0
      %v5234 = vadd.f32 %v5145, %v5233
      %5235 = vmatmul.bf16.gmra.mxu0 %v1699
      %v5236 = vpop.f32.mrf.mxu0
      %v5237 = vadd.f32 %v5148, %v5236
      %v5238 = vpop.f32.mrf.mxu0
      %v5239 = vadd.f32 %v5150, %v5238
      %5240 = vmatmul.bf16.gmra.mxu0 %v1702
      %v5241 = vpop.f32.mrf.mxu0
      %v5242 = vadd.f32 %v5153, %v5241
      %v5243 = vpop.f32.mrf.mxu0
      %v5244 = vadd.f32 %v5155, %v5243
      %5245 = vmatmul.bf16.gmra.mxu0 %v1705
      %v5246 = vpop.f32.mrf.mxu0
      %v5247 = vadd.f32 %v5158, %v5246
      %v5248 = vpop.f32.mrf.mxu0
      %v5249 = vadd.f32 %v5160, %v5248
      %5250 = vmatmul.bf16.gmra.mxu0 %v1708
      %v5251 = vpop.f32.mrf.mxu0
      %v5252 = vadd.f32 %v5163, %v5251
      %v5253 = vpop.f32.mrf.mxu0
      %v5254 = vadd.f32 %v5165, %v5253
      %5255 = vmatmul.bf16.gmra.mxu0 %v1711
      %v5256 = vpop.f32.mrf.mxu0
      %v5257 = vadd.f32 %v5168, %v5256
      %v5258 = vpop.f32.mrf.mxu0
      %v5259 = vadd.f32 %v5170, %v5258
      %5260 = vmatmul.bf16.gmra.mxu0 %v1714
      %v5261 = vpop.f32.mrf.mxu0
      %v5262 = vadd.f32 %v5173, %v5261
      %v5263 = vpop.f32.mrf.mxu0
      %v5264 = vadd.f32 %v5175, %v5263
      %5265 = vmatmul.bf16.gmra.mxu0 %v1717
      %v5266 = vpop.f32.mrf.mxu0
      %v5267 = vadd.f32 %v5178, %v5266
      %v5268 = vpop.f32.mrf.mxu0
      %v5269 = vadd.f32 %v5180, %v5268
      %5270 = vmatmul.bf16.gmra.mxu0 %v1720
      %v5271 = vpop.f32.mrf.mxu0
      %v5272 = vadd.f32 %v5183, %v5271
      %v5273 = vpop.f32.mrf.mxu0
      %v5274 = vadd.f32 %v5185, %v5273
      %5275 = vmatmul.bf16.gmra.mxu0 %v1723
      %v5276 = vpop.f32.mrf.mxu0
      %v5277 = vadd.f32 %v5188, %v5276
      %v5278 = vpop.f32.mrf.mxu0
      %v5279 = vadd.f32 %v5190, %v5278
      %5280 = vmatmul.bf16.gmra.mxu0 %v1726
      %v5281 = vpop.f32.mrf.mxu0
      %v5282 = vadd.f32 %v5193, %v5281
      %v5283 = vpop.f32.mrf.mxu0
      %v5284 = vadd.f32 %v5195, %v5283
      %5285 = vmatmul.bf16.gmra.mxu0 %v1729
      %v5286 = vpop.f32.mrf.mxu0
      %v5287 = vadd.f32 %v5198, %v5286
      %v5288 = vpop.f32.mrf.mxu0
      %v5289 = vadd.f32 %v5200, %v5288
      %5290 = vdwg.mxu0
      %v5291 = vmax.f32 %v1830, 0.0
      %v5292 = vmax.f32 %v2008, 0.0
      %v5293 = vmax.f32 %v2186, 0.0
      %v5294 = vmax.f32 %v2364, 0.0
      %v5295 = vmax.f32 %v2542, 0.0
      %v5296 = vmax.f32 %v2720, 0.0
      %v5297 = vmax.f32 %v2898, 0.0
      %v5298 = vmax.f32 %v3076, 0.0
      %v5299 = vmax.f32 %v3254, 0.0
      %v5300 = vmax.f32 %v3432, 0.0
      %v5301 = vmax.f32 %v3610, 0.0
      %v5302 = vmax.f32 %v3788, 0.0
      %v5303 = vmax.f32 %v3966, 0.0
      %v5304 = vmax.f32 %v4144, 0.0
      %v5305 = vmax.f32 %v4322, 0.0
      %v5306 = vmax.f32 %v4500, 0.0
      %v5307 = vmax.f32 %v4678, 0.0
      %v5308 = vmax.f32 %v4856, 0.0
      %v5309 = vmax.f32 %v5034, 0.0
      %v5310 = vmax.f32 %v5212, 0.0
      %v5311 = vmax.f32 %v1832, 0.0
      %v5312 = vmax.f32 %v2010, 0.0
      %v5313 = vmax.f32 %v2188, 0.0
      %v5314 = vmax.f32 %v2366, 0.0
      %v5315 = vmax.f32 %v2544, 0.0
      %v5316 = vmax.f32 %v2722, 0.0
      %v5317 = vmax.f32 %v2900, 0.0
      %v5318 = vmax.f32 %v3078, 0.0
      %v5319 = vmax.f32 %v3256, 0.0
      %v5320 = vmax.f32 %v3434, 0.0
      %v5321 = vmax.f32 %v3612, 0.0
      %v5322 = vmax.f32 %v3790, 0.0
      %v5323 = vmax.f32 %v3968, 0.0
      %v5324 = vmax.f32 %v4146, 0.0
      %v5325 = vmax.f32 %v4324, 0.0
      %v5326 = vmax.f32 %v4502, 0.0
      %v5327 = vmax.f32 %v4680, 0.0
      %v5328 = vmax.f32 %v4858, 0.0
      %v5329 = vmax.f32 %v5036, 0.0
      %v5330 = vmax.f32 %v5214, 0.0
      %v5331 = vmax.f32 %v1835, 0.0
      %v5332 = vmax.f32 %v2013, 0.0
      %v5333 = vmax.f32 %v2191, 0.0
      %v5334 = vmax.f32 %v2369, 0.0
      %v5335 = vmax.f32 %v2547, 0.0
      %v5336 = vmax.f32 %v2725, 0.0
      %v5337 = vmax.f32 %v2903, 0.0
      %v5338 = vmax.f32 %v3081, 0.0
      %v5339 = vmax.f32 %v3259, 0.0
      %v5340 = vmax.f32 %v3437, 0.0
      %v5341 = vmax.f32 %v3615, 0.0
      %v5342 = vmax.f32 %v3793, 0.0
      %v5343 = vmax.f32 %v3971, 0.0
      %v5344 = vmax.f32 %v4149, 0.0
      %v5345 = vmax.f32 %v4327, 0.0
      %v5346 = vmax.f32 %v4505, 0.0
      %v5347 = vmax.f32 %v4683, 0.0
      %v5348 = vmax.f32 %v4861, 0.0
      %v5349 = vmax.f32 %v5039, 0.0
      %v5350 = vmax.f32 %v5217, 0.0
      %v5351 = vmax.f32 %v1837, 0.0
      %v5352 = vmax.f32 %v2015, 0.0
      %v5353 = vmax.f32 %v2193, 0.0
      %v5354 = vmax.f32 %v2371, 0.0
      %v5355 = vmax.f32 %v2549, 0.0
      %v5356 = vmax.f32 %v2727, 0.0
      %v5357 = vmax.f32 %v2905, 0.0
      %v5358 = vmax.f32 %v3083, 0.0
      %v5359 = vmax.f32 %v3261, 0.0
      %v5360 = vmax.f32 %v3439, 0.0
      %v5361 = vmax.f32 %v3617, 0.0
      %v5362 = vmax.f32 %v3795, 0.0
      %v5363 = vmax.f32 %v3973, 0.0
      %v5364 = vmax.f32 %v4151, 0.0
      %v5365 = vmax.f32 %v4329, 0.0
      %v5366 = vmax.f32 %v4507, 0.0
      %v5367 = vmax.f32 %v4685, 0.0
      %v5368 = vmax.f32 %v4863, 0.0
      %v5369 = vmax.f32 %v5041, 0.0
      %v5370 = vmax.f32 %v5219, 0.0
      %v5371 = vmax.f32 %v1840, 0.0
      %v5372 = vmax.f32 %v2018, 0.0
      %v5373 = vmax.f32 %v2196, 0.0
      %v5374 = vmax.f32 %v2374, 0.0
      %v5375 = vmax.f32 %v2552, 0.0
      %v5376 = vmax.f32 %v2730, 0.0
      %v5377 = vmax.f32 %v2908, 0.0
      %v5378 = vmax.f32 %v3086, 0.0
      %v5379 = vmax.f32 %v3264, 0.0
      %v5380 = vmax.f32 %v3442, 0.0
      %v5381 = vmax.f32 %v3620, 0.0
      %v5382 = vmax.f32 %v3798, 0.0
      %v5383 = vmax.f32 %v3976, 0.0
      %v5384 = vmax.f32 %v4154, 0.0
      %v5385 = vmax.f32 %v4332, 0.0
      %v5386 = vmax.f32 %v4510, 0.0
      %v5387 = vmax.f32 %v4688, 0.0
      %v5388 = vmax.f32 %v4866, 0.0
      %v5389 = vmax.f32 %v5044, 0.0
      %v5390 = vmax.f32 %v5222, 0.0
      %v5391 = vmax.f32 %v1842, 0.0
      %v5392 = vmax.f32 %v2020, 0.0
      %v5393 = vmax.f32 %v2198, 0.0
      %v5394 = vmax.f32 %v2376, 0.0
      %v5395 = vmax.f32 %v2554, 0.0
      %v5396 = vmax.f32 %v2732, 0.0
      %v5397 = vmax.f32 %v2910, 0.0
      %v5398 = vmax.f32 %v3088, 0.0
      %v5399 = vmax.f32 %v3266, 0.0
      %v5400 = vmax.f32 %v3444, 0.0
      %v5401 = vmax.f32 %v3622, 0.0
      %v5402 = vmax.f32 %v3800, 0.0
      %v5403 = vmax.f32 %v3978, 0.0
      %v5404 = vmax.f32 %v4156, 0.0
      %v5405 = vmax.f32 %v4334, 0.0
      %v5406 = vmax.f32 %v4512, 0.0
      %v5407 = vmax.f32 %v4690, 0.0
      %v5408 = vmax.f32 %v4868, 0.0
      %v5409 = vmax.f32 %v5046, 0.0
      %v5410 = vmax.f32 %v5224, 0.0
      %v5411 = vmax.f32 %v1845, 0.0
      %v5412 = vmax.f32 %v2023, 0.0
      %v5413 = vmax.f32 %v2201, 0.0
      %v5414 = vmax.f32 %v2379, 0.0
      %v5415 = vmax.f32 %v2557, 0.0
      %v5416 = vmax.f32 %v2735, 0.0
      %v5417 = vmax.f32 %v2913, 0.0
      %v5418 = vmax.f32 %v3091, 0.0
      %v5419 = vmax.f32 %v3269, 0.0
      %v5420 = vmax.f32 %v3447, 0.0
      %v5421 = vmax.f32 %v3625, 0.0
      %v5422 = vmax.f32 %v3803, 0.0
      %v5423 = vmax.f32 %v3981, 0.0
      %v5424 = vmax.f32 %v4159, 0.0
      %v5425 = vmax.f32 %v4337, 0.0
      %v5426 = vmax.f32 %v4515, 0.0
      %v5427 = vmax.f32 %v4693, 0.0
      %v5428 = vmax.f32 %v4871, 0.0
      %v5429 = vmax.f32 %v5049, 0.0
      %v5430 = vmax.f32 %v5227, 0.0
      %v5431 = vmax.f32 %v1847, 0.0
      %v5432 = vmax.f32 %v2025, 0.0
      %v5433 = vmax.f32 %v2203, 0.0
      %v5434 = vmax.f32 %v2381, 0.0
      %v5435 = vmax.f32 %v2559, 0.0
      %v5436 = vmax.f32 %v2737, 0.0
      %v5437 = vmax.f32 %v2915, 0.0
      %v5438 = vmax.f32 %v3093, 0.0
      %v5439 = vmax.f32 %v3271, 0.0
      %v5440 = vmax.f32 %v3449, 0.0
      %v5441 = vmax.f32 %v3627, 0.0
      %v5442 = vmax.f32 %v3805, 0.0
      %v5443 = vmax.f32 %v3983, 0.0
      %v5444 = vmax.f32 %v4161, 0.0
      %v5445 = vmax.f32 %v4339, 0.0
      %v5446 = vmax.f32 %v4517, 0.0
      %v5447 = vmax.f32 %v4695, 0.0
      %v5448 = vmax.f32 %v4873, 0.0
      %v5449 = vmax.f32 %v5051, 0.0
      %v5450 = vmax.f32 %v5229, 0.0
      %v5451 = vmax.f32 %v1850, 0.0
      %v5452 = vmax.f32 %v2028, 0.0
      %v5453 = vmax.f32 %v2206, 0.0
      %v5454 = vmax.f32 %v2384, 0.0
      %v5455 = vmax.f32 %v2562, 0.0
      %v5456 = vmax.f32 %v2740, 0.0
      %v5457 = vmax.f32 %v2918, 0.0
      %v5458 = vmax.f32 %v3096, 0.0
      %v5459 = vmax.f32 %v3274, 0.0
      %v5460 = vmax.f32 %v3452, 0.0
      %v5461 = vmax.f32 %v3630, 0.0
      %v5462 = vmax.f32 %v3808, 0.0
      %v5463 = vmax.f32 %v3986, 0.0
      %v5464 = vmax.f32 %v4164, 0.0
      %v5465 = vmax.f32 %v4342, 0.0
      %v5466 = vmax.f32 %v4520, 0.0
      %v5467 = vmax.f32 %v4698, 0.0
      %v5468 = vmax.f32 %v4876, 0.0
      %v5469 = vmax.f32 %v5054, 0.0
      %v5470 = vmax.f32 %v5232, 0.0
      %v5471 = vmax.f32 %v1852, 0.0
      %v5472 = vmax.f32 %v2030, 0.0
      %v5473 = vmax.f32 %v2208, 0.0
      %v5474 = vmax.f32 %v2386, 0.0
      %v5475 = vmax.f32 %v2564, 0.0
      %v5476 = vmax.f32 %v2742, 0.0
      %v5477 = vmax.f32 %v2920, 0.0
      %v5478 = vmax.f32 %v3098, 0.0
      %v5479 = vmax.f32 %v3276, 0.0
      %v5480 = vmax.f32 %v3454, 0.0
      %v5481 = vmax.f32 %v3632, 0.0
      %v5482 = vmax.f32 %v3810, 0.0
      %v5483 = vmax.f32 %v3988, 0.0
      %v5484 = vmax.f32 %v4166, 0.0
      %v5485 = vmax.f32 %v4344, 0.0
      %v5486 = vmax.f32 %v4522, 0.0
      %v5487 = vmax.f32 %v4700, 0.0
      %v5488 = vmax.f32 %v4878, 0.0
      %v5489 = vmax.f32 %v5056, 0.0
      %v5490 = vmax.f32 %v5234, 0.0
      %v5491 = vmax.f32 %v1855, 0.0
      %v5492 = vmax.f32 %v2033, 0.0
      %v5493 = vmax.f32 %v2211, 0.0
      %v5494 = vmax.f32 %v2389, 0.0
      %v5495 = vmax.f32 %v2567, 0.0
      %v5496 = vmax.f32 %v2745, 0.0
      %v5497 = vmax.f32 %v2923, 0.0
      %v5498 = vmax.f32 %v3101, 0.0
      %v5499 = vmax.f32 %v3279, 0.0
      %v5500 = vmax.f32 %v3457, 0.0
      %v5501 = vmax.f32 %v3635, 0.0
      %v5502 = vmax.f32 %v3813, 0.0
      %v5503 = vmax.f32 %v3991, 0.0
      %v5504 = vmax.f32 %v4169, 0.0
      %v5505 = vmax.f32 %v4347, 0.0
      %v5506 = vmax.f32 %v4525, 0.0
      %v5507 = vmax.f32 %v4703, 0.0
      %v5508 = vmax.f32 %v4881, 0.0
      %v5509 = vmax.f32 %v5059, 0.0
      %v5510 = vmax.f32 %v5237, 0.0
      %v5511 = vmax.f32 %v1857, 0.0
      %v5512 = vmax.f32 %v2035, 0.0
      %v5513 = vmax.f32 %v2213, 0.0
      %v5514 = vmax.f32 %v2391, 0.0
      %v5515 = vmax.f32 %v2569, 0.0
      %v5516 = vmax.f32 %v2747, 0.0
      %v5517 = vmax.f32 %v2925, 0.0
      %v5518 = vmax.f32 %v3103, 0.0
      %v5519 = vmax.f32 %v3281, 0.0
      %v5520 = vmax.f32 %v3459, 0.0
      %v5521 = vmax.f32 %v3637, 0.0
      %v5522 = vmax.f32 %v3815, 0.0
      %v5523 = vmax.f32 %v3993, 0.0
      %v5524 = vmax.f32 %v4171, 0.0
      %v5525 = vmax.f32 %v4349, 0.0
      %v5526 = vmax.f32 %v4527, 0.0
      %v5527 = vmax.f32 %v4705, 0.0
      %v5528 = vmax.f32 %v4883, 0.0
      %v5529 = vmax.f32 %v5061, 0.0
      %v5530 = vmax.f32 %v5239, 0.0
      %v5531 = vmax.f32 %v1860, 0.0
      %v5532 = vmax.f32 %v2038, 0.0
      %v5533 = vmax.f32 %v2216, 0.0
      %v5534 = vmax.f32 %v2394, 0.0
      %v5535 = vmax.f32 %v2572, 0.0
      %v5536 = vmax.f32 %v2750, 0.0
      %v5537 = vmax.f32 %v2928, 0.0
      %v5538 = vmax.f32 %v3106, 0.0
      %v5539 = vmax.f32 %v3284, 0.0
      %v5540 = vmax.f32 %v3462, 0.0
      %v5541 = vmax.f32 %v3640, 0.0
      %v5542 = vmax.f32 %v3818, 0.0
      %v5543 = vmax.f32 %v3996, 0.0
      %v5544 = vmax.f32 %v4174, 0.0
      %v5545 = vmax.f32 %v4352, 0.0
      %v5546 = vmax.f32 %v4530, 0.0
      %v5547 = vmax.f32 %v4708, 0.0
      %v5548 = vmax.f32 %v4886, 0.0
      %v5549 = vmax.f32 %v5064, 0.0
      %v5550 = vmax.f32 %v5242, 0.0
      %v5551 = vmax.f32 %v1862, 0.0
      %v5552 = vmax.f32 %v2040, 0.0
      %v5553 = vmax.f32 %v2218, 0.0
      %v5554 = vmax.f32 %v2396, 0.0
      %v5555 = vmax.f32 %v2574, 0.0
      %v5556 = vmax.f32 %v2752, 0.0
      %v5557 = vmax.f32 %v2930, 0.0
      %v5558 = vmax.f32 %v3108, 0.0
      %v5559 = vmax.f32 %v3286, 0.0
      %v5560 = vmax.f32 %v3464, 0.0
      %v5561 = vmax.f32 %v3642, 0.0
      %v5562 = vmax.f32 %v3820, 0.0
      %v5563 = vmax.f32 %v3998, 0.0
      %v5564 = vmax.f32 %v4176, 0.0
      %v5565 = vmax.f32 %v4354, 0.0
      %v5566 = vmax.f32 %v4532, 0.0
      %v5567 = vmax.f32 %v4710, 0.0
      %v5568 = vmax.f32 %v4888, 0.0
      %v5569 = vmax.f32 %v5066, 0.0
      %v5570 = vmax.f32 %v5244, 0.0
      %v5571 = vmax.f32 %v1865, 0.0
      %v5572 = vmax.f32 %v2043, 0.0
      %v5573 = vmax.f32 %v2221, 0.0
      %v5574 = vmax.f32 %v2399, 0.0
      %v5575 = vmax.f32 %v2577, 0.0
      %v5576 = vmax.f32 %v2755, 0.0
      %v5577 = vmax.f32 %v2933, 0.0
      %v5578 = vmax.f32 %v3111, 0.0
      %v5579 = vmax.f32 %v3289, 0.0
      %v5580 = vmax.f32 %v3467, 0.0
      %v5581 = vmax.f32 %v3645, 0.0
      %v5582 = vmax.f32 %v3823, 0.0
      %v5583 = vmax.f32 %v4001, 0.0
      %v5584 = vmax.f32 %v4179, 0.0
      %v5585 = vmax.f32 %v4357, 0.0
      %v5586 = vmax.f32 %v4535, 0.0
      %v5587 = vmax.f32 %v4713, 0.0
      %v5588 = vmax.f32 %v4891, 0.0
      %v5589 = vmax.f32 %v5069, 0.0
      %v5590 = vmax.f32 %v5247, 0.0
      %v5591 = vmax.f32 %v1867, 0.0
      %v5592 = vmax.f32 %v2045, 0.0
      %v5593 = vmax.f32 %v2223, 0.0
      %v5594 = vmax.f32 %v2401, 0.0
      %v5595 = vmax.f32 %v2579, 0.0
      %v5596 = vmax.f32 %v2757, 0.0
      %v5597 = vmax.f32 %v2935, 0.0
      %v5598 = vmax.f32 %v3113, 0.0
      %v5599 = vmax.f32 %v3291, 0.0
      %v5600 = vmax.f32 %v3469, 0.0
      %v5601 = vmax.f32 %v3647, 0.0
      %v5602 = vmax.f32 %v3825, 0.0
      %v5603 = vmax.f32 %v4003, 0.0
      %v5604 = vmax.f32 %v4181, 0.0
      %v5605 = vmax.f32 %v4359, 0.0
      %v5606 = vmax.f32 %v4537, 0.0
      %v5607 = vmax.f32 %v4715, 0.0
      %v5608 = vmax.f32 %v4893, 0.0
      %v5609 = vmax.f32 %v5071, 0.0
      %v5610 = vmax.f32 %v5249, 0.0
      %v5611 = vmax.f32 %v1870, 0.0
      %v5612 = vmax.f32 %v2048, 0.0
      %v5613 = vmax.f32 %v2226, 0.0
      %v5614 = vmax.f32 %v2404, 0.0
      %v5615 = vmax.f32 %v2582, 0.0
      %v5616 = vmax.f32 %v2760, 0.0
      %v5617 = vmax.f32 %v2938, 0.0
      %v5618 = vmax.f32 %v3116, 0.0
      %v5619 = vmax.f32 %v3294, 0.0
      %v5620 = vmax.f32 %v3472, 0.0
      %v5621 = vmax.f32 %v3650, 0.0
      %v5622 = vmax.f32 %v3828, 0.0
      %v5623 = vmax.f32 %v4006, 0.0
      %v5624 = vmax.f32 %v4184, 0.0
      %v5625 = vmax.f32 %v4362, 0.0
      %v5626 = vmax.f32 %v4540, 0.0
      %v5627 = vmax.f32 %v4718, 0.0
      %v5628 = vmax.f32 %v4896, 0.0
      %v5629 = vmax.f32 %v5074, 0.0
      %v5630 = vmax.f32 %v5252, 0.0
      %v5631 = vmax.f32 %v1872, 0.0
      %v5632 = vmax.f32 %v2050, 0.0
      %v5633 = vmax.f32 %v2228, 0.0
      %v5634 = vmax.f32 %v2406, 0.0
      %v5635 = vmax.f32 %v2584, 0.0
      %v5636 = vmax.f32 %v2762, 0.0
      %v5637 = vmax.f32 %v2940, 0.0
      %v5638 = vmax.f32 %v3118, 0.0
      %v5639 = vmax.f32 %v3296, 0.0
      %v5640 = vmax.f32 %v3474, 0.0
      %v5641 = vmax.f32 %v3652, 0.0
      %v5642 = vmax.f32 %v3830, 0.0
      %v5643 = vmax.f32 %v4008, 0.0
      %v5644 = vmax.f32 %v4186, 0.0
      %v5645 = vmax.f32 %v4364, 0.0
      %v5646 = vmax.f32 %v4542, 0.0
      %v5647 = vmax.f32 %v4720, 0.0
      %v5648 = vmax.f32 %v4898, 0.0
      %v5649 = vmax.f32 %v5076, 0.0
      %v5650 = vmax.f32 %v5254, 0.0
      %v5651 = vmax.f32 %v1875, 0.0
      %v5652 = vmax.f32 %v2053, 0.0
      %v5653 = vmax.f32 %v2231, 0.0
      %v5654 = vmax.f32 %v2409, 0.0
      %v5655 = vmax.f32 %v2587, 0.0
      %v5656 = vmax.f32 %v2765, 0.0
      %v5657 = vmax.f32 %v2943, 0.0
      %v5658 = vmax.f32 %v3121, 0.0
      %v5659 = vmax.f32 %v3299, 0.0
      %v5660 = vmax.f32 %v3477, 0.0
      %v5661 = vmax.f32 %v3655, 0.0
      %v5662 = vmax.f32 %v3833, 0.0
      %v5663 = vmax.f32 %v4011, 0.0
      %v5664 = vmax.f32 %v4189, 0.0
      %v5665 = vmax.f32 %v4367, 0.0
      %v5666 = vmax.f32 %v4545, 0.0
      %v5667 = vmax.f32 %v4723, 0.0
      %v5668 = vmax.f32 %v4901, 0.0
      %v5669 = vmax.f32 %v5079, 0.0
      %v5670 = vmax.f32 %v5257, 0.0
      %v5671 = vmax.f32 %v1877, 0.0
      %v5672 = vmax.f32 %v2055, 0.0
      %v5673 = vmax.f32 %v2233, 0.0
      %v5674 = vmax.f32 %v2411, 0.0
      %v5675 = vmax.f32 %v2589, 0.0
      %v5676 = vmax.f32 %v2767, 0.0
      %v5677 = vmax.f32 %v2945, 0.0
      %v5678 = vmax.f32 %v3123, 0.0
      %v5679 = vmax.f32 %v3301, 0.0
      %v5680 = vmax.f32 %v3479, 0.0
      %v5681 = vmax.f32 %v3657, 0.0
      %v5682 = vmax.f32 %v3835, 0.0
      %v5683 = vmax.f32 %v4013, 0.0
      %v5684 = vmax.f32 %v4191, 0.0
      %v5685 = vmax.f32 %v4369, 0.0
      %v5686 = vmax.f32 %v4547, 0.0
      %v5687 = vmax.f32 %v4725, 0.0
      %v5688 = vmax.f32 %v4903, 0.0
      %v5689 = vmax.f32 %v5081, 0.0
      %v5690 = vmax.f32 %v5259, 0.0
      %v5691 = vmax.f32 %v1880, 0.0
      %v5692 = vmax.f32 %v2058, 0.0
      %v5693 = vmax.f32 %v2236, 0.0
      %v5694 = vmax.f32 %v2414, 0.0
      %v5695 = vmax.f32 %v2592, 0.0
      %v5696 = vmax.f32 %v2770, 0.0
      %v5697 = vmax.f32 %v2948, 0.0
      %v5698 = vmax.f32 %v3126, 0.0
      %v5699 = vmax.f32 %v3304, 0.0
      %v5700 = vmax.f32 %v3482, 0.0
      %v5701 = vmax.f32 %v3660, 0.0
      %v5702 = vmax.f32 %v3838, 0.0
      %v5703 = vmax.f32 %v4016, 0.0
      %v5704 = vmax.f32 %v4194, 0.0
      %v5705 = vmax.f32 %v4372, 0.0
      %v5706 = vmax.f32 %v4550, 0.0
      %v5707 = vmax.f32 %v4728, 0.0
      %v5708 = vmax.f32 %v4906, 0.0
      %v5709 = vmax.f32 %v5084, 0.0
      %v5710 = vmax.f32 %v5262, 0.0
      %v5711 = vmax.f32 %v1882, 0.0
      %v5712 = vmax.f32 %v2060, 0.0
      %v5713 = vmax.f32 %v2238, 0.0
      %v5714 = vmax.f32 %v2416, 0.0
      %v5715 = vmax.f32 %v2594, 0.0
      %v5716 = vmax.f32 %v2772, 0.0
      %v5717 = vmax.f32 %v2950, 0.0
      %v5718 = vmax.f32 %v3128, 0.0
      %v5719 = vmax.f32 %v3306, 0.0
      %v5720 = vmax.f32 %v3484, 0.0
      %v5721 = vmax.f32 %v3662, 0.0
      %v5722 = vmax.f32 %v3840, 0.0
      %v5723 = vmax.f32 %v4018, 0.0
      %v5724 = vmax.f32 %v4196, 0.0
      %v5725 = vmax.f32 %v4374, 0.0
      %v5726 = vmax.f32 %v4552, 0.0
      %v5727 = vmax.f32 %v4730, 0.0
      %v5728 = vmax.f32 %v4908, 0.0
      %v5729 = vmax.f32 %v5086, 0.0
      %v5730 = vmax.f32 %v5264, 0.0
      %v5731 = vmax.f32 %v1885, 0.0
      %v5732 = vmax.f32 %v2063, 0.0
      %v5733 = vmax.f32 %v2241, 0.0
      %v5734 = vmax.f32 %v2419, 0.0
      %v5735 = vmax.f32 %v2597, 0.0
      %v5736 = vmax.f32 %v2775, 0.0
      %v5737 = vmax.f32 %v2953, 0.0
      %v5738 = vmax.f32 %v3131, 0.0
      %v5739 = vmax.f32 %v3309, 0.0
      %v5740 = vmax.f32 %v3487, 0.0
      %v5741 = vmax.f32 %v3665, 0.0
      %v5742 = vmax.f32 %v3843, 0.0
      %v5743 = vmax.f32 %v4021, 0.0
      %v5744 = vmax.f32 %v4199, 0.0
      %v5745 = vmax.f32 %v4377, 0.0
      %v5746 = vmax.f32 %v4555, 0.0
      %v5747 = vmax.f32 %v4733, 0.0
      %v5748 = vmax.f32 %v4911, 0.0
      %v5749 = vmax.f32 %v5089, 0.0
      %v5750 = vmax.f32 %v5267, 0.0
      %v5751 = vmax.f32 %v1887, 0.0
      %v5752 = vmax.f32 %v2065, 0.0
      %v5753 = vmax.f32 %v2243, 0.0
      %v5754 = vmax.f32 %v2421, 0.0
      %v5755 = vmax.f32 %v2599, 0.0
      %v5756 = vmax.f32 %v2777, 0.0
      %v5757 = vmax.f32 %v2955, 0.0
      %v5758 = vmax.f32 %v3133, 0.0
      %v5759 = vmax.f32 %v3311, 0.0
      %v5760 = vmax.f32 %v3489, 0.0
      %v5761 = vmax.f32 %v3667, 0.0
      %v5762 = vmax.f32 %v3845, 0.0
      %v5763 = vmax.f32 %v4023, 0.0
      %v5764 = vmax.f32 %v4201, 0.0
      %v5765 = vmax.f32 %v4379, 0.0
      %v5766 = vmax.f32 %v4557, 0.0
      %v5767 = vmax.f32 %v4735, 0.0
      %v5768 = vmax.f32 %v4913, 0.0
      %v5769 = vmax.f32 %v5091, 0.0
      %v5770 = vmax.f32 %v5269, 0.0
      %v5771 = vmax.f32 %v1890, 0.0
      %v5772 = vmax.f32 %v2068, 0.0
      %v5773 = vmax.f32 %v2246, 0.0
      %v5774 = vmax.f32 %v2424, 0.0
      %v5775 = vmax.f32 %v2602, 0.0
      %v5776 = vmax.f32 %v2780, 0.0
      %v5777 = vmax.f32 %v2958, 0.0
      %v5778 = vmax.f32 %v3136, 0.0
      %v5779 = vmax.f32 %v3314, 0.0
      %v5780 = vmax.f32 %v3492, 0.0
      %v5781 = vmax.f32 %v3670, 0.0
      %v5782 = vmax.f32 %v3848, 0.0
      %v5783 = vmax.f32 %v4026, 0.0
      %v5784 = vmax.f32 %v4204, 0.0
      %v5785 = vmax.f32 %v4382, 0.0
      %v5786 = vmax.f32 %v4560, 0.0
      %v5787 = vmax.f32 %v4738, 0.0
      %v5788 = vmax.f32 %v4916, 0.0
      %v5789 = vmax.f32 %v5094, 0.0
      %v5790 = vmax.f32 %v5272, 0.0
      %v5791 = vmax.f32 %v1892, 0.0
      %v5792 = vmax.f32 %v2070, 0.0
      %v5793 = vmax.f32 %v2248, 0.0
      %v5794 = vmax.f32 %v2426, 0.0
      %v5795 = vmax.f32 %v2604, 0.0
      %v5796 = vmax.f32 %v2782, 0.0
      %v5797 = vmax.f32 %v2960, 0.0
      %v5798 = vmax.f32 %v3138, 0.0
      %v5799 = vmax.f32 %v3316, 0.0
      %v5800 = vmax.f32 %v3494, 0.0
      %v5801 = vmax.f32 %v3672, 0.0
      %v5802 = vmax.f32 %v3850, 0.0
      %v5803 = vmax.f32 %v4028, 0.0
      %v5804 = vmax.f32 %v4206, 0.0
      %v5805 = vmax.f32 %v4384, 0.0
      %v5806 = vmax.f32 %v4562, 0.0
      %v5807 = vmax.f32 %v4740, 0.0
      %v5808 = vmax.f32 %v4918, 0.0
      %v5809 = vmax.f32 %v5096, 0.0
      %v5810 = vmax.f32 %v5274, 0.0
      %v5811 = vmax.f32 %v1895, 0.0
      %v5812 = vmax.f32 %v2073, 0.0
      %v5813 = vmax.f32 %v2251, 0.0
      %v5814 = vmax.f32 %v2429, 0.0
      %v5815 = vmax.f32 %v2607, 0.0
      %v5816 = vmax.f32 %v2785, 0.0
      %v5817 = vmax.f32 %v2963, 0.0
      %v5818 = vmax.f32 %v3141, 0.0
      %v5819 = vmax.f32 %v3319, 0.0
      %v5820 = vmax.f32 %v3497, 0.0
      %v5821 = vmax.f32 %v3675, 0.0
      %v5822 = vmax.f32 %v3853, 0.0
      %v5823 = vmax.f32 %v4031, 0.0
      %v5824 = vmax.f32 %v4209, 0.0
      %v5825 = vmax.f32 %v4387, 0.0
      %v5826 = vmax.f32 %v4565, 0.0
      %v5827 = vmax.f32 %v4743, 0.0
      %v5828 = vmax.f32 %v4921, 0.0
      %v5829 = vmax.f32 %v5099, 0.0
      %v5830 = vmax.f32 %v5277, 0.0
      %v5831 = vmax.f32 %v1897, 0.0
      %v5832 = vmax.f32 %v2075, 0.0
      %v5833 = vmax.f32 %v2253, 0.0
      %v5834 = vmax.f32 %v2431, 0.0
      %v5835 = vmax.f32 %v2609, 0.0
      %v5836 = vmax.f32 %v2787, 0.0
      %v5837 = vmax.f32 %v2965, 0.0
      %v5838 = vmax.f32 %v3143, 0.0
      %v5839 = vmax.f32 %v3321, 0.0
      %v5840 = vmax.f32 %v3499, 0.0
      %v5841 = vmax.f32 %v3677, 0.0
      %v5842 = vmax.f32 %v3855, 0.0
      %v5843 = vmax.f32 %v4033, 0.0
      %v5844 = vmax.f32 %v4211, 0.0
      %v5845 = vmax.f32 %v4389, 0.0
      %v5846 = vmax.f32 %v4567, 0.0
      %v5847 = vmax.f32 %v4745, 0.0
      %v5848 = vmax.f32 %v4923, 0.0
      %v5849 = vmax.f32 %v5101, 0.0
      %v5850 = vmax.f32 %v5279, 0.0
      %v5851 = vmax.f32 %v1900, 0.0
      %v5852 = vmax.f32 %v2078, 0.0
      %v5853 = vmax.f32 %v2256, 0.0
      %v5854 = vmax.f32 %v2434, 0.0
      %v5855 = vmax.f32 %v2612, 0.0
      %v5856 = vmax.f32 %v2790, 0.0
      %v5857 = vmax.f32 %v2968, 0.0
      %v5858 = vmax.f32 %v3146, 0.0
      %v5859 = vmax.f32 %v3324, 0.0
      %v5860 = vmax.f32 %v3502, 0.0
      %v5861 = vmax.f32 %v3680, 0.0
      %v5862 = vmax.f32 %v3858, 0.0
      %v5863 = vmax.f32 %v4036, 0.0
      %v5864 = vmax.f32 %v4214, 0.0
      %v5865 = vmax.f32 %v4392, 0.0
      %v5866 = vmax.f32 %v4570, 0.0
      %v5867 = vmax.f32 %v4748, 0.0
      %v5868 = vmax.f32 %v4926, 0.0
      %v5869 = vmax.f32 %v5104, 0.0
      %v5870 = vmax.f32 %v5282, 0.0
      %v5871 = vmax.f32 %v1902, 0.0
      %v5872 = vmax.f32 %v2080, 0.0
      %v5873 = vmax.f32 %v2258, 0.0
      %v5874 = vmax.f32 %v2436, 0.0
      %v5875 = vmax.f32 %v2614, 0.0
      %v5876 = vmax.f32 %v2792, 0.0
      %v5877 = vmax.f32 %v2970, 0.0
      %v5878 = vmax.f32 %v3148, 0.0
      %v5879 = vmax.f32 %v3326, 0.0
      %v5880 = vmax.f32 %v3504, 0.0
      %v5881 = vmax.f32 %v3682, 0.0
      %v5882 = vmax.f32 %v3860, 0.0
      %v5883 = vmax.f32 %v4038, 0.0
      %v5884 = vmax.f32 %v4216, 0.0
      %v5885 = vmax.f32 %v4394, 0.0
      %v5886 = vmax.f32 %v4572, 0.0
      %v5887 = vmax.f32 %v4750, 0.0
      %v5888 = vmax.f32 %v4928, 0.0
      %v5889 = vmax.f32 %v5106, 0.0
      %v5890 = vmax.f32 %v5284, 0.0
      %v5891 = vmax.f32 %v1905, 0.0
      %v5892 = vmax.f32 %v2083, 0.0
      %v5893 = vmax.f32 %v2261, 0.0
      %v5894 = vmax.f32 %v2439, 0.0
      %v5895 = vmax.f32 %v2617, 0.0
      %v5896 = vmax.f32 %v2795, 0.0
      %v5897 = vmax.f32 %v2973, 0.0
      %v5898 = vmax.f32 %v3151, 0.0
      %v5899 = vmax.f32 %v3329, 0.0
      %v5900 = vmax.f32 %v3507, 0.0
      %v5901 = vmax.f32 %v3685, 0.0
      %v5902 = vmax.f32 %v3863, 0.0
      %v5903 = vmax.f32 %v4041, 0.0
      %v5904 = vmax.f32 %v4219, 0.0
      %v5905 = vmax.f32 %v4397, 0.0
      %v5906 = vmax.f32 %v4575, 0.0
      %v5907 = vmax.f32 %v4753, 0.0
      %v5908 = vmax.f32 %v4931, 0.0
      %v5909 = vmax.f32 %v5109, 0.0
      %v5910 = vmax.f32 %v5287, 0.0
      %v5911 = vmax.f32 %v1907, 0.0
      %v5912 = vmax.f32 %v2085, 0.0
      %v5913 = vmax.f32 %v2263, 0.0
      %v5914 = vmax.f32 %v2441, 0.0
      %v5915 = vmax.f32 %v2619, 0.0
      %v5916 = vmax.f32 %v2797, 0.0
      %v5917 = vmax.f32 %v2975, 0.0
      %v5918 = vmax.f32 %v3153, 0.0
      %v5919 = vmax.f32 %v3331, 0.0
      %v5920 = vmax.f32 %v3509, 0.0
      %v5921 = vmax.f32 %v3687, 0.0
      %v5922 = vmax.f32 %v3865, 0.0
      %v5923 = vmax.f32 %v4043, 0.0
      %v5924 = vmax.f32 %v4221, 0.0
      %v5925 = vmax.f32 %v4399, 0.0
      %v5926 = vmax.f32 %v4577, 0.0
      %v5927 = vmax.f32 %v4755, 0.0
      %v5928 = vmax.f32 %v4933, 0.0
      %v5929 = vmax.f32 %v5111, 0.0
      %v5930 = vmax.f32 %v5289, 0.0
      %v5931 = vpack.c.bf16 %v5292, %v5291
      %v5932 = vpack.c.bf16 %v5294, %v5293
      %v5933 = vpack.c.bf16 %v5296, %v5295
      %v5934 = vpack.c.bf16 %v5298, %v5297
      %v5935 = vpack.c.bf16 %v5300, %v5299
      %v5936 = vpack.c.bf16 %v5302, %v5301
      %v5937 = vpack.c.bf16 %v5304, %v5303
      %v5938 = vpack.c.bf16 %v5306, %v5305
      %v5939 = vpack.c.bf16 %v5308, %v5307
      %v5940 = vpack.c.bf16 %v5310, %v5309
      %v5941 = vpack.c.bf16 %v5312, %v5311
      %v5942 = vpack.c.bf16 %v5314, %v5313
      %v5943 = vpack.c.bf16 %v5316, %v5315
      %v5944 = vpack.c.bf16 %v5318, %v5317
      %v5945 = vpack.c.bf16 %v5320, %v5319
      %v5946 = vpack.c.bf16 %v5322, %v5321
      %v5947 = vpack.c.bf16 %v5324, %v5323
      %v5948 = vpack.c.bf16 %v5326, %v5325
      %v5949 = vpack.c.bf16 %v5328, %v5327
      %v5950 = vpack.c.bf16 %v5330, %v5329
      %v5951 = vpack.c.bf16 %v5332, %v5331
      %v5952 = vpack.c.bf16 %v5334, %v5333
      %v5953 = vpack.c.bf16 %v5336, %v5335
      %v5954 = vpack.c.bf16 %v5338, %v5337
      %v5955 = vpack.c.bf16 %v5340, %v5339
      %v5956 = vpack.c.bf16 %v5342, %v5341
      %v5957 = vpack.c.bf16 %v5344, %v5343
      %v5958 = vpack.c.bf16 %v5346, %v5345
      %v5959 = vpack.c.bf16 %v5348, %v5347
      %v5960 = vpack.c.bf16 %v5350, %v5349
      %v5961 = vpack.c.bf16 %v5352, %v5351
      %v5962 = vpack.c.bf16 %v5354, %v5353
      %v5963 = vpack.c.bf16 %v5356, %v5355
      %v5964 = vpack.c.bf16 %v5358, %v5357
      %v5965 = vpack.c.bf16 %v5360, %v5359
      %v5966 = vpack.c.bf16 %v5362, %v5361
      %v5967 = vpack.c.bf16 %v5364, %v5363
      %v5968 = vpack.c.bf16 %v5366, %v5365
      %v5969 = vpack.c.bf16 %v5368, %v5367
      %v5970 = vpack.c.bf16 %v5370, %v5369
      %v5971 = vpack.c.bf16 %v5372, %v5371
      %v5972 = vpack.c.bf16 %v5374, %v5373
      %v5973 = vpack.c.bf16 %v5376, %v5375
      %v5974 = vpack.c.bf16 %v5378, %v5377
      %v5975 = vpack.c.bf16 %v5380, %v5379
      %v5976 = vpack.c.bf16 %v5382, %v5381
      %v5977 = vpack.c.bf16 %v5384, %v5383
      %v5978 = vpack.c.bf16 %v5386, %v5385
      %v5979 = vpack.c.bf16 %v5388, %v5387
      %v5980 = vpack.c.bf16 %v5390, %v5389
      %v5981 = vpack.c.bf16 %v5392, %v5391
      %v5982 = vpack.c.bf16 %v5394, %v5393
      %v5983 = vpack.c.bf16 %v5396, %v5395
      %v5984 = vpack.c.bf16 %v5398, %v5397
      %v5985 = vpack.c.bf16 %v5400, %v5399
      %v5986 = vpack.c.bf16 %v5402, %v5401
      %v5987 = vpack.c.bf16 %v5404, %v5403
      %v5988 = vpack.c.bf16 %v5406, %v5405
      %v5989 = vpack.c.bf16 %v5408, %v5407
      %v5990 = vpack.c.bf16 %v5410, %v5409
      %v5991 = vpack.c.bf16 %v5412, %v5411
      %v5992 = vpack.c.bf16 %v5414, %v5413
      %v5993 = vpack.c.bf16 %v5416, %v5415
      %v5994 = vpack.c.bf16 %v5418, %v5417
      %v5995 = vpack.c.bf16 %v5420, %v5419
      %v5996 = vpack.c.bf16 %v5422, %v5421
      %v5997 = vpack.c.bf16 %v5424, %v5423
      %v5998 = vpack.c.bf16 %v5426, %v5425
      %v5999 = vpack.c.bf16 %v5428, %v5427
      %v6000 = vpack.c.bf16 %v5430, %v5429
      %v6001 = vpack.c.bf16 %v5432, %v5431
      %v6002 = vpack.c.bf16 %v5434, %v5433
      %v6003 = vpack.c.bf16 %v5436, %v5435
      %v6004 = vpack.c.bf16 %v5438, %v5437
      %v6005 = vpack.c.bf16 %v5440, %v5439
      %v6006 = vpack.c.bf16 %v5442, %v5441
      %v6007 = vpack.c.bf16 %v5444, %v5443
      %v6008 = vpack.c.bf16 %v5446, %v5445
      %v6009 = vpack.c.bf16 %v5448, %v5447
      %v6010 = vpack.c.bf16 %v5450, %v5449
      %v6011 = vpack.c.bf16 %v5452, %v5451
      %v6012 = vpack.c.bf16 %v5454, %v5453
      %v6013 = vpack.c.bf16 %v5456, %v5455
      %v6014 = vpack.c.bf16 %v5458, %v5457
      %v6015 = vpack.c.bf16 %v5460, %v5459
      %v6016 = vpack.c.bf16 %v5462, %v5461
      %v6017 = vpack.c.bf16 %v5464, %v5463
      %v6018 = vpack.c.bf16 %v5466, %v5465
      %v6019 = vpack.c.bf16 %v5468, %v5467
      %v6020 = vpack.c.bf16 %v5470, %v5469
      %v6021 = vpack.c.bf16 %v5472, %v5471
      %v6022 = vpack.c.bf16 %v5474, %v5473
      %v6023 = vpack.c.bf16 %v5476, %v5475
      %v6024 = vpack.c.bf16 %v5478, %v5477
      %v6025 = vpack.c.bf16 %v5480, %v5479
      %v6026 = vpack.c.bf16 %v5482, %v5481
      %v6027 = vpack.c.bf16 %v5484, %v5483
      %v6028 = vpack.c.bf16 %v5486, %v5485
      %v6029 = vpack.c.bf16 %v5488, %v5487
      %v6030 = vpack.c.bf16 %v5490, %v5489
      %v6031 = vpack.c.bf16 %v5492, %v5491
      %v6032 = vpack.c.bf16 %v5494, %v5493
      %v6033 = vpack.c.bf16 %v5496, %v5495
      %v6034 = vpack.c.bf16 %v5498, %v5497
      %v6035 = vpack.c.bf16 %v5500, %v5499
      %v6036 = vpack.c.bf16 %v5502, %v5501
      %v6037 = vpack.c.bf16 %v5504, %v5503
      %v6038 = vpack.c.bf16 %v5506, %v5505
      %v6039 = vpack.c.bf16 %v5508, %v5507
      %v6040 = vpack.c.bf16 %v5510, %v5509
      %v6041 = vpack.c.bf16 %v5512, %v5511
      %v6042 = vpack.c.bf16 %v5514, %v5513
      %v6043 = vpack.c.bf16 %v5516, %v5515
      %v6044 = vpack.c.bf16 %v5518, %v5517
      %v6045 = vpack.c.bf16 %v5520, %v5519
      %v6046 = vpack.c.bf16 %v5522, %v5521
      %v6047 = vpack.c.bf16 %v5524, %v5523
      %v6048 = vpack.c.bf16 %v5526, %v5525
      %v6049 = vpack.c.bf16 %v5528, %v5527
      %v6050 = vpack.c.bf16 %v5530, %v5529
      %v6051 = vpack.c.bf16 %v5532, %v5531
      %v6052 = vpack.c.bf16 %v5534, %v5533
      %v6053 = vpack.c.bf16 %v5536, %v5535
      %v6054 = vpack.c.bf16 %v5538, %v5537
      %v6055 = vpack.c.bf16 %v5540, %v5539
      %v6056 = vpack.c.bf16 %v5542, %v5541
      %v6057 = vpack.c.bf16 %v5544, %v5543
      %v6058 = vpack.c.bf16 %v5546, %v5545
      %v6059 = vpack.c.bf16 %v5548, %v5547
      %v6060 = vpack.c.bf16 %v5550, %v5549
      %v6061 = vpack.c.bf16 %v5552, %v5551
      %v6062 = vpack.c.bf16 %v5554, %v5553
      %v6063 = vpack.c.bf16 %v5556, %v5555
      %v6064 = vpack.c.bf16 %v5558, %v5557
      %v6065 = vpack.c.bf16 %v5560, %v5559
      %v6066 = vpack.c.bf16 %v5562, %v5561
      %v6067 = vpack.c.bf16 %v5564, %v5563
      %v6068 = vpack.c.bf16 %v5566, %v5565
      %v6069 = vpack.c.bf16 %v5568, %v5567
      %v6070 = vpack.c.bf16 %v5570, %v5569
      %v6071 = vpack.c.bf16 %v5572, %v5571
      %v6072 = vpack.c.bf16 %v5574, %v5573
      %v6073 = vpack.c.bf16 %v5576, %v5575
      %v6074 = vpack.c.bf16 %v5578, %v5577
      %v6075 = vpack.c.bf16 %v5580, %v5579
      %v6076 = vpack.c.bf16 %v5582, %v5581
      %v6077 = vpack.c.bf16 %v5584, %v5583
      %v6078 = vpack.c.bf16 %v5586, %v5585
      %v6079 = vpack.c.bf16 %v5588, %v5587
      %v6080 = vpack.c.bf16 %v5590, %v5589
      %v6081 = vpack.c.bf16 %v5592, %v5591
      %v6082 = vpack.c.bf16 %v5594, %v5593
      %v6083 = vpack.c.bf16 %v5596, %v5595
      %v6084 = vpack.c.bf16 %v5598, %v5597
      %v6085 = vpack.c.bf16 %v5600, %v5599
      %v6086 = vpack.c.bf16 %v5602, %v5601
      %v6087 = vpack.c.bf16 %v5604, %v5603
      %v6088 = vpack.c.bf16 %v5606, %v5605
      %v6089 = vpack.c.bf16 %v5608, %v5607
      %v6090 = vpack.c.bf16 %v5610, %v5609
      %v6091 = vpack.c.bf16 %v5612, %v5611
      %v6092 = vpack.c.bf16 %v5614, %v5613
      %v6093 = vpack.c.bf16 %v5616, %v5615
      %v6094 = vpack.c.bf16 %v5618, %v5617
      %v6095 = vpack.c.bf16 %v5620, %v5619
      %v6096 = vpack.c.bf16 %v5622, %v5621
      %v6097 = vpack.c.bf16 %v5624, %v5623
      %v6098 = vpack.c.bf16 %v5626, %v5625
      %v6099 = vpack.c.bf16 %v5628, %v5627
      %v6100 = vpack.c.bf16 %v5630, %v5629
      %v6101 = vpack.c.bf16 %v5632, %v5631
      %v6102 = vpack.c.bf16 %v5634, %v5633
      %v6103 = vpack.c.bf16 %v5636, %v5635
      %v6104 = vpack.c.bf16 %v5638, %v5637
      %v6105 = vpack.c.bf16 %v5640, %v5639
      %v6106 = vpack.c.bf16 %v5642, %v5641
      %v6107 = vpack.c.bf16 %v5644, %v5643
      %v6108 = vpack.c.bf16 %v5646, %v5645
      %v6109 = vpack.c.bf16 %v5648, %v5647
      %v6110 = vpack.c.bf16 %v5650, %v5649
      %v6111 = vpack.c.bf16 %v5652, %v5651
      %v6112 = vpack.c.bf16 %v5654, %v5653
      %v6113 = vpack.c.bf16 %v5656, %v5655
      %v6114 = vpack.c.bf16 %v5658, %v5657
      %v6115 = vpack.c.bf16 %v5660, %v5659
      %v6116 = vpack.c.bf16 %v5662, %v5661
      %v6117 = vpack.c.bf16 %v5664, %v5663
      %v6118 = vpack.c.bf16 %v5666, %v5665
      %v6119 = vpack.c.bf16 %v5668, %v5667
      %v6120 = vpack.c.bf16 %v5670, %v5669
      %v6121 = vpack.c.bf16 %v5672, %v5671
      %v6122 = vpack.c.bf16 %v5674, %v5673
      %v6123 = vpack.c.bf16 %v5676, %v5675
      %v6124 = vpack.c.bf16 %v5678, %v5677
      %v6125 = vpack.c.bf16 %v5680, %v5679
      %v6126 = vpack.c.bf16 %v5682, %v5681
      %v6127 = vpack.c.bf16 %v5684, %v5683
      %v6128 = vpack.c.bf16 %v5686, %v5685
      %v6129 = vpack.c.bf16 %v5688, %v5687
      %v6130 = vpack.c.bf16 %v5690, %v5689
      %v6131 = vpack.c.bf16 %v5692, %v5691
      %v6132 = vpack.c.bf16 %v5694, %v5693
      %v6133 = vpack.c.bf16 %v5696, %v5695
      %v6134 = vpack.c.bf16 %v5698, %v5697
      %v6135 = vpack.c.bf16 %v5700, %v5699
      %v6136 = vpack.c.bf16 %v5702, %v5701
      %v6137 = vpack.c.bf16 %v5704, %v5703
      %v6138 = vpack.c.bf16 %v5706, %v5705
      %v6139 = vpack.c.bf16 %v5708, %v5707
      %v6140 = vpack.c.bf16 %v5710, %v5709
      %v6141 = vpack.c.bf16 %v5712, %v5711
      %v6142 = vpack.c.bf16 %v5714, %v5713
      %v6143 = vpack.c.bf16 %v5716, %v5715
      %v6144 = vpack.c.bf16 %v5718, %v5717
      %v6145 = vpack.c.bf16 %v5720, %v5719
      %v6146 = vpack.c.bf16 %v5722, %v5721
      %v6147 = vpack.c.bf16 %v5724, %v5723
      %v6148 = vpack.c.bf16 %v5726, %v5725
      %v6149 = vpack.c.bf16 %v5728, %v5727
      %v6150 = vpack.c.bf16 %v5730, %v5729
      %v6151 = vpack.c.bf16 %v5732, %v5731
      %v6152 = vpack.c.bf16 %v5734, %v5733
      %v6153 = vpack.c.bf16 %v5736, %v5735
      %v6154 = vpack.c.bf16 %v5738, %v5737
      %v6155 = vpack.c.bf16 %v5740, %v5739
      %v6156 = vpack.c.bf16 %v5742, %v5741
      %v6157 = vpack.c.bf16 %v5744, %v5743
      %v6158 = vpack.c.bf16 %v5746, %v5745
      %v6159 = vpack.c.bf16 %v5748, %v5747
      %v6160 = vpack.c.bf16 %v5750, %v5749
      %v6161 = vpack.c.bf16 %v5752, %v5751
      %v6162 = vpack.c.bf16 %v5754, %v5753
      %v6163 = vpack.c.bf16 %v5756, %v5755
      %v6164 = vpack.c.bf16 %v5758, %v5757
      %v6165 = vpack.c.bf16 %v5760, %v5759
      %v6166 = vpack.c.bf16 %v5762, %v5761
      %v6167 = vpack.c.bf16 %v5764, %v5763
      %v6168 = vpack.c.bf16 %v5766, %v5765
      %v6169 = vpack.c.bf16 %v5768, %v5767
      %v6170 = vpack.c.bf16 %v5770, %v5769
      %v6171 = vpack.c.bf16 %v5772, %v5771
      %v6172 = vpack.c.bf16 %v5774, %v5773
      %v6173 = vpack.c.bf16 %v5776, %v5775
      %v6174 = vpack.c.bf16 %v5778, %v5777
      %v6175 = vpack.c.bf16 %v5780, %v5779
      %v6176 = vpack.c.bf16 %v5782, %v5781
      %v6177 = vpack.c.bf16 %v5784, %v5783
      %v6178 = vpack.c.bf16 %v5786, %v5785
      %v6179 = vpack.c.bf16 %v5788, %v5787
      %v6180 = vpack.c.bf16 %v5790, %v5789
      %v6181 = vpack.c.bf16 %v5792, %v5791
      %v6182 = vpack.c.bf16 %v5794, %v5793
      %v6183 = vpack.c.bf16 %v5796, %v5795
      %v6184 = vpack.c.bf16 %v5798, %v5797
      %v6185 = vpack.c.bf16 %v5800, %v5799
      %v6186 = vpack.c.bf16 %v5802, %v5801
      %v6187 = vpack.c.bf16 %v5804, %v5803
      %v6188 = vpack.c.bf16 %v5806, %v5805
      %v6189 = vpack.c.bf16 %v5808, %v5807
      %v6190 = vpack.c.bf16 %v5810, %v5809
      %v6191 = vpack.c.bf16 %v5812, %v5811
      %v6192 = vpack.c.bf16 %v5814, %v5813
      %v6193 = vpack.c.bf16 %v5816, %v5815
      %v6194 = vpack.c.bf16 %v5818, %v5817
      %v6195 = vpack.c.bf16 %v5820, %v5819
      %v6196 = vpack.c.bf16 %v5822, %v5821
      %v6197 = vpack.c.bf16 %v5824, %v5823
      %v6198 = vpack.c.bf16 %v5826, %v5825
      %v6199 = vpack.c.bf16 %v5828, %v5827
      %v6200 = vpack.c.bf16 %v5830, %v5829
      %v6201 = vpack.c.bf16 %v5832, %v5831
      %v6202 = vpack.c.bf16 %v5834, %v5833
      %v6203 = vpack.c.bf16 %v5836, %v5835
      %v6204 = vpack.c.bf16 %v5838, %v5837
      %v6205 = vpack.c.bf16 %v5840, %v5839
      %v6206 = vpack.c.bf16 %v5842, %v5841
      %v6207 = vpack.c.bf16 %v5844, %v5843
      %v6208 = vpack.c.bf16 %v5846, %v5845
      %v6209 = vpack.c.bf16 %v5848, %v5847
      %v6210 = vpack.c.bf16 %v5850, %v5849
      %v6211 = vpack.c.bf16 %v5852, %v5851
      %v6212 = vpack.c.bf16 %v5854, %v5853
      %v6213 = vpack.c.bf16 %v5856, %v5855
      %v6214 = vpack.c.bf16 %v5858, %v5857
      %v6215 = vpack.c.bf16 %v5860, %v5859
      %v6216 = vpack.c.bf16 %v5862, %v5861
      %v6217 = vpack.c.bf16 %v5864, %v5863
      %v6218 = vpack.c.bf16 %v5866, %v5865
      %v6219 = vpack.c.bf16 %v5868, %v5867
      %v6220 = vpack.c.bf16 %v5870, %v5869
      %v6221 = vpack.c.bf16 %v5872, %v5871
      %v6222 = vpack.c.bf16 %v5874, %v5873
      %v6223 = vpack.c.bf16 %v5876, %v5875
      %v6224 = vpack.c.bf16 %v5878, %v5877
      %v6225 = vpack.c.bf16 %v5880, %v5879
      %v6226 = vpack.c.bf16 %v5882, %v5881
      %v6227 = vpack.c.bf16 %v5884, %v5883
      %v6228 = vpack.c.bf16 %v5886, %v5885
      %v6229 = vpack.c.bf16 %v5888, %v5887
      %v6230 = vpack.c.bf16 %v5890, %v5889
      %v6231 = vpack.c.bf16 %v5892, %v5891
      %v6232 = vpack.c.bf16 %v5894, %v5893
      %v6233 = vpack.c.bf16 %v5896, %v5895
      %v6234 = vpack.c.bf16 %v5898, %v5897
      %v6235 = vpack.c.bf16 %v5900, %v5899
      %v6236 = vpack.c.bf16 %v5902, %v5901
      %v6237 = vpack.c.bf16 %v5904, %v5903
      %v6238 = vpack.c.bf16 %v5906, %v5905
      %v6239 = vpack.c.bf16 %v5908, %v5907
      %v6240 = vpack.c.bf16 %v5910, %v5909
      %v6241 = vpack.c.bf16 %v5912, %v5911
      %v6242 = vpack.c.bf16 %v5914, %v5913
      %v6243 = vpack.c.bf16 %v5916, %v5915
      %v6244 = vpack.c.bf16 %v5918, %v5917
      %v6245 = vpack.c.bf16 %v5920, %v5919
      %v6246 = vpack.c.bf16 %v5922, %v5921
      %v6247 = vpack.c.bf16 %v5924, %v5923
      %v6248 = vpack.c.bf16 %v5926, %v5925
      %v6249 = vpack.c.bf16 %v5928, %v5927
      %v6250 = vpack.c.bf16 %v5930, %v5929
      %v6251 = vld [vmem:[%s3] sm:$0xf]
      %v6252 = vld [vmem:[%s3 + $0x4] sm:$0xf]
      %v6253 = vld [vmem:[%s3 + $0x8] sm:$0xf]
      %v6254 = vld [vmem:[%s3 + $0xc] sm:$0xf]
      %v6255 = vld [vmem:[%s3 + $0x10] sm:$0xf]
      %v6256 = vld [vmem:[%s3 + $0x14] sm:$0xf]
      %v6257 = vld [vmem:[%s3 + $0x18] sm:$0xf]
      %v6258 = vld [vmem:[%s3 + $0x1c] sm:$0xf]
      %v6259 = vld [vmem:[%s3 + $0x20] sm:$0xf]
      %v6260 = vld [vmem:[%s3 + $0x24] sm:$0xf]
      %v6261 = vld [vmem:[%s3 + $0x28] sm:$0xf]
      %v6262 = vld [vmem:[%s3 + $0x2c] sm:$0xf]
      %v6263 = vld [vmem:[%s3 + $0x30] sm:$0xf]
      %v6264 = vld [vmem:[%s3 + $0x34] sm:$0xf]
      %v6265 = vld [vmem:[%s3 + $0x38] sm:$0xf]
      %v6266 = vld [vmem:[%s3 + $0x3c] sm:$0xf]
      %v6267 = vld [vmem:[%s3 + $0x40] sm:$0xf]
      %v6268 = vld [vmem:[%s3 + $0x44] sm:$0xf]
      %v6269 = vld [vmem:[%s3 + $0x48] sm:$0xf]
      %v6270 = vld [vmem:[%s3 + $0x4c] sm:$0xf]
      %v6271 = vld [vmem:[%s3 + $0x50] sm:$0xf]
      %v6272 = vld [vmem:[%s3 + $0x54] sm:$0xf]
      %v6273 = vld [vmem:[%s3 + $0x58] sm:$0xf]
      %v6274 = vld [vmem:[%s3 + $0x5c] sm:$0xf]
      %v6275 = vld [vmem:[%s3 + $0x60] sm:$0xf]
      %v6276 = vld [vmem:[%s3 + $0x64] sm:$0xf]
      %v6277 = vld [vmem:[%s3 + $0x68] sm:$0xf]
      %v6278 = vld [vmem:[%s3 + $0x6c] sm:$0xf]
      %v6279 = vld [vmem:[%s3 + $0x70] sm:$0xf]
      %v6280 = vld [vmem:[%s3 + $0x74] sm:$0xf]
      %v6281 = vld [vmem:[%s3 + $0x78] sm:$0xf]
      %v6282 = vld [vmem:[%s3 + $0x7c] sm:$0xf]
      %v6315 = vunpack.c.l.b16 %v5931
      %v6316 = vunpack.c.h.b16 %v5931
      %v6317 = vunpack.c.l.b16 %v5941
      %v6318 = vunpack.c.h.b16 %v5941
      %v6319 = vunpack.c.l.b16 %v5951
      %v6320 = vunpack.c.h.b16 %v5951
      %v6321 = vunpack.c.l.b16 %v5961
      %v6322 = vunpack.c.h.b16 %v5961
      %v6323 = vunpack.c.l.b16 %v5971
      %v6324 = vunpack.c.h.b16 %v5971
      %v6325 = vunpack.c.l.b16 %v5981
      %v6326 = vunpack.c.h.b16 %v5981
      %v6327 = vunpack.c.l.b16 %v5991
      %v6328 = vunpack.c.h.b16 %v5991
      %v6329 = vunpack.c.l.b16 %v6001
      %v6330 = vunpack.c.h.b16 %v6001
      %v6331 = vunpack.c.l.b16 %v6011
      %v6332 = vunpack.c.h.b16 %v6011
      %v6333 = vunpack.c.l.b16 %v6021
      %v6334 = vunpack.c.h.b16 %v6021
      %v6335 = vunpack.c.l.b16 %v6031
      %v6336 = vunpack.c.h.b16 %v6031
      %v6337 = vunpack.c.l.b16 %v6041
      %v6338 = vunpack.c.h.b16 %v6041
      %v6339 = vunpack.c.l.b16 %v6051
      %v6340 = vunpack.c.h.b16 %v6051
      %v6341 = vunpack.c.l.b16 %v6061
      %v6342 = vunpack.c.h.b16 %v6061
      %v6343 = vunpack.c.l.b16 %v6071
      %v6344 = vunpack.c.h.b16 %v6071
      %v6345 = vunpack.c.l.b16 %v6081
      %v6346 = vunpack.c.h.b16 %v6081
      %v6347 = vunpack.c.l.b16 %v6091
      %v6348 = vunpack.c.h.b16 %v6091
      %v6349 = vunpack.c.l.b16 %v6101
      %v6350 = vunpack.c.h.b16 %v6101
      %v6351 = vunpack.c.l.b16 %v6111
      %v6352 = vunpack.c.h.b16 %v6111
      %v6353 = vunpack.c.l.b16 %v6121
      %v6354 = vunpack.c.h.b16 %v6121
      %v6355 = vunpack.c.l.b16 %v6131
      %v6356 = vunpack.c.h.b16 %v6131
      %v6357 = vunpack.c.l.b16 %v6141
      %v6358 = vunpack.c.h.b16 %v6141
      %v6359 = vunpack.c.l.b16 %v6151
      %v6360 = vunpack.c.h.b16 %v6151
      %v6361 = vunpack.c.l.b16 %v6161
      %v6362 = vunpack.c.h.b16 %v6161
      %v6363 = vunpack.c.l.b16 %v6171
      %v6364 = vunpack.c.h.b16 %v6171
      %v6365 = vunpack.c.l.b16 %v6181
      %v6366 = vunpack.c.h.b16 %v6181
      %v6367 = vunpack.c.l.b16 %v6191
      %v6368 = vunpack.c.h.b16 %v6191
      %v6369 = vunpack.c.l.b16 %v6201
      %v6370 = vunpack.c.h.b16 %v6201
      %v6371 = vunpack.c.l.b16 %v6211
      %v6372 = vunpack.c.h.b16 %v6211
      %v6373 = vunpack.c.l.b16 %v6221
      %v6374 = vunpack.c.h.b16 %v6221
      %v6375 = vunpack.c.l.b16 %v6231
      %v6376 = vunpack.c.h.b16 %v6231
      %v6377 = vunpack.c.l.b16 %v6241
      %v6378 = vunpack.c.h.b16 %v6241
      %v6379 = vpack.c.b16 %v6317, %v6315
      %v6380 = vpack.c.b16 %v6318, %v6316
      %v6381 = vpack.c.b16 %v6321, %v6319
      %v6382 = vpack.c.b16 %v6322, %v6320
      %v6383 = vpack.c.b16 %v6325, %v6323
      %v6384 = vpack.c.b16 %v6326, %v6324
      %v6385 = vpack.c.b16 %v6329, %v6327
      %v6386 = vpack.c.b16 %v6330, %v6328
      %v6387 = vpack.c.b16 %v6333, %v6331
      %v6388 = vpack.c.b16 %v6334, %v6332
      %v6389 = vpack.c.b16 %v6337, %v6335
      %v6390 = vpack.c.b16 %v6338, %v6336
      %v6391 = vpack.c.b16 %v6341, %v6339
      %v6392 = vpack.c.b16 %v6342, %v6340
      %v6393 = vpack.c.b16 %v6345, %v6343
      %v6394 = vpack.c.b16 %v6346, %v6344
      %v6395 = vpack.c.b16 %v6349, %v6347
      %v6396 = vpack.c.b16 %v6350, %v6348
      %v6397 = vpack.c.b16 %v6353, %v6351
      %v6398 = vpack.c.b16 %v6354, %v6352
      %v6399 = vpack.c.b16 %v6357, %v6355
      %v6400 = vpack.c.b16 %v6358, %v6356
      %v6401 = vpack.c.b16 %v6361, %v6359
      %v6402 = vpack.c.b16 %v6362, %v6360
      %v6403 = vpack.c.b16 %v6365, %v6363
      %v6404 = vpack.c.b16 %v6366, %v6364
      %v6405 = vpack.c.b16 %v6369, %v6367
      %v6406 = vpack.c.b16 %v6370, %v6368
      %v6407 = vpack.c.b16 %v6373, %v6371
      %v6408 = vpack.c.b16 %v6374, %v6372
      %v6409 = vpack.c.b16 %v6377, %v6375
      %v6410 = vpack.c.b16 %v6378, %v6376
      %v6475 = vunpack.c.l.b16 %v6251
      %v6476 = vunpack.c.l.b16 %v6252
      %v6477 = vunpack.c.l.b16 %v6253
      %v6478 = vunpack.c.l.b16 %v6254
      %v6479 = vunpack.c.l.b16 %v6255
      %v6480 = vunpack.c.l.b16 %v6256
      %v6481 = vunpack.c.l.b16 %v6257
      %v6482 = vunpack.c.l.b16 %v6258
      %v6483 = vunpack.c.l.b16 %v6259
      %v6484 = vunpack.c.l.b16 %v6260
      %v6485 = vunpack.c.l.b16 %v6261
      %v6486 = vunpack.c.l.b16 %v6262
      %v6487 = vunpack.c.l.b16 %v6263
      %v6488 = vunpack.c.l.b16 %v6264
      %v6489 = vunpack.c.l.b16 %v6265
      %v6490 = vunpack.c.l.b16 %v6266
      %v6491 = vunpack.c.l.b16 %v6267
      %v6492 = vunpack.c.l.b16 %v6268
      %v6493 = vunpack.c.l.b16 %v6269
      %v6494 = vunpack.c.l.b16 %v6270
      %v6495 = vunpack.c.l.b16 %v6271
      %v6496 = vunpack.c.l.b16 %v6272
      %v6497 = vunpack.c.l.b16 %v6273
      %v6498 = vunpack.c.l.b16 %v6274
      %v6499 = vunpack.c.l.b16 %v6275
      %v6500 = vunpack.c.l.b16 %v6276
      %v6501 = vunpack.c.l.b16 %v6277
      %v6502 = vunpack.c.l.b16 %v6278
      %v6503 = vunpack.c.l.b16 %v6279
      %v6504 = vunpack.c.l.b16 %v6280
      %v6505 = vunpack.c.l.b16 %v6281
      %v6506 = vunpack.c.l.b16 %v6282
      %v6507 = vpack.c.b16 %v6476, %v6475
      %v6508 = vpack.c.b16 %v6478, %v6477
      %v6509 = vpack.c.b16 %v6480, %v6479
      %v6510 = vpack.c.b16 %v6482, %v6481
      %v6511 = vpack.c.b16 %v6484, %v6483
      %v6512 = vpack.c.b16 %v6486, %v6485
      %v6513 = vpack.c.b16 %v6488, %v6487
      %v6514 = vpack.c.b16 %v6490, %v6489
      %v6515 = vpack.c.b16 %v6492, %v6491
      %v6516 = vpack.c.b16 %v6494, %v6493
      %v6517 = vpack.c.b16 %v6496, %v6495
      %v6518 = vpack.c.b16 %v6498, %v6497
      %v6519 = vpack.c.b16 %v6500, %v6499
      %v6520 = vpack.c.b16 %v6502, %v6501
      %v6521 = vpack.c.b16 %v6504, %v6503
      %v6522 = vpack.c.b16 %v6506, %v6505
      %6539 = vmatpush.bf16.msra.mxu0 %v6514
      %6540 = vmatpush.bf16.msra.mxu0 %v6513
      %6541 = vmatpush.bf16.msra.mxu0 %v6512
      %6542 = vmatpush.bf16.msra.mxu0 %v6511
      %6543 = vmatpush.bf16.msra.mxu0 %v6510
      %6544 = vmatpush.bf16.msra.mxu0 %v6509
      %6545 = vmatpush.bf16.msra.mxu0 %v6508
      %6546 = vmatpush.bf16.msra.mxu0 %v6507
      %6547 = vmatmul.bf16.gmra.mxu0 %v6379
      %v6548 = vpop.f32.mrf.mxu0
      %v6549 = vadd.f32 0.0, %v6548
      %v6550 = vpop.f32.mrf.mxu0
      %v6551 = vadd.f32 0.0, %v6550
      %6552 = vmatmul.bf16.gmra.mxu0 %v6381
      %v6553 = vpop.f32.mrf.mxu0
      %v6554 = vadd.f32 0.0, %v6553
      %v6555 = vpop.f32.mrf.mxu0
      %v6556 = vadd.f32 0.0, %v6555
      %6557 = vmatmul.bf16.gmra.mxu0 %v6383
      %v6558 = vpop.f32.mrf.mxu0
      %v6559 = vadd.f32 0.0, %v6558
      %v6560 = vpop.f32.mrf.mxu0
      %v6561 = vadd.f32 0.0, %v6560
      %6562 = vmatmul.bf16.gmra.mxu0 %v6385
      %v6563 = vpop.f32.mrf.mxu0
      %v6564 = vadd.f32 0.0, %v6563
      %v6565 = vpop.f32.mrf.mxu0
      %v6566 = vadd.f32 0.0, %v6565
      %6567 = vmatmul.bf16.gmra.mxu0 %v6387
      %v6568 = vpop.f32.mrf.mxu0
      %v6569 = vadd.f32 0.0, %v6568
      %v6570 = vpop.f32.mrf.mxu0
      %v6571 = vadd.f32 0.0, %v6570
      %6572 = vmatmul.bf16.gmra.mxu0 %v6389
      %v6573 = vpop.f32.mrf.mxu0
      %v6574 = vadd.f32 0.0, %v6573
      %v6575 = vpop.f32.mrf.mxu0
      %v6576 = vadd.f32 0.0, %v6575
      %6577 = vmatmul.bf16.gmra.mxu0 %v6391
      %v6578 = vpop.f32.mrf.mxu0
      %v6579 = vadd.f32 0.0, %v6578
      %v6580 = vpop.f32.mrf.mxu0
      %v6581 = vadd.f32 0.0, %v6580
      %6582 = vmatmul.bf16.gmra.mxu0 %v6393
      %v6583 = vpop.f32.mrf.mxu0
      %v6584 = vadd.f32 0.0, %v6583
      %v6585 = vpop.f32.mrf.mxu0
      %v6586 = vadd.f32 0.0, %v6585
      %6587 = vmatmul.bf16.gmra.mxu0 %v6395
      %v6588 = vpop.f32.mrf.mxu0
      %v6589 = vadd.f32 0.0, %v6588
      %v6590 = vpop.f32.mrf.mxu0
      %v6591 = vadd.f32 0.0, %v6590
      %6592 = vmatmul.bf16.gmra.mxu0 %v6397
      %v6593 = vpop.f32.mrf.mxu0
      %v6594 = vadd.f32 0.0, %v6593
      %v6595 = vpop.f32.mrf.mxu0
      %v6596 = vadd.f32 0.0, %v6595
      %6597 = vmatmul.bf16.gmra.mxu0 %v6399
      %v6598 = vpop.f32.mrf.mxu0
      %v6599 = vadd.f32 0.0, %v6598
      %v6600 = vpop.f32.mrf.mxu0
      %v6601 = vadd.f32 0.0, %v6600
      %6602 = vmatmul.bf16.gmra.mxu0 %v6401
      %v6603 = vpop.f32.mrf.mxu0
      %v6604 = vadd.f32 0.0, %v6603
      %v6605 = vpop.f32.mrf.mxu0
      %v6606 = vadd.f32 0.0, %v6605
      %6607 = vmatmul.bf16.gmra.mxu0 %v6403
      %v6608 = vpop.f32.mrf.mxu0
      %v6609 = vadd.f32 0.0, %v6608
      %v6610 = vpop.f32.mrf.mxu0
      %v6611 = vadd.f32 0.0, %v6610
      %6612 = vmatmul.bf16.gmra.mxu0 %v6405
      %v6613 = vpop.f32.mrf.mxu0
      %v6614 = vadd.f32 0.0, %v6613
      %v6615 = vpop.f32.mrf.mxu0
      %v6616 = vadd.f32 0.0, %v6615
      %6617 = vmatmul.bf16.gmra.mxu0 %v6407
      %v6618 = vpop.f32.mrf.mxu0
      %v6619 = vadd.f32 0.0, %v6618
      %v6620 = vpop.f32.mrf.mxu0
      %v6621 = vadd.f32 0.0, %v6620
      %6622 = vmatmul.bf16.gmra.mxu0 %v6409
      %v6623 = vpop.f32.mrf.mxu0
      %v6624 = vadd.f32 0.0, %v6623
      %v6625 = vpop.f32.mrf.mxu0
      %v6626 = vadd.f32 0.0, %v6625
      %6627 = vdwg.mxu0
      %6628 = vmatpush.bf16.msra.mxu0 %v6522
      %6629 = vmatpush.bf16.msra.mxu0 %v6521
      %6630 = vmatpush.bf16.msra.mxu0 %v6520
      %6631 = vmatpush.bf16.msra.mxu0 %v6519
      %6632 = vmatpush.bf16.msra.mxu0 %v6518
      %6633 = vmatpush.bf16.msra.mxu0 %v6517
      %6634 = vmatpush.bf16.msra.mxu0 %v6516
      %6635 = vmatpush.bf16.msra.mxu0 %v6515
      %6636 = vmatmul.bf16.gmra.mxu0 %v6380
      %v6637 = vpop.f32.mrf.mxu0
      %v6638 = vadd.f32 %v6549, %v6637
      %v6639 = vpop.f32.mrf.mxu0
      %v6640 = vadd.f32 %v6551, %v6639
      %6641 = vmatmul.bf16.gmra.mxu0 %v6382
      %v6642 = vpop.f32.mrf.mxu0
      %v6643 = vadd.f32 %v6554, %v6642
      %v6644 = vpop.f32.mrf.mxu0
      %v6645 = vadd.f32 %v6556, %v6644
      %6646 = vmatmul.bf16.gmra.mxu0 %v6384
      %v6647 = vpop.f32.mrf.mxu0
      %v6648 = vadd.f32 %v6559, %v6647
      %v6649 = vpop.f32.mrf.mxu0
      %v6650 = vadd.f32 %v6561, %v6649
      %6651 = vmatmul.bf16.gmra.mxu0 %v6386
      %v6652 = vpop.f32.mrf.mxu0
      %v6653 = vadd.f32 %v6564, %v6652
      %v6654 = vpop.f32.mrf.mxu0
      %v6655 = vadd.f32 %v6566, %v6654
      %6656 = vmatmul.bf16.gmra.mxu0 %v6388
      %v6657 = vpop.f32.mrf.mxu0
      %v6658 = vadd.f32 %v6569, %v6657
      %v6659 = vpop.f32.mrf.mxu0
      %v6660 = vadd.f32 %v6571, %v6659
      %6661 = vmatmul.bf16.gmra.mxu0 %v6390
      %v6662 = vpop.f32.mrf.mxu0
      %v6663 = vadd.f32 %v6574, %v6662
      %v6664 = vpop.f32.mrf.mxu0
      %v6665 = vadd.f32 %v6576, %v6664
      %6666 = vmatmul.bf16.gmra.mxu0 %v6392
      %v6667 = vpop.f32.mrf.mxu0
      %v6668 = vadd.f32 %v6579, %v6667
      %v6669 = vpop.f32.mrf.mxu0
      %v6670 = vadd.f32 %v6581, %v6669
      %6671 = vmatmul.bf16.gmra.mxu0 %v6394
      %v6672 = vpop.f32.mrf.mxu0
      %v6673 = vadd.f32 %v6584, %v6672
      %v6674 = vpop.f32.mrf.mxu0
      %v6675 = vadd.f32 %v6586, %v6674
      %6676 = vmatmul.bf16.gmra.mxu0 %v6396
      %v6677 = vpop.f32.mrf.mxu0
      %v6678 = vadd.f32 %v6589, %v6677
      %v6679 = vpop.f32.mrf.mxu0
      %v6680 = vadd.f32 %v6591, %v6679
      %6681 = vmatmul.bf16.gmra.mxu0 %v6398
      %v6682 = vpop.f32.mrf.mxu0
      %v6683 = vadd.f32 %v6594, %v6682
      %v6684 = vpop.f32.mrf.mxu0
      %v6685 = vadd.f32 %v6596, %v6684
      %6686 = vmatmul.bf16.gmra.mxu0 %v6400
      %v6687 = vpop.f32.mrf.mxu0
      %v6688 = vadd.f32 %v6599, %v6687
      %v6689 = vpop.f32.mrf.mxu0
      %v6690 = vadd.f32 %v6601, %v6689
      %6691 = vmatmul.bf16.gmra.mxu0 %v6402
      %v6692 = vpop.f32.mrf.mxu0
      %v6693 = vadd.f32 %v6604, %v6692
      %v6694 = vpop.f32.mrf.mxu0
      %v6695 = vadd.f32 %v6606, %v6694
      %6696 = vmatmul.bf16.gmra.mxu0 %v6404
      %v6697 = vpop.f32.mrf.mxu0
      %v6698 = vadd.f32 %v6609, %v6697
      %v6699 = vpop.f32.mrf.mxu0
      %v6700 = vadd.f32 %v6611, %v6699
      %6701 = vmatmul.bf16.gmra.mxu0 %v6406
      %v6702 = vpop.f32.mrf.mxu0
      %v6703 = vadd.f32 %v6614, %v6702
      %v6704 = vpop.f32.mrf.mxu0
      %v6705 = vadd.f32 %v6616, %v6704
      %6706 = vmatmul.bf16.gmra.mxu0 %v6408
      %v6707 = vpop.f32.mrf.mxu0
      %v6708 = vadd.f32 %v6619, %v6707
      %v6709 = vpop.f32.mrf.mxu0
      %v6710 = vadd.f32 %v6621, %v6709
      %6711 = vmatmul.bf16.gmra.mxu0 %v6410
      %v6712 = vpop.f32.mrf.mxu0
      %v6713 = vadd.f32 %v6624, %v6712
      %v6714 = vpop.f32.mrf.mxu0
      %v6715 = vadd.f32 %v6626, %v6714
      %6716 = vdwg.mxu0
      %v6749 = vunpack.c.l.b16 %v5932
      %v6750 = vunpack.c.h.b16 %v5932
      %v6751 = vunpack.c.l.b16 %v5942
      %v6752 = vunpack.c.h.b16 %v5942
      %v6753 = vunpack.c.l.b16 %v5952
      %v6754 = vunpack.c.h.b16 %v5952
      %v6755 = vunpack.c.l.b16 %v5962
      %v6756 = vunpack.c.h.b16 %v5962
      %v6757 = vunpack.c.l.b16 %v5972
      %v6758 = vunpack.c.h.b16 %v5972
      %v6759 = vunpack.c.l.b16 %v5982
      %v6760 = vunpack.c.h.b16 %v5982
      %v6761 = vunpack.c.l.b16 %v5992
      %v6762 = vunpack.c.h.b16 %v5992
      %v6763 = vunpack.c.l.b16 %v6002
      %v6764 = vunpack.c.h.b16 %v6002
      %v6765 = vunpack.c.l.b16 %v6012
      %v6766 = vunpack.c.h.b16 %v6012
      %v6767 = vunpack.c.l.b16 %v6022
      %v6768 = vunpack.c.h.b16 %v6022
      %v6769 = vunpack.c.l.b16 %v6032
      %v6770 = vunpack.c.h.b16 %v6032
      %v6771 = vunpack.c.l.b16 %v6042
      %v6772 = vunpack.c.h.b16 %v6042
      %v6773 = vunpack.c.l.b16 %v6052
      %v6774 = vunpack.c.h.b16 %v6052
      %v6775 = vunpack.c.l.b16 %v6062
      %v6776 = vunpack.c.h.b16 %v6062
      %v6777 = vunpack.c.l.b16 %v6072
      %v6778 = vunpack.c.h.b16 %v6072
      %v6779 = vunpack.c.l.b16 %v6082
      %v6780 = vunpack.c.h.b16 %v6082
      %v6781 = vunpack.c.l.b16 %v6092
      %v6782 = vunpack.c.h.b16 %v6092
      %v6783 = vunpack.c.l.b16 %v6102
      %v6784 = vunpack.c.h.b16 %v6102
      %v6785 = vunpack.c.l.b16 %v6112
      %v6786 = vunpack.c.h.b16 %v6112
      %v6787 = vunpack.c.l.b16 %v6122
      %v6788 = vunpack.c.h.b16 %v6122
      %v6789 = vunpack.c.l.b16 %v6132
      %v6790 = vunpack.c.h.b16 %v6132
      %v6791 = vunpack.c.l.b16 %v6142
      %v6792 = vunpack.c.h.b16 %v6142
      %v6793 = vunpack.c.l.b16 %v6152
      %v6794 = vunpack.c.h.b16 %v6152
      %v6795 = vunpack.c.l.b16 %v6162
      %v6796 = vunpack.c.h.b16 %v6162
      %v6797 = vunpack.c.l.b16 %v6172
      %v6798 = vunpack.c.h.b16 %v6172
      %v6799 = vunpack.c.l.b16 %v6182
      %v6800 = vunpack.c.h.b16 %v6182
      %v6801 = vunpack.c.l.b16 %v6192
      %v6802 = vunpack.c.h.b16 %v6192
      %v6803 = vunpack.c.l.b16 %v6202
      %v6804 = vunpack.c.h.b16 %v6202
      %v6805 = vunpack.c.l.b16 %v6212
      %v6806 = vunpack.c.h.b16 %v6212
      %v6807 = vunpack.c.l.b16 %v6222
      %v6808 = vunpack.c.h.b16 %v6222
      %v6809 = vunpack.c.l.b16 %v6232
      %v6810 = vunpack.c.h.b16 %v6232
      %v6811 = vunpack.c.l.b16 %v6242
      %v6812 = vunpack.c.h.b16 %v6242
      %v6813 = vpack.c.b16 %v6751, %v6749
      %v6814 = vpack.c.b16 %v6752, %v6750
      %v6815 = vpack.c.b16 %v6755, %v6753
      %v6816 = vpack.c.b16 %v6756, %v6754
      %v6817 = vpack.c.b16 %v6759, %v6757
      %v6818 = vpack.c.b16 %v6760, %v6758
      %v6819 = vpack.c.b16 %v6763, %v6761
      %v6820 = vpack.c.b16 %v6764, %v6762
      %v6821 = vpack.c.b16 %v6767, %v6765
      %v6822 = vpack.c.b16 %v6768, %v6766
      %v6823 = vpack.c.b16 %v6771, %v6769
      %v6824 = vpack.c.b16 %v6772, %v6770
      %v6825 = vpack.c.b16 %v6775, %v6773
      %v6826 = vpack.c.b16 %v6776, %v6774
      %v6827 = vpack.c.b16 %v6779, %v6777
      %v6828 = vpack.c.b16 %v6780, %v6778
      %v6829 = vpack.c.b16 %v6783, %v6781
      %v6830 = vpack.c.b16 %v6784, %v6782
      %v6831 = vpack.c.b16 %v6787, %v6785
      %v6832 = vpack.c.b16 %v6788, %v6786
      %v6833 = vpack.c.b16 %v6791, %v6789
      %v6834 = vpack.c.b16 %v6792, %v6790
      %v6835 = vpack.c.b16 %v6795, %v6793
      %v6836 = vpack.c.b16 %v6796, %v6794
      %v6837 = vpack.c.b16 %v6799, %v6797
      %v6838 = vpack.c.b16 %v6800, %v6798
      %v6839 = vpack.c.b16 %v6803, %v6801
      %v6840 = vpack.c.b16 %v6804, %v6802
      %v6841 = vpack.c.b16 %v6807, %v6805
      %v6842 = vpack.c.b16 %v6808, %v6806
      %v6843 = vpack.c.b16 %v6811, %v6809
      %v6844 = vpack.c.b16 %v6812, %v6810
      %6877 = vmatpush.bf16.msra.mxu0 %v6514
      %6878 = vmatpush.bf16.msra.mxu0 %v6513
      %6879 = vmatpush.bf16.msra.mxu0 %v6512
      %6880 = vmatpush.bf16.msra.mxu0 %v6511
      %6881 = vmatpush.bf16.msra.mxu0 %v6510
      %6882 = vmatpush.bf16.msra.mxu0 %v6509
      %6883 = vmatpush.bf16.msra.mxu0 %v6508
      %6884 = vmatpush.bf16.msra.mxu0 %v6507
      %6885 = vmatmul.bf16.gmra.mxu0 %v6813
      %v6886 = vpop.f32.mrf.mxu0
      %v6887 = vadd.f32 0.0, %v6886
      %v6888 = vpop.f32.mrf.mxu0
      %v6889 = vadd.f32 0.0, %v6888
      %6890 = vmatmul.bf16.gmra.mxu0 %v6815
      %v6891 = vpop.f32.mrf.mxu0
      %v6892 = vadd.f32 0.0, %v6891
      %v6893 = vpop.f32.mrf.mxu0
      %v6894 = vadd.f32 0.0, %v6893
      %6895 = vmatmul.bf16.gmra.mxu0 %v6817
      %v6896 = vpop.f32.mrf.mxu0
      %v6897 = vadd.f32 0.0, %v6896
      %v6898 = vpop.f32.mrf.mxu0
      %v6899 = vadd.f32 0.0, %v6898
      %6900 = vmatmul.bf16.gmra.mxu0 %v6819
      %v6901 = vpop.f32.mrf.mxu0
      %v6902 = vadd.f32 0.0, %v6901
      %v6903 = vpop.f32.mrf.mxu0
      %v6904 = vadd.f32 0.0, %v6903
      %6905 = vmatmul.bf16.gmra.mxu0 %v6821
      %v6906 = vpop.f32.mrf.mxu0
      %v6907 = vadd.f32 0.0, %v6906
      %v6908 = vpop.f32.mrf.mxu0
      %v6909 = vadd.f32 0.0, %v6908
      %6910 = vmatmul.bf16.gmra.mxu0 %v6823
      %v6911 = vpop.f32.mrf.mxu0
      %v6912 = vadd.f32 0.0, %v6911
      %v6913 = vpop.f32.mrf.mxu0
      %v6914 = vadd.f32 0.0, %v6913
      %6915 = vmatmul.bf16.gmra.mxu0 %v6825
      %v6916 = vpop.f32.mrf.mxu0
      %v6917 = vadd.f32 0.0, %v6916
      %v6918 = vpop.f32.mrf.mxu0
      %v6919 = vadd.f32 0.0, %v6918
      %6920 = vmatmul.bf16.gmra.mxu0 %v6827
      %v6921 = vpop.f32.mrf.mxu0
      %v6922 = vadd.f32 0.0, %v6921
      %v6923 = vpop.f32.mrf.mxu0
      %v6924 = vadd.f32 0.0, %v6923
      %6925 = vmatmul.bf16.gmra.mxu0 %v6829
      %v6926 = vpop.f32.mrf.mxu0
      %v6927 = vadd.f32 0.0, %v6926
      %v6928 = vpop.f32.mrf.mxu0
      %v6929 = vadd.f32 0.0, %v6928
      %6930 = vmatmul.bf16.gmra.mxu0 %v6831
      %v6931 = vpop.f32.mrf.mxu0
      %v6932 = vadd.f32 0.0, %v6931
      %v6933 = vpop.f32.mrf.mxu0
      %v6934 = vadd.f32 0.0, %v6933
      %6935 = vmatmul.bf16.gmra.mxu0 %v6833
      %v6936 = vpop.f32.mrf.mxu0
      %v6937 = vadd.f32 0.0, %v6936
      %v6938 = vpop.f32.mrf.mxu0
      %v6939 = vadd.f32 0.0, %v6938
      %6940 = vmatmul.bf16.gmra.mxu0 %v6835
      %v6941 = vpop.f32.mrf.mxu0
      %v6942 = vadd.f32 0.0, %v6941
      %v6943 = vpop.f32.mrf.mxu0
      %v6944 = vadd.f32 0.0, %v6943
      %6945 = vmatmul.bf16.gmra.mxu0 %v6837
      %v6946 = vpop.f32.mrf.mxu0
      %v6947 = vadd.f32 0.0, %v6946
      %v6948 = vpop.f32.mrf.mxu0
      %v6949 = vadd.f32 0.0, %v6948
      %6950 = vmatmul.bf16.gmra.mxu0 %v6839
      %v6951 = vpop.f32.mrf.mxu0
      %v6952 = vadd.f32 0.0, %v6951
      %v6953 = vpop.f32.mrf.mxu0
      %v6954 = vadd.f32 0.0, %v6953
      %6955 = vmatmul.bf16.gmra.mxu0 %v6841
      %v6956 = vpop.f32.mrf.mxu0
      %v6957 = vadd.f32 0.0, %v6956
      %v6958 = vpop.f32.mrf.mxu0
      %v6959 = vadd.f32 0.0, %v6958
      %6960 = vmatmul.bf16.gmra.mxu0 %v6843
      %v6961 = vpop.f32.mrf.mxu0
      %v6962 = vadd.f32 0.0, %v6961
      %v6963 = vpop.f32.mrf.mxu0
      %v6964 = vadd.f32 0.0, %v6963
      %6965 = vdwg.mxu0
      %6966 = vmatpush.bf16.msra.mxu0 %v6522
      %6967 = vmatpush.bf16.msra.mxu0 %v6521
      %6968 = vmatpush.bf16.msra.mxu0 %v6520
      %6969 = vmatpush.bf16.msra.mxu0 %v6519
      %6970 = vmatpush.bf16.msra.mxu0 %v6518
      %6971 = vmatpush.bf16.msra.mxu0 %v6517
      %6972 = vmatpush.bf16.msra.mxu0 %v6516
      %6973 = vmatpush.bf16.msra.mxu0 %v6515
      %6974 = vmatmul.bf16.gmra.mxu0 %v6814
      %v6975 = vpop.f32.mrf.mxu0
      %v6976 = vadd.f32 %v6887, %v6975
      %v6977 = vpop.f32.mrf.mxu0
      %v6978 = vadd.f32 %v6889, %v6977
      %6979 = vmatmul.bf16.gmra.mxu0 %v6816
      %v6980 = vpop.f32.mrf.mxu0
      %v6981 = vadd.f32 %v6892, %v6980
      %v6982 = vpop.f32.mrf.mxu0
      %v6983 = vadd.f32 %v6894, %v6982
      %6984 = vmatmul.bf16.gmra.mxu0 %v6818
      %v6985 = vpop.f32.mrf.mxu0
      %v6986 = vadd.f32 %v6897, %v6985
      %v6987 = vpop.f32.mrf.mxu0
      %v6988 = vadd.f32 %v6899, %v6987
      %6989 = vmatmul.bf16.gmra.mxu0 %v6820
      %v6990 = vpop.f32.mrf.mxu0
      %v6991 = vadd.f32 %v6902, %v6990
      %v6992 = vpop.f32.mrf.mxu0
      %v6993 = vadd.f32 %v6904, %v6992
      %6994 = vmatmul.bf16.gmra.mxu0 %v6822
      %v6995 = vpop.f32.mrf.mxu0
      %v6996 = vadd.f32 %v6907, %v6995
      %v6997 = vpop.f32.mrf.mxu0
      %v6998 = vadd.f32 %v6909, %v6997
      %6999 = vmatmul.bf16.gmra.mxu0 %v6824
      %v7000 = vpop.f32.mrf.mxu0
      %v7001 = vadd.f32 %v6912, %v7000
      %v7002 = vpop.f32.mrf.mxu0
      %v7003 = vadd.f32 %v6914, %v7002
      %7004 = vmatmul.bf16.gmra.mxu0 %v6826
      %v7005 = vpop.f32.mrf.mxu0
      %v7006 = vadd.f32 %v6917, %v7005
      %v7007 = vpop.f32.mrf.mxu0
      %v7008 = vadd.f32 %v6919, %v7007
      %7009 = vmatmul.bf16.gmra.mxu0 %v6828
      %v7010 = vpop.f32.mrf.mxu0
      %v7011 = vadd.f32 %v6922, %v7010
      %v7012 = vpop.f32.mrf.mxu0
      %v7013 = vadd.f32 %v6924, %v7012
      %7014 = vmatmul.bf16.gmra.mxu0 %v6830
      %v7015 = vpop.f32.mrf.mxu0
      %v7016 = vadd.f32 %v6927, %v7015
      %v7017 = vpop.f32.mrf.mxu0
      %v7018 = vadd.f32 %v6929, %v7017
      %7019 = vmatmul.bf16.gmra.mxu0 %v6832
      %v7020 = vpop.f32.mrf.mxu0
      %v7021 = vadd.f32 %v6932, %v7020
      %v7022 = vpop.f32.mrf.mxu0
      %v7023 = vadd.f32 %v6934, %v7022
      %7024 = vmatmul.bf16.gmra.mxu0 %v6834
      %v7025 = vpop.f32.mrf.mxu0
      %v7026 = vadd.f32 %v6937, %v7025
      %v7027 = vpop.f32.mrf.mxu0
      %v7028 = vadd.f32 %v6939, %v7027
      %7029 = vmatmul.bf16.gmra.mxu0 %v6836
      %v7030 = vpop.f32.mrf.mxu0
      %v7031 = vadd.f32 %v6942, %v7030
      %v7032 = vpop.f32.mrf.mxu0
      %v7033 = vadd.f32 %v6944, %v7032
      %7034 = vmatmul.bf16.gmra.mxu0 %v6838
      %v7035 = vpop.f32.mrf.mxu0
      %v7036 = vadd.f32 %v6947, %v7035
      %v7037 = vpop.f32.mrf.mxu0
      %v7038 = vadd.f32 %v6949, %v7037
      %7039 = vmatmul.bf16.gmra.mxu0 %v6840
      %v7040 = vpop.f32.mrf.mxu0
      %v7041 = vadd.f32 %v6952, %v7040
      %v7042 = vpop.f32.mrf.mxu0
      %v7043 = vadd.f32 %v6954, %v7042
      %7044 = vmatmul.bf16.gmra.mxu0 %v6842
      %v7045 = vpop.f32.mrf.mxu0
      %v7046 = vadd.f32 %v6957, %v7045
      %v7047 = vpop.f32.mrf.mxu0
      %v7048 = vadd.f32 %v6959, %v7047
      %7049 = vmatmul.bf16.gmra.mxu0 %v6844
      %v7050 = vpop.f32.mrf.mxu0
      %v7051 = vadd.f32 %v6962, %v7050
      %v7052 = vpop.f32.mrf.mxu0
      %v7053 = vadd.f32 %v6964, %v7052
      %7054 = vdwg.mxu0
      %v7055 = vmax.f32 %v6638, %v6976
      %v7056 = vmax.f32 %v6640, %v6978
      %v7057 = vmax.f32 %v6643, %v6981
      %v7058 = vmax.f32 %v6645, %v6983
      %v7059 = vmax.f32 %v6648, %v6986
      %v7060 = vmax.f32 %v6650, %v6988
      %v7061 = vmax.f32 %v6653, %v6991
      %v7062 = vmax.f32 %v6655, %v6993
      %v7063 = vmax.f32 %v6658, %v6996
      %v7064 = vmax.f32 %v6660, %v6998
      %v7065 = vmax.f32 %v6663, %v7001
      %v7066 = vmax.f32 %v6665, %v7003
      %v7067 = vmax.f32 %v6668, %v7006
      %v7068 = vmax.f32 %v6670, %v7008
      %v7069 = vmax.f32 %v6673, %v7011
      %v7070 = vmax.f32 %v6675, %v7013
      %v7071 = vmax.f32 %v6678, %v7016
      %v7072 = vmax.f32 %v6680, %v7018
      %v7073 = vmax.f32 %v6683, %v7021
      %v7074 = vmax.f32 %v6685, %v7023
      %v7075 = vmax.f32 %v6688, %v7026
      %v7076 = vmax.f32 %v6690, %v7028
      %v7077 = vmax.f32 %v6693, %v7031
      %v7078 = vmax.f32 %v6695, %v7033
      %v7079 = vmax.f32 %v6698, %v7036
      %v7080 = vmax.f32 %v6700, %v7038
      %v7081 = vmax.f32 %v6703, %v7041
      %v7082 = vmax.f32 %v6705, %v7043
      %v7083 = vmax.f32 %v6708, %v7046
      %v7084 = vmax.f32 %v6710, %v7048
      %v7085 = vmax.f32 %v6713, %v7051
      %v7086 = vmax.f32 %v6715, %v7053
      %v7119 = vunpack.c.l.b16 %v5933
      %v7120 = vunpack.c.h.b16 %v5933
      %v7121 = vunpack.c.l.b16 %v5943
      %v7122 = vunpack.c.h.b16 %v5943
      %v7123 = vunpack.c.l.b16 %v5953
      %v7124 = vunpack.c.h.b16 %v5953
      %v7125 = vunpack.c.l.b16 %v5963
      %v7126 = vunpack.c.h.b16 %v5963
      %v7127 = vunpack.c.l.b16 %v5973
      %v7128 = vunpack.c.h.b16 %v5973
      %v7129 = vunpack.c.l.b16 %v5983
      %v7130 = vunpack.c.h.b16 %v5983
      %v7131 = vunpack.c.l.b16 %v5993
      %v7132 = vunpack.c.h.b16 %v5993
      %v7133 = vunpack.c.l.b16 %v6003
      %v7134 = vunpack.c.h.b16 %v6003
      %v7135 = vunpack.c.l.b16 %v6013
      %v7136 = vunpack.c.h.b16 %v6013
      %v7137 = vunpack.c.l.b16 %v6023
      %v7138 = vunpack.c.h.b16 %v6023
      %v7139 = vunpack.c.l.b16 %v6033
      %v7140 = vunpack.c.h.b16 %v6033
      %v7141 = vunpack.c.l.b16 %v6043
      %v7142 = vunpack.c.h.b16 %v6043
      %v7143 = vunpack.c.l.b16 %v6053
      %v7144 = vunpack.c.h.b16 %v6053
      %v7145 = vunpack.c.l.b16 %v6063
      %v7146 = vunpack.c.h.b16 %v6063
      %v7147 = vunpack.c.l.b16 %v6073
      %v7148 = vunpack.c.h.b16 %v6073
      %v7149 = vunpack.c.l.b16 %v6083
      %v7150 = vunpack.c.h.b16 %v6083
      %v7151 = vunpack.c.l.b16 %v6093
      %v7152 = vunpack.c.h.b16 %v6093
      %v7153 = vunpack.c.l.b16 %v6103
      %v7154 = vunpack.c.h.b16 %v6103
      %v7155 = vunpack.c.l.b16 %v6113
      %v7156 = vunpack.c.h.b16 %v6113
      %v7157 = vunpack.c.l.b16 %v6123
      %v7158 = vunpack.c.h.b16 %v6123
      %v7159 = vunpack.c.l.b16 %v6133
      %v7160 = vunpack.c.h.b16 %v6133
      %v7161 = vunpack.c.l.b16 %v6143
      %v7162 = vunpack.c.h.b16 %v6143
      %v7163 = vunpack.c.l.b16 %v6153
      %v7164 = vunpack.c.h.b16 %v6153
      %v7165 = vunpack.c.l.b16 %v6163
      %v7166 = vunpack.c.h.b16 %v6163
      %v7167 = vunpack.c.l.b16 %v6173
      %v7168 = vunpack.c.h.b16 %v6173
      %v7169 = vunpack.c.l.b16 %v6183
      %v7170 = vunpack.c.h.b16 %v6183
      %v7171 = vunpack.c.l.b16 %v6193
      %v7172 = vunpack.c.h.b16 %v6193
      %v7173 = vunpack.c.l.b16 %v6203
      %v7174 = vunpack.c.h.b16 %v6203
      %v7175 = vunpack.c.l.b16 %v6213
      %v7176 = vunpack.c.h.b16 %v6213
      %v7177 = vunpack.c.l.b16 %v6223
      %v7178 = vunpack.c.h.b16 %v6223
      %v7179 = vunpack.c.l.b16 %v6233
      %v7180 = vunpack.c.h.b16 %v6233
      %v7181 = vunpack.c.l.b16 %v6243
      %v7182 = vunpack.c.h.b16 %v6243
      %v7183 = vpack.c.b16 %v7121, %v7119
      %v7184 = vpack.c.b16 %v7122, %v7120
      %v7185 = vpack.c.b16 %v7125, %v7123
      %v7186 = vpack.c.b16 %v7126, %v7124
      %v7187 = vpack.c.b16 %v7129, %v7127
      %v7188 = vpack.c.b16 %v7130, %v7128
      %v7189 = vpack.c.b16 %v7133, %v7131
      %v7190 = vpack.c.b16 %v7134, %v7132
      %v7191 = vpack.c.b16 %v7137, %v7135
      %v7192 = vpack.c.b16 %v7138, %v7136
      %v7193 = vpack.c.b16 %v7141, %v7139
      %v7194 = vpack.c.b16 %v7142, %v7140
      %v7195 = vpack.c.b16 %v7145, %v7143
      %v7196 = vpack.c.b16 %v7146, %v7144
      %v7197 = vpack.c.b16 %v7149, %v7147
      %v7198 = vpack.c.b16 %v7150, %v7148
      %v7199 = vpack.c.b16 %v7153, %v7151
      %v7200 = vpack.c.b16 %v7154, %v7152
      %v7201 = vpack.c.b16 %v7157, %v7155
      %v7202 = vpack.c.b16 %v7158, %v7156
      %v7203 = vpack.c.b16 %v7161, %v7159
      %v7204 = vpack.c.b16 %v7162, %v7160
      %v7205 = vpack.c.b16 %v7165, %v7163
      %v7206 = vpack.c.b16 %v7166, %v7164
      %v7207 = vpack.c.b16 %v7169, %v7167
      %v7208 = vpack.c.b16 %v7170, %v7168
      %v7209 = vpack.c.b16 %v7173, %v7171
      %v7210 = vpack.c.b16 %v7174, %v7172
      %v7211 = vpack.c.b16 %v7177, %v7175
      %v7212 = vpack.c.b16 %v7178, %v7176
      %v7213 = vpack.c.b16 %v7181, %v7179
      %v7214 = vpack.c.b16 %v7182, %v7180
      %7247 = vmatpush.bf16.msra.mxu0 %v6514
      %7248 = vmatpush.bf16.msra.mxu0 %v6513
      %7249 = vmatpush.bf16.msra.mxu0 %v6512
      %7250 = vmatpush.bf16.msra.mxu0 %v6511
      %7251 = vmatpush.bf16.msra.mxu0 %v6510
      %7252 = vmatpush.bf16.msra.mxu0 %v6509
      %7253 = vmatpush.bf16.msra.mxu0 %v6508
      %7254 = vmatpush.bf16.msra.mxu0 %v6507
      %7255 = vmatmul.bf16.gmra.mxu0 %v7183
      %v7256 = vpop.f32.mrf.mxu0
      %v7257 = vadd.f32 0.0, %v7256
      %v7258 = vpop.f32.mrf.mxu0
      %v7259 = vadd.f32 0.0, %v7258
      %7260 = vmatmul.bf16.gmra.mxu0 %v7185
      %v7261 = vpop.f32.mrf.mxu0
      %v7262 = vadd.f32 0.0, %v7261
      %v7263 = vpop.f32.mrf.mxu0
      %v7264 = vadd.f32 0.0, %v7263
      %7265 = vmatmul.bf16.gmra.mxu0 %v7187
      %v7266 = vpop.f32.mrf.mxu0
      %v7267 = vadd.f32 0.0, %v7266
      %v7268 = vpop.f32.mrf.mxu0
      %v7269 = vadd.f32 0.0, %v7268
      %7270 = vmatmul.bf16.gmra.mxu0 %v7189
      %v7271 = vpop.f32.mrf.mxu0
      %v7272 = vadd.f32 0.0, %v7271
      %v7273 = vpop.f32.mrf.mxu0
      %v7274 = vadd.f32 0.0, %v7273
      %7275 = vmatmul.bf16.gmra.mxu0 %v7191
      %v7276 = vpop.f32.mrf.mxu0
      %v7277 = vadd.f32 0.0, %v7276
      %v7278 = vpop.f32.mrf.mxu0
      %v7279 = vadd.f32 0.0, %v7278
      %7280 = vmatmul.bf16.gmra.mxu0 %v7193
      %v7281 = vpop.f32.mrf.mxu0
      %v7282 = vadd.f32 0.0, %v7281
      %v7283 = vpop.f32.mrf.mxu0
      %v7284 = vadd.f32 0.0, %v7283
      %7285 = vmatmul.bf16.gmra.mxu0 %v7195
      %v7286 = vpop.f32.mrf.mxu0
      %v7287 = vadd.f32 0.0, %v7286
      %v7288 = vpop.f32.mrf.mxu0
      %v7289 = vadd.f32 0.0, %v7288
      %7290 = vmatmul.bf16.gmra.mxu0 %v7197
      %v7291 = vpop.f32.mrf.mxu0
      %v7292 = vadd.f32 0.0, %v7291
      %v7293 = vpop.f32.mrf.mxu0
      %v7294 = vadd.f32 0.0, %v7293
      %7295 = vmatmul.bf16.gmra.mxu0 %v7199
      %v7296 = vpop.f32.mrf.mxu0
      %v7297 = vadd.f32 0.0, %v7296
      %v7298 = vpop.f32.mrf.mxu0
      %v7299 = vadd.f32 0.0, %v7298
      %7300 = vmatmul.bf16.gmra.mxu0 %v7201
      %v7301 = vpop.f32.mrf.mxu0
      %v7302 = vadd.f32 0.0, %v7301
      %v7303 = vpop.f32.mrf.mxu0
      %v7304 = vadd.f32 0.0, %v7303
      %7305 = vmatmul.bf16.gmra.mxu0 %v7203
      %v7306 = vpop.f32.mrf.mxu0
      %v7307 = vadd.f32 0.0, %v7306
      %v7308 = vpop.f32.mrf.mxu0
      %v7309 = vadd.f32 0.0, %v7308
      %7310 = vmatmul.bf16.gmra.mxu0 %v7205
      %v7311 = vpop.f32.mrf.mxu0
      %v7312 = vadd.f32 0.0, %v7311
      %v7313 = vpop.f32.mrf.mxu0
      %v7314 = vadd.f32 0.0, %v7313
      %7315 = vmatmul.bf16.gmra.mxu0 %v7207
      %v7316 = vpop.f32.mrf.mxu0
      %v7317 = vadd.f32 0.0, %v7316
      %v7318 = vpop.f32.mrf.mxu0
      %v7319 = vadd.f32 0.0, %v7318
      %7320 = vmatmul.bf16.gmra.mxu0 %v7209
      %v7321 = vpop.f32.mrf.mxu0
      %v7322 = vadd.f32 0.0, %v7321
      %v7323 = vpop.f32.mrf.mxu0
      %v7324 = vadd.f32 0.0, %v7323
      %7325 = vmatmul.bf16.gmra.mxu0 %v7211
      %v7326 = vpop.f32.mrf.mxu0
      %v7327 = vadd.f32 0.0, %v7326
      %v7328 = vpop.f32.mrf.mxu0
      %v7329 = vadd.f32 0.0, %v7328
      %7330 = vmatmul.bf16.gmra.mxu0 %v7213
      %v7331 = vpop.f32.mrf.mxu0
      %v7332 = vadd.f32 0.0, %v7331
      %v7333 = vpop.f32.mrf.mxu0
      %v7334 = vadd.f32 0.0, %v7333
      %7335 = vdwg.mxu0
      %7336 = vmatpush.bf16.msra.mxu0 %v6522
      %7337 = vmatpush.bf16.msra.mxu0 %v6521
      %7338 = vmatpush.bf16.msra.mxu0 %v6520
      %7339 = vmatpush.bf16.msra.mxu0 %v6519
      %7340 = vmatpush.bf16.msra.mxu0 %v6518
      %7341 = vmatpush.bf16.msra.mxu0 %v6517
      %7342 = vmatpush.bf16.msra.mxu0 %v6516
      %7343 = vmatpush.bf16.msra.mxu0 %v6515
      %7344 = vmatmul.bf16.gmra.mxu0 %v7184
      %v7345 = vpop.f32.mrf.mxu0
      %v7346 = vadd.f32 %v7257, %v7345
      %v7347 = vpop.f32.mrf.mxu0
      %v7348 = vadd.f32 %v7259, %v7347
      %7349 = vmatmul.bf16.gmra.mxu0 %v7186
      %v7350 = vpop.f32.mrf.mxu0
      %v7351 = vadd.f32 %v7262, %v7350
      %v7352 = vpop.f32.mrf.mxu0
      %v7353 = vadd.f32 %v7264, %v7352
      %7354 = vmatmul.bf16.gmra.mxu0 %v7188
      %v7355 = vpop.f32.mrf.mxu0
      %v7356 = vadd.f32 %v7267, %v7355
      %v7357 = vpop.f32.mrf.mxu0
      %v7358 = vadd.f32 %v7269, %v7357
      %7359 = vmatmul.bf16.gmra.mxu0 %v7190
      %v7360 = vpop.f32.mrf.mxu0
      %v7361 = vadd.f32 %v7272, %v7360
      %v7362 = vpop.f32.mrf.mxu0
      %v7363 = vadd.f32 %v7274, %v7362
      %7364 = vmatmul.bf16.gmra.mxu0 %v7192
      %v7365 = vpop.f32.mrf.mxu0
      %v7366 = vadd.f32 %v7277, %v7365
      %v7367 = vpop.f32.mrf.mxu0
      %v7368 = vadd.f32 %v7279, %v7367
      %7369 = vmatmul.bf16.gmra.mxu0 %v7194
      %v7370 = vpop.f32.mrf.mxu0
      %v7371 = vadd.f32 %v7282, %v7370
      %v7372 = vpop.f32.mrf.mxu0
      %v7373 = vadd.f32 %v7284, %v7372
      %7374 = vmatmul.bf16.gmra.mxu0 %v7196
      %v7375 = vpop.f32.mrf.mxu0
      %v7376 = vadd.f32 %v7287, %v7375
      %v7377 = vpop.f32.mrf.mxu0
      %v7378 = vadd.f32 %v7289, %v7377
      %7379 = vmatmul.bf16.gmra.mxu0 %v7198
      %v7380 = vpop.f32.mrf.mxu0
      %v7381 = vadd.f32 %v7292, %v7380
      %v7382 = vpop.f32.mrf.mxu0
      %v7383 = vadd.f32 %v7294, %v7382
      %7384 = vmatmul.bf16.gmra.mxu0 %v7200
      %v7385 = vpop.f32.mrf.mxu0
      %v7386 = vadd.f32 %v7297, %v7385
      %v7387 = vpop.f32.mrf.mxu0
      %v7388 = vadd.f32 %v7299, %v7387
      %7389 = vmatmul.bf16.gmra.mxu0 %v7202
      %v7390 = vpop.f32.mrf.mxu0
      %v7391 = vadd.f32 %v7302, %v7390
      %v7392 = vpop.f32.mrf.mxu0
      %v7393 = vadd.f32 %v7304, %v7392
      %7394 = vmatmul.bf16.gmra.mxu0 %v7204
      %v7395 = vpop.f32.mrf.mxu0
      %v7396 = vadd.f32 %v7307, %v7395
      %v7397 = vpop.f32.mrf.mxu0
      %v7398 = vadd.f32 %v7309, %v7397
      %7399 = vmatmul.bf16.gmra.mxu0 %v7206
      %v7400 = vpop.f32.mrf.mxu0
      %v7401 = vadd.f32 %v7312, %v7400
      %v7402 = vpop.f32.mrf.mxu0
      %v7403 = vadd.f32 %v7314, %v7402
      %7404 = vmatmul.bf16.gmra.mxu0 %v7208
      %v7405 = vpop.f32.mrf.mxu0
      %v7406 = vadd.f32 %v7317, %v7405
      %v7407 = vpop.f32.mrf.mxu0
      %v7408 = vadd.f32 %v7319, %v7407
      %7409 = vmatmul.bf16.gmra.mxu0 %v7210
      %v7410 = vpop.f32.mrf.mxu0
      %v7411 = vadd.f32 %v7322, %v7410
      %v7412 = vpop.f32.mrf.mxu0
      %v7413 = vadd.f32 %v7324, %v7412
      %7414 = vmatmul.bf16.gmra.mxu0 %v7212
      %v7415 = vpop.f32.mrf.mxu0
      %v7416 = vadd.f32 %v7327, %v7415
      %v7417 = vpop.f32.mrf.mxu0
      %v7418 = vadd.f32 %v7329, %v7417
      %7419 = vmatmul.bf16.gmra.mxu0 %v7214
      %v7420 = vpop.f32.mrf.mxu0
      %v7421 = vadd.f32 %v7332, %v7420
      %v7422 = vpop.f32.mrf.mxu0
      %v7423 = vadd.f32 %v7334, %v7422
      %7424 = vdwg.mxu0
      %v7425 = vmax.f32 %v7055, %v7346
      %v7426 = vmax.f32 %v7056, %v7348
      %v7427 = vmax.f32 %v7057, %v7351
      %v7428 = vmax.f32 %v7058, %v7353
      %v7429 = vmax.f32 %v7059, %v7356
      %v7430 = vmax.f32 %v7060, %v7358
      %v7431 = vmax.f32 %v7061, %v7361
      %v7432 = vmax.f32 %v7062, %v7363
      %v7433 = vmax.f32 %v7063, %v7366
      %v7434 = vmax.f32 %v7064, %v7368
      %v7435 = vmax.f32 %v7065, %v7371
      %v7436 = vmax.f32 %v7066, %v7373
      %v7437 = vmax.f32 %v7067, %v7376
      %v7438 = vmax.f32 %v7068, %v7378
      %v7439 = vmax.f32 %v7069, %v7381
      %v7440 = vmax.f32 %v7070, %v7383
      %v7441 = vmax.f32 %v7071, %v7386
      %v7442 = vmax.f32 %v7072, %v7388
      %v7443 = vmax.f32 %v7073, %v7391
      %v7444 = vmax.f32 %v7074, %v7393
      %v7445 = vmax.f32 %v7075, %v7396
      %v7446 = vmax.f32 %v7076, %v7398
      %v7447 = vmax.f32 %v7077, %v7401
      %v7448 = vmax.f32 %v7078, %v7403
      %v7449 = vmax.f32 %v7079, %v7406
      %v7450 = vmax.f32 %v7080, %v7408
      %v7451 = vmax.f32 %v7081, %v7411
      %v7452 = vmax.f32 %v7082, %v7413
      %v7453 = vmax.f32 %v7083, %v7416
      %v7454 = vmax.f32 %v7084, %v7418
      %v7455 = vmax.f32 %v7085, %v7421
      %v7456 = vmax.f32 %v7086, %v7423
      %v7489 = vunpack.c.l.b16 %v5934
      %v7490 = vunpack.c.h.b16 %v5934
      %v7491 = vunpack.c.l.b16 %v5944
      %v7492 = vunpack.c.h.b16 %v5944
      %v7493 = vunpack.c.l.b16 %v5954
      %v7494 = vunpack.c.h.b16 %v5954
      %v7495 = vunpack.c.l.b16 %v5964
      %v7496 = vunpack.c.h.b16 %v5964
      %v7497 = vunpack.c.l.b16 %v5974
      %v7498 = vunpack.c.h.b16 %v5974
      %v7499 = vunpack.c.l.b16 %v5984
      %v7500 = vunpack.c.h.b16 %v5984
      %v7501 = vunpack.c.l.b16 %v5994
      %v7502 = vunpack.c.h.b16 %v5994
      %v7503 = vunpack.c.l.b16 %v6004
      %v7504 = vunpack.c.h.b16 %v6004
      %v7505 = vunpack.c.l.b16 %v6014
      %v7506 = vunpack.c.h.b16 %v6014
      %v7507 = vunpack.c.l.b16 %v6024
      %v7508 = vunpack.c.h.b16 %v6024
      %v7509 = vunpack.c.l.b16 %v6034
      %v7510 = vunpack.c.h.b16 %v6034
      %v7511 = vunpack.c.l.b16 %v6044
      %v7512 = vunpack.c.h.b16 %v6044
      %v7513 = vunpack.c.l.b16 %v6054
      %v7514 = vunpack.c.h.b16 %v6054
      %v7515 = vunpack.c.l.b16 %v6064
      %v7516 = vunpack.c.h.b16 %v6064
      %v7517 = vunpack.c.l.b16 %v6074
      %v7518 = vunpack.c.h.b16 %v6074
      %v7519 = vunpack.c.l.b16 %v6084
      %v7520 = vunpack.c.h.b16 %v6084
      %v7521 = vunpack.c.l.b16 %v6094
      %v7522 = vunpack.c.h.b16 %v6094
      %v7523 = vunpack.c.l.b16 %v6104
      %v7524 = vunpack.c.h.b16 %v6104
      %v7525 = vunpack.c.l.b16 %v6114
      %v7526 = vunpack.c.h.b16 %v6114
      %v7527 = vunpack.c.l.b16 %v6124
      %v7528 = vunpack.c.h.b16 %v6124
      %v7529 = vunpack.c.l.b16 %v6134
      %v7530 = vunpack.c.h.b16 %v6134
      %v7531 = vunpack.c.l.b16 %v6144
      %v7532 = vunpack.c.h.b16 %v6144
      %v7533 = vunpack.c.l.b16 %v6154
      %v7534 = vunpack.c.h.b16 %v6154
      %v7535 = vunpack.c.l.b16 %v6164
      %v7536 = vunpack.c.h.b16 %v6164
      %v7537 = vunpack.c.l.b16 %v6174
      %v7538 = vunpack.c.h.b16 %v6174
      %v7539 = vunpack.c.l.b16 %v6184
      %v7540 = vunpack.c.h.b16 %v6184
      %v7541 = vunpack.c.l.b16 %v6194
      %v7542 = vunpack.c.h.b16 %v6194
      %v7543 = vunpack.c.l.b16 %v6204
      %v7544 = vunpack.c.h.b16 %v6204
      %v7545 = vunpack.c.l.b16 %v6214
      %v7546 = vunpack.c.h.b16 %v6214
      %v7547 = vunpack.c.l.b16 %v6224
      %v7548 = vunpack.c.h.b16 %v6224
      %v7549 = vunpack.c.l.b16 %v6234
      %v7550 = vunpack.c.h.b16 %v6234
      %v7551 = vunpack.c.l.b16 %v6244
      %v7552 = vunpack.c.h.b16 %v6244
      %v7553 = vpack.c.b16 %v7491, %v7489
      %v7554 = vpack.c.b16 %v7492, %v7490
      %v7555 = vpack.c.b16 %v7495, %v7493
      %v7556 = vpack.c.b16 %v7496, %v7494
      %v7557 = vpack.c.b16 %v7499, %v7497
      %v7558 = vpack.c.b16 %v7500, %v7498
      %v7559 = vpack.c.b16 %v7503, %v7501
      %v7560 = vpack.c.b16 %v7504, %v7502
      %v7561 = vpack.c.b16 %v7507, %v7505
      %v7562 = vpack.c.b16 %v7508, %v7506
      %v7563 = vpack.c.b16 %v7511, %v7509
      %v7564 = vpack.c.b16 %v7512, %v7510
      %v7565 = vpack.c.b16 %v7515, %v7513
      %v7566 = vpack.c.b16 %v7516, %v7514
      %v7567 = vpack.c.b16 %v7519, %v7517
      %v7568 = vpack.c.b16 %v7520, %v7518
      %v7569 = vpack.c.b16 %v7523, %v7521
      %v7570 = vpack.c.b16 %v7524, %v7522
      %v7571 = vpack.c.b16 %v7527, %v7525
      %v7572 = vpack.c.b16 %v7528, %v7526
      %v7573 = vpack.c.b16 %v7531, %v7529
      %v7574 = vpack.c.b16 %v7532, %v7530
      %v7575 = vpack.c.b16 %v7535, %v7533
      %v7576 = vpack.c.b16 %v7536, %v7534
      %v7577 = vpack.c.b16 %v7539, %v7537
      %v7578 = vpack.c.b16 %v7540, %v7538
      %v7579 = vpack.c.b16 %v7543, %v7541
      %v7580 = vpack.c.b16 %v7544, %v7542
      %v7581 = vpack.c.b16 %v7547, %v7545
      %v7582 = vpack.c.b16 %v7548, %v7546
      %v7583 = vpack.c.b16 %v7551, %v7549
      %v7584 = vpack.c.b16 %v7552, %v7550
      %7617 = vmatpush.bf16.msra.mxu0 %v6514
      %7618 = vmatpush.bf16.msra.mxu0 %v6513
      %7619 = vmatpush.bf16.msra.mxu0 %v6512
      %7620 = vmatpush.bf16.msra.mxu0 %v6511
      %7621 = vmatpush.bf16.msra.mxu0 %v6510
      %7622 = vmatpush.bf16.msra.mxu0 %v6509
      %7623 = vmatpush.bf16.msra.mxu0 %v6508
      %7624 = vmatpush.bf16.msra.mxu0 %v6507
      %7625 = vmatmul.bf16.gmra.mxu0 %v7553
      %v7626 = vpop.f32.mrf.mxu0
      %v7627 = vadd.f32 0.0, %v7626
      %v7628 = vpop.f32.mrf.mxu0
      %v7629 = vadd.f32 0.0, %v7628
      %7630 = vmatmul.bf16.gmra.mxu0 %v7555
      %v7631 = vpop.f32.mrf.mxu0
      %v7632 = vadd.f32 0.0, %v7631
      %v7633 = vpop.f32.mrf.mxu0
      %v7634 = vadd.f32 0.0, %v7633
      %7635 = vmatmul.bf16.gmra.mxu0 %v7557
      %v7636 = vpop.f32.mrf.mxu0
      %v7637 = vadd.f32 0.0, %v7636
      %v7638 = vpop.f32.mrf.mxu0
      %v7639 = vadd.f32 0.0, %v7638
      %7640 = vmatmul.bf16.gmra.mxu0 %v7559
      %v7641 = vpop.f32.mrf.mxu0
      %v7642 = vadd.f32 0.0, %v7641
      %v7643 = vpop.f32.mrf.mxu0
      %v7644 = vadd.f32 0.0, %v7643
      %7645 = vmatmul.bf16.gmra.mxu0 %v7561
      %v7646 = vpop.f32.mrf.mxu0
      %v7647 = vadd.f32 0.0, %v7646
      %v7648 = vpop.f32.mrf.mxu0
      %v7649 = vadd.f32 0.0, %v7648
      %7650 = vmatmul.bf16.gmra.mxu0 %v7563
      %v7651 = vpop.f32.mrf.mxu0
      %v7652 = vadd.f32 0.0, %v7651
      %v7653 = vpop.f32.mrf.mxu0
      %v7654 = vadd.f32 0.0, %v7653
      %7655 = vmatmul.bf16.gmra.mxu0 %v7565
      %v7656 = vpop.f32.mrf.mxu0
      %v7657 = vadd.f32 0.0, %v7656
      %v7658 = vpop.f32.mrf.mxu0
      %v7659 = vadd.f32 0.0, %v7658
      %7660 = vmatmul.bf16.gmra.mxu0 %v7567
      %v7661 = vpop.f32.mrf.mxu0
      %v7662 = vadd.f32 0.0, %v7661
      %v7663 = vpop.f32.mrf.mxu0
      %v7664 = vadd.f32 0.0, %v7663
      %7665 = vmatmul.bf16.gmra.mxu0 %v7569
      %v7666 = vpop.f32.mrf.mxu0
      %v7667 = vadd.f32 0.0, %v7666
      %v7668 = vpop.f32.mrf.mxu0
      %v7669 = vadd.f32 0.0, %v7668
      %7670 = vmatmul.bf16.gmra.mxu0 %v7571
      %v7671 = vpop.f32.mrf.mxu0
      %v7672 = vadd.f32 0.0, %v7671
      %v7673 = vpop.f32.mrf.mxu0
      %v7674 = vadd.f32 0.0, %v7673
      %7675 = vmatmul.bf16.gmra.mxu0 %v7573
      %v7676 = vpop.f32.mrf.mxu0
      %v7677 = vadd.f32 0.0, %v7676
      %v7678 = vpop.f32.mrf.mxu0
      %v7679 = vadd.f32 0.0, %v7678
      %7680 = vmatmul.bf16.gmra.mxu0 %v7575
      %v7681 = vpop.f32.mrf.mxu0
      %v7682 = vadd.f32 0.0, %v7681
      %v7683 = vpop.f32.mrf.mxu0
      %v7684 = vadd.f32 0.0, %v7683
      %7685 = vmatmul.bf16.gmra.mxu0 %v7577
      %v7686 = vpop.f32.mrf.mxu0
      %v7687 = vadd.f32 0.0, %v7686
      %v7688 = vpop.f32.mrf.mxu0
      %v7689 = vadd.f32 0.0, %v7688
      %7690 = vmatmul.bf16.gmra.mxu0 %v7579
      %v7691 = vpop.f32.mrf.mxu0
      %v7692 = vadd.f32 0.0, %v7691
      %v7693 = vpop.f32.mrf.mxu0
      %v7694 = vadd.f32 0.0, %v7693
      %7695 = vmatmul.bf16.gmra.mxu0 %v7581
      %v7696 = vpop.f32.mrf.mxu0
      %v7697 = vadd.f32 0.0, %v7696
      %v7698 = vpop.f32.mrf.mxu0
      %v7699 = vadd.f32 0.0, %v7698
      %7700 = vmatmul.bf16.gmra.mxu0 %v7583
      %v7701 = vpop.f32.mrf.mxu0
      %v7702 = vadd.f32 0.0, %v7701
      %v7703 = vpop.f32.mrf.mxu0
      %v7704 = vadd.f32 0.0, %v7703
      %7705 = vdwg.mxu0
      %7706 = vmatpush.bf16.msra.mxu0 %v6522
      %7707 = vmatpush.bf16.msra.mxu0 %v6521
      %7708 = vmatpush.bf16.msra.mxu0 %v6520
      %7709 = vmatpush.bf16.msra.mxu0 %v6519
      %7710 = vmatpush.bf16.msra.mxu0 %v6518
      %7711 = vmatpush.bf16.msra.mxu0 %v6517
      %7712 = vmatpush.bf16.msra.mxu0 %v6516
      %7713 = vmatpush.bf16.msra.mxu0 %v6515
      %7714 = vmatmul.bf16.gmra.mxu0 %v7554
      %v7715 = vpop.f32.mrf.mxu0
      %v7716 = vadd.f32 %v7627, %v7715
      %v7717 = vpop.f32.mrf.mxu0
      %v7718 = vadd.f32 %v7629, %v7717
      %7719 = vmatmul.bf16.gmra.mxu0 %v7556
      %v7720 = vpop.f32.mrf.mxu0
      %v7721 = vadd.f32 %v7632, %v7720
      %v7722 = vpop.f32.mrf.mxu0
      %v7723 = vadd.f32 %v7634, %v7722
      %7724 = vmatmul.bf16.gmra.mxu0 %v7558
      %v7725 = vpop.f32.mrf.mxu0
      %v7726 = vadd.f32 %v7637, %v7725
      %v7727 = vpop.f32.mrf.mxu0
      %v7728 = vadd.f32 %v7639, %v7727
      %7729 = vmatmul.bf16.gmra.mxu0 %v7560
      %v7730 = vpop.f32.mrf.mxu0
      %v7731 = vadd.f32 %v7642, %v7730
      %v7732 = vpop.f32.mrf.mxu0
      %v7733 = vadd.f32 %v7644, %v7732
      %7734 = vmatmul.bf16.gmra.mxu0 %v7562
      %v7735 = vpop.f32.mrf.mxu0
      %v7736 = vadd.f32 %v7647, %v7735
      %v7737 = vpop.f32.mrf.mxu0
      %v7738 = vadd.f32 %v7649, %v7737
      %7739 = vmatmul.bf16.gmra.mxu0 %v7564
      %v7740 = vpop.f32.mrf.mxu0
      %v7741 = vadd.f32 %v7652, %v7740
      %v7742 = vpop.f32.mrf.mxu0
      %v7743 = vadd.f32 %v7654, %v7742
      %7744 = vmatmul.bf16.gmra.mxu0 %v7566
      %v7745 = vpop.f32.mrf.mxu0
      %v7746 = vadd.f32 %v7657, %v7745
      %v7747 = vpop.f32.mrf.mxu0
      %v7748 = vadd.f32 %v7659, %v7747
      %7749 = vmatmul.bf16.gmra.mxu0 %v7568
      %v7750 = vpop.f32.mrf.mxu0
      %v7751 = vadd.f32 %v7662, %v7750
      %v7752 = vpop.f32.mrf.mxu0
      %v7753 = vadd.f32 %v7664, %v7752
      %7754 = vmatmul.bf16.gmra.mxu0 %v7570
      %v7755 = vpop.f32.mrf.mxu0
      %v7756 = vadd.f32 %v7667, %v7755
      %v7757 = vpop.f32.mrf.mxu0
      %v7758 = vadd.f32 %v7669, %v7757
      %7759 = vmatmul.bf16.gmra.mxu0 %v7572
      %v7760 = vpop.f32.mrf.mxu0
      %v7761 = vadd.f32 %v7672, %v7760
      %v7762 = vpop.f32.mrf.mxu0
      %v7763 = vadd.f32 %v7674, %v7762
      %7764 = vmatmul.bf16.gmra.mxu0 %v7574
      %v7765 = vpop.f32.mrf.mxu0
      %v7766 = vadd.f32 %v7677, %v7765
      %v7767 = vpop.f32.mrf.mxu0
      %v7768 = vadd.f32 %v7679, %v7767
      %7769 = vmatmul.bf16.gmra.mxu0 %v7576
      %v7770 = vpop.f32.mrf.mxu0
      %v7771 = vadd.f32 %v7682, %v7770
      %v7772 = vpop.f32.mrf.mxu0
      %v7773 = vadd.f32 %v7684, %v7772
      %7774 = vmatmul.bf16.gmra.mxu0 %v7578
      %v7775 = vpop.f32.mrf.mxu0
      %v7776 = vadd.f32 %v7687, %v7775
      %v7777 = vpop.f32.mrf.mxu0
      %v7778 = vadd.f32 %v7689, %v7777
      %7779 = vmatmul.bf16.gmra.mxu0 %v7580
      %v7780 = vpop.f32.mrf.mxu0
      %v7781 = vadd.f32 %v7692, %v7780
      %v7782 = vpop.f32.mrf.mxu0
      %v7783 = vadd.f32 %v7694, %v7782
      %7784 = vmatmul.bf16.gmra.mxu0 %v7582
      %v7785 = vpop.f32.mrf.mxu0
      %v7786 = vadd.f32 %v7697, %v7785
      %v7787 = vpop.f32.mrf.mxu0
      %v7788 = vadd.f32 %v7699, %v7787
      %7789 = vmatmul.bf16.gmra.mxu0 %v7584
      %v7790 = vpop.f32.mrf.mxu0
      %v7791 = vadd.f32 %v7702, %v7790
      %v7792 = vpop.f32.mrf.mxu0
      %v7793 = vadd.f32 %v7704, %v7792
      %7794 = vdwg.mxu0
      %v7795 = vmax.f32 %v7425, %v7716
      %v7796 = vmax.f32 %v7426, %v7718
      %v7797 = vmax.f32 %v7427, %v7721
      %v7798 = vmax.f32 %v7428, %v7723
      %v7799 = vmax.f32 %v7429, %v7726
      %v7800 = vmax.f32 %v7430, %v7728
      %v7801 = vmax.f32 %v7431, %v7731
      %v7802 = vmax.f32 %v7432, %v7733
      %v7803 = vmax.f32 %v7433, %v7736
      %v7804 = vmax.f32 %v7434, %v7738
      %v7805 = vmax.f32 %v7435, %v7741
      %v7806 = vmax.f32 %v7436, %v7743
      %v7807 = vmax.f32 %v7437, %v7746
      %v7808 = vmax.f32 %v7438, %v7748
      %v7809 = vmax.f32 %v7439, %v7751
      %v7810 = vmax.f32 %v7440, %v7753
      %v7811 = vmax.f32 %v7441, %v7756
      %v7812 = vmax.f32 %v7442, %v7758
      %v7813 = vmax.f32 %v7443, %v7761
      %v7814 = vmax.f32 %v7444, %v7763
      %v7815 = vmax.f32 %v7445, %v7766
      %v7816 = vmax.f32 %v7446, %v7768
      %v7817 = vmax.f32 %v7447, %v7771
      %v7818 = vmax.f32 %v7448, %v7773
      %v7819 = vmax.f32 %v7449, %v7776
      %v7820 = vmax.f32 %v7450, %v7778
      %v7821 = vmax.f32 %v7451, %v7781
      %v7822 = vmax.f32 %v7452, %v7783
      %v7823 = vmax.f32 %v7453, %v7786
      %v7824 = vmax.f32 %v7454, %v7788
      %v7825 = vmax.f32 %v7455, %v7791
      %v7826 = vmax.f32 %v7456, %v7793
      %v7859 = vunpack.c.l.b16 %v5935
      %v7860 = vunpack.c.h.b16 %v5935
      %v7861 = vunpack.c.l.b16 %v5945
      %v7862 = vunpack.c.h.b16 %v5945
      %v7863 = vunpack.c.l.b16 %v5955
      %v7864 = vunpack.c.h.b16 %v5955
      %v7865 = vunpack.c.l.b16 %v5965
      %v7866 = vunpack.c.h.b16 %v5965
      %v7867 = vunpack.c.l.b16 %v5975
      %v7868 = vunpack.c.h.b16 %v5975
      %v7869 = vunpack.c.l.b16 %v5985
      %v7870 = vunpack.c.h.b16 %v5985
      %v7871 = vunpack.c.l.b16 %v5995
      %v7872 = vunpack.c.h.b16 %v5995
      %v7873 = vunpack.c.l.b16 %v6005
      %v7874 = vunpack.c.h.b16 %v6005
      %v7875 = vunpack.c.l.b16 %v6015
      %v7876 = vunpack.c.h.b16 %v6015
      %v7877 = vunpack.c.l.b16 %v6025
      %v7878 = vunpack.c.h.b16 %v6025
      %v7879 = vunpack.c.l.b16 %v6035
      %v7880 = vunpack.c.h.b16 %v6035
      %v7881 = vunpack.c.l.b16 %v6045
      %v7882 = vunpack.c.h.b16 %v6045
      %v7883 = vunpack.c.l.b16 %v6055
      %v7884 = vunpack.c.h.b16 %v6055
      %v7885 = vunpack.c.l.b16 %v6065
      %v7886 = vunpack.c.h.b16 %v6065
      %v7887 = vunpack.c.l.b16 %v6075
      %v7888 = vunpack.c.h.b16 %v6075
      %v7889 = vunpack.c.l.b16 %v6085
      %v7890 = vunpack.c.h.b16 %v6085
      %v7891 = vunpack.c.l.b16 %v6095
      %v7892 = vunpack.c.h.b16 %v6095
      %v7893 = vunpack.c.l.b16 %v6105
      %v7894 = vunpack.c.h.b16 %v6105
      %v7895 = vunpack.c.l.b16 %v6115
      %v7896 = vunpack.c.h.b16 %v6115
      %v7897 = vunpack.c.l.b16 %v6125
      %v7898 = vunpack.c.h.b16 %v6125
      %v7899 = vunpack.c.l.b16 %v6135
      %v7900 = vunpack.c.h.b16 %v6135
      %v7901 = vunpack.c.l.b16 %v6145
      %v7902 = vunpack.c.h.b16 %v6145
      %v7903 = vunpack.c.l.b16 %v6155
      %v7904 = vunpack.c.h.b16 %v6155
      %v7905 = vunpack.c.l.b16 %v6165
      %v7906 = vunpack.c.h.b16 %v6165
      %v7907 = vunpack.c.l.b16 %v6175
      %v7908 = vunpack.c.h.b16 %v6175
      %v7909 = vunpack.c.l.b16 %v6185
      %v7910 = vunpack.c.h.b16 %v6185
      %v7911 = vunpack.c.l.b16 %v6195
      %v7912 = vunpack.c.h.b16 %v6195
      %v7913 = vunpack.c.l.b16 %v6205
      %v7914 = vunpack.c.h.b16 %v6205
      %v7915 = vunpack.c.l.b16 %v6215
      %v7916 = vunpack.c.h.b16 %v6215
      %v7917 = vunpack.c.l.b16 %v6225
      %v7918 = vunpack.c.h.b16 %v6225
      %v7919 = vunpack.c.l.b16 %v6235
      %v7920 = vunpack.c.h.b16 %v6235
      %v7921 = vunpack.c.l.b16 %v6245
      %v7922 = vunpack.c.h.b16 %v6245
      %v7923 = vpack.c.b16 %v7861, %v7859
      %v7924 = vpack.c.b16 %v7862, %v7860
      %v7925 = vpack.c.b16 %v7865, %v7863
      %v7926 = vpack.c.b16 %v7866, %v7864
      %v7927 = vpack.c.b16 %v7869, %v7867
      %v7928 = vpack.c.b16 %v7870, %v7868
      %v7929 = vpack.c.b16 %v7873, %v7871
      %v7930 = vpack.c.b16 %v7874, %v7872
      %v7931 = vpack.c.b16 %v7877, %v7875
      %v7932 = vpack.c.b16 %v7878, %v7876
      %v7933 = vpack.c.b16 %v7881, %v7879
      %v7934 = vpack.c.b16 %v7882, %v7880
      %v7935 = vpack.c.b16 %v7885, %v7883
      %v7936 = vpack.c.b16 %v7886, %v7884
      %v7937 = vpack.c.b16 %v7889, %v7887
      %v7938 = vpack.c.b16 %v7890, %v7888
      %v7939 = vpack.c.b16 %v7893, %v7891
      %v7940 = vpack.c.b16 %v7894, %v7892
      %v7941 = vpack.c.b16 %v7897, %v7895
      %v7942 = vpack.c.b16 %v7898, %v7896
      %v7943 = vpack.c.b16 %v7901, %v7899
      %v7944 = vpack.c.b16 %v7902, %v7900
      %v7945 = vpack.c.b16 %v7905, %v7903
      %v7946 = vpack.c.b16 %v7906, %v7904
      %v7947 = vpack.c.b16 %v7909, %v7907
      %v7948 = vpack.c.b16 %v7910, %v7908
      %v7949 = vpack.c.b16 %v7913, %v7911
      %v7950 = vpack.c.b16 %v7914, %v7912
      %v7951 = vpack.c.b16 %v7917, %v7915
      %v7952 = vpack.c.b16 %v7918, %v7916
      %v7953 = vpack.c.b16 %v7921, %v7919
      %v7954 = vpack.c.b16 %v7922, %v7920
      %7987 = vmatpush.bf16.msra.mxu0 %v6514
      %7988 = vmatpush.bf16.msra.mxu0 %v6513
      %7989 = vmatpush.bf16.msra.mxu0 %v6512
      %7990 = vmatpush.bf16.msra.mxu0 %v6511
      %7991 = vmatpush.bf16.msra.mxu0 %v6510
      %7992 = vmatpush.bf16.msra.mxu0 %v6509
      %7993 = vmatpush.bf16.msra.mxu0 %v6508
      %7994 = vmatpush.bf16.msra.mxu0 %v6507
      %7995 = vmatmul.bf16.gmra.mxu0 %v7923
      %v7996 = vpop.f32.mrf.mxu0
      %v7997 = vadd.f32 0.0, %v7996
      %v7998 = vpop.f32.mrf.mxu0
      %v7999 = vadd.f32 0.0, %v7998
      %8000 = vmatmul.bf16.gmra.mxu0 %v7925
      %v8001 = vpop.f32.mrf.mxu0
      %v8002 = vadd.f32 0.0, %v8001
      %v8003 = vpop.f32.mrf.mxu0
      %v8004 = vadd.f32 0.0, %v8003
      %8005 = vmatmul.bf16.gmra.mxu0 %v7927
      %v8006 = vpop.f32.mrf.mxu0
      %v8007 = vadd.f32 0.0, %v8006
      %v8008 = vpop.f32.mrf.mxu0
      %v8009 = vadd.f32 0.0, %v8008
      %8010 = vmatmul.bf16.gmra.mxu0 %v7929
      %v8011 = vpop.f32.mrf.mxu0
      %v8012 = vadd.f32 0.0, %v8011
      %v8013 = vpop.f32.mrf.mxu0
      %v8014 = vadd.f32 0.0, %v8013
      %8015 = vmatmul.bf16.gmra.mxu0 %v7931
      %v8016 = vpop.f32.mrf.mxu0
      %v8017 = vadd.f32 0.0, %v8016
      %v8018 = vpop.f32.mrf.mxu0
      %v8019 = vadd.f32 0.0, %v8018
      %8020 = vmatmul.bf16.gmra.mxu0 %v7933
      %v8021 = vpop.f32.mrf.mxu0
      %v8022 = vadd.f32 0.0, %v8021
      %v8023 = vpop.f32.mrf.mxu0
      %v8024 = vadd.f32 0.0, %v8023
      %8025 = vmatmul.bf16.gmra.mxu0 %v7935
      %v8026 = vpop.f32.mrf.mxu0
      %v8027 = vadd.f32 0.0, %v8026
      %v8028 = vpop.f32.mrf.mxu0
      %v8029 = vadd.f32 0.0, %v8028
      %8030 = vmatmul.bf16.gmra.mxu0 %v7937
      %v8031 = vpop.f32.mrf.mxu0
      %v8032 = vadd.f32 0.0, %v8031
      %v8033 = vpop.f32.mrf.mxu0
      %v8034 = vadd.f32 0.0, %v8033
      %8035 = vmatmul.bf16.gmra.mxu0 %v7939
      %v8036 = vpop.f32.mrf.mxu0
      %v8037 = vadd.f32 0.0, %v8036
      %v8038 = vpop.f32.mrf.mxu0
      %v8039 = vadd.f32 0.0, %v8038
      %8040 = vmatmul.bf16.gmra.mxu0 %v7941
      %v8041 = vpop.f32.mrf.mxu0
      %v8042 = vadd.f32 0.0, %v8041
      %v8043 = vpop.f32.mrf.mxu0
      %v8044 = vadd.f32 0.0, %v8043
      %8045 = vmatmul.bf16.gmra.mxu0 %v7943
      %v8046 = vpop.f32.mrf.mxu0
      %v8047 = vadd.f32 0.0, %v8046
      %v8048 = vpop.f32.mrf.mxu0
      %v8049 = vadd.f32 0.0, %v8048
      %8050 = vmatmul.bf16.gmra.mxu0 %v7945
      %v8051 = vpop.f32.mrf.mxu0
      %v8052 = vadd.f32 0.0, %v8051
      %v8053 = vpop.f32.mrf.mxu0
      %v8054 = vadd.f32 0.0, %v8053
      %8055 = vmatmul.bf16.gmra.mxu0 %v7947
      %v8056 = vpop.f32.mrf.mxu0
      %v8057 = vadd.f32 0.0, %v8056
      %v8058 = vpop.f32.mrf.mxu0
      %v8059 = vadd.f32 0.0, %v8058
      %8060 = vmatmul.bf16.gmra.mxu0 %v7949
      %v8061 = vpop.f32.mrf.mxu0
      %v8062 = vadd.f32 0.0, %v8061
      %v8063 = vpop.f32.mrf.mxu0
      %v8064 = vadd.f32 0.0, %v8063
      %8065 = vmatmul.bf16.gmra.mxu0 %v7951
      %v8066 = vpop.f32.mrf.mxu0
      %v8067 = vadd.f32 0.0, %v8066
      %v8068 = vpop.f32.mrf.mxu0
      %v8069 = vadd.f32 0.0, %v8068
      %8070 = vmatmul.bf16.gmra.mxu0 %v7953
      %v8071 = vpop.f32.mrf.mxu0
      %v8072 = vadd.f32 0.0, %v8071
      %v8073 = vpop.f32.mrf.mxu0
      %v8074 = vadd.f32 0.0, %v8073
      %8075 = vdwg.mxu0
      %8076 = vmatpush.bf16.msra.mxu0 %v6522
      %8077 = vmatpush.bf16.msra.mxu0 %v6521
      %8078 = vmatpush.bf16.msra.mxu0 %v6520
      %8079 = vmatpush.bf16.msra.mxu0 %v6519
      %8080 = vmatpush.bf16.msra.mxu0 %v6518
      %8081 = vmatpush.bf16.msra.mxu0 %v6517
      %8082 = vmatpush.bf16.msra.mxu0 %v6516
      %8083 = vmatpush.bf16.msra.mxu0 %v6515
      %8084 = vmatmul.bf16.gmra.mxu0 %v7924
      %v8085 = vpop.f32.mrf.mxu0
      %v8086 = vadd.f32 %v7997, %v8085
      %v8087 = vpop.f32.mrf.mxu0
      %v8088 = vadd.f32 %v7999, %v8087
      %8089 = vmatmul.bf16.gmra.mxu0 %v7926
      %v8090 = vpop.f32.mrf.mxu0
      %v8091 = vadd.f32 %v8002, %v8090
      %v8092 = vpop.f32.mrf.mxu0
      %v8093 = vadd.f32 %v8004, %v8092
      %8094 = vmatmul.bf16.gmra.mxu0 %v7928
      %v8095 = vpop.f32.mrf.mxu0
      %v8096 = vadd.f32 %v8007, %v8095
      %v8097 = vpop.f32.mrf.mxu0
      %v8098 = vadd.f32 %v8009, %v8097
      %8099 = vmatmul.bf16.gmra.mxu0 %v7930
      %v8100 = vpop.f32.mrf.mxu0
      %v8101 = vadd.f32 %v8012, %v8100
      %v8102 = vpop.f32.mrf.mxu0
      %v8103 = vadd.f32 %v8014, %v8102
      %8104 = vmatmul.bf16.gmra.mxu0 %v7932
      %v8105 = vpop.f32.mrf.mxu0
      %v8106 = vadd.f32 %v8017, %v8105
      %v8107 = vpop.f32.mrf.mxu0
      %v8108 = vadd.f32 %v8019, %v8107
      %8109 = vmatmul.bf16.gmra.mxu0 %v7934
      %v8110 = vpop.f32.mrf.mxu0
      %v8111 = vadd.f32 %v8022, %v8110
      %v8112 = vpop.f32.mrf.mxu0
      %v8113 = vadd.f32 %v8024, %v8112
      %8114 = vmatmul.bf16.gmra.mxu0 %v7936
      %v8115 = vpop.f32.mrf.mxu0
      %v8116 = vadd.f32 %v8027, %v8115
      %v8117 = vpop.f32.mrf.mxu0
      %v8118 = vadd.f32 %v8029, %v8117
      %8119 = vmatmul.bf16.gmra.mxu0 %v7938
      %v8120 = vpop.f32.mrf.mxu0
      %v8121 = vadd.f32 %v8032, %v8120
      %v8122 = vpop.f32.mrf.mxu0
      %v8123 = vadd.f32 %v8034, %v8122
      %8124 = vmatmul.bf16.gmra.mxu0 %v7940
      %v8125 = vpop.f32.mrf.mxu0
      %v8126 = vadd.f32 %v8037, %v8125
      %v8127 = vpop.f32.mrf.mxu0
      %v8128 = vadd.f32 %v8039, %v8127
      %8129 = vmatmul.bf16.gmra.mxu0 %v7942
      %v8130 = vpop.f32.mrf.mxu0
      %v8131 = vadd.f32 %v8042, %v8130
      %v8132 = vpop.f32.mrf.mxu0
      %v8133 = vadd.f32 %v8044, %v8132
      %8134 = vmatmul.bf16.gmra.mxu0 %v7944
      %v8135 = vpop.f32.mrf.mxu0
      %v8136 = vadd.f32 %v8047, %v8135
      %v8137 = vpop.f32.mrf.mxu0
      %v8138 = vadd.f32 %v8049, %v8137
      %8139 = vmatmul.bf16.gmra.mxu0 %v7946
      %v8140 = vpop.f32.mrf.mxu0
      %v8141 = vadd.f32 %v8052, %v8140
      %v8142 = vpop.f32.mrf.mxu0
      %v8143 = vadd.f32 %v8054, %v8142
      %8144 = vmatmul.bf16.gmra.mxu0 %v7948
      %v8145 = vpop.f32.mrf.mxu0
      %v8146 = vadd.f32 %v8057, %v8145
      %v8147 = vpop.f32.mrf.mxu0
      %v8148 = vadd.f32 %v8059, %v8147
      %8149 = vmatmul.bf16.gmra.mxu0 %v7950
      %v8150 = vpop.f32.mrf.mxu0
      %v8151 = vadd.f32 %v8062, %v8150
      %v8152 = vpop.f32.mrf.mxu0
      %v8153 = vadd.f32 %v8064, %v8152
      %8154 = vmatmul.bf16.gmra.mxu0 %v7952
      %v8155 = vpop.f32.mrf.mxu0
      %v8156 = vadd.f32 %v8067, %v8155
      %v8157 = vpop.f32.mrf.mxu0
      %v8158 = vadd.f32 %v8069, %v8157
      %8159 = vmatmul.bf16.gmra.mxu0 %v7954
      %v8160 = vpop.f32.mrf.mxu0
      %v8161 = vadd.f32 %v8072, %v8160
      %v8162 = vpop.f32.mrf.mxu0
      %v8163 = vadd.f32 %v8074, %v8162
      %8164 = vdwg.mxu0
      %v8165 = vmax.f32 %v7795, %v8086
      %v8166 = vmax.f32 %v7796, %v8088
      %v8167 = vmax.f32 %v7797, %v8091
      %v8168 = vmax.f32 %v7798, %v8093
      %v8169 = vmax.f32 %v7799, %v8096
      %v8170 = vmax.f32 %v7800, %v8098
      %v8171 = vmax.f32 %v7801, %v8101
      %v8172 = vmax.f32 %v7802, %v8103
      %v8173 = vmax.f32 %v7803, %v8106
      %v8174 = vmax.f32 %v7804, %v8108
      %v8175 = vmax.f32 %v7805, %v8111
      %v8176 = vmax.f32 %v7806, %v8113
      %v8177 = vmax.f32 %v7807, %v8116
      %v8178 = vmax.f32 %v7808, %v8118
      %v8179 = vmax.f32 %v7809, %v8121
      %v8180 = vmax.f32 %v7810, %v8123
      %v8181 = vmax.f32 %v7811, %v8126
      %v8182 = vmax.f32 %v7812, %v8128
      %v8183 = vmax.f32 %v7813, %v8131
      %v8184 = vmax.f32 %v7814, %v8133
      %v8185 = vmax.f32 %v7815, %v8136
      %v8186 = vmax.f32 %v7816, %v8138
      %v8187 = vmax.f32 %v7817, %v8141
      %v8188 = vmax.f32 %v7818, %v8143
      %v8189 = vmax.f32 %v7819, %v8146
      %v8190 = vmax.f32 %v7820, %v8148
      %v8191 = vmax.f32 %v7821, %v8151
      %v8192 = vmax.f32 %v7822, %v8153
      %v8193 = vmax.f32 %v7823, %v8156
      %v8194 = vmax.f32 %v7824, %v8158
      %v8195 = vmax.f32 %v7825, %v8161
      %v8196 = vmax.f32 %v7826, %v8163
      %v8229 = vunpack.c.l.b16 %v5936
      %v8230 = vunpack.c.h.b16 %v5936
      %v8231 = vunpack.c.l.b16 %v5946
      %v8232 = vunpack.c.h.b16 %v5946
      %v8233 = vunpack.c.l.b16 %v5956
      %v8234 = vunpack.c.h.b16 %v5956
      %v8235 = vunpack.c.l.b16 %v5966
      %v8236 = vunpack.c.h.b16 %v5966
      %v8237 = vunpack.c.l.b16 %v5976
      %v8238 = vunpack.c.h.b16 %v5976
      %v8239 = vunpack.c.l.b16 %v5986
      %v8240 = vunpack.c.h.b16 %v5986
      %v8241 = vunpack.c.l.b16 %v5996
      %v8242 = vunpack.c.h.b16 %v5996
      %v8243 = vunpack.c.l.b16 %v6006
      %v8244 = vunpack.c.h.b16 %v6006
      %v8245 = vunpack.c.l.b16 %v6016
      %v8246 = vunpack.c.h.b16 %v6016
      %v8247 = vunpack.c.l.b16 %v6026
      %v8248 = vunpack.c.h.b16 %v6026
      %v8249 = vunpack.c.l.b16 %v6036
      %v8250 = vunpack.c.h.b16 %v6036
      %v8251 = vunpack.c.l.b16 %v6046
      %v8252 = vunpack.c.h.b16 %v6046
      %v8253 = vunpack.c.l.b16 %v6056
      %v8254 = vunpack.c.h.b16 %v6056
      %v8255 = vunpack.c.l.b16 %v6066
      %v8256 = vunpack.c.h.b16 %v6066
      %v8257 = vunpack.c.l.b16 %v6076
      %v8258 = vunpack.c.h.b16 %v6076
      %v8259 = vunpack.c.l.b16 %v6086
      %v8260 = vunpack.c.h.b16 %v6086
      %v8261 = vunpack.c.l.b16 %v6096
      %v8262 = vunpack.c.h.b16 %v6096
      %v8263 = vunpack.c.l.b16 %v6106
      %v8264 = vunpack.c.h.b16 %v6106
      %v8265 = vunpack.c.l.b16 %v6116
      %v8266 = vunpack.c.h.b16 %v6116
      %v8267 = vunpack.c.l.b16 %v6126
      %v8268 = vunpack.c.h.b16 %v6126
      %v8269 = vunpack.c.l.b16 %v6136
      %v8270 = vunpack.c.h.b16 %v6136
      %v8271 = vunpack.c.l.b16 %v6146
      %v8272 = vunpack.c.h.b16 %v6146
      %v8273 = vunpack.c.l.b16 %v6156
      %v8274 = vunpack.c.h.b16 %v6156
      %v8275 = vunpack.c.l.b16 %v6166
      %v8276 = vunpack.c.h.b16 %v6166
      %v8277 = vunpack.c.l.b16 %v6176
      %v8278 = vunpack.c.h.b16 %v6176
      %v8279 = vunpack.c.l.b16 %v6186
      %v8280 = vunpack.c.h.b16 %v6186
      %v8281 = vunpack.c.l.b16 %v6196
      %v8282 = vunpack.c.h.b16 %v6196
      %v8283 = vunpack.c.l.b16 %v6206
      %v8284 = vunpack.c.h.b16 %v6206
      %v8285 = vunpack.c.l.b16 %v6216
      %v8286 = vunpack.c.h.b16 %v6216
      %v8287 = vunpack.c.l.b16 %v6226
      %v8288 = vunpack.c.h.b16 %v6226
      %v8289 = vunpack.c.l.b16 %v6236
      %v8290 = vunpack.c.h.b16 %v6236
      %v8291 = vunpack.c.l.b16 %v6246
      %v8292 = vunpack.c.h.b16 %v6246
      %v8293 = vpack.c.b16 %v8231, %v8229
      %v8294 = vpack.c.b16 %v8232, %v8230
      %v8295 = vpack.c.b16 %v8235, %v8233
      %v8296 = vpack.c.b16 %v8236, %v8234
      %v8297 = vpack.c.b16 %v8239, %v8237
      %v8298 = vpack.c.b16 %v8240, %v8238
      %v8299 = vpack.c.b16 %v8243, %v8241
      %v8300 = vpack.c.b16 %v8244, %v8242
      %v8301 = vpack.c.b16 %v8247, %v8245
      %v8302 = vpack.c.b16 %v8248, %v8246
      %v8303 = vpack.c.b16 %v8251, %v8249
      %v8304 = vpack.c.b16 %v8252, %v8250
      %v8305 = vpack.c.b16 %v8255, %v8253
      %v8306 = vpack.c.b16 %v8256, %v8254
      %v8307 = vpack.c.b16 %v8259, %v8257
      %v8308 = vpack.c.b16 %v8260, %v8258
      %v8309 = vpack.c.b16 %v8263, %v8261
      %v8310 = vpack.c.b16 %v8264, %v8262
      %v8311 = vpack.c.b16 %v8267, %v8265
      %v8312 = vpack.c.b16 %v8268, %v8266
      %v8313 = vpack.c.b16 %v8271, %v8269
      %v8314 = vpack.c.b16 %v8272, %v8270
      %v8315 = vpack.c.b16 %v8275, %v8273
      %v8316 = vpack.c.b16 %v8276, %v8274
      %v8317 = vpack.c.b16 %v8279, %v8277
      %v8318 = vpack.c.b16 %v8280, %v8278
      %v8319 = vpack.c.b16 %v8283, %v8281
      %v8320 = vpack.c.b16 %v8284, %v8282
      %v8321 = vpack.c.b16 %v8287, %v8285
      %v8322 = vpack.c.b16 %v8288, %v8286
      %v8323 = vpack.c.b16 %v8291, %v8289
      %v8324 = vpack.c.b16 %v8292, %v8290
      %8357 = vmatpush.bf16.msra.mxu0 %v6514
      %8358 = vmatpush.bf16.msra.mxu0 %v6513
      %8359 = vmatpush.bf16.msra.mxu0 %v6512
      %8360 = vmatpush.bf16.msra.mxu0 %v6511
      %8361 = vmatpush.bf16.msra.mxu0 %v6510
      %8362 = vmatpush.bf16.msra.mxu0 %v6509
      %8363 = vmatpush.bf16.msra.mxu0 %v6508
      %8364 = vmatpush.bf16.msra.mxu0 %v6507
      %8365 = vmatmul.bf16.gmra.mxu0 %v8293
      %v8366 = vpop.f32.mrf.mxu0
      %v8367 = vadd.f32 0.0, %v8366
      %v8368 = vpop.f32.mrf.mxu0
      %v8369 = vadd.f32 0.0, %v8368
      %8370 = vmatmul.bf16.gmra.mxu0 %v8295
      %v8371 = vpop.f32.mrf.mxu0
      %v8372 = vadd.f32 0.0, %v8371
      %v8373 = vpop.f32.mrf.mxu0
      %v8374 = vadd.f32 0.0, %v8373
      %8375 = vmatmul.bf16.gmra.mxu0 %v8297
      %v8376 = vpop.f32.mrf.mxu0
      %v8377 = vadd.f32 0.0, %v8376
      %v8378 = vpop.f32.mrf.mxu0
      %v8379 = vadd.f32 0.0, %v8378
      %8380 = vmatmul.bf16.gmra.mxu0 %v8299
      %v8381 = vpop.f32.mrf.mxu0
      %v8382 = vadd.f32 0.0, %v8381
      %v8383 = vpop.f32.mrf.mxu0
      %v8384 = vadd.f32 0.0, %v8383
      %8385 = vmatmul.bf16.gmra.mxu0 %v8301
      %v8386 = vpop.f32.mrf.mxu0
      %v8387 = vadd.f32 0.0, %v8386
      %v8388 = vpop.f32.mrf.mxu0
      %v8389 = vadd.f32 0.0, %v8388
      %8390 = vmatmul.bf16.gmra.mxu0 %v8303
      %v8391 = vpop.f32.mrf.mxu0
      %v8392 = vadd.f32 0.0, %v8391
      %v8393 = vpop.f32.mrf.mxu0
      %v8394 = vadd.f32 0.0, %v8393
      %8395 = vmatmul.bf16.gmra.mxu0 %v8305
      %v8396 = vpop.f32.mrf.mxu0
      %v8397 = vadd.f32 0.0, %v8396
      %v8398 = vpop.f32.mrf.mxu0
      %v8399 = vadd.f32 0.0, %v8398
      %8400 = vmatmul.bf16.gmra.mxu0 %v8307
      %v8401 = vpop.f32.mrf.mxu0
      %v8402 = vadd.f32 0.0, %v8401
      %v8403 = vpop.f32.mrf.mxu0
      %v8404 = vadd.f32 0.0, %v8403
      %8405 = vmatmul.bf16.gmra.mxu0 %v8309
      %v8406 = vpop.f32.mrf.mxu0
      %v8407 = vadd.f32 0.0, %v8406
      %v8408 = vpop.f32.mrf.mxu0
      %v8409 = vadd.f32 0.0, %v8408
      %8410 = vmatmul.bf16.gmra.mxu0 %v8311
      %v8411 = vpop.f32.mrf.mxu0
      %v8412 = vadd.f32 0.0, %v8411
      %v8413 = vpop.f32.mrf.mxu0
      %v8414 = vadd.f32 0.0, %v8413
      %8415 = vmatmul.bf16.gmra.mxu0 %v8313
      %v8416 = vpop.f32.mrf.mxu0
      %v8417 = vadd.f32 0.0, %v8416
      %v8418 = vpop.f32.mrf.mxu0
      %v8419 = vadd.f32 0.0, %v8418
      %8420 = vmatmul.bf16.gmra.mxu0 %v8315
      %v8421 = vpop.f32.mrf.mxu0
      %v8422 = vadd.f32 0.0, %v8421
      %v8423 = vpop.f32.mrf.mxu0
      %v8424 = vadd.f32 0.0, %v8423
      %8425 = vmatmul.bf16.gmra.mxu0 %v8317
      %v8426 = vpop.f32.mrf.mxu0
      %v8427 = vadd.f32 0.0, %v8426
      %v8428 = vpop.f32.mrf.mxu0
      %v8429 = vadd.f32 0.0, %v8428
      %8430 = vmatmul.bf16.gmra.mxu0 %v8319
      %v8431 = vpop.f32.mrf.mxu0
      %v8432 = vadd.f32 0.0, %v8431
      %v8433 = vpop.f32.mrf.mxu0
      %v8434 = vadd.f32 0.0, %v8433
      %8435 = vmatmul.bf16.gmra.mxu0 %v8321
      %v8436 = vpop.f32.mrf.mxu0
      %v8437 = vadd.f32 0.0, %v8436
      %v8438 = vpop.f32.mrf.mxu0
      %v8439 = vadd.f32 0.0, %v8438
      %8440 = vmatmul.bf16.gmra.mxu0 %v8323
      %v8441 = vpop.f32.mrf.mxu0
      %v8442 = vadd.f32 0.0, %v8441
      %v8443 = vpop.f32.mrf.mxu0
      %v8444 = vadd.f32 0.0, %v8443
      %8445 = vdwg.mxu0
      %8446 = vmatpush.bf16.msra.mxu0 %v6522
      %8447 = vmatpush.bf16.msra.mxu0 %v6521
      %8448 = vmatpush.bf16.msra.mxu0 %v6520
      %8449 = vmatpush.bf16.msra.mxu0 %v6519
      %8450 = vmatpush.bf16.msra.mxu0 %v6518
      %8451 = vmatpush.bf16.msra.mxu0 %v6517
      %8452 = vmatpush.bf16.msra.mxu0 %v6516
      %8453 = vmatpush.bf16.msra.mxu0 %v6515
      %8454 = vmatmul.bf16.gmra.mxu0 %v8294
      %v8455 = vpop.f32.mrf.mxu0
      %v8456 = vadd.f32 %v8367, %v8455
      %v8457 = vpop.f32.mrf.mxu0
      %v8458 = vadd.f32 %v8369, %v8457
      %8459 = vmatmul.bf16.gmra.mxu0 %v8296
      %v8460 = vpop.f32.mrf.mxu0
      %v8461 = vadd.f32 %v8372, %v8460
      %v8462 = vpop.f32.mrf.mxu0
      %v8463 = vadd.f32 %v8374, %v8462
      %8464 = vmatmul.bf16.gmra.mxu0 %v8298
      %v8465 = vpop.f32.mrf.mxu0
      %v8466 = vadd.f32 %v8377, %v8465
      %v8467 = vpop.f32.mrf.mxu0
      %v8468 = vadd.f32 %v8379, %v8467
      %8469 = vmatmul.bf16.gmra.mxu0 %v8300
      %v8470 = vpop.f32.mrf.mxu0
      %v8471 = vadd.f32 %v8382, %v8470
      %v8472 = vpop.f32.mrf.mxu0
      %v8473 = vadd.f32 %v8384, %v8472
      %8474 = vmatmul.bf16.gmra.mxu0 %v8302
      %v8475 = vpop.f32.mrf.mxu0
      %v8476 = vadd.f32 %v8387, %v8475
      %v8477 = vpop.f32.mrf.mxu0
      %v8478 = vadd.f32 %v8389, %v8477
      %8479 = vmatmul.bf16.gmra.mxu0 %v8304
      %v8480 = vpop.f32.mrf.mxu0
      %v8481 = vadd.f32 %v8392, %v8480
      %v8482 = vpop.f32.mrf.mxu0
      %v8483 = vadd.f32 %v8394, %v8482
      %8484 = vmatmul.bf16.gmra.mxu0 %v8306
      %v8485 = vpop.f32.mrf.mxu0
      %v8486 = vadd.f32 %v8397, %v8485
      %v8487 = vpop.f32.mrf.mxu0
      %v8488 = vadd.f32 %v8399, %v8487
      %8489 = vmatmul.bf16.gmra.mxu0 %v8308
      %v8490 = vpop.f32.mrf.mxu0
      %v8491 = vadd.f32 %v8402, %v8490
      %v8492 = vpop.f32.mrf.mxu0
      %v8493 = vadd.f32 %v8404, %v8492
      %8494 = vmatmul.bf16.gmra.mxu0 %v8310
      %v8495 = vpop.f32.mrf.mxu0
      %v8496 = vadd.f32 %v8407, %v8495
      %v8497 = vpop.f32.mrf.mxu0
      %v8498 = vadd.f32 %v8409, %v8497
      %8499 = vmatmul.bf16.gmra.mxu0 %v8312
      %v8500 = vpop.f32.mrf.mxu0
      %v8501 = vadd.f32 %v8412, %v8500
      %v8502 = vpop.f32.mrf.mxu0
      %v8503 = vadd.f32 %v8414, %v8502
      %8504 = vmatmul.bf16.gmra.mxu0 %v8314
      %v8505 = vpop.f32.mrf.mxu0
      %v8506 = vadd.f32 %v8417, %v8505
      %v8507 = vpop.f32.mrf.mxu0
      %v8508 = vadd.f32 %v8419, %v8507
      %8509 = vmatmul.bf16.gmra.mxu0 %v8316
      %v8510 = vpop.f32.mrf.mxu0
      %v8511 = vadd.f32 %v8422, %v8510
      %v8512 = vpop.f32.mrf.mxu0
      %v8513 = vadd.f32 %v8424, %v8512
      %8514 = vmatmul.bf16.gmra.mxu0 %v8318
      %v8515 = vpop.f32.mrf.mxu0
      %v8516 = vadd.f32 %v8427, %v8515
      %v8517 = vpop.f32.mrf.mxu0
      %v8518 = vadd.f32 %v8429, %v8517
      %8519 = vmatmul.bf16.gmra.mxu0 %v8320
      %v8520 = vpop.f32.mrf.mxu0
      %v8521 = vadd.f32 %v8432, %v8520
      %v8522 = vpop.f32.mrf.mxu0
      %v8523 = vadd.f32 %v8434, %v8522
      %8524 = vmatmul.bf16.gmra.mxu0 %v8322
      %v8525 = vpop.f32.mrf.mxu0
      %v8526 = vadd.f32 %v8437, %v8525
      %v8527 = vpop.f32.mrf.mxu0
      %v8528 = vadd.f32 %v8439, %v8527
      %8529 = vmatmul.bf16.gmra.mxu0 %v8324
      %v8530 = vpop.f32.mrf.mxu0
      %v8531 = vadd.f32 %v8442, %v8530
      %v8532 = vpop.f32.mrf.mxu0
      %v8533 = vadd.f32 %v8444, %v8532
      %8534 = vdwg.mxu0
      %v8535 = vmax.f32 %v8165, %v8456
      %v8536 = vmax.f32 %v8166, %v8458
      %v8537 = vmax.f32 %v8167, %v8461
      %v8538 = vmax.f32 %v8168, %v8463
      %v8539 = vmax.f32 %v8169, %v8466
      %v8540 = vmax.f32 %v8170, %v8468
      %v8541 = vmax.f32 %v8171, %v8471
      %v8542 = vmax.f32 %v8172, %v8473
      %v8543 = vmax.f32 %v8173, %v8476
      %v8544 = vmax.f32 %v8174, %v8478
      %v8545 = vmax.f32 %v8175, %v8481
      %v8546 = vmax.f32 %v8176, %v8483
      %v8547 = vmax.f32 %v8177, %v8486
      %v8548 = vmax.f32 %v8178, %v8488
      %v8549 = vmax.f32 %v8179, %v8491
      %v8550 = vmax.f32 %v8180, %v8493
      %v8551 = vmax.f32 %v8181, %v8496
      %v8552 = vmax.f32 %v8182, %v8498
      %v8553 = vmax.f32 %v8183, %v8501
      %v8554 = vmax.f32 %v8184, %v8503
      %v8555 = vmax.f32 %v8185, %v8506
      %v8556 = vmax.f32 %v8186, %v8508
      %v8557 = vmax.f32 %v8187, %v8511
      %v8558 = vmax.f32 %v8188, %v8513
      %v8559 = vmax.f32 %v8189, %v8516
      %v8560 = vmax.f32 %v8190, %v8518
      %v8561 = vmax.f32 %v8191, %v8521
      %v8562 = vmax.f32 %v8192, %v8523
      %v8563 = vmax.f32 %v8193, %v8526
      %v8564 = vmax.f32 %v8194, %v8528
      %v8565 = vmax.f32 %v8195, %v8531
      %v8566 = vmax.f32 %v8196, %v8533
      %v8599 = vunpack.c.l.b16 %v5937
      %v8600 = vunpack.c.h.b16 %v5937
      %v8601 = vunpack.c.l.b16 %v5947
      %v8602 = vunpack.c.h.b16 %v5947
      %v8603 = vunpack.c.l.b16 %v5957
      %v8604 = vunpack.c.h.b16 %v5957
      %v8605 = vunpack.c.l.b16 %v5967
      %v8606 = vunpack.c.h.b16 %v5967
      %v8607 = vunpack.c.l.b16 %v5977
      %v8608 = vunpack.c.h.b16 %v5977
      %v8609 = vunpack.c.l.b16 %v5987
      %v8610 = vunpack.c.h.b16 %v5987
      %v8611 = vunpack.c.l.b16 %v5997
      %v8612 = vunpack.c.h.b16 %v5997
      %v8613 = vunpack.c.l.b16 %v6007
      %v8614 = vunpack.c.h.b16 %v6007
      %v8615 = vunpack.c.l.b16 %v6017
      %v8616 = vunpack.c.h.b16 %v6017
      %v8617 = vunpack.c.l.b16 %v6027
      %v8618 = vunpack.c.h.b16 %v6027
      %v8619 = vunpack.c.l.b16 %v6037
      %v8620 = vunpack.c.h.b16 %v6037
      %v8621 = vunpack.c.l.b16 %v6047
      %v8622 = vunpack.c.h.b16 %v6047
      %v8623 = vunpack.c.l.b16 %v6057
      %v8624 = vunpack.c.h.b16 %v6057
      %v8625 = vunpack.c.l.b16 %v6067
      %v8626 = vunpack.c.h.b16 %v6067
      %v8627 = vunpack.c.l.b16 %v6077
      %v8628 = vunpack.c.h.b16 %v6077
      %v8629 = vunpack.c.l.b16 %v6087
      %v8630 = vunpack.c.h.b16 %v6087
      %v8631 = vunpack.c.l.b16 %v6097
      %v8632 = vunpack.c.h.b16 %v6097
      %v8633 = vunpack.c.l.b16 %v6107
      %v8634 = vunpack.c.h.b16 %v6107
      %v8635 = vunpack.c.l.b16 %v6117
      %v8636 = vunpack.c.h.b16 %v6117
      %v8637 = vunpack.c.l.b16 %v6127
      %v8638 = vunpack.c.h.b16 %v6127
      %v8639 = vunpack.c.l.b16 %v6137
      %v8640 = vunpack.c.h.b16 %v6137
      %v8641 = vunpack.c.l.b16 %v6147
      %v8642 = vunpack.c.h.b16 %v6147
      %v8643 = vunpack.c.l.b16 %v6157
      %v8644 = vunpack.c.h.b16 %v6157
      %v8645 = vunpack.c.l.b16 %v6167
      %v8646 = vunpack.c.h.b16 %v6167
      %v8647 = vunpack.c.l.b16 %v6177
      %v8648 = vunpack.c.h.b16 %v6177
      %v8649 = vunpack.c.l.b16 %v6187
      %v8650 = vunpack.c.h.b16 %v6187
      %v8651 = vunpack.c.l.b16 %v6197
      %v8652 = vunpack.c.h.b16 %v6197
      %v8653 = vunpack.c.l.b16 %v6207
      %v8654 = vunpack.c.h.b16 %v6207
      %v8655 = vunpack.c.l.b16 %v6217
      %v8656 = vunpack.c.h.b16 %v6217
      %v8657 = vunpack.c.l.b16 %v6227
      %v8658 = vunpack.c.h.b16 %v6227
      %v8659 = vunpack.c.l.b16 %v6237
      %v8660 = vunpack.c.h.b16 %v6237
      %v8661 = vunpack.c.l.b16 %v6247
      %v8662 = vunpack.c.h.b16 %v6247
      %v8663 = vpack.c.b16 %v8601, %v8599
      %v8664 = vpack.c.b16 %v8602, %v8600
      %v8665 = vpack.c.b16 %v8605, %v8603
      %v8666 = vpack.c.b16 %v8606, %v8604
      %v8667 = vpack.c.b16 %v8609, %v8607
      %v8668 = vpack.c.b16 %v8610, %v8608
      %v8669 = vpack.c.b16 %v8613, %v8611
      %v8670 = vpack.c.b16 %v8614, %v8612
      %v8671 = vpack.c.b16 %v8617, %v8615
      %v8672 = vpack.c.b16 %v8618, %v8616
      %v8673 = vpack.c.b16 %v8621, %v8619
      %v8674 = vpack.c.b16 %v8622, %v8620
      %v8675 = vpack.c.b16 %v8625, %v8623
      %v8676 = vpack.c.b16 %v8626, %v8624
      %v8677 = vpack.c.b16 %v8629, %v8627
      %v8678 = vpack.c.b16 %v8630, %v8628
      %v8679 = vpack.c.b16 %v8633, %v8631
      %v8680 = vpack.c.b16 %v8634, %v8632
      %v8681 = vpack.c.b16 %v8637, %v8635
      %v8682 = vpack.c.b16 %v8638, %v8636
      %v8683 = vpack.c.b16 %v8641, %v8639
      %v8684 = vpack.c.b16 %v8642, %v8640
      %v8685 = vpack.c.b16 %v8645, %v8643
      %v8686 = vpack.c.b16 %v8646, %v8644
      %v8687 = vpack.c.b16 %v8649, %v8647
      %v8688 = vpack.c.b16 %v8650, %v8648
      %v8689 = vpack.c.b16 %v8653, %v8651
      %v8690 = vpack.c.b16 %v8654, %v8652
      %v8691 = vpack.c.b16 %v8657, %v8655
      %v8692 = vpack.c.b16 %v8658, %v8656
      %v8693 = vpack.c.b16 %v8661, %v8659
      %v8694 = vpack.c.b16 %v8662, %v8660
      %8727 = vmatpush.bf16.msra.mxu0 %v6514
      %8728 = vmatpush.bf16.msra.mxu0 %v6513
      %8729 = vmatpush.bf16.msra.mxu0 %v6512
      %8730 = vmatpush.bf16.msra.mxu0 %v6511
      %8731 = vmatpush.bf16.msra.mxu0 %v6510
      %8732 = vmatpush.bf16.msra.mxu0 %v6509
      %8733 = vmatpush.bf16.msra.mxu0 %v6508
      %8734 = vmatpush.bf16.msra.mxu0 %v6507
      %8735 = vmatmul.bf16.gmra.mxu0 %v8663
      %v8736 = vpop.f32.mrf.mxu0
      %v8737 = vadd.f32 0.0, %v8736
      %v8738 = vpop.f32.mrf.mxu0
      %v8739 = vadd.f32 0.0, %v8738
      %8740 = vmatmul.bf16.gmra.mxu0 %v8665
      %v8741 = vpop.f32.mrf.mxu0
      %v8742 = vadd.f32 0.0, %v8741
      %v8743 = vpop.f32.mrf.mxu0
      %v8744 = vadd.f32 0.0, %v8743
      %8745 = vmatmul.bf16.gmra.mxu0 %v8667
      %v8746 = vpop.f32.mrf.mxu0
      %v8747 = vadd.f32 0.0, %v8746
      %v8748 = vpop.f32.mrf.mxu0
      %v8749 = vadd.f32 0.0, %v8748
      %8750 = vmatmul.bf16.gmra.mxu0 %v8669
      %v8751 = vpop.f32.mrf.mxu0
      %v8752 = vadd.f32 0.0, %v8751
      %v8753 = vpop.f32.mrf.mxu0
      %v8754 = vadd.f32 0.0, %v8753
      %8755 = vmatmul.bf16.gmra.mxu0 %v8671
      %v8756 = vpop.f32.mrf.mxu0
      %v8757 = vadd.f32 0.0, %v8756
      %v8758 = vpop.f32.mrf.mxu0
      %v8759 = vadd.f32 0.0, %v8758
      %8760 = vmatmul.bf16.gmra.mxu0 %v8673
      %v8761 = vpop.f32.mrf.mxu0
      %v8762 = vadd.f32 0.0, %v8761
      %v8763 = vpop.f32.mrf.mxu0
      %v8764 = vadd.f32 0.0, %v8763
      %8765 = vmatmul.bf16.gmra.mxu0 %v8675
      %v8766 = vpop.f32.mrf.mxu0
      %v8767 = vadd.f32 0.0, %v8766
      %v8768 = vpop.f32.mrf.mxu0
      %v8769 = vadd.f32 0.0, %v8768
      %8770 = vmatmul.bf16.gmra.mxu0 %v8677
      %v8771 = vpop.f32.mrf.mxu0
      %v8772 = vadd.f32 0.0, %v8771
      %v8773 = vpop.f32.mrf.mxu0
      %v8774 = vadd.f32 0.0, %v8773
      %8775 = vmatmul.bf16.gmra.mxu0 %v8679
      %v8776 = vpop.f32.mrf.mxu0
      %v8777 = vadd.f32 0.0, %v8776
      %v8778 = vpop.f32.mrf.mxu0
      %v8779 = vadd.f32 0.0, %v8778
      %8780 = vmatmul.bf16.gmra.mxu0 %v8681
      %v8781 = vpop.f32.mrf.mxu0
      %v8782 = vadd.f32 0.0, %v8781
      %v8783 = vpop.f32.mrf.mxu0
      %v8784 = vadd.f32 0.0, %v8783
      %8785 = vmatmul.bf16.gmra.mxu0 %v8683
      %v8786 = vpop.f32.mrf.mxu0
      %v8787 = vadd.f32 0.0, %v8786
      %v8788 = vpop.f32.mrf.mxu0
      %v8789 = vadd.f32 0.0, %v8788
      %8790 = vmatmul.bf16.gmra.mxu0 %v8685
      %v8791 = vpop.f32.mrf.mxu0
      %v8792 = vadd.f32 0.0, %v8791
      %v8793 = vpop.f32.mrf.mxu0
      %v8794 = vadd.f32 0.0, %v8793
      %8795 = vmatmul.bf16.gmra.mxu0 %v8687
      %v8796 = vpop.f32.mrf.mxu0
      %v8797 = vadd.f32 0.0, %v8796
      %v8798 = vpop.f32.mrf.mxu0
      %v8799 = vadd.f32 0.0, %v8798
      %8800 = vmatmul.bf16.gmra.mxu0 %v8689
      %v8801 = vpop.f32.mrf.mxu0
      %v8802 = vadd.f32 0.0, %v8801
      %v8803 = vpop.f32.mrf.mxu0
      %v8804 = vadd.f32 0.0, %v8803
      %8805 = vmatmul.bf16.gmra.mxu0 %v8691
      %v8806 = vpop.f32.mrf.mxu0
      %v8807 = vadd.f32 0.0, %v8806
      %v8808 = vpop.f32.mrf.mxu0
      %v8809 = vadd.f32 0.0, %v8808
      %8810 = vmatmul.bf16.gmra.mxu0 %v8693
      %v8811 = vpop.f32.mrf.mxu0
      %v8812 = vadd.f32 0.0, %v8811
      %v8813 = vpop.f32.mrf.mxu0
      %v8814 = vadd.f32 0.0, %v8813
      %8815 = vdwg.mxu0
      %8816 = vmatpush.bf16.msra.mxu0 %v6522
      %8817 = vmatpush.bf16.msra.mxu0 %v6521
      %8818 = vmatpush.bf16.msra.mxu0 %v6520
      %8819 = vmatpush.bf16.msra.mxu0 %v6519
      %8820 = vmatpush.bf16.msra.mxu0 %v6518
      %8821 = vmatpush.bf16.msra.mxu0 %v6517
      %8822 = vmatpush.bf16.msra.mxu0 %v6516
      %8823 = vmatpush.bf16.msra.mxu0 %v6515
      %8824 = vmatmul.bf16.gmra.mxu0 %v8664
      %v8825 = vpop.f32.mrf.mxu0
      %v8826 = vadd.f32 %v8737, %v8825
      %v8827 = vpop.f32.mrf.mxu0
      %v8828 = vadd.f32 %v8739, %v8827
      %8829 = vmatmul.bf16.gmra.mxu0 %v8666
      %v8830 = vpop.f32.mrf.mxu0
      %v8831 = vadd.f32 %v8742, %v8830
      %v8832 = vpop.f32.mrf.mxu0
      %v8833 = vadd.f32 %v8744, %v8832
      %8834 = vmatmul.bf16.gmra.mxu0 %v8668
      %v8835 = vpop.f32.mrf.mxu0
      %v8836 = vadd.f32 %v8747, %v8835
      %v8837 = vpop.f32.mrf.mxu0
      %v8838 = vadd.f32 %v8749, %v8837
      %8839 = vmatmul.bf16.gmra.mxu0 %v8670
      %v8840 = vpop.f32.mrf.mxu0
      %v8841 = vadd.f32 %v8752, %v8840
      %v8842 = vpop.f32.mrf.mxu0
      %v8843 = vadd.f32 %v8754, %v8842
      %8844 = vmatmul.bf16.gmra.mxu0 %v8672
      %v8845 = vpop.f32.mrf.mxu0
      %v8846 = vadd.f32 %v8757, %v8845
      %v8847 = vpop.f32.mrf.mxu0
      %v8848 = vadd.f32 %v8759, %v8847
      %8849 = vmatmul.bf16.gmra.mxu0 %v8674
      %v8850 = vpop.f32.mrf.mxu0
      %v8851 = vadd.f32 %v8762, %v8850
      %v8852 = vpop.f32.mrf.mxu0
      %v8853 = vadd.f32 %v8764, %v8852
      %8854 = vmatmul.bf16.gmra.mxu0 %v8676
      %v8855 = vpop.f32.mrf.mxu0
      %v8856 = vadd.f32 %v8767, %v8855
      %v8857 = vpop.f32.mrf.mxu0
      %v8858 = vadd.f32 %v8769, %v8857
      %8859 = vmatmul.bf16.gmra.mxu0 %v8678
      %v8860 = vpop.f32.mrf.mxu0
      %v8861 = vadd.f32 %v8772, %v8860
      %v8862 = vpop.f32.mrf.mxu0
      %v8863 = vadd.f32 %v8774, %v8862
      %8864 = vmatmul.bf16.gmra.mxu0 %v8680
      %v8865 = vpop.f32.mrf.mxu0
      %v8866 = vadd.f32 %v8777, %v8865
      %v8867 = vpop.f32.mrf.mxu0
      %v8868 = vadd.f32 %v8779, %v8867
      %8869 = vmatmul.bf16.gmra.mxu0 %v8682
      %v8870 = vpop.f32.mrf.mxu0
      %v8871 = vadd.f32 %v8782, %v8870
      %v8872 = vpop.f32.mrf.mxu0
      %v8873 = vadd.f32 %v8784, %v8872
      %8874 = vmatmul.bf16.gmra.mxu0 %v8684
      %v8875 = vpop.f32.mrf.mxu0
      %v8876 = vadd.f32 %v8787, %v8875
      %v8877 = vpop.f32.mrf.mxu0
      %v8878 = vadd.f32 %v8789, %v8877
      %8879 = vmatmul.bf16.gmra.mxu0 %v8686
      %v8880 = vpop.f32.mrf.mxu0
      %v8881 = vadd.f32 %v8792, %v8880
      %v8882 = vpop.f32.mrf.mxu0
      %v8883 = vadd.f32 %v8794, %v8882
      %8884 = vmatmul.bf16.gmra.mxu0 %v8688
      %v8885 = vpop.f32.mrf.mxu0
      %v8886 = vadd.f32 %v8797, %v8885
      %v8887 = vpop.f32.mrf.mxu0
      %v8888 = vadd.f32 %v8799, %v8887
      %8889 = vmatmul.bf16.gmra.mxu0 %v8690
      %v8890 = vpop.f32.mrf.mxu0
      %v8891 = vadd.f32 %v8802, %v8890
      %v8892 = vpop.f32.mrf.mxu0
      %v8893 = vadd.f32 %v8804, %v8892
      %8894 = vmatmul.bf16.gmra.mxu0 %v8692
      %v8895 = vpop.f32.mrf.mxu0
      %v8896 = vadd.f32 %v8807, %v8895
      %v8897 = vpop.f32.mrf.mxu0
      %v8898 = vadd.f32 %v8809, %v8897
      %8899 = vmatmul.bf16.gmra.mxu0 %v8694
      %v8900 = vpop.f32.mrf.mxu0
      %v8901 = vadd.f32 %v8812, %v8900
      %v8902 = vpop.f32.mrf.mxu0
      %v8903 = vadd.f32 %v8814, %v8902
      %8904 = vdwg.mxu0
      %v8905 = vmax.f32 %v8535, %v8826
      %v8906 = vmax.f32 %v8536, %v8828
      %v8907 = vmax.f32 %v8537, %v8831
      %v8908 = vmax.f32 %v8538, %v8833
      %v8909 = vmax.f32 %v8539, %v8836
      %v8910 = vmax.f32 %v8540, %v8838
      %v8911 = vmax.f32 %v8541, %v8841
      %v8912 = vmax.f32 %v8542, %v8843
      %v8913 = vmax.f32 %v8543, %v8846
      %v8914 = vmax.f32 %v8544, %v8848
      %v8915 = vmax.f32 %v8545, %v8851
      %v8916 = vmax.f32 %v8546, %v8853
      %v8917 = vmax.f32 %v8547, %v8856
      %v8918 = vmax.f32 %v8548, %v8858
      %v8919 = vmax.f32 %v8549, %v8861
      %v8920 = vmax.f32 %v8550, %v8863
      %v8921 = vmax.f32 %v8551, %v8866
      %v8922 = vmax.f32 %v8552, %v8868
      %v8923 = vmax.f32 %v8553, %v8871
      %v8924 = vmax.f32 %v8554, %v8873
      %v8925 = vmax.f32 %v8555, %v8876
      %v8926 = vmax.f32 %v8556, %v8878
      %v8927 = vmax.f32 %v8557, %v8881
      %v8928 = vmax.f32 %v8558, %v8883
      %v8929 = vmax.f32 %v8559, %v8886
      %v8930 = vmax.f32 %v8560, %v8888
      %v8931 = vmax.f32 %v8561, %v8891
      %v8932 = vmax.f32 %v8562, %v8893
      %v8933 = vmax.f32 %v8563, %v8896
      %v8934 = vmax.f32 %v8564, %v8898
      %v8935 = vmax.f32 %v8565, %v8901
      %v8936 = vmax.f32 %v8566, %v8903
      %v8969 = vunpack.c.l.b16 %v5938
      %v8970 = vunpack.c.h.b16 %v5938
      %v8971 = vunpack.c.l.b16 %v5948
      %v8972 = vunpack.c.h.b16 %v5948
      %v8973 = vunpack.c.l.b16 %v5958
      %v8974 = vunpack.c.h.b16 %v5958
      %v8975 = vunpack.c.l.b16 %v5968
      %v8976 = vunpack.c.h.b16 %v5968
      %v8977 = vunpack.c.l.b16 %v5978
      %v8978 = vunpack.c.h.b16 %v5978
      %v8979 = vunpack.c.l.b16 %v5988
      %v8980 = vunpack.c.h.b16 %v5988
      %v8981 = vunpack.c.l.b16 %v5998
      %v8982 = vunpack.c.h.b16 %v5998
      %v8983 = vunpack.c.l.b16 %v6008
      %v8984 = vunpack.c.h.b16 %v6008
      %v8985 = vunpack.c.l.b16 %v6018
      %v8986 = vunpack.c.h.b16 %v6018
      %v8987 = vunpack.c.l.b16 %v6028
      %v8988 = vunpack.c.h.b16 %v6028
      %v8989 = vunpack.c.l.b16 %v6038
      %v8990 = vunpack.c.h.b16 %v6038
      %v8991 = vunpack.c.l.b16 %v6048
      %v8992 = vunpack.c.h.b16 %v6048
      %v8993 = vunpack.c.l.b16 %v6058
      %v8994 = vunpack.c.h.b16 %v6058
      %v8995 = vunpack.c.l.b16 %v6068
      %v8996 = vunpack.c.h.b16 %v6068
      %v8997 = vunpack.c.l.b16 %v6078
      %v8998 = vunpack.c.h.b16 %v6078
      %v8999 = vunpack.c.l.b16 %v6088
      %v9000 = vunpack.c.h.b16 %v6088
      %v9001 = vunpack.c.l.b16 %v6098
      %v9002 = vunpack.c.h.b16 %v6098
      %v9003 = vunpack.c.l.b16 %v6108
      %v9004 = vunpack.c.h.b16 %v6108
      %v9005 = vunpack.c.l.b16 %v6118
      %v9006 = vunpack.c.h.b16 %v6118
      %v9007 = vunpack.c.l.b16 %v6128
      %v9008 = vunpack.c.h.b16 %v6128
      %v9009 = vunpack.c.l.b16 %v6138
      %v9010 = vunpack.c.h.b16 %v6138
      %v9011 = vunpack.c.l.b16 %v6148
      %v9012 = vunpack.c.h.b16 %v6148
      %v9013 = vunpack.c.l.b16 %v6158
      %v9014 = vunpack.c.h.b16 %v6158
      %v9015 = vunpack.c.l.b16 %v6168
      %v9016 = vunpack.c.h.b16 %v6168
      %v9017 = vunpack.c.l.b16 %v6178
      %v9018 = vunpack.c.h.b16 %v6178
      %v9019 = vunpack.c.l.b16 %v6188
      %v9020 = vunpack.c.h.b16 %v6188
      %v9021 = vunpack.c.l.b16 %v6198
      %v9022 = vunpack.c.h.b16 %v6198
      %v9023 = vunpack.c.l.b16 %v6208
      %v9024 = vunpack.c.h.b16 %v6208
      %v9025 = vunpack.c.l.b16 %v6218
      %v9026 = vunpack.c.h.b16 %v6218
      %v9027 = vunpack.c.l.b16 %v6228
      %v9028 = vunpack.c.h.b16 %v6228
      %v9029 = vunpack.c.l.b16 %v6238
      %v9030 = vunpack.c.h.b16 %v6238
      %v9031 = vunpack.c.l.b16 %v6248
      %v9032 = vunpack.c.h.b16 %v6248
      %v9033 = vpack.c.b16 %v8971, %v8969
      %v9034 = vpack.c.b16 %v8972, %v8970
      %v9035 = vpack.c.b16 %v8975, %v8973
      %v9036 = vpack.c.b16 %v8976, %v8974
      %v9037 = vpack.c.b16 %v8979, %v8977
      %v9038 = vpack.c.b16 %v8980, %v8978
      %v9039 = vpack.c.b16 %v8983, %v8981
      %v9040 = vpack.c.b16 %v8984, %v8982
      %v9041 = vpack.c.b16 %v8987, %v8985
      %v9042 = vpack.c.b16 %v8988, %v8986
      %v9043 = vpack.c.b16 %v8991, %v8989
      %v9044 = vpack.c.b16 %v8992, %v8990
      %v9045 = vpack.c.b16 %v8995, %v8993
      %v9046 = vpack.c.b16 %v8996, %v8994
      %v9047 = vpack.c.b16 %v8999, %v8997
      %v9048 = vpack.c.b16 %v9000, %v8998
      %v9049 = vpack.c.b16 %v9003, %v9001
      %v9050 = vpack.c.b16 %v9004, %v9002
      %v9051 = vpack.c.b16 %v9007, %v9005
      %v9052 = vpack.c.b16 %v9008, %v9006
      %v9053 = vpack.c.b16 %v9011, %v9009
      %v9054 = vpack.c.b16 %v9012, %v9010
      %v9055 = vpack.c.b16 %v9015, %v9013
      %v9056 = vpack.c.b16 %v9016, %v9014
      %v9057 = vpack.c.b16 %v9019, %v9017
      %v9058 = vpack.c.b16 %v9020, %v9018
      %v9059 = vpack.c.b16 %v9023, %v9021
      %v9060 = vpack.c.b16 %v9024, %v9022
      %v9061 = vpack.c.b16 %v9027, %v9025
      %v9062 = vpack.c.b16 %v9028, %v9026
      %v9063 = vpack.c.b16 %v9031, %v9029
      %v9064 = vpack.c.b16 %v9032, %v9030
      %9097 = vmatpush.bf16.msra.mxu0 %v6514
      %9098 = vmatpush.bf16.msra.mxu0 %v6513
      %9099 = vmatpush.bf16.msra.mxu0 %v6512
      %9100 = vmatpush.bf16.msra.mxu0 %v6511
      %9101 = vmatpush.bf16.msra.mxu0 %v6510
      %9102 = vmatpush.bf16.msra.mxu0 %v6509
      %9103 = vmatpush.bf16.msra.mxu0 %v6508
      %9104 = vmatpush.bf16.msra.mxu0 %v6507
      %9105 = vmatmul.bf16.gmra.mxu0 %v9033
      %v9106 = vpop.f32.mrf.mxu0
      %v9107 = vadd.f32 0.0, %v9106
      %v9108 = vpop.f32.mrf.mxu0
      %v9109 = vadd.f32 0.0, %v9108
      %9110 = vmatmul.bf16.gmra.mxu0 %v9035
      %v9111 = vpop.f32.mrf.mxu0
      %v9112 = vadd.f32 0.0, %v9111
      %v9113 = vpop.f32.mrf.mxu0
      %v9114 = vadd.f32 0.0, %v9113
      %9115 = vmatmul.bf16.gmra.mxu0 %v9037
      %v9116 = vpop.f32.mrf.mxu0
      %v9117 = vadd.f32 0.0, %v9116
      %v9118 = vpop.f32.mrf.mxu0
      %v9119 = vadd.f32 0.0, %v9118
      %9120 = vmatmul.bf16.gmra.mxu0 %v9039
      %v9121 = vpop.f32.mrf.mxu0
      %v9122 = vadd.f32 0.0, %v9121
      %v9123 = vpop.f32.mrf.mxu0
      %v9124 = vadd.f32 0.0, %v9123
      %9125 = vmatmul.bf16.gmra.mxu0 %v9041
      %v9126 = vpop.f32.mrf.mxu0
      %v9127 = vadd.f32 0.0, %v9126
      %v9128 = vpop.f32.mrf.mxu0
      %v9129 = vadd.f32 0.0, %v9128
      %9130 = vmatmul.bf16.gmra.mxu0 %v9043
      %v9131 = vpop.f32.mrf.mxu0
      %v9132 = vadd.f32 0.0, %v9131
      %v9133 = vpop.f32.mrf.mxu0
      %v9134 = vadd.f32 0.0, %v9133
      %9135 = vmatmul.bf16.gmra.mxu0 %v9045
      %v9136 = vpop.f32.mrf.mxu0
      %v9137 = vadd.f32 0.0, %v9136
      %v9138 = vpop.f32.mrf.mxu0
      %v9139 = vadd.f32 0.0, %v9138
      %9140 = vmatmul.bf16.gmra.mxu0 %v9047
      %v9141 = vpop.f32.mrf.mxu0
      %v9142 = vadd.f32 0.0, %v9141
      %v9143 = vpop.f32.mrf.mxu0
      %v9144 = vadd.f32 0.0, %v9143
      %9145 = vmatmul.bf16.gmra.mxu0 %v9049
      %v9146 = vpop.f32.mrf.mxu0
      %v9147 = vadd.f32 0.0, %v9146
      %v9148 = vpop.f32.mrf.mxu0
      %v9149 = vadd.f32 0.0, %v9148
      %9150 = vmatmul.bf16.gmra.mxu0 %v9051
      %v9151 = vpop.f32.mrf.mxu0
      %v9152 = vadd.f32 0.0, %v9151
      %v9153 = vpop.f32.mrf.mxu0
      %v9154 = vadd.f32 0.0, %v9153
      %9155 = vmatmul.bf16.gmra.mxu0 %v9053
      %v9156 = vpop.f32.mrf.mxu0
      %v9157 = vadd.f32 0.0, %v9156
      %v9158 = vpop.f32.mrf.mxu0
      %v9159 = vadd.f32 0.0, %v9158
      %9160 = vmatmul.bf16.gmra.mxu0 %v9055
      %v9161 = vpop.f32.mrf.mxu0
      %v9162 = vadd.f32 0.0, %v9161
      %v9163 = vpop.f32.mrf.mxu0
      %v9164 = vadd.f32 0.0, %v9163
      %9165 = vmatmul.bf16.gmra.mxu0 %v9057
      %v9166 = vpop.f32.mrf.mxu0
      %v9167 = vadd.f32 0.0, %v9166
      %v9168 = vpop.f32.mrf.mxu0
      %v9169 = vadd.f32 0.0, %v9168
      %9170 = vmatmul.bf16.gmra.mxu0 %v9059
      %v9171 = vpop.f32.mrf.mxu0
      %v9172 = vadd.f32 0.0, %v9171
      %v9173 = vpop.f32.mrf.mxu0
      %v9174 = vadd.f32 0.0, %v9173
      %9175 = vmatmul.bf16.gmra.mxu0 %v9061
      %v9176 = vpop.f32.mrf.mxu0
      %v9177 = vadd.f32 0.0, %v9176
      %v9178 = vpop.f32.mrf.mxu0
      %v9179 = vadd.f32 0.0, %v9178
      %9180 = vmatmul.bf16.gmra.mxu0 %v9063
      %v9181 = vpop.f32.mrf.mxu0
      %v9182 = vadd.f32 0.0, %v9181
      %v9183 = vpop.f32.mrf.mxu0
      %v9184 = vadd.f32 0.0, %v9183
      %9185 = vdwg.mxu0
      %9186 = vmatpush.bf16.msra.mxu0 %v6522
      %9187 = vmatpush.bf16.msra.mxu0 %v6521
      %9188 = vmatpush.bf16.msra.mxu0 %v6520
      %9189 = vmatpush.bf16.msra.mxu0 %v6519
      %9190 = vmatpush.bf16.msra.mxu0 %v6518
      %9191 = vmatpush.bf16.msra.mxu0 %v6517
      %9192 = vmatpush.bf16.msra.mxu0 %v6516
      %9193 = vmatpush.bf16.msra.mxu0 %v6515
      %9194 = vmatmul.bf16.gmra.mxu0 %v9034
      %v9195 = vpop.f32.mrf.mxu0
      %v9196 = vadd.f32 %v9107, %v9195
      %v9197 = vpop.f32.mrf.mxu0
      %v9198 = vadd.f32 %v9109, %v9197
      %9199 = vmatmul.bf16.gmra.mxu0 %v9036
      %v9200 = vpop.f32.mrf.mxu0
      %v9201 = vadd.f32 %v9112, %v9200
      %v9202 = vpop.f32.mrf.mxu0
      %v9203 = vadd.f32 %v9114, %v9202
      %9204 = vmatmul.bf16.gmra.mxu0 %v9038
      %v9205 = vpop.f32.mrf.mxu0
      %v9206 = vadd.f32 %v9117, %v9205
      %v9207 = vpop.f32.mrf.mxu0
      %v9208 = vadd.f32 %v9119, %v9207
      %9209 = vmatmul.bf16.gmra.mxu0 %v9040
      %v9210 = vpop.f32.mrf.mxu0
      %v9211 = vadd.f32 %v9122, %v9210
      %v9212 = vpop.f32.mrf.mxu0
      %v9213 = vadd.f32 %v9124, %v9212
      %9214 = vmatmul.bf16.gmra.mxu0 %v9042
      %v9215 = vpop.f32.mrf.mxu0
      %v9216 = vadd.f32 %v9127, %v9215
      %v9217 = vpop.f32.mrf.mxu0
      %v9218 = vadd.f32 %v9129, %v9217
      %9219 = vmatmul.bf16.gmra.mxu0 %v9044
      %v9220 = vpop.f32.mrf.mxu0
      %v9221 = vadd.f32 %v9132, %v9220
      %v9222 = vpop.f32.mrf.mxu0
      %v9223 = vadd.f32 %v9134, %v9222
      %9224 = vmatmul.bf16.gmra.mxu0 %v9046
      %v9225 = vpop.f32.mrf.mxu0
      %v9226 = vadd.f32 %v9137, %v9225
      %v9227 = vpop.f32.mrf.mxu0
      %v9228 = vadd.f32 %v9139, %v9227
      %9229 = vmatmul.bf16.gmra.mxu0 %v9048
      %v9230 = vpop.f32.mrf.mxu0
      %v9231 = vadd.f32 %v9142, %v9230
      %v9232 = vpop.f32.mrf.mxu0
      %v9233 = vadd.f32 %v9144, %v9232
      %9234 = vmatmul.bf16.gmra.mxu0 %v9050
      %v9235 = vpop.f32.mrf.mxu0
      %v9236 = vadd.f32 %v9147, %v9235
      %v9237 = vpop.f32.mrf.mxu0
      %v9238 = vadd.f32 %v9149, %v9237
      %9239 = vmatmul.bf16.gmra.mxu0 %v9052
      %v9240 = vpop.f32.mrf.mxu0
      %v9241 = vadd.f32 %v9152, %v9240
      %v9242 = vpop.f32.mrf.mxu0
      %v9243 = vadd.f32 %v9154, %v9242
      %9244 = vmatmul.bf16.gmra.mxu0 %v9054
      %v9245 = vpop.f32.mrf.mxu0
      %v9246 = vadd.f32 %v9157, %v9245
      %v9247 = vpop.f32.mrf.mxu0
      %v9248 = vadd.f32 %v9159, %v9247
      %9249 = vmatmul.bf16.gmra.mxu0 %v9056
      %v9250 = vpop.f32.mrf.mxu0
      %v9251 = vadd.f32 %v9162, %v9250
      %v9252 = vpop.f32.mrf.mxu0
      %v9253 = vadd.f32 %v9164, %v9252
      %9254 = vmatmul.bf16.gmra.mxu0 %v9058
      %v9255 = vpop.f32.mrf.mxu0
      %v9256 = vadd.f32 %v9167, %v9255
      %v9257 = vpop.f32.mrf.mxu0
      %v9258 = vadd.f32 %v9169, %v9257
      %9259 = vmatmul.bf16.gmra.mxu0 %v9060
      %v9260 = vpop.f32.mrf.mxu0
      %v9261 = vadd.f32 %v9172, %v9260
      %v9262 = vpop.f32.mrf.mxu0
      %v9263 = vadd.f32 %v9174, %v9262
      %9264 = vmatmul.bf16.gmra.mxu0 %v9062
      %v9265 = vpop.f32.mrf.mxu0
      %v9266 = vadd.f32 %v9177, %v9265
      %v9267 = vpop.f32.mrf.mxu0
      %v9268 = vadd.f32 %v9179, %v9267
      %9269 = vmatmul.bf16.gmra.mxu0 %v9064
      %v9270 = vpop.f32.mrf.mxu0
      %v9271 = vadd.f32 %v9182, %v9270
      %v9272 = vpop.f32.mrf.mxu0
      %v9273 = vadd.f32 %v9184, %v9272
      %9274 = vdwg.mxu0
      %v9275 = vmax.f32 %v8905, %v9196
      %v9276 = vmax.f32 %v8906, %v9198
      %v9277 = vmax.f32 %v8907, %v9201
      %v9278 = vmax.f32 %v8908, %v9203
      %v9279 = vmax.f32 %v8909, %v9206
      %v9280 = vmax.f32 %v8910, %v9208
      %v9281 = vmax.f32 %v8911, %v9211
      %v9282 = vmax.f32 %v8912, %v9213
      %v9283 = vmax.f32 %v8913, %v9216
      %v9284 = vmax.f32 %v8914, %v9218
      %v9285 = vmax.f32 %v8915, %v9221
      %v9286 = vmax.f32 %v8916, %v9223
      %v9287 = vmax.f32 %v8917, %v9226
      %v9288 = vmax.f32 %v8918, %v9228
      %v9289 = vmax.f32 %v8919, %v9231
      %v9290 = vmax.f32 %v8920, %v9233
      %v9291 = vmax.f32 %v8921, %v9236
      %v9292 = vmax.f32 %v8922, %v9238
      %v9293 = vmax.f32 %v8923, %v9241
      %v9294 = vmax.f32 %v8924, %v9243
      %v9295 = vmax.f32 %v8925, %v9246
      %v9296 = vmax.f32 %v8926, %v9248
      %v9297 = vmax.f32 %v8927, %v9251
      %v9298 = vmax.f32 %v8928, %v9253
      %v9299 = vmax.f32 %v8929, %v9256
      %v9300 = vmax.f32 %v8930, %v9258
      %v9301 = vmax.f32 %v8931, %v9261
      %v9302 = vmax.f32 %v8932, %v9263
      %v9303 = vmax.f32 %v8933, %v9266
      %v9304 = vmax.f32 %v8934, %v9268
      %v9305 = vmax.f32 %v8935, %v9271
      %v9306 = vmax.f32 %v8936, %v9273
      %v9339 = vunpack.c.l.b16 %v5939
      %v9340 = vunpack.c.h.b16 %v5939
      %v9341 = vunpack.c.l.b16 %v5949
      %v9342 = vunpack.c.h.b16 %v5949
      %v9343 = vunpack.c.l.b16 %v5959
      %v9344 = vunpack.c.h.b16 %v5959
      %v9345 = vunpack.c.l.b16 %v5969
      %v9346 = vunpack.c.h.b16 %v5969
      %v9347 = vunpack.c.l.b16 %v5979
      %v9348 = vunpack.c.h.b16 %v5979
      %v9349 = vunpack.c.l.b16 %v5989
      %v9350 = vunpack.c.h.b16 %v5989
      %v9351 = vunpack.c.l.b16 %v5999
      %v9352 = vunpack.c.h.b16 %v5999
      %v9353 = vunpack.c.l.b16 %v6009
      %v9354 = vunpack.c.h.b16 %v6009
      %v9355 = vunpack.c.l.b16 %v6019
      %v9356 = vunpack.c.h.b16 %v6019
      %v9357 = vunpack.c.l.b16 %v6029
      %v9358 = vunpack.c.h.b16 %v6029
      %v9359 = vunpack.c.l.b16 %v6039
      %v9360 = vunpack.c.h.b16 %v6039
      %v9361 = vunpack.c.l.b16 %v6049
      %v9362 = vunpack.c.h.b16 %v6049
      %v9363 = vunpack.c.l.b16 %v6059
      %v9364 = vunpack.c.h.b16 %v6059
      %v9365 = vunpack.c.l.b16 %v6069
      %v9366 = vunpack.c.h.b16 %v6069
      %v9367 = vunpack.c.l.b16 %v6079
      %v9368 = vunpack.c.h.b16 %v6079
      %v9369 = vunpack.c.l.b16 %v6089
      %v9370 = vunpack.c.h.b16 %v6089
      %v9371 = vunpack.c.l.b16 %v6099
      %v9372 = vunpack.c.h.b16 %v6099
      %v9373 = vunpack.c.l.b16 %v6109
      %v9374 = vunpack.c.h.b16 %v6109
      %v9375 = vunpack.c.l.b16 %v6119
      %v9376 = vunpack.c.h.b16 %v6119
      %v9377 = vunpack.c.l.b16 %v6129
      %v9378 = vunpack.c.h.b16 %v6129
      %v9379 = vunpack.c.l.b16 %v6139
      %v9380 = vunpack.c.h.b16 %v6139
      %v9381 = vunpack.c.l.b16 %v6149
      %v9382 = vunpack.c.h.b16 %v6149
      %v9383 = vunpack.c.l.b16 %v6159
      %v9384 = vunpack.c.h.b16 %v6159
      %v9385 = vunpack.c.l.b16 %v6169
      %v9386 = vunpack.c.h.b16 %v6169
      %v9387 = vunpack.c.l.b16 %v6179
      %v9388 = vunpack.c.h.b16 %v6179
      %v9389 = vunpack.c.l.b16 %v6189
      %v9390 = vunpack.c.h.b16 %v6189
      %v9391 = vunpack.c.l.b16 %v6199
      %v9392 = vunpack.c.h.b16 %v6199
      %v9393 = vunpack.c.l.b16 %v6209
      %v9394 = vunpack.c.h.b16 %v6209
      %v9395 = vunpack.c.l.b16 %v6219
      %v9396 = vunpack.c.h.b16 %v6219
      %v9397 = vunpack.c.l.b16 %v6229
      %v9398 = vunpack.c.h.b16 %v6229
      %v9399 = vunpack.c.l.b16 %v6239
      %v9400 = vunpack.c.h.b16 %v6239
      %v9401 = vunpack.c.l.b16 %v6249
      %v9402 = vunpack.c.h.b16 %v6249
      %v9403 = vpack.c.b16 %v9341, %v9339
      %v9404 = vpack.c.b16 %v9342, %v9340
      %v9405 = vpack.c.b16 %v9345, %v9343
      %v9406 = vpack.c.b16 %v9346, %v9344
      %v9407 = vpack.c.b16 %v9349, %v9347
      %v9408 = vpack.c.b16 %v9350, %v9348
      %v9409 = vpack.c.b16 %v9353, %v9351
      %v9410 = vpack.c.b16 %v9354, %v9352
      %v9411 = vpack.c.b16 %v9357, %v9355
      %v9412 = vpack.c.b16 %v9358, %v9356
      %v9413 = vpack.c.b16 %v9361, %v9359
      %v9414 = vpack.c.b16 %v9362, %v9360
      %v9415 = vpack.c.b16 %v9365, %v9363
      %v9416 = vpack.c.b16 %v9366, %v9364
      %v9417 = vpack.c.b16 %v9369, %v9367
      %v9418 = vpack.c.b16 %v9370, %v9368
      %v9419 = vpack.c.b16 %v9373, %v9371
      %v9420 = vpack.c.b16 %v9374, %v9372
      %v9421 = vpack.c.b16 %v9377, %v9375
      %v9422 = vpack.c.b16 %v9378, %v9376
      %v9423 = vpack.c.b16 %v9381, %v9379
      %v9424 = vpack.c.b16 %v9382, %v9380
      %v9425 = vpack.c.b16 %v9385, %v9383
      %v9426 = vpack.c.b16 %v9386, %v9384
      %v9427 = vpack.c.b16 %v9389, %v9387
      %v9428 = vpack.c.b16 %v9390, %v9388
      %v9429 = vpack.c.b16 %v9393, %v9391
      %v9430 = vpack.c.b16 %v9394, %v9392
      %v9431 = vpack.c.b16 %v9397, %v9395
      %v9432 = vpack.c.b16 %v9398, %v9396
      %v9433 = vpack.c.b16 %v9401, %v9399
      %v9434 = vpack.c.b16 %v9402, %v9400
      %9467 = vmatpush.bf16.msra.mxu0 %v6514
      %9468 = vmatpush.bf16.msra.mxu0 %v6513
      %9469 = vmatpush.bf16.msra.mxu0 %v6512
      %9470 = vmatpush.bf16.msra.mxu0 %v6511
      %9471 = vmatpush.bf16.msra.mxu0 %v6510
      %9472 = vmatpush.bf16.msra.mxu0 %v6509
      %9473 = vmatpush.bf16.msra.mxu0 %v6508
      %9474 = vmatpush.bf16.msra.mxu0 %v6507
      %9475 = vmatmul.bf16.gmra.mxu0 %v9403
      %v9476 = vpop.f32.mrf.mxu0
      %v9477 = vadd.f32 0.0, %v9476
      %v9478 = vpop.f32.mrf.mxu0
      %v9479 = vadd.f32 0.0, %v9478
      %9480 = vmatmul.bf16.gmra.mxu0 %v9405
      %v9481 = vpop.f32.mrf.mxu0
      %v9482 = vadd.f32 0.0, %v9481
      %v9483 = vpop.f32.mrf.mxu0
      %v9484 = vadd.f32 0.0, %v9483
      %9485 = vmatmul.bf16.gmra.mxu0 %v9407
      %v9486 = vpop.f32.mrf.mxu0
      %v9487 = vadd.f32 0.0, %v9486
      %v9488 = vpop.f32.mrf.mxu0
      %v9489 = vadd.f32 0.0, %v9488
      %9490 = vmatmul.bf16.gmra.mxu0 %v9409
      %v9491 = vpop.f32.mrf.mxu0
      %v9492 = vadd.f32 0.0, %v9491
      %v9493 = vpop.f32.mrf.mxu0
      %v9494 = vadd.f32 0.0, %v9493
      %9495 = vmatmul.bf16.gmra.mxu0 %v9411
      %v9496 = vpop.f32.mrf.mxu0
      %v9497 = vadd.f32 0.0, %v9496
      %v9498 = vpop.f32.mrf.mxu0
      %v9499 = vadd.f32 0.0, %v9498
      %9500 = vmatmul.bf16.gmra.mxu0 %v9413
      %v9501 = vpop.f32.mrf.mxu0
      %v9502 = vadd.f32 0.0, %v9501
      %v9503 = vpop.f32.mrf.mxu0
      %v9504 = vadd.f32 0.0, %v9503
      %9505 = vmatmul.bf16.gmra.mxu0 %v9415
      %v9506 = vpop.f32.mrf.mxu0
      %v9507 = vadd.f32 0.0, %v9506
      %v9508 = vpop.f32.mrf.mxu0
      %v9509 = vadd.f32 0.0, %v9508
      %9510 = vmatmul.bf16.gmra.mxu0 %v9417
      %v9511 = vpop.f32.mrf.mxu0
      %v9512 = vadd.f32 0.0, %v9511
      %v9513 = vpop.f32.mrf.mxu0
      %v9514 = vadd.f32 0.0, %v9513
      %9515 = vmatmul.bf16.gmra.mxu0 %v9419
      %v9516 = vpop.f32.mrf.mxu0
      %v9517 = vadd.f32 0.0, %v9516
      %v9518 = vpop.f32.mrf.mxu0
      %v9519 = vadd.f32 0.0, %v9518
      %9520 = vmatmul.bf16.gmra.mxu0 %v9421
      %v9521 = vpop.f32.mrf.mxu0
      %v9522 = vadd.f32 0.0, %v9521
      %v9523 = vpop.f32.mrf.mxu0
      %v9524 = vadd.f32 0.0, %v9523
      %9525 = vmatmul.bf16.gmra.mxu0 %v9423
      %v9526 = vpop.f32.mrf.mxu0
      %v9527 = vadd.f32 0.0, %v9526
      %v9528 = vpop.f32.mrf.mxu0
      %v9529 = vadd.f32 0.0, %v9528
      %9530 = vmatmul.bf16.gmra.mxu0 %v9425
      %v9531 = vpop.f32.mrf.mxu0
      %v9532 = vadd.f32 0.0, %v9531
      %v9533 = vpop.f32.mrf.mxu0
      %v9534 = vadd.f32 0.0, %v9533
      %9535 = vmatmul.bf16.gmra.mxu0 %v9427
      %v9536 = vpop.f32.mrf.mxu0
      %v9537 = vadd.f32 0.0, %v9536
      %v9538 = vpop.f32.mrf.mxu0
      %v9539 = vadd.f32 0.0, %v9538
      %9540 = vmatmul.bf16.gmra.mxu0 %v9429
      %v9541 = vpop.f32.mrf.mxu0
      %v9542 = vadd.f32 0.0, %v9541
      %v9543 = vpop.f32.mrf.mxu0
      %v9544 = vadd.f32 0.0, %v9543
      %9545 = vmatmul.bf16.gmra.mxu0 %v9431
      %v9546 = vpop.f32.mrf.mxu0
      %v9547 = vadd.f32 0.0, %v9546
      %v9548 = vpop.f32.mrf.mxu0
      %v9549 = vadd.f32 0.0, %v9548
      %9550 = vmatmul.bf16.gmra.mxu0 %v9433
      %v9551 = vpop.f32.mrf.mxu0
      %v9552 = vadd.f32 0.0, %v9551
      %v9553 = vpop.f32.mrf.mxu0
      %v9554 = vadd.f32 0.0, %v9553
      %9555 = vdwg.mxu0
      %9556 = vmatpush.bf16.msra.mxu0 %v6522
      %9557 = vmatpush.bf16.msra.mxu0 %v6521
      %9558 = vmatpush.bf16.msra.mxu0 %v6520
      %9559 = vmatpush.bf16.msra.mxu0 %v6519
      %9560 = vmatpush.bf16.msra.mxu0 %v6518
      %9561 = vmatpush.bf16.msra.mxu0 %v6517
      %9562 = vmatpush.bf16.msra.mxu0 %v6516
      %9563 = vmatpush.bf16.msra.mxu0 %v6515
      %9564 = vmatmul.bf16.gmra.mxu0 %v9404
      %v9565 = vpop.f32.mrf.mxu0
      %v9566 = vadd.f32 %v9477, %v9565
      %v9567 = vpop.f32.mrf.mxu0
      %v9568 = vadd.f32 %v9479, %v9567
      %9569 = vmatmul.bf16.gmra.mxu0 %v9406
      %v9570 = vpop.f32.mrf.mxu0
      %v9571 = vadd.f32 %v9482, %v9570
      %v9572 = vpop.f32.mrf.mxu0
      %v9573 = vadd.f32 %v9484, %v9572
      %9574 = vmatmul.bf16.gmra.mxu0 %v9408
      %v9575 = vpop.f32.mrf.mxu0
      %v9576 = vadd.f32 %v9487, %v9575
      %v9577 = vpop.f32.mrf.mxu0
      %v9578 = vadd.f32 %v9489, %v9577
      %9579 = vmatmul.bf16.gmra.mxu0 %v9410
      %v9580 = vpop.f32.mrf.mxu0
      %v9581 = vadd.f32 %v9492, %v9580
      %v9582 = vpop.f32.mrf.mxu0
      %v9583 = vadd.f32 %v9494, %v9582
      %9584 = vmatmul.bf16.gmra.mxu0 %v9412
      %v9585 = vpop.f32.mrf.mxu0
      %v9586 = vadd.f32 %v9497, %v9585
      %v9587 = vpop.f32.mrf.mxu0
      %v9588 = vadd.f32 %v9499, %v9587
      %9589 = vmatmul.bf16.gmra.mxu0 %v9414
      %v9590 = vpop.f32.mrf.mxu0
      %v9591 = vadd.f32 %v9502, %v9590
      %v9592 = vpop.f32.mrf.mxu0
      %v9593 = vadd.f32 %v9504, %v9592
      %9594 = vmatmul.bf16.gmra.mxu0 %v9416
      %v9595 = vpop.f32.mrf.mxu0
      %v9596 = vadd.f32 %v9507, %v9595
      %v9597 = vpop.f32.mrf.mxu0
      %v9598 = vadd.f32 %v9509, %v9597
      %9599 = vmatmul.bf16.gmra.mxu0 %v9418
      %v9600 = vpop.f32.mrf.mxu0
      %v9601 = vadd.f32 %v9512, %v9600
      %v9602 = vpop.f32.mrf.mxu0
      %v9603 = vadd.f32 %v9514, %v9602
      %9604 = vmatmul.bf16.gmra.mxu0 %v9420
      %v9605 = vpop.f32.mrf.mxu0
      %v9606 = vadd.f32 %v9517, %v9605
      %v9607 = vpop.f32.mrf.mxu0
      %v9608 = vadd.f32 %v9519, %v9607
      %9609 = vmatmul.bf16.gmra.mxu0 %v9422
      %v9610 = vpop.f32.mrf.mxu0
      %v9611 = vadd.f32 %v9522, %v9610
      %v9612 = vpop.f32.mrf.mxu0
      %v9613 = vadd.f32 %v9524, %v9612
      %9614 = vmatmul.bf16.gmra.mxu0 %v9424
      %v9615 = vpop.f32.mrf.mxu0
      %v9616 = vadd.f32 %v9527, %v9615
      %v9617 = vpop.f32.mrf.mxu0
      %v9618 = vadd.f32 %v9529, %v9617
      %9619 = vmatmul.bf16.gmra.mxu0 %v9426
      %v9620 = vpop.f32.mrf.mxu0
      %v9621 = vadd.f32 %v9532, %v9620
      %v9622 = vpop.f32.mrf.mxu0
      %v9623 = vadd.f32 %v9534, %v9622
      %9624 = vmatmul.bf16.gmra.mxu0 %v9428
      %v9625 = vpop.f32.mrf.mxu0
      %v9626 = vadd.f32 %v9537, %v9625
      %v9627 = vpop.f32.mrf.mxu0
      %v9628 = vadd.f32 %v9539, %v9627
      %9629 = vmatmul.bf16.gmra.mxu0 %v9430
      %v9630 = vpop.f32.mrf.mxu0
      %v9631 = vadd.f32 %v9542, %v9630
      %v9632 = vpop.f32.mrf.mxu0
      %v9633 = vadd.f32 %v9544, %v9632
      %9634 = vmatmul.bf16.gmra.mxu0 %v9432
      %v9635 = vpop.f32.mrf.mxu0
      %v9636 = vadd.f32 %v9547, %v9635
      %v9637 = vpop.f32.mrf.mxu0
      %v9638 = vadd.f32 %v9549, %v9637
      %9639 = vmatmul.bf16.gmra.mxu0 %v9434
      %v9640 = vpop.f32.mrf.mxu0
      %v9641 = vadd.f32 %v9552, %v9640
      %v9642 = vpop.f32.mrf.mxu0
      %v9643 = vadd.f32 %v9554, %v9642
      %9644 = vdwg.mxu0
      %v9645 = vmax.f32 %v9275, %v9566
      %v9646 = vmax.f32 %v9276, %v9568
      %v9647 = vmax.f32 %v9277, %v9571
      %v9648 = vmax.f32 %v9278, %v9573
      %v9649 = vmax.f32 %v9279, %v9576
      %v9650 = vmax.f32 %v9280, %v9578
      %v9651 = vmax.f32 %v9281, %v9581
      %v9652 = vmax.f32 %v9282, %v9583
      %v9653 = vmax.f32 %v9283, %v9586
      %v9654 = vmax.f32 %v9284, %v9588
      %v9655 = vmax.f32 %v9285, %v9591
      %v9656 = vmax.f32 %v9286, %v9593
      %v9657 = vmax.f32 %v9287, %v9596
      %v9658 = vmax.f32 %v9288, %v9598
      %v9659 = vmax.f32 %v9289, %v9601
      %v9660 = vmax.f32 %v9290, %v9603
      %v9661 = vmax.f32 %v9291, %v9606
      %v9662 = vmax.f32 %v9292, %v9608
      %v9663 = vmax.f32 %v9293, %v9611
      %v9664 = vmax.f32 %v9294, %v9613
      %v9665 = vmax.f32 %v9295, %v9616
      %v9666 = vmax.f32 %v9296, %v9618
      %v9667 = vmax.f32 %v9297, %v9621
      %v9668 = vmax.f32 %v9298, %v9623
      %v9669 = vmax.f32 %v9299, %v9626
      %v9670 = vmax.f32 %v9300, %v9628
      %v9671 = vmax.f32 %v9301, %v9631
      %v9672 = vmax.f32 %v9302, %v9633
      %v9673 = vmax.f32 %v9303, %v9636
      %v9674 = vmax.f32 %v9304, %v9638
      %v9675 = vmax.f32 %v9305, %v9641
      %v9676 = vmax.f32 %v9306, %v9643
      %v9709 = vunpack.c.l.b16 %v5940
      %v9710 = vunpack.c.h.b16 %v5940
      %v9711 = vunpack.c.l.b16 %v5950
      %v9712 = vunpack.c.h.b16 %v5950
      %v9713 = vunpack.c.l.b16 %v5960
      %v9714 = vunpack.c.h.b16 %v5960
      %v9715 = vunpack.c.l.b16 %v5970
      %v9716 = vunpack.c.h.b16 %v5970
      %v9717 = vunpack.c.l.b16 %v5980
      %v9718 = vunpack.c.h.b16 %v5980
      %v9719 = vunpack.c.l.b16 %v5990
      %v9720 = vunpack.c.h.b16 %v5990
      %v9721 = vunpack.c.l.b16 %v6000
      %v9722 = vunpack.c.h.b16 %v6000
      %v9723 = vunpack.c.l.b16 %v6010
      %v9724 = vunpack.c.h.b16 %v6010
      %v9725 = vunpack.c.l.b16 %v6020
      %v9726 = vunpack.c.h.b16 %v6020
      %v9727 = vunpack.c.l.b16 %v6030
      %v9728 = vunpack.c.h.b16 %v6030
      %v9729 = vunpack.c.l.b16 %v6040
      %v9730 = vunpack.c.h.b16 %v6040
      %v9731 = vunpack.c.l.b16 %v6050
      %v9732 = vunpack.c.h.b16 %v6050
      %v9733 = vunpack.c.l.b16 %v6060
      %v9734 = vunpack.c.h.b16 %v6060
      %v9735 = vunpack.c.l.b16 %v6070
      %v9736 = vunpack.c.h.b16 %v6070
      %v9737 = vunpack.c.l.b16 %v6080
      %v9738 = vunpack.c.h.b16 %v6080
      %v9739 = vunpack.c.l.b16 %v6090
      %v9740 = vunpack.c.h.b16 %v6090
      %v9741 = vunpack.c.l.b16 %v6100
      %v9742 = vunpack.c.h.b16 %v6100
      %v9743 = vunpack.c.l.b16 %v6110
      %v9744 = vunpack.c.h.b16 %v6110
      %v9745 = vunpack.c.l.b16 %v6120
      %v9746 = vunpack.c.h.b16 %v6120
      %v9747 = vunpack.c.l.b16 %v6130
      %v9748 = vunpack.c.h.b16 %v6130
      %v9749 = vunpack.c.l.b16 %v6140
      %v9750 = vunpack.c.h.b16 %v6140
      %v9751 = vunpack.c.l.b16 %v6150
      %v9752 = vunpack.c.h.b16 %v6150
      %v9753 = vunpack.c.l.b16 %v6160
      %v9754 = vunpack.c.h.b16 %v6160
      %v9755 = vunpack.c.l.b16 %v6170
      %v9756 = vunpack.c.h.b16 %v6170
      %v9757 = vunpack.c.l.b16 %v6180
      %v9758 = vunpack.c.h.b16 %v6180
      %v9759 = vunpack.c.l.b16 %v6190
      %v9760 = vunpack.c.h.b16 %v6190
      %v9761 = vunpack.c.l.b16 %v6200
      %v9762 = vunpack.c.h.b16 %v6200
      %v9763 = vunpack.c.l.b16 %v6210
      %v9764 = vunpack.c.h.b16 %v6210
      %v9765 = vunpack.c.l.b16 %v6220
      %v9766 = vunpack.c.h.b16 %v6220
      %v9767 = vunpack.c.l.b16 %v6230
      %v9768 = vunpack.c.h.b16 %v6230
      %v9769 = vunpack.c.l.b16 %v6240
      %v9770 = vunpack.c.h.b16 %v6240
      %v9771 = vunpack.c.l.b16 %v6250
      %v9772 = vunpack.c.h.b16 %v6250
      %v9773 = vpack.c.b16 %v9711, %v9709
      %v9774 = vpack.c.b16 %v9712, %v9710
      %v9775 = vpack.c.b16 %v9715, %v9713
      %v9776 = vpack.c.b16 %v9716, %v9714
      %v9777 = vpack.c.b16 %v9719, %v9717
      %v9778 = vpack.c.b16 %v9720, %v9718
      %v9779 = vpack.c.b16 %v9723, %v9721
      %v9780 = vpack.c.b16 %v9724, %v9722
      %v9781 = vpack.c.b16 %v9727, %v9725
      %v9782 = vpack.c.b16 %v9728, %v9726
      %v9783 = vpack.c.b16 %v9731, %v9729
      %v9784 = vpack.c.b16 %v9732, %v9730
      %v9785 = vpack.c.b16 %v9735, %v9733
      %v9786 = vpack.c.b16 %v9736, %v9734
      %v9787 = vpack.c.b16 %v9739, %v9737
      %v9788 = vpack.c.b16 %v9740, %v9738
      %v9789 = vpack.c.b16 %v9743, %v9741
      %v9790 = vpack.c.b16 %v9744, %v9742
      %v9791 = vpack.c.b16 %v9747, %v9745
      %v9792 = vpack.c.b16 %v9748, %v9746
      %v9793 = vpack.c.b16 %v9751, %v9749
      %v9794 = vpack.c.b16 %v9752, %v9750
      %v9795 = vpack.c.b16 %v9755, %v9753
      %v9796 = vpack.c.b16 %v9756, %v9754
      %v9797 = vpack.c.b16 %v9759, %v9757
      %v9798 = vpack.c.b16 %v9760, %v9758
      %v9799 = vpack.c.b16 %v9763, %v9761
      %v9800 = vpack.c.b16 %v9764, %v9762
      %v9801 = vpack.c.b16 %v9767, %v9765
      %v9802 = vpack.c.b16 %v9768, %v9766
      %v9803 = vpack.c.b16 %v9771, %v9769
      %v9804 = vpack.c.b16 %v9772, %v9770
      %9837 = vmatpush.bf16.msra.mxu0 %v6514
      %9838 = vmatpush.bf16.msra.mxu0 %v6513
      %9839 = vmatpush.bf16.msra.mxu0 %v6512
      %9840 = vmatpush.bf16.msra.mxu0 %v6511
      %9841 = vmatpush.bf16.msra.mxu0 %v6510
      %9842 = vmatpush.bf16.msra.mxu0 %v6509
      %9843 = vmatpush.bf16.msra.mxu0 %v6508
      %9844 = vmatpush.bf16.msra.mxu0 %v6507
      %9845 = vmatmul.bf16.gmra.mxu0 %v9773
      %v9846 = vpop.f32.mrf.mxu0
      %v9847 = vadd.f32 0.0, %v9846
      %v9848 = vpop.f32.mrf.mxu0
      %v9849 = vadd.f32 0.0, %v9848
      %9850 = vmatmul.bf16.gmra.mxu0 %v9775
      %v9851 = vpop.f32.mrf.mxu0
      %v9852 = vadd.f32 0.0, %v9851
      %v9853 = vpop.f32.mrf.mxu0
      %v9854 = vadd.f32 0.0, %v9853
      %9855 = vmatmul.bf16.gmra.mxu0 %v9777
      %v9856 = vpop.f32.mrf.mxu0
      %v9857 = vadd.f32 0.0, %v9856
      %v9858 = vpop.f32.mrf.mxu0
      %v9859 = vadd.f32 0.0, %v9858
      %9860 = vmatmul.bf16.gmra.mxu0 %v9779
      %v9861 = vpop.f32.mrf.mxu0
      %v9862 = vadd.f32 0.0, %v9861
      %v9863 = vpop.f32.mrf.mxu0
      %v9864 = vadd.f32 0.0, %v9863
      %9865 = vmatmul.bf16.gmra.mxu0 %v9781
      %v9866 = vpop.f32.mrf.mxu0
      %v9867 = vadd.f32 0.0, %v9866
      %v9868 = vpop.f32.mrf.mxu0
      %v9869 = vadd.f32 0.0, %v9868
      %9870 = vmatmul.bf16.gmra.mxu0 %v9783
      %v9871 = vpop.f32.mrf.mxu0
      %v9872 = vadd.f32 0.0, %v9871
      %v9873 = vpop.f32.mrf.mxu0
      %v9874 = vadd.f32 0.0, %v9873
      %9875 = vmatmul.bf16.gmra.mxu0 %v9785
      %v9876 = vpop.f32.mrf.mxu0
      %v9877 = vadd.f32 0.0, %v9876
      %v9878 = vpop.f32.mrf.mxu0
      %v9879 = vadd.f32 0.0, %v9878
      %9880 = vmatmul.bf16.gmra.mxu0 %v9787
      %v9881 = vpop.f32.mrf.mxu0
      %v9882 = vadd.f32 0.0, %v9881
      %v9883 = vpop.f32.mrf.mxu0
      %v9884 = vadd.f32 0.0, %v9883
      %9885 = vmatmul.bf16.gmra.mxu0 %v9789
      %v9886 = vpop.f32.mrf.mxu0
      %v9887 = vadd.f32 0.0, %v9886
      %v9888 = vpop.f32.mrf.mxu0
      %v9889 = vadd.f32 0.0, %v9888
      %9890 = vmatmul.bf16.gmra.mxu0 %v9791
      %v9891 = vpop.f32.mrf.mxu0
      %v9892 = vadd.f32 0.0, %v9891
      %v9893 = vpop.f32.mrf.mxu0
      %v9894 = vadd.f32 0.0, %v9893
      %9895 = vmatmul.bf16.gmra.mxu0 %v9793
      %v9896 = vpop.f32.mrf.mxu0
      %v9897 = vadd.f32 0.0, %v9896
      %v9898 = vpop.f32.mrf.mxu0
      %v9899 = vadd.f32 0.0, %v9898
      %9900 = vmatmul.bf16.gmra.mxu0 %v9795
      %v9901 = vpop.f32.mrf.mxu0
      %v9902 = vadd.f32 0.0, %v9901
      %v9903 = vpop.f32.mrf.mxu0
      %v9904 = vadd.f32 0.0, %v9903
      %9905 = vmatmul.bf16.gmra.mxu0 %v9797
      %v9906 = vpop.f32.mrf.mxu0
      %v9907 = vadd.f32 0.0, %v9906
      %v9908 = vpop.f32.mrf.mxu0
      %v9909 = vadd.f32 0.0, %v9908
      %9910 = vmatmul.bf16.gmra.mxu0 %v9799
      %v9911 = vpop.f32.mrf.mxu0
      %v9912 = vadd.f32 0.0, %v9911
      %v9913 = vpop.f32.mrf.mxu0
      %v9914 = vadd.f32 0.0, %v9913
      %9915 = vmatmul.bf16.gmra.mxu0 %v9801
      %v9916 = vpop.f32.mrf.mxu0
      %v9917 = vadd.f32 0.0, %v9916
      %v9918 = vpop.f32.mrf.mxu0
      %v9919 = vadd.f32 0.0, %v9918
      %9920 = vmatmul.bf16.gmra.mxu0 %v9803
      %v9921 = vpop.f32.mrf.mxu0
      %v9922 = vadd.f32 0.0, %v9921
      %v9923 = vpop.f32.mrf.mxu0
      %v9924 = vadd.f32 0.0, %v9923
      %9925 = vdwg.mxu0
      %9926 = vmatpush.bf16.msra.mxu0 %v6522
      %9927 = vmatpush.bf16.msra.mxu0 %v6521
      %9928 = vmatpush.bf16.msra.mxu0 %v6520
      %9929 = vmatpush.bf16.msra.mxu0 %v6519
      %9930 = vmatpush.bf16.msra.mxu0 %v6518
      %9931 = vmatpush.bf16.msra.mxu0 %v6517
      %9932 = vmatpush.bf16.msra.mxu0 %v6516
      %9933 = vmatpush.bf16.msra.mxu0 %v6515
      %9934 = vmatmul.bf16.gmra.mxu0 %v9774
      %v9935 = vpop.f32.mrf.mxu0
      %v9936 = vadd.f32 %v9847, %v9935
      %v9937 = vpop.f32.mrf.mxu0
      %v9938 = vadd.f32 %v9849, %v9937
      %9939 = vmatmul.bf16.gmra.mxu0 %v9776
      %v9940 = vpop.f32.mrf.mxu0
      %v9941 = vadd.f32 %v9852, %v9940
      %v9942 = vpop.f32.mrf.mxu0
      %v9943 = vadd.f32 %v9854, %v9942
      %9944 = vmatmul.bf16.gmra.mxu0 %v9778
      %v9945 = vpop.f32.mrf.mxu0
      %v9946 = vadd.f32 %v9857, %v9945
      %v9947 = vpop.f32.mrf.mxu0
      %v9948 = vadd.f32 %v9859, %v9947
      %9949 = vmatmul.bf16.gmra.mxu0 %v9780
      %v9950 = vpop.f32.mrf.mxu0
      %v9951 = vadd.f32 %v9862, %v9950
      %v9952 = vpop.f32.mrf.mxu0
      %v9953 = vadd.f32 %v9864, %v9952
      %9954 = vmatmul.bf16.gmra.mxu0 %v9782
      %v9955 = vpop.f32.mrf.mxu0
      %v9956 = vadd.f32 %v9867, %v9955
      %v9957 = vpop.f32.mrf.mxu0
      %v9958 = vadd.f32 %v9869, %v9957
      %9959 = vmatmul.bf16.gmra.mxu0 %v9784
      %v9960 = vpop.f32.mrf.mxu0
      %v9961 = vadd.f32 %v9872, %v9960
      %v9962 = vpop.f32.mrf.mxu0
      %v9963 = vadd.f32 %v9874, %v9962
      %9964 = vmatmul.bf16.gmra.mxu0 %v9786
      %v9965 = vpop.f32.mrf.mxu0
      %v9966 = vadd.f32 %v9877, %v9965
      %v9967 = vpop.f32.mrf.mxu0
      %v9968 = vadd.f32 %v9879, %v9967
      %9969 = vmatmul.bf16.gmra.mxu0 %v9788
      %v9970 = vpop.f32.mrf.mxu0
      %v9971 = vadd.f32 %v9882, %v9970
      %v9972 = vpop.f32.mrf.mxu0
      %v9973 = vadd.f32 %v9884, %v9972
      %9974 = vmatmul.bf16.gmra.mxu0 %v9790
      %v9975 = vpop.f32.mrf.mxu0
      %v9976 = vadd.f32 %v9887, %v9975
      %v9977 = vpop.f32.mrf.mxu0
      %v9978 = vadd.f32 %v9889, %v9977
      %9979 = vmatmul.bf16.gmra.mxu0 %v9792
      %v9980 = vpop.f32.mrf.mxu0
      %v9981 = vadd.f32 %v9892, %v9980
      %v9982 = vpop.f32.mrf.mxu0
      %v9983 = vadd.f32 %v9894, %v9982
      %9984 = vmatmul.bf16.gmra.mxu0 %v9794
      %v9985 = vpop.f32.mrf.mxu0
      %v9986 = vadd.f32 %v9897, %v9985
      %v9987 = vpop.f32.mrf.mxu0
      %v9988 = vadd.f32 %v9899, %v9987
      %9989 = vmatmul.bf16.gmra.mxu0 %v9796
      %v9990 = vpop.f32.mrf.mxu0
      %v9991 = vadd.f32 %v9902, %v9990
      %v9992 = vpop.f32.mrf.mxu0
      %v9993 = vadd.f32 %v9904, %v9992
      %9994 = vmatmul.bf16.gmra.mxu0 %v9798
      %v9995 = vpop.f32.mrf.mxu0
      %v9996 = vadd.f32 %v9907, %v9995
      %v9997 = vpop.f32.mrf.mxu0
      %v9998 = vadd.f32 %v9909, %v9997
      %9999 = vmatmul.bf16.gmra.mxu0 %v9800
      %v10000 = vpop.f32.mrf.mxu0
      %v10001 = vadd.f32 %v9912, %v10000
      %v10002 = vpop.f32.mrf.mxu0
      %v10003 = vadd.f32 %v9914, %v10002
      %10004 = vmatmul.bf16.gmra.mxu0 %v9802
      %v10005 = vpop.f32.mrf.mxu0
      %v10006 = vadd.f32 %v9917, %v10005
      %v10007 = vpop.f32.mrf.mxu0
      %v10008 = vadd.f32 %v9919, %v10007
      %10009 = vmatmul.bf16.gmra.mxu0 %v9804
      %v10010 = vpop.f32.mrf.mxu0
      %v10011 = vadd.f32 %v9922, %v10010
      %v10012 = vpop.f32.mrf.mxu0
      %v10013 = vadd.f32 %v9924, %v10012
      %10014 = vdwg.mxu0
      %v10015 = vmax.f32 %v9645, %v9936
      %v10016 = vmax.f32 %v9646, %v9938
      %v10017 = vmax.f32 %v9647, %v9941
      %v10018 = vmax.f32 %v9648, %v9943
      %v10019 = vmax.f32 %v9649, %v9946
      %v10020 = vmax.f32 %v9650, %v9948
      %v10021 = vmax.f32 %v9651, %v9951
      %v10022 = vmax.f32 %v9652, %v9953
      %v10023 = vmax.f32 %v9653, %v9956
      %v10024 = vmax.f32 %v9654, %v9958
      %v10025 = vmax.f32 %v9655, %v9961
      %v10026 = vmax.f32 %v9656, %v9963
      %v10027 = vmax.f32 %v9657, %v9966
      %v10028 = vmax.f32 %v9658, %v9968
      %v10029 = vmax.f32 %v9659, %v9971
      %v10030 = vmax.f32 %v9660, %v9973
      %v10031 = vmax.f32 %v9661, %v9976
      %v10032 = vmax.f32 %v9662, %v9978
      %v10033 = vmax.f32 %v9663, %v9981
      %v10034 = vmax.f32 %v9664, %v9983
      %v10035 = vmax.f32 %v9665, %v9986
      %v10036 = vmax.f32 %v9666, %v9988
      %v10037 = vmax.f32 %v9667, %v9991
      %v10038 = vmax.f32 %v9668, %v9993
      %v10039 = vmax.f32 %v9669, %v9996
      %v10040 = vmax.f32 %v9670, %v9998
      %v10041 = vmax.f32 %v9671, %v10001
      %v10042 = vmax.f32 %v9672, %v10003
      %v10043 = vmax.f32 %v9673, %v10006
      %v10044 = vmax.f32 %v9674, %v10008
      %v10045 = vmax.f32 %v9675, %v10011
      %v10046 = vmax.f32 %v9676, %v10013
      %v10047 = vld [vmem:[%s4] sm:$0x1]
      %v10049 = vperm.slane %v10047, 0
      %v10051 = vadd.f32 %v10015, %v10049
      %v10052 = vadd.f32 %v10016, %v10049
      %v10053 = vadd.f32 %v10017, %v10049
      %v10054 = vadd.f32 %v10018, %v10049
      %v10055 = vadd.f32 %v10019, %v10049
      %v10056 = vadd.f32 %v10020, %v10049
      %v10057 = vadd.f32 %v10021, %v10049
      %v10058 = vadd.f32 %v10022, %v10049
      %v10059 = vadd.f32 %v10023, %v10049
      %v10060 = vadd.f32 %v10024, %v10049
      %v10061 = vadd.f32 %v10025, %v10049
      %v10062 = vadd.f32 %v10026, %v10049
      %v10063 = vadd.f32 %v10027, %v10049
      %v10064 = vadd.f32 %v10028, %v10049
      %v10065 = vadd.f32 %v10029, %v10049
      %v10066 = vadd.f32 %v10030, %v10049
      %v10067 = vadd.f32 %v10031, %v10049
      %v10068 = vadd.f32 %v10032, %v10049
      %v10069 = vadd.f32 %v10033, %v10049
      %v10070 = vadd.f32 %v10034, %v10049
      %v10071 = vadd.f32 %v10035, %v10049
      %v10072 = vadd.f32 %v10036, %v10049
      %v10073 = vadd.f32 %v10037, %v10049
      %v10074 = vadd.f32 %v10038, %v10049
      %v10075 = vadd.f32 %v10039, %v10049
      %v10076 = vadd.f32 %v10040, %v10049
      %v10077 = vadd.f32 %v10041, %v10049
      %v10078 = vadd.f32 %v10042, %v10049
      %v10079 = vadd.f32 %v10043, %v10049
      %v10080 = vadd.f32 %v10044, %v10049
      %v10081 = vadd.f32 %v10045, %v10049
      %v10082 = vadd.f32 %v10046, %v10049
      %10083 = vxpose.xlu0.b32.start [1/16] %v10051, 128
      %10084 = vxpose.xlu0.b32.cont [2/16] %v10052, 128
      %10085 = vxpose.xlu0.b32.cont [3/16] %v10053, 128
      %10086 = vxpose.xlu0.b32.cont [4/16] %v10054, 128
      %10087 = vxpose.xlu0.b32.cont [5/16] %v10055, 128
      %10088 = vxpose.xlu0.b32.cont [6/16] %v10056, 128
      %10089 = vxpose.xlu0.b32.cont [7/16] %v10057, 128
      %10090 = vxpose.xlu0.b32.cont [8/16] %v10058, 128
      %10091 = vxpose.xlu0.b32.cont [9/16] %v10059, 128
      %10092 = vxpose.xlu0.b32.cont [10/16] %v10060, 128
      %10093 = vxpose.xlu0.b32.cont [11/16] %v10061, 128
      %10094 = vxpose.xlu0.b32.cont [12/16] %v10062, 128
      %10095 = vxpose.xlu0.b32.cont [13/16] %v10063, 128
      %10096 = vxpose.xlu0.b32.cont [14/16] %v10064, 128
      %10097 = vxpose.xlu0.b32.cont [15/16] %v10065, 128
      %10098 = vxpose.xlu0.b32.end [16/16] %v10066, 128
      %v10099 = vpop.trf.xlu0
      %v10100 = vpop.trf.xlu0
      %v10101 = vpop.trf.xlu0
      %v10102 = vpop.trf.xlu0
      %v10103 = vpop.trf.xlu0
      %v10104 = vpop.trf.xlu0
      %v10105 = vpop.trf.xlu0
      %v10106 = vpop.trf.xlu0
      %v10107 = vpop.trf.xlu0
      %v10108 = vpop.trf.xlu0
      %v10109 = vpop.trf.xlu0
      %v10110 = vpop.trf.xlu0
      %v10111 = vpop.trf.xlu0
      %v10112 = vpop.trf.xlu0
      %v10113 = vpop.trf.xlu0
      %v10114 = vpop.trf.xlu0
      %10115 = vxpose.xlu0.b32.start [1/16] %v10067, 128
      %10116 = vxpose.xlu0.b32.cont [2/16] %v10068, 128
      %10117 = vxpose.xlu0.b32.cont [3/16] %v10069, 128
      %10118 = vxpose.xlu0.b32.cont [4/16] %v10070, 128
      %10119 = vxpose.xlu0.b32.cont [5/16] %v10071, 128
      %10120 = vxpose.xlu0.b32.cont [6/16] %v10072, 128
      %10121 = vxpose.xlu0.b32.cont [7/16] %v10073, 128
      %10122 = vxpose.xlu0.b32.cont [8/16] %v10074, 128
      %10123 = vxpose.xlu0.b32.cont [9/16] %v10075, 128
      %10124 = vxpose.xlu0.b32.cont [10/16] %v10076, 128
      %10125 = vxpose.xlu0.b32.cont [11/16] %v10077, 128
      %10126 = vxpose.xlu0.b32.cont [12/16] %v10078, 128
      %10127 = vxpose.xlu0.b32.cont [13/16] %v10079, 128
      %10128 = vxpose.xlu0.b32.cont [14/16] %v10080, 128
      %10129 = vxpose.xlu0.b32.cont [15/16] %v10081, 128
      %10130 = vxpose.xlu0.b32.end [16/16] %v10082, 128
      %v10131 = vpop.trf.xlu0
      %v10132 = vpop.trf.xlu0
      %v10133 = vpop.trf.xlu0
      %v10134 = vpop.trf.xlu0
      %v10135 = vpop.trf.xlu0
      %v10136 = vpop.trf.xlu0
      %v10137 = vpop.trf.xlu0
      %v10138 = vpop.trf.xlu0
      %v10139 = vpop.trf.xlu0
      %v10140 = vpop.trf.xlu0
      %v10141 = vpop.trf.xlu0
      %v10142 = vpop.trf.xlu0
      %v10143 = vpop.trf.xlu0
      %v10144 = vpop.trf.xlu0
      %v10145 = vpop.trf.xlu0
      %v10146 = vpop.trf.xlu0
      %v10147 = vpack.c.bf16 %v10100, %v10099
      %v10148 = vpack.c.bf16 %v10132, %v10131
      %v10149 = vpack.c.bf16 %v10102, %v10101
      %v10150 = vpack.c.bf16 %v10134, %v10133
      %v10151 = vpack.c.bf16 %v10104, %v10103
      %v10152 = vpack.c.bf16 %v10136, %v10135
      %v10153 = vpack.c.bf16 %v10106, %v10105
      %v10154 = vpack.c.bf16 %v10138, %v10137
      %v10155 = vpack.c.bf16 %v10108, %v10107
      %v10156 = vpack.c.bf16 %v10140, %v10139
      %v10157 = vpack.c.bf16 %v10110, %v10109
      %v10158 = vpack.c.bf16 %v10142, %v10141
      %v10159 = vpack.c.bf16 %v10112, %v10111
      %v10160 = vpack.c.bf16 %v10144, %v10143
      %v10161 = vpack.c.bf16 %v10114, %v10113
      %v10162 = vpack.c.bf16 %v10146, %v10145
      %v10163 = vld [vmem:[%s5] sm:$0xf]
      %v10164 = vld [vmem:[%s5 + $0x4] sm:$0xf]
      %v10165 = vld [vmem:[%s5 + $0x8] sm:$0xf]
      %v10166 = vld [vmem:[%s5 + $0xc] sm:$0xf]
      %v10167 = vld [vmem:[%s5 + $0x10] sm:$0xf]
      %v10168 = vld [vmem:[%s5 + $0x14] sm:$0xf]
      %v10169 = vld [vmem:[%s5 + $0x18] sm:$0xf]
      %v10170 = vld [vmem:[%s5 + $0x1c] sm:$0xf]
      %v10171 = vld [vmem:[%s6] sm:$0xff]
      %v10172 = vld [vmem:[%s6 + $0x8] sm:$0xff]
      %v10173 = vld [vmem:[%s6 + $0x10] sm:$0xff]
      %v10174 = vld [vmem:[%s6 + $0x18] sm:$0xff]
      %v10175 = vld [vmem:[%s6 + $0x20] sm:$0xff]
      %v10176 = vld [vmem:[%s6 + $0x28] sm:$0xff]
      %v10177 = vld [vmem:[%s6 + $0x30] sm:$0xff]
      %v10178 = vld [vmem:[%s6 + $0x38] sm:$0xff]
      %10180 = vset.pattern.permute.xlu0 0
      %10181 = vperm.xlu0 %10180, %v10171
      %v10182 = vpop.permute.xlu0 %10181
      %10185 = vset.pattern.permute.xlu0 0
      %10186 = vperm.xlu0 %10185, %v10172
      %v10187 = vpop.permute.xlu0 %10186
      %10190 = vset.pattern.permute.xlu0 0
      %10191 = vperm.xlu0 %10190, %v10173
      %v10192 = vpop.permute.xlu0 %10191
      %10195 = vset.pattern.permute.xlu0 0
      %10196 = vperm.xlu0 %10195, %v10174
      %v10197 = vpop.permute.xlu0 %10196
      %10200 = vset.pattern.permute.xlu0 0
      %10201 = vperm.xlu0 %10200, %v10175
      %v10202 = vpop.permute.xlu0 %10201
      %10205 = vset.pattern.permute.xlu0 0
      %10206 = vperm.xlu0 %10205, %v10176
      %v10207 = vpop.permute.xlu0 %10206
      %10210 = vset.pattern.permute.xlu0 0
      %10211 = vperm.xlu0 %10210, %v10177
      %v10212 = vpop.permute.xlu0 %10211
      %10215 = vset.pattern.permute.xlu0 0
      %10216 = vperm.xlu0 %10215, %v10178
      %v10217 = vpop.permute.xlu0 %10216
      %v10227 = vunpack.c.l.b16 %v10163
      %v10228 = vunpack.c.l.b16 %v10164
      %v10229 = vunpack.c.l.b16 %v10165
      %v10230 = vunpack.c.l.b16 %v10166
      %v10231 = vunpack.c.l.b16 %v10167
      %v10232 = vunpack.c.l.b16 %v10168
      %v10233 = vunpack.c.l.b16 %v10169
      %v10234 = vunpack.c.l.b16 %v10170
      %v10235 = vpack.c.b16 %v10228, %v10227
      %v10236 = vpack.c.b16 %v10230, %v10229
      %v10237 = vpack.c.b16 %v10232, %v10231
      %v10238 = vpack.c.b16 %v10234, %v10233
      %10243 = vmatpush.bf16.msra.mxu0 %v10161
      %10244 = vmatpush.bf16.msra.mxu0 %v10159
      %10245 = vmatpush.bf16.msra.mxu0 %v10157
      %10246 = vmatpush.bf16.msra.mxu0 %v10155
      %10247 = vmatpush.bf16.msra.mxu0 %v10153
      %10248 = vmatpush.bf16.msra.mxu0 %v10151
      %10249 = vmatpush.bf16.msra.mxu0 %v10149
      %10250 = vmatpush.bf16.msra.mxu0 %v10147
      %10251 = vmatmul.bf16.gmra.mxu0 %v10235
      %v10252 = vpop.f32.mrf.mxu0
      %v10253 = vadd.f32 %v10182, %v10252
      %v10254 = vpop.f32.mrf.mxu0
      %v10255 = vadd.f32 %v10187, %v10254
      %10256 = vmatmul.bf16.gmra.mxu0 %v10236
      %v10257 = vpop.f32.mrf.mxu0
      %v10258 = vadd.f32 %v10192, %v10257
      %v10259 = vpop.f32.mrf.mxu0
      %v10260 = vadd.f32 %v10197, %v10259
      %10261 = vmatmul.bf16.gmra.mxu0 %v10237
      %v10262 = vpop.f32.mrf.mxu0
      %v10263 = vadd.f32 %v10202, %v10262
      %v10264 = vpop.f32.mrf.mxu0
      %v10265 = vadd.f32 %v10207, %v10264
      %10266 = vmatmul.bf16.gmra.mxu0 %v10238
      %v10267 = vpop.f32.mrf.mxu0
      %v10268 = vadd.f32 %v10212, %v10267
      %v10269 = vpop.f32.mrf.mxu0
      %v10270 = vadd.f32 %v10217, %v10269
      %10271 = vdwg.mxu0
      %10272 = vmatpush.bf16.msra.mxu0 %v10162
      %10273 = vmatpush.bf16.msra.mxu0 %v10160
      %10274 = vmatpush.bf16.msra.mxu0 %v10158
      %10275 = vmatpush.bf16.msra.mxu0 %v10156
      %10276 = vmatpush.bf16.msra.mxu0 %v10154
      %10277 = vmatpush.bf16.msra.mxu0 %v10152
      %10278 = vmatpush.bf16.msra.mxu0 %v10150
      %10279 = vmatpush.bf16.msra.mxu0 %v10148
      %10280 = vmatmul.bf16.gmra.mxu0 %v10235
      %v10281 = vpop.f32.mrf.mxu0
      %v10282 = vadd.f32 %v10182, %v10281
      %v10283 = vpop.f32.mrf.mxu0
      %v10284 = vadd.f32 %v10187, %v10283
      %10285 = vmatmul.bf16.gmra.mxu0 %v10236
      %v10286 = vpop.f32.mrf.mxu0
      %v10287 = vadd.f32 %v10192, %v10286
      %v10288 = vpop.f32.mrf.mxu0
      %v10289 = vadd.f32 %v10197, %v10288
      %10290 = vmatmul.bf16.gmra.mxu0 %v10237
      %v10291 = vpop.f32.mrf.mxu0
      %v10292 = vadd.f32 %v10202, %v10291
      %v10293 = vpop.f32.mrf.mxu0
      %v10294 = vadd.f32 %v10207, %v10293
      %10295 = vmatmul.bf16.gmra.mxu0 %v10238
      %v10296 = vpop.f32.mrf.mxu0
      %v10297 = vadd.f32 %v10212, %v10296
      %v10298 = vpop.f32.mrf.mxu0
      %v10299 = vadd.f32 %v10217, %v10298
      %10300 = vdwg.mxu0
      %v10301 = vmax.f32 %v10253, 0.0
      %v10302 = vmax.f32 %v10282, 0.0
      %v10303 = vmax.f32 %v10255, 0.0
      %v10304 = vmax.f32 %v10284, 0.0
      %v10305 = vmax.f32 %v10258, 0.0
      %v10306 = vmax.f32 %v10287, 0.0
      %v10307 = vmax.f32 %v10260, 0.0
      %v10308 = vmax.f32 %v10289, 0.0
      %v10309 = vmax.f32 %v10263, 0.0
      %v10310 = vmax.f32 %v10292, 0.0
      %v10311 = vmax.f32 %v10265, 0.0
      %v10312 = vmax.f32 %v10294, 0.0
      %v10313 = vmax.f32 %v10268, 0.0
      %v10314 = vmax.f32 %v10297, 0.0
      %v10315 = vmax.f32 %v10270, 0.0
      %v10316 = vmax.f32 %v10299, 0.0
      %v10317 = vpack.c.bf16 %v10303, %v10301
      %v10318 = vpack.c.bf16 %v10304, %v10302
      %v10319 = vpack.c.bf16 %v10307, %v10305
      %v10320 = vpack.c.bf16 %v10308, %v10306
      %v10321 = vpack.c.bf16 %v10311, %v10309
      %v10322 = vpack.c.bf16 %v10312, %v10310
      %v10323 = vpack.c.bf16 %v10315, %v10313
      %v10324 = vpack.c.bf16 %v10316, %v10314
      %v10325 = vld [vmem:[%s7] sm:$0x1]
      %v10326 = vld [vmem:[#allocation2] sm:$0x1]
      %10328 = vset.pattern.permute.xlu0 0
      %10329 = vperm.xlu0 %10328, %v10326
      %v10330 = vpop.permute.xlu0 %10329
      %v10332 = vperm.slane %v10330, 0
      %vm10333 = vcmask 523264
      %v10335 = vsel %vm10333, %v10325, 0
      %10337 = vmatpush.bf16.msra.mxu0 0
      %10338 = vmatpush.bf16.msra.mxu0 0
      %10339 = vmatpush.bf16.msra.mxu0 0
      %10340 = vmatpush.bf16.msra.mxu0 0
      %10341 = vmatpush.bf16.msra.mxu0 %v10323
      %10342 = vmatpush.bf16.msra.mxu0 %v10321
      %10343 = vmatpush.bf16.msra.mxu0 %v10319
      %10344 = vmatpush.bf16.msra.mxu0 %v10317
      %10345 = vmatmul.bf16.gmra.mxu0 %v10335
      %v10346 = vpop.f32.mrf.mxu0
      %v10347 = vadd.f32 %v10332, %v10346
      %v10348 = vpop.f32.mrf.mxu0
      %10349 = vdwg.mxu0
      %10350 = vmatpush.bf16.msra.mxu0 0
      %10351 = vmatpush.bf16.msra.mxu0 0
      %10352 = vmatpush.bf16.msra.mxu0 0
      %10353 = vmatpush.bf16.msra.mxu0 0
      %10354 = vmatpush.bf16.msra.mxu0 %v10324
      %10355 = vmatpush.bf16.msra.mxu0 %v10322
      %10356 = vmatpush.bf16.msra.mxu0 %v10320
      %10357 = vmatpush.bf16.msra.mxu0 %v10318
      %10358 = vmatmul.bf16.gmra.mxu0 %v10335
      %v10359 = vpop.f32.mrf.mxu0
      %v10360 = vadd.f32 %v10332, %v10359
      %v10361 = vpop.f32.mrf.mxu0
      %10362 = vdwg.mxu0
      %v10363 = vxor.u32 %v10347, 2147483648
      %v10364 = vxor.u32 %v10360, 2147483648
      %v10365 = vmul.f32 %v10363, 1.442695
      %v10366 = vpow.pop %v10365
      %v10367 = vmul.f32 %v10364, 1.442695
      %v10368 = vpow.pop %v10367
      %v10369 = vadd.f32 %v10366, 1.0
      %v10370 = vadd.f32 %v10368, 1.0
      %v10371 = vrcp.pop %v10369
      %v10372 = vmul.f32 %v10369, %v10371
      %v10373 = vsub.f32 1.0, %v10372
      %v10374 = vmul.f32 %v10371, %v10373
      %v10375 = vadd.f32 %v10371, %v10374
      %vm10376 = vweird.f32 %v10369
      %vm10377 = vweird.f32 %v10371
      %vm10378 = vmor %vm10376, %vm10377
      %v10379 = vsel %vm10378, %v10371, %v10375
      %v10380 = vand.u32 2147483647, %v10369
      %vm10381 = vcmp.eq.f32.partialorder %v10380, 8.507059e+37
      %v10382 = vand.u32 %v10369, 2147483648
      %v10383 = vor.u32 1.1754944e-38, %v10382
      %v10384 = vsel %vm10381, %v10383, %v10379
      %v10385 = vmul.f32 1.0, %v10384
      %v10386 = vrcp.pop %v10370
      %v10387 = vmul.f32 %v10370, %v10386
      %v10388 = vsub.f32 1.0, %v10387
      %v10389 = vmul.f32 %v10386, %v10388
      %v10390 = vadd.f32 %v10386, %v10389
      %vm10391 = vweird.f32 %v10370
      %vm10392 = vweird.f32 %v10386
      %vm10393 = vmor %vm10391, %vm10392
      %v10394 = vsel %vm10393, %v10386, %v10390
      %v10395 = vand.u32 2147483647, %v10370
      %vm10396 = vcmp.eq.f32.partialorder %v10395, 8.507059e+37
      %v10397 = vand.u32 %v10370, 2147483648
      %v10398 = vor.u32 1.1754944e-38, %v10397
      %v10399 = vsel %vm10396, %v10398, %v10394
      %v10400 = vmul.f32 1.0, %v10399
      %v10403 = vrot.slane %v10400, 7
      %vm10404 = vcmask 1040384
      %v10405 = vsel %vm10404, %v10385, %v10403
      %v10407 = vlaneseq
      %vm10408 = vcmp.ge.s32.totalorder %v10407, 0
      %vm10409 = vcmp.lt.s32.totalorder %v10407, 256
      %vm10410 = vmand %vm10408, %vm10409
      %10411 = vst.msk [vmem:[%s337] sm:$0x3] %vm10410, %v10405
      %s10412 = smul.u32 2, %s22
      %p10413 = scmp.lt.s32.totalorder %s10412, 3
      %s10414 = scalar_select %p10413, %s10412, 3
      %s10415 = scalar_lea.vmem %s9, %s10414
      // Predicated region
      $region57: #{net_forward_batched.1} parent=55 // pred_check
        %p10416 = pneg %p234
      $region58: #{net_forward_batched.1} parent=55 // pred_check_branch
        %10418 = sbr.rel (%p10416) target = $region60
      $region59: #{net_forward_batched.1} parent=55 // pred_region
        %s10419 = smul.u32 2, %s22
      $region60: #{net_forward_batched.1} parent=55 // pred_fallthru
        _
    $region56: #{net_forward_batched.1} parent=5 // pred_fallthru
      _
    %p10420 = scmp.le.s32.totalorder 2, %s17
    // Predicated region
    $region61: #{net_forward_batched.1} parent=5 // pred_check
      %p10421 = pneg %p10420
    $region62: #{net_forward_batched.1} parent=5 // pred_check_branch
      %10423 = sbr.rel (%p10421) target = $region64
    $region63: #{net_forward_batched.1} parent=5 // pred_region
      %s10424 = ssub.s32 %s17, 2
      // Predicated region
      $region65: #{net_forward_batched.1} parent=63 // pred_check
        %p10425 = pneg %p240
      $region66: #{net_forward_batched.1} parent=63 // pred_check_branch
        %10427 = sbr.rel (%p10425) target = $region68
      $region67: #{net_forward_batched.1} parent=63 // pred_region
        %s10428 = smul.u32 2, %s23
        %p10429 = scmp.lt.s32.totalorder %s10428, 3
        %s10430 = scalar_select %p10429, %s10428, 3
        %s10431 = scalar_lea.vmem %s9, %s10430
      $region68: #{net_forward_batched.1} parent=63 // pred_fallthru
        _
    $region64: #{net_forward_batched.1} parent=5 // pred_fallthru
      _
  $region6: #{net_forward_batched.1} parent=0 // loop_footer
    %s21 = sadd.s32 1, %s17
  $region7: #{net_forward_batched.1} parent=0 // loop_footer_branch
    %16 = sbr.rel target = $region3
  $region8: #{net_forward_batched.1} parent=0 // loop_exit
    _

</llo_original>
